<compile_context>
chip_gen: v6e
topology: v6e:2x2x1
jax: 0.10.0
libtpu: 0.0.40
codegen_flags: <defaults>
</compile_context>

<pallas_src>
import jax
import jax.numpy as jnp
import numpy as np
from jax.experimental import pallas as pl
from jax.experimental.pallas import tpu as pltpu

# ---------------- model hyper-params (match the PyTorch module) ----------------
NUM_CLASSES = 2          # DeprNet(num_classes=2)
L_IN = 307               # Conv1d(k=5, s=2): (307-5)//2+1 = 152 ; AvgPool1d(2,2): 76 ; 32*76 = 2432
L_CONV = 152
L_POOL = 76
C1 = 32
FC1_IN = C1 * L_POOL     # 2432  (128-lane aligned: 19*128)
FC1_OUT = 128
LRELU_SLOPE = 0.01       # nn.LeakyReLU default
BN_EPS = 1e-5

# N-chunking of the conv/pool stage: pooled columns per chunk (all multiples of 128, sum = 2432)
CHUNK_HALVES = (640, 640, 640, 512)
CHUNK_OFFS = (0, 640, 1280, 1920)
assert sum(CHUNK_HALVES) == FC1_IN


# ---------------- fused Pallas kernel ----------------
def deprnet_kernel(x_ref, wexp_ref, shift_ref, wfc1_ref, bfc1_ref,
                   wfc2_ref, bfc2_ref, invt_ref, out_ref, flat_sc):
    """Whole forward for one batch tile.

    x_ref:     (TB, 307)   bf16 raw input rows.
    wexp_ref:  (307, 4864) bf16 Toeplitz conv weight with the eval-BN scale folded in; columns
               grouped per N-chunk as [even conv positions | odd conv positions] (see builder).
    shift_ref: (1, 4864)   f32 folded BN shift (+conv bias), replicated per column.
    wfc1/bfc1: (2432, 128) bf16 (0.5 AvgPool factor folded in) / (1, 128) f32.
    wfc2/bfc2: (128, 2)    bf16 / (1, 2) f32.
    invt_ref:  (1, 1)      f32 in SMEM = 1/t.
    out_ref:   (TB, 6)     f32 = [log_softmax | softmax(x/t) | logits].
    flat_sc:   (TB, 2432)  bf16 VMEM scratch: pooled activations in PyTorch flatten order.
    """
    x = x_ref[...]                                                          # (TB, 307) bf16

    # Conv1d(1->32,k5,s2) + BN (folded) + LeakyReLU + AvgPool1d(2,2) + flatten, chunked along N:
    # chunk i's VPU epilogue overlaps chunk i+1's MXU matmul, and the live f32 intermediate is
    # (TB, <=1280) instead of (TB, 4864).
    for off, half in zip(CHUNK_OFFS, CHUNK_HALVES):                         # static unroll
        c0 = 2 * off
        z = jnp.dot(x, wexp_ref[:, c0:c0 + 2 * half],
                    preferred_element_type=jnp.float32)                     # (TB, 2*half) f32
        z = z + shift_ref[:, c0:c0 + 2 * half]                              # folded BN shift (+bias)
        a = jnp.maximum(z, LRELU_SLOPE * z)                                 # LeakyReLU (2 VPU ops)
        # AvgPool1d(2,2): even/odd conv positions are the chunk's two halves; the 0.5 factor is
        # folded into wfc1.  All slice offsets are 128-lane aligned.
        flat_sc[:, off:off + half] = (a[:, :half] + a[:, half:]).astype(jnp.bfloat16)

    # fc1 (Linear 2432->128) + ReLU.  (Dropout = identity in eval mode.)
    h = jnp.dot(flat_sc[...], wfc1_ref[...],
                preferred_element_type=jnp.float32) + bfc1_ref[...]
    h = jnp.maximum(h, 0.0)

    # fc2 (Linear 128 -> num_classes)
    logits = jnp.dot(h.astype(jnp.bfloat16), wfc2_ref[...],
                     preferred_element_type=jnp.float32) + bfc2_ref[...]    # (TB, 2) f32

    # log_softmax(dim=1)
    m = jnp.max(logits, axis=1, keepdims=True)
    zs = logits - m
    logsm = zs - jnp.log(jnp.sum(jnp.exp(zs), axis=1, keepdims=True))

    # softmax(logits / t, dim=1): 1/t from SMEM; exact divide (tiny tensor) so rows sum to 1.
    zt = logits * invt_ref[0, 0]
    mt = jnp.max(zt, axis=1, keepdims=True)
    et = jnp.exp(zt - mt)
    sm = et / jnp.sum(et, axis=1, keepdims=True)

    # Single merged (TB, 6) output block: [log_softmax | softmax(x/t) | logits].
    out_ref[:, 0:NUM_CLASSES] = logsm
    out_ref[:, NUM_CLASSES:2 * NUM_CLASSES] = sm
    out_ref[:, 2 * NUM_CLASSES:3 * NUM_CLASSES] = logits


# ---------------- wrapper ----------------
def _cdiv(a, b):
    return -(-a // b)


def _round_up(a, b):
    return _cdiv(a, b) * b


def _default_batch_tile():
    # 512 on 128-MiB-VMEM parts (v5e/v6e); 256 on 64-MiB v7x.  Fallback 256 is safe everywhere.
    try:
        vmem = pltpu.get_tpu_info().vmem_capacity_bytes
        return 512 if vmem >= 96 * 1024 * 1024 else 256
    except Exception:
        return 256


def deprnet_forward(x, t, kernel_params, *, batch_tile=None):
    """x: (B, 1, 307) float32 (NCL, like PyTorch Conv1d).  t: scalar softmax temperature."""
    (wexp, shift_rep, wfc1, bfc1, wfc2, bfc2) = kernel_params
    B = x.shape[0]
    if batch_tile is None:
        batch_tile = _default_batch_tile()

    # Batch tile: large enough to amortize streaming the resident RHS weights through the MXU and
    # the per-grid-step overhead, but always >= 2 grid blocks (when B allows) so ("parallel",)
    # can split the batch across v7x's two TensorCores.
    if B <= 8:
        TB = B
    else:
        TB = min(batch_tile, _round_up(_cdiv(B, 2), 8))
    n_blk = _cdiv(B, TB)
    B_pad = n_blk * TB

    # bf16 input (halves the only recurring per-step HBM DMA); zero-pad a ragged batch so the
    # trailing block never feeds garbage rows through exp().
    x2d = x.reshape(B, L_IN).astype(jnp.bfloat16)
    if B_pad != B:
        x2d = jnp.pad(x2d, ((0, B_pad - B), (0, 0)))
    inv_t = (1.0 / jnp.asarray(t, jnp.float32)).reshape(1, 1)

    def const_spec(shape):                      # weights: resident in VMEM across grid steps
        return pl.BlockSpec(shape, lambda i: (0, 0))

    vmem_limit = (40 if TB <= 256 else 88) * 1024 * 1024

    out = pl.pallas_call(
        deprnet_kernel,
        grid=(n_blk,),
        in_specs=[
            pl.BlockSpec((TB, L_IN), lambda i: (i, 0)),            # x (batch-tiled, bf16)
            const_spec((L_IN, 2 * FC1_IN)),                        # Toeplitz conv weight * BN scale
            const_spec((1, 2 * FC1_IN)),                           # folded BN shift (+conv bias)
            const_spec((FC1_IN, FC1_OUT)),                         # fc1 weight * 0.5 (bf16)
            const_spec((1, FC1_OUT)),                              # fc1 bias
            const_spec((FC1_OUT, NUM_CLASSES)),                    # fc2 weight (bf16)
            const_spec((1, NUM_CLASSES)),                          # fc2 bias
            pl.BlockSpec(memory_space=pltpu.MemorySpace.SMEM),     # 1/t scalar
        ],
        out_specs=pl.BlockSpec((TB, 3 * NUM_CLASSES), lambda i: (i, 0)),
        out_shape=jax.ShapeDtypeStruct((B_pad, 3 * NUM_CLASSES), jnp.float32),
        scratch_shapes=[pltpu.VMEM((TB, FC1_IN), jnp.bfloat16)],   # pooled activations (fc1 input)
        compiler_params=pltpu.CompilerParams(
            dimension_semantics=("parallel",),                     # shard batch grid across cores
            vmem_limit_bytes=vmem_limit),
    )(x2d, wexp, shift_rep, wfc1, bfc1, wfc2, bfc2, inv_t)

    out = out[:B]
    logsm = out[:, 0:NUM_CLASSES]
    sm = out[:, NUM_CLASSES:2 * NUM_CLASSES]
    logits = out[:, 2 * NUM_CLASSES:3 * NUM_CLASSES]
    return logsm, sm, logits


# ---------------- deterministic parameter construction ----------------
def build_conv_matrices(conv_w, eff_scale, eff_shift):
    """Conv1d(1->32,k5,s2) + eval BatchNorm as a dense (307, 4864) matrix and (4864,) shift.

    Column layout (grouped per N-chunk so pooling stays a lane-aligned add inside the kernel):
      for pooled flat index f in chunk [off, off+half): channel c=f//76, pooled pos t=f%76,
        col 2*off + (f-off)          -> even conv position 2t   (input rows 4t+k)
        col 2*off + half + (f-off)   -> odd  conv position 2t+1 (input rows 4t+2+k)
    Pooled flat indices follow PyTorch (c*76 + t) flatten order, so fc1's weight needs no permute.
    The BN scale is folded into the matrix in f32 (before any bf16 cast).
    """
    w = conv_w[:, 0, :] * eff_scale[:, None]                       # (32, 5) scaled taps
    f = np.arange(FC1_IN)
    c = f // L_POOL
    t = f % L_POOL
    col_even = np.empty(FC1_IN, np.int64)
    col_odd = np.empty(FC1_IN, np.int64)
    for off, half in zip(CHUNK_OFFS, CHUNK_HALVES):
        j = np.arange(half)
        col_even[off:off + half] = 2 * off + j
        col_odd[off:off + half] = 2 * off + half + j
    W = np.zeros((L_IN, 2 * FC1_IN), np.float32)
    for k in range(5):
        W[4 * t + k, col_even] = w[c, k]
        W[4 * t + 2 + k, col_odd] = w[c, k]
    shift = np.zeros((2 * FC1_IN,), np.float32)
    shift[col_even] = eff_shift[c]
    shift[col_odd] = eff_shift[c]
    return W, shift


def make_params():
    key = jax.random.PRNGKey(0)
    ks = jax.random.split(key, 6)

    # PyTorch-shaped parameters (synthetic, deterministic)
    conv_w = jax.random.normal(ks[0], (C1, 1, 5), jnp.float32) * 0.1     # Conv1d weight
    conv_b = jax.random.normal(ks[1], (C1,), jnp.float32) * 0.1          # Conv1d bias
    # BatchNorm1d(32) at PyTorch init (eval mode): gamma=1, beta=0, running_mean=0, running_var=1
    gamma = jnp.ones((C1,), jnp.float32)
    beta = jnp.zeros((C1,), jnp.float32)
    r_mean = jnp.zeros((C1,), jnp.float32)
    r_var = jnp.ones((C1,), jnp.float32)
    fc1_w = jax.random.normal(ks[2], (FC1_OUT, FC1_IN), jnp.float32) * 0.02
    fc1_b = jax.random.normal(ks[3], (FC1_OUT,), jnp.float32) * 0.02
    fc2_w = jax.random.normal(ks[4], (NUM_CLASSES, FC1_OUT), jnp.float32) * 0.1
    fc2_b = jax.random.normal(ks[5], (NUM_CLASSES,), jnp.float32) * 0.1

    # ---- kernel-layout parameters (all folds done in f32, then cast) ----
    eff_scale = np.asarray(gamma / jnp.sqrt(r_var + BN_EPS))                       # (32,)
    eff_shift = eff_scale * (np.asarray(conv_b) - np.asarray(r_mean)) + np.asarray(beta)
    wexp_np, shift_np = build_conv_matrices(np.asarray(conv_w), eff_scale, eff_shift)
    wexp = jnp.asarray(wexp_np, jnp.bfloat16)                                      # (307, 4864)
    shift_rep = jnp.asarray(shift_np.reshape(1, 2 * FC1_IN), jnp.float32)          # (1, 4864)
    wfc1 = jnp.asarray(0.5 * np.asarray(fc1_w).T, jnp.bfloat16)                    # pool 0.5 folded
    bfc1 = fc1_b.reshape(1, FC1_OUT)
    wfc2 = fc2_w.T.astype(jnp.bfloat16)                                            # (128, 2)
    bfc2 = fc2_b.reshape(1, NUM_CLASSES)

    kernel_params = (wexp, shift_rep, wfc1, bfc1, wfc2, bfc2)
    torch_params = (conv_w, conv_b, gamma, beta, r_mean, r_var, fc1_w, fc1_b, fc2_w, fc2_b)
    return kernel_params, torch_params


# ---------------- pure-JAX reference (mirrors PyTorch eval-mode forward) ----------------
def ref_forward(x, t, torch_params):
    (conv_w, conv_b, gamma, beta, r_mean, r_var, fc1_w, fc1_b, fc2_w, fc2_b) = torch_params
    B = x.shape[0]
    pos = jnp.arange(L_CONV)[:, None] * 2 + jnp.arange(5)[None, :]
    patches = x[:, 0, :][:, pos]                              # (B, 152, 5)
    y = jnp.einsum('blk,ck->blc', patches, conv_w[:, 0, :]) + conv_b   # (B, 152, 32)
    y = (y - r_mean) / jnp.sqrt(r_var + BN_EPS) * gamma + beta
    y = jnp.where(y > 0, y, LRELU_SLOPE * y)
    y = 0.5 * (y[:, 0::2, :] + y[:, 1::2, :])                 # (B, 76, 32)
    flat = jnp.transpose(y, (0, 2, 1)).reshape(B, FC1_IN)     # PyTorch channel-major flatten
    h = jnp.maximum(flat @ fc1_w.T + fc1_b, 0.0)
    logits = h @ fc2_w.T + fc2_b
    return (jax.nn.log_softmax(logits, axis=1),
            jax.nn.softmax(logits / t, axis=1),
            logits)


if __name__ == "__main__":
    t = 2.0  # softmax temperature
    kernel_params, torch_params = make_params()
    kx1, kx2 = jax.random.split(jax.random.PRNGKey(0))

    # Test 1: tiny batch (single grid step), default generation-aware tile.
    x1 = jax.random.normal(kx1, (2, 1, L_IN), jnp.float32)
    outs1 = deprnet_forward(x1, t, kernel_params)
    jax.block_until_ready(outs1)
    refs1 = ref_forward(x1, t, torch_params)
    for o, r in zip(outs1, refs1):
        np.testing.assert_allclose(np.asarray(o), np.asarray(r), atol=2e-2, rtol=2e-2)

    # Test 2: multi-block + ragged batch (B > batch_tile, B % TB != 0) with a small tile override
    # to exercise the tiled/padded path at small shapes.
    x2 = jax.random.normal(kx2, (22, 1, L_IN), jnp.float32)
    outs2 = deprnet_forward(x2, t, kernel_params, batch_tile=8)
    jax.block_until_ready(outs2)
    refs2 = ref_forward(x2, t, torch_params)
    for o, r in zip(outs2, refs2):
        np.testing.assert_allclose(np.asarray(o), np.asarray(r), atol=2e-2, rtol=2e-2)

    print("KERNEL_OK")
</pallas_src>

<mosaic_0001>
module attributes {stable_mosaic.version = 11 : i64} {
  func.func @deprnet_kernel(%arg0: i32, %arg1: memref<2x307xbf16, #tpu.memory_space<vmem>>, %arg2: memref<307x4864xbf16, #tpu.memory_space<vmem>>, %arg3: memref<1x4864xf32, #tpu.memory_space<vmem>>, %arg4: memref<2432x128xbf16, #tpu.memory_space<vmem>>, %arg5: memref<1x128xf32, #tpu.memory_space<vmem>>, %arg6: memref<128x2xbf16, #tpu.memory_space<vmem>>, %arg7: memref<1x2xf32, #tpu.memory_space<vmem>>, %arg8: memref<1x1xf32, #tpu.memory_space<smem>>, %arg9: memref<2x6xf32, #tpu.memory_space<vmem>>, %arg10: memref<2x2432xbf16, #tpu.memory_space<vmem>>) attributes {dimension_semantics = [#tpu.dimension_semantics<parallel>], iteration_bounds = array<i64: 1>, scalar_prefetch = 0 : i64, scratch_operands = 1 : i64, tpu.core_type = #tpu.core_type<tc>, window_params = [{transform_indices = @transform_0, window_bounds = array<i64: 2, 307>}, {pipeline_mode = #tpu.pipeline_mode<synchronous>, transform_indices = @transform_1, window_bounds = array<i64: 307, 4864>}, {pipeline_mode = #tpu.pipeline_mode<synchronous>, transform_indices = @transform_2, window_bounds = array<i64: 1, 4864>}, {pipeline_mode = #tpu.pipeline_mode<synchronous>, transform_indices = @transform_3, window_bounds = array<i64: 2432, 128>}, {pipeline_mode = #tpu.pipeline_mode<synchronous>, transform_indices = @transform_4, window_bounds = array<i64: 1, 128>}, {pipeline_mode = #tpu.pipeline_mode<synchronous>, transform_indices = @transform_5, window_bounds = array<i64: 128, 2>}, {pipeline_mode = #tpu.pipeline_mode<synchronous>, transform_indices = @transform_6, window_bounds = array<i64: 1, 2>}, {transform_indices = @transform_7, window_bounds = array<i64: 1, 1>}, {transform_indices = @transform_8, window_bounds = array<i64: 2, 6>}]} {
    %c0 = arith.constant 0 : index
    %c0_0 = arith.constant 0 : index
    %0 = vector.load %arg1[%c0, %c0_0] : memref<2x307xbf16, #tpu.memory_space<vmem>>, vector<2x307xbf16>
    %c0_1 = arith.constant 0 : index
    %c0_2 = arith.constant 0 : index
    %1 = vector.load %arg2[%c0_1, %c0_2] : memref<307x4864xbf16, #tpu.memory_space<vmem>>, vector<307x1280xbf16>
    %cst = arith.constant dense<0.000000e+00> : vector<2x1280xf32>
    %2 = tpu.matmul %0, %1, %cst {dimension_numbers = #tpu.dot_dimension_numbers<[1], [0], [0], [1], [0, 0, 1, 1], [], []>} : vector<2x307xbf16>, vector<307x1280xbf16>, vector<2x1280xf32> -> vector<2x1280xf32>
    %c0_3 = arith.constant 0 : index
    %c0_4 = arith.constant 0 : index
    %3 = vector.load %arg3[%c0_3, %c0_4] : memref<1x4864xf32, #tpu.memory_space<vmem>>, vector<1x1280xf32>
    %4 = vector.broadcast %3 : vector<1x1280xf32> to vector<2x1280xf32>
    %5 = arith.addf %2, %4 : vector<2x1280xf32>
    %cst_5 = arith.constant 0.00999999977 : f32
    %6 = vector.broadcast %cst_5 : f32 to vector<2x1280xf32>
    %7 = arith.mulf %6, %5 : vector<2x1280xf32>
    %8 = arith.maximumf %5, %7 : vector<2x1280xf32>
    %9 = vector.extract_strided_slice %8 {offsets = [0, 0], sizes = [2, 640], strides = [1, 1]} : vector<2x1280xf32> to vector<2x640xf32>
    %10 = vector.extract_strided_slice %8 {offsets = [0, 640], sizes = [2, 640], strides = [1, 1]} : vector<2x1280xf32> to vector<2x640xf32>
    %11 = arith.addf %9, %10 : vector<2x640xf32>
    %12 = arith.truncf %11 : vector<2x640xf32> to vector<2x640xbf16>
    %c0_6 = arith.constant 0 : index
    %c0_7 = arith.constant 0 : index
    %13 = vector.load %arg10[%c0_6, %c0_7] : memref<2x2432xbf16, #tpu.memory_space<vmem>>, vector<2x640xbf16>
    tpu.vector_store %arg10[%c0_6, %c0_7], %12 {strides = array<i32>} : memref<2x2432xbf16, #tpu.memory_space<vmem>>, vector<2x640xbf16>,
    %c0_8 = arith.constant 0 : index
    %c1280 = arith.constant 1280 : index
    %14 = vector.load %arg2[%c0_8, %c1280] : memref<307x4864xbf16, #tpu.memory_space<vmem>>, vector<307x1280xbf16>
    %cst_9 = arith.constant dense<0.000000e+00> : vector<2x1280xf32>
    %15 = tpu.matmul %0, %14, %cst_9 {dimension_numbers = #tpu.dot_dimension_numbers<[1], [0], [0], [1], [0, 0, 1, 1], [], []>} : vector<2x307xbf16>, vector<307x1280xbf16>, vector<2x1280xf32> -> vector<2x1280xf32>
    %c0_10 = arith.constant 0 : index
    %c1280_11 = arith.constant 1280 : index
    %16 = vector.load %arg3[%c0_10, %c1280_11] : memref<1x4864xf32, #tpu.memory_space<vmem>>, vector<1x1280xf32>
    %17 = vector.broadcast %16 : vector<1x1280xf32> to vector<2x1280xf32>
    %18 = arith.addf %15, %17 : vector<2x1280xf32>
    %cst_12 = arith.constant 0.00999999977 : f32
    %19 = vector.broadcast %cst_12 : f32 to vector<2x1280xf32>
    %20 = arith.mulf %19, %18 : vector<2x1280xf32>
    %21 = arith.maximumf %18, %20 : vector<2x1280xf32>
    %22 = vector.extract_strided_slice %21 {offsets = [0, 0], sizes = [2, 640], strides = [1, 1]} : vector<2x1280xf32> to vector<2x640xf32>
    %23 = vector.extract_strided_slice %21 {offsets = [0, 640], sizes = [2, 640], strides = [1, 1]} : vector<2x1280xf32> to vector<2x640xf32>
    %24 = arith.addf %22, %23 : vector<2x640xf32>
    %25 = arith.truncf %24 : vector<2x640xf32> to vector<2x640xbf16>
    %c0_13 = arith.constant 0 : index
    %c640 = arith.constant 640 : index
    %26 = vector.load %arg10[%c0_13, %c640] : memref<2x2432xbf16, #tpu.memory_space<vmem>>, vector<2x640xbf16>
    tpu.vector_store %arg10[%c0_13, %c640], %25 {strides = array<i32>} : memref<2x2432xbf16, #tpu.memory_space<vmem>>, vector<2x640xbf16>,
    %c0_14 = arith.constant 0 : index
    %c2560 = arith.constant 2560 : index
    %27 = vector.load %arg2[%c0_14, %c2560] : memref<307x4864xbf16, #tpu.memory_space<vmem>>, vector<307x1280xbf16>
    %cst_15 = arith.constant dense<0.000000e+00> : vector<2x1280xf32>
    %28 = tpu.matmul %0, %27, %cst_15 {dimension_numbers = #tpu.dot_dimension_numbers<[1], [0], [0], [1], [0, 0, 1, 1], [], []>} : vector<2x307xbf16>, vector<307x1280xbf16>, vector<2x1280xf32> -> vector<2x1280xf32>
    %c0_16 = arith.constant 0 : index
    %c2560_17 = arith.constant 2560 : index
    %29 = vector.load %arg3[%c0_16, %c2560_17] : memref<1x4864xf32, #tpu.memory_space<vmem>>, vector<1x1280xf32>
    %30 = vector.broadcast %29 : vector<1x1280xf32> to vector<2x1280xf32>
    %31 = arith.addf %28, %30 : vector<2x1280xf32>
    %cst_18 = arith.constant 0.00999999977 : f32
    %32 = vector.broadcast %cst_18 : f32 to vector<2x1280xf32>
    %33 = arith.mulf %32, %31 : vector<2x1280xf32>
    %34 = arith.maximumf %31, %33 : vector<2x1280xf32>
    %35 = vector.extract_strided_slice %34 {offsets = [0, 0], sizes = [2, 640], strides = [1, 1]} : vector<2x1280xf32> to vector<2x640xf32>
    %36 = vector.extract_strided_slice %34 {offsets = [0, 640], sizes = [2, 640], strides = [1, 1]} : vector<2x1280xf32> to vector<2x640xf32>
    %37 = arith.addf %35, %36 : vector<2x640xf32>
    %38 = arith.truncf %37 : vector<2x640xf32> to vector<2x640xbf16>
    %c0_19 = arith.constant 0 : index
    %c1280_20 = arith.constant 1280 : index
    %39 = vector.load %arg10[%c0_19, %c1280_20] : memref<2x2432xbf16, #tpu.memory_space<vmem>>, vector<2x640xbf16>
    tpu.vector_store %arg10[%c0_19, %c1280_20], %38 {strides = array<i32>} : memref<2x2432xbf16, #tpu.memory_space<vmem>>, vector<2x640xbf16>,
    %c0_21 = arith.constant 0 : index
    %c3840 = arith.constant 3840 : index
    %40 = vector.load %arg2[%c0_21, %c3840] : memref<307x4864xbf16, #tpu.memory_space<vmem>>, vector<307x1024xbf16>
    %cst_22 = arith.constant dense<0.000000e+00> : vector<2x1024xf32>
    %41 = tpu.matmul %0, %40, %cst_22 {dimension_numbers = #tpu.dot_dimension_numbers<[1], [0], [0], [1], [0, 0, 1, 1], [], []>} : vector<2x307xbf16>, vector<307x1024xbf16>, vector<2x1024xf32> -> vector<2x1024xf32>
    %c0_23 = arith.constant 0 : index
    %c3840_24 = arith.constant 3840 : index
    %42 = vector.load %arg3[%c0_23, %c3840_24] : memref<1x4864xf32, #tpu.memory_space<vmem>>, vector<1x1024xf32>
    %43 = vector.broadcast %42 : vector<1x1024xf32> to vector<2x1024xf32>
    %44 = arith.addf %41, %43 : vector<2x1024xf32>
    %cst_25 = arith.constant 0.00999999977 : f32
    %45 = vector.broadcast %cst_25 : f32 to vector<2x1024xf32>
    %46 = arith.mulf %45, %44 : vector<2x1024xf32>
    %47 = arith.maximumf %44, %46 : vector<2x1024xf32>
    %48 = vector.extract_strided_slice %47 {offsets = [0, 0], sizes = [2, 512], strides = [1, 1]} : vector<2x1024xf32> to vector<2x512xf32>
    %49 = vector.extract_strided_slice %47 {offsets = [0, 512], sizes = [2, 512], strides = [1, 1]} : vector<2x1024xf32> to vector<2x512xf32>
    %50 = arith.addf %48, %49 : vector<2x512xf32>
    %51 = arith.truncf %50 : vector<2x512xf32> to vector<2x512xbf16>
    %c0_26 = arith.constant 0 : index
    %c1920 = arith.constant 1920 : index
    %52 = vector.load %arg10[%c0_26, %c1920] : memref<2x2432xbf16, #tpu.memory_space<vmem>>, vector<2x512xbf16>
    tpu.vector_store %arg10[%c0_26, %c1920], %51 {strides = array<i32>} : memref<2x2432xbf16, #tpu.memory_space<vmem>>, vector<2x512xbf16>,
    %c0_27 = arith.constant 0 : index
    %c0_28 = arith.constant 0 : index
    %53 = vector.load %arg10[%c0_27, %c0_28] : memref<2x2432xbf16, #tpu.memory_space<vmem>>, vector<2x2432xbf16>
    %c0_29 = arith.constant 0 : index
    %c0_30 = arith.constant 0 : index
    %54 = vector.load %arg4[%c0_29, %c0_30] : memref<2432x128xbf16, #tpu.memory_space<vmem>>, vector<2432x128xbf16>
    %cst_31 = arith.constant dense<0.000000e+00> : vector<2x128xf32>
    %55 = tpu.matmul %53, %54, %cst_31 {dimension_numbers = #tpu.dot_dimension_numbers<[1], [0], [0], [1], [0, 0, 1, 1], [], []>} : vector<2x2432xbf16>, vector<2432x128xbf16>, vector<2x128xf32> -> vector<2x128xf32>
    %c0_32 = arith.constant 0 : index
    %c0_33 = arith.constant 0 : index
    %56 = vector.load %arg5[%c0_32, %c0_33] : memref<1x128xf32, #tpu.memory_space<vmem>>, vector<1x128xf32>
    %57 = vector.broadcast %56 : vector<1x128xf32> to vector<2x128xf32>
    %58 = arith.addf %55, %57 : vector<2x128xf32>
    %cst_34 = arith.constant 0.000000e+00 : f32
    %59 = vector.broadcast %cst_34 : f32 to vector<2x128xf32>
    %60 = arith.maximumf %58, %59 : vector<2x128xf32>
    %61 = arith.truncf %60 : vector<2x128xf32> to vector<2x128xbf16>
    %c0_35 = arith.constant 0 : index
    %c0_36 = arith.constant 0 : index
    %62 = vector.load %arg6[%c0_35, %c0_36] : memref<128x2xbf16, #tpu.memory_space<vmem>>, vector<128x2xbf16>
    %cst_37 = arith.constant dense<0.000000e+00> : vector<2x2xf32>
    %63 = tpu.matmul %61, %62, %cst_37 {dimension_numbers = #tpu.dot_dimension_numbers<[1], [0], [0], [1], [0, 0, 1, 1], [], []>} : vector<2x128xbf16>, vector<128x2xbf16>, vector<2x2xf32> -> vector<2x2xf32>
    %c0_38 = arith.constant 0 : index
    %c0_39 = arith.constant 0 : index
    %64 = vector.load %arg7[%c0_38, %c0_39] : memref<1x2xf32, #tpu.memory_space<vmem>>, vector<1x2xf32>
    %65 = vector.broadcast %64 : vector<1x2xf32> to vector<2x2xf32>
    %66 = arith.addf %63, %65 : vector<2x2xf32>
    %cst_40 = arith.constant dense<0xFF800000> : vector<2xf32>
    %67 = vector.multi_reduction <maximumf>, %66, %cst_40 [1] : vector<2x2xf32> to vector<2xf32>
    %68 = vector.shape_cast %67 : vector<2xf32> to vector<2x1xf32>
    %69 = vector.broadcast %68 : vector<2x1xf32> to vector<2x2xf32>
    %70 = arith.subf %66, %69 : vector<2x2xf32>
    %71 = math.exp %70 : vector<2x2xf32>
    %cst_41 = arith.constant dense<0.000000e+00> : vector<2xf32>
    %72 = vector.multi_reduction <add>, %71, %cst_41 [1] : vector<2x2xf32> to vector<2xf32>
    %73 = vector.shape_cast %72 : vector<2xf32> to vector<2x1xf32>
    %74 = math.log %73 : vector<2x1xf32>
    %75 = vector.broadcast %74 : vector<2x1xf32> to vector<2x2xf32>
    %76 = arith.subf %70, %75 : vector<2x2xf32>
    %c0_42 = arith.constant 0 : index
    %c0_43 = arith.constant 0 : index
    %77 = memref.load %arg8[%c0_42, %c0_43] : memref<1x1xf32, #tpu.memory_space<smem>>
    %78 = vector.broadcast %77 : f32 to vector<2x2xf32>
    %79 = arith.mulf %66, %78 : vector<2x2xf32>
    %cst_44 = arith.constant dense<0xFF800000> : vector<2xf32>
    %80 = vector.multi_reduction <maximumf>, %79, %cst_44 [1] : vector<2x2xf32> to vector<2xf32>
    %81 = vector.shape_cast %80 : vector<2xf32> to vector<2x1xf32>
    %82 = vector.broadcast %81 : vector<2x1xf32> to vector<2x2xf32>
    %83 = arith.subf %79, %82 : vector<2x2xf32>
    %84 = math.exp %83 : vector<2x2xf32>
    %cst_45 = arith.constant dense<0.000000e+00> : vector<2xf32>
    %85 = vector.multi_reduction <add>, %84, %cst_45 [1] : vector<2x2xf32> to vector<2xf32>
    %86 = vector.shape_cast %85 : vector<2xf32> to vector<2x1xf32>
    %87 = vector.broadcast %86 : vector<2x1xf32> to vector<2x2xf32>
    %88 = arith.divf %84, %87 : vector<2x2xf32>
    %c0_46 = arith.constant 0 : index
    %c0_47 = arith.constant 0 : index
    %89 = vector.load %arg9[%c0_46, %c0_47] : memref<2x6xf32, #tpu.memory_space<vmem>>, vector<2x2xf32>
    tpu.vector_store %arg9[%c0_46, %c0_47], %76 {strides = array<i32>} : memref<2x6xf32, #tpu.memory_space<vmem>>, vector<2x2xf32>,
    %c0_48 = arith.constant 0 : index
    %c2 = arith.constant 2 : index
    %90 = vector.load %arg9[%c0_48, %c2] : memref<2x6xf32, #tpu.memory_space<vmem>>, vector<2x2xf32>
    tpu.vector_store %arg9[%c0_48, %c2], %88 {strides = array<i32>} : memref<2x6xf32, #tpu.memory_space<vmem>>, vector<2x2xf32>,
    %c0_49 = arith.constant 0 : index
    %c4 = arith.constant 4 : index
    %91 = vector.load %arg9[%c0_49, %c4] : memref<2x6xf32, #tpu.memory_space<vmem>>, vector<2x2xf32>
    tpu.vector_store %arg9[%c0_49, %c4], %66 {strides = array<i32>} : memref<2x6xf32, #tpu.memory_space<vmem>>, vector<2x2xf32>,
    return
  }
  func.func @transform_0(%arg0: i32) -> (i32, i32) {
    %c0_i32 = arith.constant 0 : i32
    %c0_i32_0 = arith.constant 0 : i32
    return %arg0, %c0_i32 : i32, i32
  }
  func.func @transform_1(%arg0: i32) -> (i32, i32) {
    %c0_i32 = arith.constant 0 : i32
    %c0_i32_0 = arith.constant 0 : i32
    %c0_i32_1 = arith.constant 0 : i32
    return %c0_i32, %c0_i32_0 : i32, i32
  }
  func.func @transform_2(%arg0: i32) -> (i32, i32) {
    %c0_i32 = arith.constant 0 : i32
    %c0_i32_0 = arith.constant 0 : i32
    %c0_i32_1 = arith.constant 0 : i32
    return %c0_i32, %c0_i32_0 : i32, i32
  }
  func.func @transform_3(%arg0: i32) -> (i32, i32) {
    %c0_i32 = arith.constant 0 : i32
    %c0_i32_0 = arith.constant 0 : i32
    %c0_i32_1 = arith.constant 0 : i32
    return %c0_i32, %c0_i32_0 : i32, i32
  }
  func.func @transform_4(%arg0: i32) -> (i32, i32) {
    %c0_i32 = arith.constant 0 : i32
    %c0_i32_0 = arith.constant 0 : i32
    %c0_i32_1 = arith.constant 0 : i32
    return %c0_i32, %c0_i32_0 : i32, i32
  }
  func.func @transform_5(%arg0: i32) -> (i32, i32) {
    %c0_i32 = arith.constant 0 : i32
    %c0_i32_0 = arith.constant 0 : i32
    %c0_i32_1 = arith.constant 0 : i32
    return %c0_i32, %c0_i32_0 : i32, i32
  }
  func.func @transform_6(%arg0: i32) -> (i32, i32) {
    %c0_i32 = arith.constant 0 : i32
    %c0_i32_0 = arith.constant 0 : i32
    %c0_i32_1 = arith.constant 0 : i32
    return %c0_i32, %c0_i32_0 : i32, i32
  }
  func.func @transform_7(%arg0: i32) -> (i32, i32) {
    %c0_i32 = arith.constant 0 : i32
    %c0_i32_0 = arith.constant 0 : i32
    %c0_i32_1 = arith.constant 0 : i32
    return %c0_i32, %c0_i32_0 : i32, i32
  }
  func.func @transform_8(%arg0: i32) -> (i32, i32) {
    %c0_i32 = arith.constant 0 : i32
    %c0_i32_0 = arith.constant 0 : i32
    return %arg0, %c0_i32 : i32, i32
  }
}

</mosaic_0001>

<llo_original>
// kernel: tpu_custom_call.1
$region0: #{tpu_custom_call.1}
  #allocation0 [shape = 'u32[]', space=smem, size = 0x4, offset = 0x4, fixed_abs, tag = 'smem constant byte address 0x4 - core index']
  #allocation1 [shape = 'u32[144,128]{1,0:T(1,128)}', space=vmem, size = 0x12000, scoped, tag = 'internal scratch']
  #allocation2 [shape = 'bf16[2,2432]{1,0:T(2,128)(2,1)}', space=vmem, size = 0x2600, scoped, tag = 'scratch operand']
  #allocation3 [shape = 'f32[1,1]{1,0:T(1,128)S(6)}', space=smem, size = 0x200, scoped, tag = 'scoped memory for tpu_custom_call.1']
  %s0 = inlined_call_operand.hbm [shape: bf16[2,307], index: 0, kind: input, shape index: {}]
  %s1 = inlined_call_operand.hbm [shape: bf16[307,4864], index: 1, kind: input, shape index: {}]
  %s2 = inlined_call_operand.hbm [shape: f32[1,4864], index: 2, kind: input, shape index: {}]
  %s3 = inlined_call_operand.hbm [shape: bf16[2432,128], index: 3, kind: input, shape index: {}]
  %s4 = inlined_call_operand.hbm [shape: f32[1,128], index: 4, kind: input, shape index: {}]
  %s5 = inlined_call_operand.vmem [shape: bf16[128,2], index: 5, kind: input, shape index: {}]
  %s6 = inlined_call_operand.hbm [shape: f32[1,2], index: 6, kind: input, shape index: {}]
  %s7 = inlined_call_operand.<no memory space> [shape: f32[1,1], index: 7, kind: input, shape index: {}]
  %s8 = inlined_call_operand.hbm [shape: f32[2,6], index: 8, kind: output, shape index: {}]
  %s9 = sld [smem:[#allocation0]]
  $region66: #{tpu_custom_call.1} parent=0
    _
  %s11 = ssub.s32 1, %s9
  %s12 = scalar_select 0, %s11, %s9
  %13 = sst [smem:[#allocation3]] %s7
  $region1: #{tpu_custom_call.1} parent=0
    #allocation4 [shape = 'u8[1536]{0}', space=vmem, size = 0x800, scoped, tag = 'input window, operand 0, single buffered']
    #allocation5 [shape = 's32[1]{0}', space=sflag, size = 0x4, scoped, tag = 'scoped memory for tpu_custom_call.1']
    #allocation6 [shape = 's32[1]{0}', space=sflag, size = 0x4, scoped, tag = 'scoped memory for tpu_custom_call.1']
    #allocation7 [shape = 'u8[3035136]{0}', space=vmem, size = 0x2e5000, scoped, tag = 'input window, operand 1, single buffered']
    #allocation8 [shape = 's32[1]{0}', space=sflag, size = 0x4, scoped, tag = 'scoped memory for tpu_custom_call.1']
    #allocation9 [shape = 'u8[19456]{0}', space=vmem, size = 0x4c00, scoped, tag = 'input window, operand 2, single buffered']
    #allocation10 [shape = 'u8[622592]{0}', space=vmem, size = 0x98000, scoped, tag = 'input window, operand 3, single buffered']
    #allocation11 [shape = 's32[1]{0}', space=sflag, size = 0x4, scoped, tag = 'scoped memory for tpu_custom_call.1']
    #allocation12 [shape = 'u8[512]{0}', space=vmem, size = 0x400, scoped, tag = 'input window, operand 4, single buffered']
    #allocation13 [shape = 'u8[512]{0}', space=vmem, size = 0x400, scoped, tag = 'input window, operand 6, single buffered']
    #allocation14 [shape = 's32[1]{0}', space=sflag, size = 0x4, scoped, tag = 'scoped memory for tpu_custom_call.1']
    #allocation15 [shape = 'u8[1024]{0}', space=vmem, size = 0x400, scoped, tag = 'output window, operand 0, single buffered']
    %14 = vsyncpa [#allocation5], 0
    %15 = vsyncpa [#allocation8], 0
    %16 = vsyncpa [#allocation11], 0
    %17 = vsyncpa [#allocation14], 0
    %18 = vsyncpa [#allocation6], 0
    // Predicated region
    $region2: #{tpu_custom_call.1} parent=1 // pred_check
      _
    $region3: #{tpu_custom_call.1} parent=1 // pred_check_branch
      %20 = sbr.rel (0) target = $region5
    $region4: #{tpu_custom_call.1} parent=1 // pred_region
      %s22 = ssub.s32 48, 48
      %23 = vsyncadd [#allocation5], %s22
      %s25 = sshll.u32 [#allocation4], 4
      %s26 = int_to_ptr.vmem [resolvable:$true] %s25
      %28 = dma.hbm_to_vmem [thread:$0]  %s0, 48, %s26, [#allocation5]
    $region5: #{tpu_custom_call.1} parent=1 // pred_fallthru
      _
    // Predicated region
    $region6: #{tpu_custom_call.1} parent=1 // pred_check
      _
    $region7: #{tpu_custom_call.1} parent=1 // pred_check_branch
      %30 = sbr.rel (0) target = $region9
    $region8: #{tpu_custom_call.1} parent=1 // pred_region
      %s32 = ssub.s32 94848, 94848
      %33 = vsyncadd [#allocation8], %s32
      %s34 = sshll.u32 [#allocation7], 4
      %s35 = int_to_ptr.vmem [resolvable:$true] %s34
      %40 = dma.hbm_to_vmem [thread:$0]  %s1, 94848, %s35, [#allocation8], 2432, 2432, 152
    $region9: #{tpu_custom_call.1} parent=1 // pred_fallthru
      _
    // Predicated region
    $region10: #{tpu_custom_call.1} parent=1 // pred_check
      _
    $region11: #{tpu_custom_call.1} parent=1 // pred_check_branch
      %42 = sbr.rel (0) target = $region13
    $region12: #{tpu_custom_call.1} parent=1 // pred_region
      %s44 = ssub.s32 608, 608
      %45 = vsyncadd [#allocation8], %s44
      %s47 = sshll.u32 [#allocation9], 4
      %s48 = int_to_ptr.vmem [resolvable:$true] %s47
      %50 = dma.hbm_to_vmem [thread:$0]  %s2, 608, %s48, [#allocation8]
    $region13: #{tpu_custom_call.1} parent=1 // pred_fallthru
      _
    // Predicated region
    $region14: #{tpu_custom_call.1} parent=1 // pred_check
      _
    $region15: #{tpu_custom_call.1} parent=1 // pred_check_branch
      %52 = sbr.rel (0) target = $region17
    $region16: #{tpu_custom_call.1} parent=1 // pred_region
      %s54 = ssub.s32 19456, 19456
      %55 = vsyncadd [#allocation11], %s54
      %s56 = sshll.u32 [#allocation10], 4
      %s57 = int_to_ptr.vmem [resolvable:$true] %s56
      %62 = dma.hbm_to_vmem [thread:$0]  %s3, 19456, %s57, [#allocation11], 64, 64, 4
    $region17: #{tpu_custom_call.1} parent=1 // pred_fallthru
      _
    // Predicated region
    $region18: #{tpu_custom_call.1} parent=1 // pred_check
      _
    $region19: #{tpu_custom_call.1} parent=1 // pred_check_branch
      %64 = sbr.rel (0) target = $region21
    $region20: #{tpu_custom_call.1} parent=1 // pred_region
      %s66 = ssub.s32 16, 16
      %67 = vsyncadd [#allocation11], %s66
      %s69 = sshll.u32 [#allocation12], 4
      %s70 = int_to_ptr.vmem [resolvable:$true] %s69
      %72 = dma.hbm_to_vmem [thread:$0]  %s4, 16, %s70, [#allocation11]
    $region21: #{tpu_custom_call.1} parent=1 // pred_fallthru
      _
    // Predicated region
    $region22: #{tpu_custom_call.1} parent=1 // pred_check
      _
    $region23: #{tpu_custom_call.1} parent=1 // pred_check_branch
      %74 = sbr.rel (0) target = $region25
    $region24: #{tpu_custom_call.1} parent=1 // pred_region
      _
    $region25: #{tpu_custom_call.1} parent=1 // pred_fallthru
      _
    // Predicated region
    $region26: #{tpu_custom_call.1} parent=1 // pred_check
      _
    $region27: #{tpu_custom_call.1} parent=1 // pred_check_branch
      %76 = sbr.rel (0) target = $region29
    $region28: #{tpu_custom_call.1} parent=1 // pred_region
      %s78 = ssub.s32 16, 16
      %79 = vsyncadd [#allocation14], %s78
      %s81 = sshll.u32 [#allocation13], 4
      %s82 = int_to_ptr.vmem [resolvable:$true] %s81
      %84 = dma.hbm_to_vmem [thread:$0]  %s6, 16, %s82, [#allocation14]
    $region29: #{tpu_custom_call.1} parent=1 // pred_fallthru
      _
    // Predicated region
    $region30: #{tpu_custom_call.1} parent=1 // pred_check
      _
    $region31: #{tpu_custom_call.1} parent=1 // pred_check_branch
      %86 = sbr.rel (0) target = $region33
    $region32: #{tpu_custom_call.1} parent=1 // pred_region
      _
    $region33: #{tpu_custom_call.1} parent=1 // pred_fallthru
      _
    // Predicated region
    $region34: #{tpu_custom_call.1} parent=1 // pred_check
      _
    $region35: #{tpu_custom_call.1} parent=1 // pred_check_branch
      %88 = sbr.rel (0) target = $region37
    $region36: #{tpu_custom_call.1} parent=1 // pred_region
      %89 = dma.done [#allocation5], 48
    $region37: #{tpu_custom_call.1} parent=1 // pred_fallthru
      _
    // Predicated region
    $region38: #{tpu_custom_call.1} parent=1 // pred_check
      _
    $region39: #{tpu_custom_call.1} parent=1 // pred_check_branch
      %91 = sbr.rel (0) target = $region41
    $region40: #{tpu_custom_call.1} parent=1 // pred_region
      %92 = dma.done [#allocation8], 94848
    $region41: #{tpu_custom_call.1} parent=1 // pred_fallthru
      _
    // Predicated region
    $region42: #{tpu_custom_call.1} parent=1 // pred_check
      _
    $region43: #{tpu_custom_call.1} parent=1 // pred_check_branch
      %94 = sbr.rel (0) target = $region45
    $region44: #{tpu_custom_call.1} parent=1 // pred_region
      %95 = dma.done [#allocation8], 608
    $region45: #{tpu_custom_call.1} parent=1 // pred_fallthru
      _
    // Predicated region
    $region46: #{tpu_custom_call.1} parent=1 // pred_check
      _
    $region47: #{tpu_custom_call.1} parent=1 // pred_check_branch
      %97 = sbr.rel (0) target = $region49
    $region48: #{tpu_custom_call.1} parent=1 // pred_region
      %98 = dma.done [#allocation11], 19456
    $region49: #{tpu_custom_call.1} parent=1 // pred_fallthru
      _
    // Predicated region
    $region50: #{tpu_custom_call.1} parent=1 // pred_check
      _
    $region51: #{tpu_custom_call.1} parent=1 // pred_check_branch
      %100 = sbr.rel (0) target = $region53
    $region52: #{tpu_custom_call.1} parent=1 // pred_region
      %101 = dma.done [#allocation11], 16
    $region53: #{tpu_custom_call.1} parent=1 // pred_fallthru
      _
    // Predicated region
    $region54: #{tpu_custom_call.1} parent=1 // pred_check
      _
    $region55: #{tpu_custom_call.1} parent=1 // pred_check_branch
      %103 = sbr.rel (0) target = $region57
    $region56: #{tpu_custom_call.1} parent=1 // pred_region
      %104 = dma.done [#allocation14], 16
    $region57: #{tpu_custom_call.1} parent=1 // pred_fallthru
      _
    %v106 = vld [vmem:[#allocation4] sm:$0x7]
    %v107 = vld [vmem:[#allocation7] sm:$0xff]
    %v108 = vld [vmem:[#allocation7 + $0x8] sm:$0xff]
    %v109 = vld [vmem:[#allocation7 + $0x10] sm:$0xff]
    %v110 = vld [vmem:[#allocation7 + $0x18] sm:$0xff]
    %v111 = vld [vmem:[#allocation7 + $0x20] sm:$0xff]
    %v112 = vld [vmem:[#allocation7 + $0x98] sm:$0xff]
    %v113 = vld [vmem:[#allocation7 + $0xa0] sm:$0xff]
    %v114 = vld [vmem:[#allocation7 + $0xa8] sm:$0xff]
    %v115 = vld [vmem:[#allocation7 + $0xb0] sm:$0xff]
    %v116 = vld [vmem:[#allocation7 + $0xb8] sm:$0xff]
    %v117 = vld [vmem:[#allocation7 + $0x130] sm:$0xff]
    %v118 = vld [vmem:[#allocation7 + $0x138] sm:$0xff]
    %v119 = vld [vmem:[#allocation7 + $0x140] sm:$0xff]
    %v120 = vld [vmem:[#allocation7 + $0x148] sm:$0xff]
    %v121 = vld [vmem:[#allocation7 + $0x150] sm:$0xff]
    %v122 = vld [vmem:[#allocation7 + $0x1c8] sm:$0xff]
    %v123 = vld [vmem:[#allocation7 + $0x1d0] sm:$0xff]
    %v124 = vld [vmem:[#allocation7 + $0x1d8] sm:$0xff]
    %v125 = vld [vmem:[#allocation7 + $0x1e0] sm:$0xff]
    %v126 = vld [vmem:[#allocation7 + $0x1e8] sm:$0xff]
    %v127 = vld [vmem:[#allocation7 + $0x260] sm:$0xff]
    %v128 = vld [vmem:[#allocation7 + $0x268] sm:$0xff]
    %v129 = vld [vmem:[#allocation7 + $0x270] sm:$0xff]
    %v130 = vld [vmem:[#allocation7 + $0x278] sm:$0xff]
    %v131 = vld [vmem:[#allocation7 + $0x280] sm:$0xff]
    %v132 = vld [vmem:[#allocation7 + $0x2f8] sm:$0xff]
    %v133 = vld [vmem:[#allocation7 + $0x300] sm:$0xff]
    %v134 = vld [vmem:[#allocation7 + $0x308] sm:$0xff]
    %v135 = vld [vmem:[#allocation7 + $0x310] sm:$0xff]
    %v136 = vld [vmem:[#allocation7 + $0x318] sm:$0xff]
    %v137 = vld [vmem:[#allocation7 + $0x390] sm:$0xff]
    %v138 = vld [vmem:[#allocation7 + $0x398] sm:$0xff]
    %v139 = vld [vmem:[#allocation7 + $0x3a0] sm:$0xff]
    %v140 = vld [vmem:[#allocation7 + $0x3a8] sm:$0xff]
    %v141 = vld [vmem:[#allocation7 + $0x3b0] sm:$0xff]
    %v142 = vld [vmem:[#allocation7 + $0x428] sm:$0xff]
    %v143 = vld [vmem:[#allocation7 + $0x430] sm:$0xff]
    %v144 = vld [vmem:[#allocation7 + $0x438] sm:$0xff]
    %v145 = vld [vmem:[#allocation7 + $0x440] sm:$0xff]
    %v146 = vld [vmem:[#allocation7 + $0x448] sm:$0xff]
    %v147 = vld [vmem:[#allocation7 + $0x4c0] sm:$0xff]
    %v148 = vld [vmem:[#allocation7 + $0x4c8] sm:$0xff]
    %v149 = vld [vmem:[#allocation7 + $0x4d0] sm:$0xff]
    %v150 = vld [vmem:[#allocation7 + $0x4d8] sm:$0xff]
    %v151 = vld [vmem:[#allocation7 + $0x4e0] sm:$0xff]
    %v152 = vld [vmem:[#allocation7 + $0x558] sm:$0xff]
    %v153 = vld [vmem:[#allocation7 + $0x560] sm:$0xff]
    %v154 = vld [vmem:[#allocation7 + $0x568] sm:$0xff]
    %v155 = vld [vmem:[#allocation7 + $0x570] sm:$0xff]
    %v156 = vld [vmem:[#allocation7 + $0x578] sm:$0xff]
    %v157 = vld [vmem:[#allocation7 + $0x5f0] sm:$0xff]
    %v158 = vld [vmem:[#allocation7 + $0x5f8] sm:$0xff]
    %v159 = vld [vmem:[#allocation7 + $0x600] sm:$0xff]
    %v160 = vld [vmem:[#allocation7 + $0x608] sm:$0xff]
    %v161 = vld [vmem:[#allocation7 + $0x610] sm:$0xff]
    %v162 = vld [vmem:[#allocation7 + $0x688] sm:$0xff]
    %v163 = vld [vmem:[#allocation7 + $0x690] sm:$0xff]
    %v164 = vld [vmem:[#allocation7 + $0x698] sm:$0xff]
    %v165 = vld [vmem:[#allocation7 + $0x6a0] sm:$0xff]
    %v166 = vld [vmem:[#allocation7 + $0x6a8] sm:$0xff]
    %v167 = vld [vmem:[#allocation7 + $0x720] sm:$0xff]
    %v168 = vld [vmem:[#allocation7 + $0x728] sm:$0xff]
    %v169 = vld [vmem:[#allocation7 + $0x730] sm:$0xff]
    %v170 = vld [vmem:[#allocation7 + $0x738] sm:$0xff]
    %v171 = vld [vmem:[#allocation7 + $0x740] sm:$0xff]
    %v172 = vld [vmem:[#allocation7 + $0x7b8] sm:$0xff]
    %v173 = vld [vmem:[#allocation7 + $0x7c0] sm:$0xff]
    %v174 = vld [vmem:[#allocation7 + $0x7c8] sm:$0xff]
    %v175 = vld [vmem:[#allocation7 + $0x7d0] sm:$0xff]
    %v176 = vld [vmem:[#allocation7 + $0x7d8] sm:$0xff]
    %v177 = vld [vmem:[#allocation7 + $0x850] sm:$0xff]
    %v178 = vld [vmem:[#allocation7 + $0x858] sm:$0xff]
    %v179 = vld [vmem:[#allocation7 + $0x860] sm:$0xff]
    %v180 = vld [vmem:[#allocation7 + $0x868] sm:$0xff]
    %v181 = vld [vmem:[#allocation7 + $0x870] sm:$0xff]
    %v182 = vld [vmem:[#allocation7 + $0x8e8] sm:$0xff]
    %v183 = vld [vmem:[#allocation7 + $0x8f0] sm:$0xff]
    %v184 = vld [vmem:[#allocation7 + $0x8f8] sm:$0xff]
    %v185 = vld [vmem:[#allocation7 + $0x900] sm:$0xff]
    %v186 = vld [vmem:[#allocation7 + $0x908] sm:$0xff]
    %v187 = vld [vmem:[#allocation7 + $0x980] sm:$0xff]
    %v188 = vld [vmem:[#allocation7 + $0x988] sm:$0xff]
    %v189 = vld [vmem:[#allocation7 + $0x990] sm:$0xff]
    %v190 = vld [vmem:[#allocation7 + $0x998] sm:$0xff]
    %v191 = vld [vmem:[#allocation7 + $0x9a0] sm:$0xff]
    %v192 = vld [vmem:[#allocation7 + $0xa18] sm:$0xff]
    %v193 = vld [vmem:[#allocation7 + $0xa20] sm:$0xff]
    %v194 = vld [vmem:[#allocation7 + $0xa28] sm:$0xff]
    %v195 = vld [vmem:[#allocation7 + $0xa30] sm:$0xff]
    %v196 = vld [vmem:[#allocation7 + $0xa38] sm:$0xff]
    %v197 = vld [vmem:[#allocation7 + $0xab0] sm:$0xff]
    %v198 = vld [vmem:[#allocation7 + $0xab8] sm:$0xff]
    %v199 = vld [vmem:[#allocation7 + $0xac0] sm:$0xff]
    %v200 = vld [vmem:[#allocation7 + $0xac8] sm:$0xff]
    %v201 = vld [vmem:[#allocation7 + $0xad0] sm:$0xff]
    %v202 = vld [vmem:[#allocation7 + $0xb48] sm:$0xff]
    %v203 = vld [vmem:[#allocation7 + $0xb50] sm:$0xff]
    %v204 = vld [vmem:[#allocation7 + $0xb58] sm:$0xff]
    %v205 = vld [vmem:[#allocation7 + $0xb60] sm:$0xff]
    %v206 = vld [vmem:[#allocation7 + $0xb68] sm:$0xff]
    %v207 = vld [vmem:[#allocation7 + $0xbe0] sm:$0xff]
    %v208 = vld [vmem:[#allocation7 + $0xbe8] sm:$0xff]
    %v209 = vld [vmem:[#allocation7 + $0xbf0] sm:$0xff]
    %v210 = vld [vmem:[#allocation7 + $0xbf8] sm:$0xff]
    %v211 = vld [vmem:[#allocation7 + $0xc00] sm:$0xff]
    %v212 = vld [vmem:[#allocation7 + $0xc78] sm:$0xff]
    %v213 = vld [vmem:[#allocation7 + $0xc80] sm:$0xff]
    %v214 = vld [vmem:[#allocation7 + $0xc88] sm:$0xff]
    %v215 = vld [vmem:[#allocation7 + $0xc90] sm:$0xff]
    %v216 = vld [vmem:[#allocation7 + $0xc98] sm:$0xff]
    %v217 = vld [vmem:[#allocation7 + $0xd10] sm:$0xff]
    %v218 = vld [vmem:[#allocation7 + $0xd18] sm:$0xff]
    %v219 = vld [vmem:[#allocation7 + $0xd20] sm:$0xff]
    %v220 = vld [vmem:[#allocation7 + $0xd28] sm:$0xff]
    %v221 = vld [vmem:[#allocation7 + $0xd30] sm:$0xff]
    %v222 = vld [vmem:[#allocation7 + $0xda8] sm:$0xff]
    %v223 = vld [vmem:[#allocation7 + $0xdb0] sm:$0xff]
    %v224 = vld [vmem:[#allocation7 + $0xdb8] sm:$0xff]
    %v225 = vld [vmem:[#allocation7 + $0xdc0] sm:$0xff]
    %v226 = vld [vmem:[#allocation7 + $0xdc8] sm:$0xff]
    %v227 = vld [vmem:[#allocation7 + $0xe40] sm:$0xff]
    %v228 = vld [vmem:[#allocation7 + $0xe48] sm:$0xff]
    %v229 = vld [vmem:[#allocation7 + $0xe50] sm:$0xff]
    %v230 = vld [vmem:[#allocation7 + $0xe58] sm:$0xff]
    %v231 = vld [vmem:[#allocation7 + $0xe60] sm:$0xff]
    %v232 = vld [vmem:[#allocation7 + $0xed8] sm:$0xff]
    %v233 = vld [vmem:[#allocation7 + $0xee0] sm:$0xff]
    %v234 = vld [vmem:[#allocation7 + $0xee8] sm:$0xff]
    %v235 = vld [vmem:[#allocation7 + $0xef0] sm:$0xff]
    %v236 = vld [vmem:[#allocation7 + $0xef8] sm:$0xff]
    %v237 = vld [vmem:[#allocation7 + $0xf70] sm:$0xff]
    %v238 = vld [vmem:[#allocation7 + $0xf78] sm:$0xff]
    %v239 = vld [vmem:[#allocation7 + $0xf80] sm:$0xff]
    %v240 = vld [vmem:[#allocation7 + $0xf88] sm:$0xff]
    %v241 = vld [vmem:[#allocation7 + $0xf90] sm:$0xff]
    %v242 = vld [vmem:[#allocation7 + $0x1008] sm:$0xff]
    %v243 = vld [vmem:[#allocation7 + $0x1010] sm:$0xff]
    %v244 = vld [vmem:[#allocation7 + $0x1018] sm:$0xff]
    %v245 = vld [vmem:[#allocation7 + $0x1020] sm:$0xff]
    %v246 = vld [vmem:[#allocation7 + $0x1028] sm:$0xff]
    %v247 = vld [vmem:[#allocation7 + $0x10a0] sm:$0xff]
    %v248 = vld [vmem:[#allocation7 + $0x10a8] sm:$0xff]
    %v249 = vld [vmem:[#allocation7 + $0x10b0] sm:$0xff]
    %v250 = vld [vmem:[#allocation7 + $0x10b8] sm:$0xff]
    %v251 = vld [vmem:[#allocation7 + $0x10c0] sm:$0xff]
    %v252 = vld [vmem:[#allocation7 + $0x1138] sm:$0xff]
    %v253 = vld [vmem:[#allocation7 + $0x1140] sm:$0xff]
    %v254 = vld [vmem:[#allocation7 + $0x1148] sm:$0xff]
    %v255 = vld [vmem:[#allocation7 + $0x1150] sm:$0xff]
    %v256 = vld [vmem:[#allocation7 + $0x1158] sm:$0xff]
    %v257 = vld [vmem:[#allocation7 + $0x11d0] sm:$0xff]
    %v258 = vld [vmem:[#allocation7 + $0x11d8] sm:$0xff]
    %v259 = vld [vmem:[#allocation7 + $0x11e0] sm:$0xff]
    %v260 = vld [vmem:[#allocation7 + $0x11e8] sm:$0xff]
    %v261 = vld [vmem:[#allocation7 + $0x11f0] sm:$0xff]
    %v262 = vld [vmem:[#allocation7 + $0x1268] sm:$0xff]
    %v263 = vld [vmem:[#allocation7 + $0x1270] sm:$0xff]
    %v264 = vld [vmem:[#allocation7 + $0x1278] sm:$0xff]
    %v265 = vld [vmem:[#allocation7 + $0x1280] sm:$0xff]
    %v266 = vld [vmem:[#allocation7 + $0x1288] sm:$0xff]
    %v267 = vld [vmem:[#allocation7 + $0x1300] sm:$0xff]
    %v268 = vld [vmem:[#allocation7 + $0x1308] sm:$0xff]
    %v269 = vld [vmem:[#allocation7 + $0x1310] sm:$0xff]
    %v270 = vld [vmem:[#allocation7 + $0x1318] sm:$0xff]
    %v271 = vld [vmem:[#allocation7 + $0x1320] sm:$0xff]
    %v272 = vld [vmem:[#allocation7 + $0x1398] sm:$0xff]
    %v273 = vld [vmem:[#allocation7 + $0x13a0] sm:$0xff]
    %v274 = vld [vmem:[#allocation7 + $0x13a8] sm:$0xff]
    %v275 = vld [vmem:[#allocation7 + $0x13b0] sm:$0xff]
    %v276 = vld [vmem:[#allocation7 + $0x13b8] sm:$0xff]
    %v277 = vld [vmem:[#allocation7 + $0x1430] sm:$0xff]
    %v278 = vld [vmem:[#allocation7 + $0x1438] sm:$0xff]
    %v279 = vld [vmem:[#allocation7 + $0x1440] sm:$0xff]
    %v280 = vld [vmem:[#allocation7 + $0x1448] sm:$0xff]
    %v281 = vld [vmem:[#allocation7 + $0x1450] sm:$0xff]
    %v282 = vld [vmem:[#allocation7 + $0x14c8] sm:$0xff]
    %v283 = vld [vmem:[#allocation7 + $0x14d0] sm:$0xff]
    %v284 = vld [vmem:[#allocation7 + $0x14d8] sm:$0xff]
    %v285 = vld [vmem:[#allocation7 + $0x14e0] sm:$0xff]
    %v286 = vld [vmem:[#allocation7 + $0x14e8] sm:$0xff]
    %v287 = vld [vmem:[#allocation7 + $0x1560] sm:$0xff]
    %v288 = vld [vmem:[#allocation7 + $0x1568] sm:$0xff]
    %v289 = vld [vmem:[#allocation7 + $0x1570] sm:$0xff]
    %v290 = vld [vmem:[#allocation7 + $0x1578] sm:$0xff]
    %v291 = vld [vmem:[#allocation7 + $0x1580] sm:$0xff]
    %v292 = vld [vmem:[#allocation7 + $0x15f8] sm:$0xff]
    %v293 = vld [vmem:[#allocation7 + $0x1600] sm:$0xff]
    %v294 = vld [vmem:[#allocation7 + $0x1608] sm:$0xff]
    %v295 = vld [vmem:[#allocation7 + $0x1610] sm:$0xff]
    %v296 = vld [vmem:[#allocation7 + $0x1618] sm:$0xff]
    %v297 = vld [vmem:[#allocation7 + $0x1690] sm:$0x33]
    %v298 = vld [vmem:[#allocation7 + $0x1698] sm:$0x33]
    %v299 = vld [vmem:[#allocation7 + $0x16a0] sm:$0x33]
    %v300 = vld [vmem:[#allocation7 + $0x16a8] sm:$0x33]
    %v301 = vld [vmem:[#allocation7 + $0x16b0] sm:$0x33]
    %v302 = vld [vmem:[#allocation9] sm:$0xff]
    %v303 = vld [vmem:[#allocation9 + $0x8] sm:$0x3]
    %v306 = vlaneseq
    %v307 = vshrl.u32 %v306, 7
    %v308 = vsub.s32 0, %v307
    %v309 = vrot.slane %v302, %v308
    %v310 = vlaneseq
    %v311 = vshrl.u32 %v310, 7
    %v312 = vsub.s32 1, %v311
    %v313 = vrot.slane %v302, %v312
    %v314 = vlaneseq
    %v315 = vshrl.u32 %v314, 7
    %v316 = vsub.s32 2, %v315
    %v317 = vrot.slane %v302, %v316
    %v318 = vlaneseq
    %v319 = vshrl.u32 %v318, 7
    %v320 = vsub.s32 3, %v319
    %v321 = vrot.slane %v302, %v320
    %v322 = vlaneseq
    %v323 = vshrl.u32 %v322, 7
    %v324 = vsub.s32 4, %v323
    %v325 = vrot.slane %v302, %v324
    %v326 = vlaneseq
    %v327 = vshrl.u32 %v326, 7
    %v328 = vsub.s32 5, %v327
    %v329 = vrot.slane %v302, %v328
    %v330 = vlaneseq
    %v331 = vshrl.u32 %v330, 7
    %v332 = vsub.s32 6, %v331
    %v333 = vrot.slane %v302, %v332
    %v334 = vlaneseq
    %v335 = vshrl.u32 %v334, 7
    %v336 = vsub.s32 7, %v335
    %v337 = vrot.slane %v302, %v336
    %v338 = vlaneseq
    %v339 = vshrl.u32 %v338, 7
    %v340 = vsub.s32 0, %v339
    %v341 = vrot.slane %v303, %v340
    %v342 = vlaneseq
    %v343 = vshrl.u32 %v342, 7
    %v344 = vsub.s32 1, %v343
    %v345 = vrot.slane %v303, %v344
    %v358 = vunpack.c.l.s4 1966171168
    %v359 = vunpack.c.0.s8 %v358
    %v360 = vlaneseq
    %v361 = vshrl.u32 %v360, 7
    %v362 = vsub.s32 %v359, %v361
    %v363 = vrot.slane %v106, %v362
    %v364 = vcombine.high %v363, %v363
    %v366 = vunpack.c.l.s4 1966171168
    %v367 = vunpack.c.0.s8 %v366
    %v368 = vlaneseq
    %v369 = vshrl.u32 %v368, 7
    %v370 = vsub.s32 %v367, %v369
    %v371 = vrot.slane %v363, %v370
    %v373 = vunpack.c.l.s4 1966171168
    %v374 = vunpack.c.0.s8 %v373
    %v375 = vlaneseq
    %v376 = vshrl.u32 %v375, 7
    %v377 = vsub.s32 %v374, %v376
    %v378 = vrot.slane %v364, %v377
    %v379 = vcombine.high %v371, %v371
    %v577 = vunpack.c.l.b16 %v107
    %v578 = vunpack.c.h.b16 %v107
    %v579 = vunpack.c.l.b16 %v108
    %v580 = vunpack.c.h.b16 %v108
    %v581 = vunpack.c.l.b16 %v109
    %v582 = vunpack.c.h.b16 %v109
    %v583 = vunpack.c.l.b16 %v110
    %v584 = vunpack.c.h.b16 %v110
    %v585 = vunpack.c.l.b16 %v111
    %v586 = vunpack.c.h.b16 %v111
    %v587 = vunpack.c.l.b16 %v112
    %v588 = vunpack.c.h.b16 %v112
    %v589 = vunpack.c.l.b16 %v113
    %v590 = vunpack.c.h.b16 %v113
    %v591 = vunpack.c.l.b16 %v114
    %v592 = vunpack.c.h.b16 %v114
    %v593 = vunpack.c.l.b16 %v115
    %v594 = vunpack.c.h.b16 %v115
    %v595 = vunpack.c.l.b16 %v116
    %v596 = vunpack.c.h.b16 %v116
    %v597 = vunpack.c.l.b16 %v117
    %v598 = vunpack.c.h.b16 %v117
    %v599 = vunpack.c.l.b16 %v118
    %v600 = vunpack.c.h.b16 %v118
    %v601 = vunpack.c.l.b16 %v119
    %v602 = vunpack.c.h.b16 %v119
    %v603 = vunpack.c.l.b16 %v120
    %v604 = vunpack.c.h.b16 %v120
    %v605 = vunpack.c.l.b16 %v121
    %v606 = vunpack.c.h.b16 %v121
    %v607 = vunpack.c.l.b16 %v122
    %v608 = vunpack.c.h.b16 %v122
    %v609 = vunpack.c.l.b16 %v123
    %v610 = vunpack.c.h.b16 %v123
    %v611 = vunpack.c.l.b16 %v124
    %v612 = vunpack.c.h.b16 %v124
    %v613 = vunpack.c.l.b16 %v125
    %v614 = vunpack.c.h.b16 %v125
    %v615 = vunpack.c.l.b16 %v126
    %v616 = vunpack.c.h.b16 %v126
    %v617 = vunpack.c.l.b16 %v127
    %v618 = vunpack.c.h.b16 %v127
    %v619 = vunpack.c.l.b16 %v128
    %v620 = vunpack.c.h.b16 %v128
    %v621 = vunpack.c.l.b16 %v129
    %v622 = vunpack.c.h.b16 %v129
    %v623 = vunpack.c.l.b16 %v130
    %v624 = vunpack.c.h.b16 %v130
    %v625 = vunpack.c.l.b16 %v131
    %v626 = vunpack.c.h.b16 %v131
    %v627 = vunpack.c.l.b16 %v132
    %v628 = vunpack.c.h.b16 %v132
    %v629 = vunpack.c.l.b16 %v133
    %v630 = vunpack.c.h.b16 %v133
    %v631 = vunpack.c.l.b16 %v134
    %v632 = vunpack.c.h.b16 %v134
    %v633 = vunpack.c.l.b16 %v135
    %v634 = vunpack.c.h.b16 %v135
    %v635 = vunpack.c.l.b16 %v136
    %v636 = vunpack.c.h.b16 %v136
    %v637 = vunpack.c.l.b16 %v137
    %v638 = vunpack.c.h.b16 %v137
    %v639 = vunpack.c.l.b16 %v138
    %v640 = vunpack.c.h.b16 %v138
    %v641 = vunpack.c.l.b16 %v139
    %v642 = vunpack.c.h.b16 %v139
    %v643 = vunpack.c.l.b16 %v140
    %v644 = vunpack.c.h.b16 %v140
    %v645 = vunpack.c.l.b16 %v141
    %v646 = vunpack.c.h.b16 %v141
    %v647 = vunpack.c.l.b16 %v142
    %v648 = vunpack.c.h.b16 %v142
    %v649 = vunpack.c.l.b16 %v143
    %v650 = vunpack.c.h.b16 %v143
    %v651 = vunpack.c.l.b16 %v144
    %v652 = vunpack.c.h.b16 %v144
    %v653 = vunpack.c.l.b16 %v145
    %v654 = vunpack.c.h.b16 %v145
    %v655 = vunpack.c.l.b16 %v146
    %v656 = vunpack.c.h.b16 %v146
    %v657 = vunpack.c.l.b16 %v147
    %v658 = vunpack.c.h.b16 %v147
    %v659 = vunpack.c.l.b16 %v148
    %v660 = vunpack.c.h.b16 %v148
    %v661 = vunpack.c.l.b16 %v149
    %v662 = vunpack.c.h.b16 %v149
    %v663 = vunpack.c.l.b16 %v150
    %v664 = vunpack.c.h.b16 %v150
    %v665 = vunpack.c.l.b16 %v151
    %v666 = vunpack.c.h.b16 %v151
    %v667 = vunpack.c.l.b16 %v152
    %v668 = vunpack.c.h.b16 %v152
    %v669 = vunpack.c.l.b16 %v153
    %v670 = vunpack.c.h.b16 %v153
    %v671 = vunpack.c.l.b16 %v154
    %v672 = vunpack.c.h.b16 %v154
    %v673 = vunpack.c.l.b16 %v155
    %v674 = vunpack.c.h.b16 %v155
    %v675 = vunpack.c.l.b16 %v156
    %v676 = vunpack.c.h.b16 %v156
    %v677 = vunpack.c.l.b16 %v157
    %v678 = vunpack.c.h.b16 %v157
    %v679 = vunpack.c.l.b16 %v158
    %v680 = vunpack.c.h.b16 %v158
    %v681 = vunpack.c.l.b16 %v159
    %v682 = vunpack.c.h.b16 %v159
    %v683 = vunpack.c.l.b16 %v160
    %v684 = vunpack.c.h.b16 %v160
    %v685 = vunpack.c.l.b16 %v161
    %v686 = vunpack.c.h.b16 %v161
    %v687 = vunpack.c.l.b16 %v162
    %v688 = vunpack.c.h.b16 %v162
    %v689 = vunpack.c.l.b16 %v163
    %v690 = vunpack.c.h.b16 %v163
    %v691 = vunpack.c.l.b16 %v164
    %v692 = vunpack.c.h.b16 %v164
    %v693 = vunpack.c.l.b16 %v165
    %v694 = vunpack.c.h.b16 %v165
    %v695 = vunpack.c.l.b16 %v166
    %v696 = vunpack.c.h.b16 %v166
    %v697 = vunpack.c.l.b16 %v167
    %v698 = vunpack.c.h.b16 %v167
    %v699 = vunpack.c.l.b16 %v168
    %v700 = vunpack.c.h.b16 %v168
    %v701 = vunpack.c.l.b16 %v169
    %v702 = vunpack.c.h.b16 %v169
    %v703 = vunpack.c.l.b16 %v170
    %v704 = vunpack.c.h.b16 %v170
    %v705 = vunpack.c.l.b16 %v171
    %v706 = vunpack.c.h.b16 %v171
    %v707 = vunpack.c.l.b16 %v172
    %v708 = vunpack.c.h.b16 %v172
    %v709 = vunpack.c.l.b16 %v173
    %v710 = vunpack.c.h.b16 %v173
    %v711 = vunpack.c.l.b16 %v174
    %v712 = vunpack.c.h.b16 %v174
    %v713 = vunpack.c.l.b16 %v175
    %v714 = vunpack.c.h.b16 %v175
    %v715 = vunpack.c.l.b16 %v176
    %v716 = vunpack.c.h.b16 %v176
    %v717 = vunpack.c.l.b16 %v177
    %v718 = vunpack.c.h.b16 %v177
    %v719 = vunpack.c.l.b16 %v178
    %v720 = vunpack.c.h.b16 %v178
    %v721 = vunpack.c.l.b16 %v179
    %v722 = vunpack.c.h.b16 %v179
    %v723 = vunpack.c.l.b16 %v180
    %v724 = vunpack.c.h.b16 %v180
    %v725 = vunpack.c.l.b16 %v181
    %v726 = vunpack.c.h.b16 %v181
    %v727 = vunpack.c.l.b16 %v182
    %v728 = vunpack.c.h.b16 %v182
    %v729 = vunpack.c.l.b16 %v183
    %v730 = vunpack.c.h.b16 %v183
    %v731 = vunpack.c.l.b16 %v184
    %v732 = vunpack.c.h.b16 %v184
    %v733 = vunpack.c.l.b16 %v185
    %v734 = vunpack.c.h.b16 %v185
    %v735 = vunpack.c.l.b16 %v186
    %v736 = vunpack.c.h.b16 %v186
    %v737 = vunpack.c.l.b16 %v187
    %v738 = vunpack.c.h.b16 %v187
    %v739 = vunpack.c.l.b16 %v188
    %v740 = vunpack.c.h.b16 %v188
    %v741 = vunpack.c.l.b16 %v189
    %v742 = vunpack.c.h.b16 %v189
    %v743 = vunpack.c.l.b16 %v190
    %v744 = vunpack.c.h.b16 %v190
    %v745 = vunpack.c.l.b16 %v191
    %v746 = vunpack.c.h.b16 %v191
    %v747 = vunpack.c.l.b16 %v192
    %v748 = vunpack.c.h.b16 %v192
    %v749 = vunpack.c.l.b16 %v193
    %v750 = vunpack.c.h.b16 %v193
    %v751 = vunpack.c.l.b16 %v194
    %v752 = vunpack.c.h.b16 %v194
    %v753 = vunpack.c.l.b16 %v195
    %v754 = vunpack.c.h.b16 %v195
    %v755 = vunpack.c.l.b16 %v196
    %v756 = vunpack.c.h.b16 %v196
    %v757 = vunpack.c.l.b16 %v197
    %v758 = vunpack.c.h.b16 %v197
    %v759 = vunpack.c.l.b16 %v198
    %v760 = vunpack.c.h.b16 %v198
    %v761 = vunpack.c.l.b16 %v199
    %v762 = vunpack.c.h.b16 %v199
    %v763 = vunpack.c.l.b16 %v200
    %v764 = vunpack.c.h.b16 %v200
    %v765 = vunpack.c.l.b16 %v201
    %v766 = vunpack.c.h.b16 %v201
    %v767 = vunpack.c.l.b16 %v202
    %v768 = vunpack.c.h.b16 %v202
    %v769 = vunpack.c.l.b16 %v203
    %v770 = vunpack.c.h.b16 %v203
    %v771 = vunpack.c.l.b16 %v204
    %v772 = vunpack.c.h.b16 %v204
    %v773 = vunpack.c.l.b16 %v205
    %v774 = vunpack.c.h.b16 %v205
    %v775 = vunpack.c.l.b16 %v206
    %v776 = vunpack.c.h.b16 %v206
    %v777 = vunpack.c.l.b16 %v207
    %v778 = vunpack.c.h.b16 %v207
    %v779 = vunpack.c.l.b16 %v208
    %v780 = vunpack.c.h.b16 %v208
    %v781 = vunpack.c.l.b16 %v209
    %v782 = vunpack.c.h.b16 %v209
    %v783 = vunpack.c.l.b16 %v210
    %v784 = vunpack.c.h.b16 %v210
    %v785 = vunpack.c.l.b16 %v211
    %v786 = vunpack.c.h.b16 %v211
    %v787 = vunpack.c.l.b16 %v212
    %v788 = vunpack.c.h.b16 %v212
    %v789 = vunpack.c.l.b16 %v213
    %v790 = vunpack.c.h.b16 %v213
    %v791 = vunpack.c.l.b16 %v214
    %v792 = vunpack.c.h.b16 %v214
    %v793 = vunpack.c.l.b16 %v215
    %v794 = vunpack.c.h.b16 %v215
    %v795 = vunpack.c.l.b16 %v216
    %v796 = vunpack.c.h.b16 %v216
    %v797 = vunpack.c.l.b16 %v217
    %v798 = vunpack.c.h.b16 %v217
    %v799 = vunpack.c.l.b16 %v218
    %v800 = vunpack.c.h.b16 %v218
    %v801 = vunpack.c.l.b16 %v219
    %v802 = vunpack.c.h.b16 %v219
    %v803 = vunpack.c.l.b16 %v220
    %v804 = vunpack.c.h.b16 %v220
    %v805 = vunpack.c.l.b16 %v221
    %v806 = vunpack.c.h.b16 %v221
    %v807 = vunpack.c.l.b16 %v222
    %v808 = vunpack.c.h.b16 %v222
    %v809 = vunpack.c.l.b16 %v223
    %v810 = vunpack.c.h.b16 %v223
    %v811 = vunpack.c.l.b16 %v224
    %v812 = vunpack.c.h.b16 %v224
    %v813 = vunpack.c.l.b16 %v225
    %v814 = vunpack.c.h.b16 %v225
    %v815 = vunpack.c.l.b16 %v226
    %v816 = vunpack.c.h.b16 %v226
    %v817 = vunpack.c.l.b16 %v227
    %v818 = vunpack.c.h.b16 %v227
    %v819 = vunpack.c.l.b16 %v228
    %v820 = vunpack.c.h.b16 %v228
    %v821 = vunpack.c.l.b16 %v229
    %v822 = vunpack.c.h.b16 %v229
    %v823 = vunpack.c.l.b16 %v230
    %v824 = vunpack.c.h.b16 %v230
    %v825 = vunpack.c.l.b16 %v231
    %v826 = vunpack.c.h.b16 %v231
    %v827 = vunpack.c.l.b16 %v232
    %v828 = vunpack.c.h.b16 %v232
    %v829 = vunpack.c.l.b16 %v233
    %v830 = vunpack.c.h.b16 %v233
    %v831 = vunpack.c.l.b16 %v234
    %v832 = vunpack.c.h.b16 %v234
    %v833 = vunpack.c.l.b16 %v235
    %v834 = vunpack.c.h.b16 %v235
    %v835 = vunpack.c.l.b16 %v236
    %v836 = vunpack.c.h.b16 %v236
    %v837 = vunpack.c.l.b16 %v237
    %v838 = vunpack.c.h.b16 %v237
    %v839 = vunpack.c.l.b16 %v238
    %v840 = vunpack.c.h.b16 %v238
    %v841 = vunpack.c.l.b16 %v239
    %v842 = vunpack.c.h.b16 %v239
    %v843 = vunpack.c.l.b16 %v240
    %v844 = vunpack.c.h.b16 %v240
    %v845 = vunpack.c.l.b16 %v241
    %v846 = vunpack.c.h.b16 %v241
    %v847 = vunpack.c.l.b16 %v242
    %v848 = vunpack.c.h.b16 %v242
    %v849 = vunpack.c.l.b16 %v243
    %v850 = vunpack.c.h.b16 %v243
    %v851 = vunpack.c.l.b16 %v244
    %v852 = vunpack.c.h.b16 %v244
    %v853 = vunpack.c.l.b16 %v245
    %v854 = vunpack.c.h.b16 %v245
    %v855 = vunpack.c.l.b16 %v246
    %v856 = vunpack.c.h.b16 %v246
    %v857 = vunpack.c.l.b16 %v247
    %v858 = vunpack.c.h.b16 %v247
    %v859 = vunpack.c.l.b16 %v248
    %v860 = vunpack.c.h.b16 %v248
    %v861 = vunpack.c.l.b16 %v249
    %v862 = vunpack.c.h.b16 %v249
    %v863 = vunpack.c.l.b16 %v250
    %v864 = vunpack.c.h.b16 %v250
    %v865 = vunpack.c.l.b16 %v251
    %v866 = vunpack.c.h.b16 %v251
    %v867 = vunpack.c.l.b16 %v252
    %v868 = vunpack.c.h.b16 %v252
    %v869 = vunpack.c.l.b16 %v253
    %v870 = vunpack.c.h.b16 %v253
    %v871 = vunpack.c.l.b16 %v254
    %v872 = vunpack.c.h.b16 %v254
    %v873 = vunpack.c.l.b16 %v255
    %v874 = vunpack.c.h.b16 %v255
    %v875 = vunpack.c.l.b16 %v256
    %v876 = vunpack.c.h.b16 %v256
    %v877 = vunpack.c.l.b16 %v257
    %v878 = vunpack.c.h.b16 %v257
    %v879 = vunpack.c.l.b16 %v258
    %v880 = vunpack.c.h.b16 %v258
    %v881 = vunpack.c.l.b16 %v259
    %v882 = vunpack.c.h.b16 %v259
    %v883 = vunpack.c.l.b16 %v260
    %v884 = vunpack.c.h.b16 %v260
    %v885 = vunpack.c.l.b16 %v261
    %v886 = vunpack.c.h.b16 %v261
    %v887 = vunpack.c.l.b16 %v262
    %v888 = vunpack.c.h.b16 %v262
    %v889 = vunpack.c.l.b16 %v263
    %v890 = vunpack.c.h.b16 %v263
    %v891 = vunpack.c.l.b16 %v264
    %v892 = vunpack.c.h.b16 %v264
    %v893 = vunpack.c.l.b16 %v265
    %v894 = vunpack.c.h.b16 %v265
    %v895 = vunpack.c.l.b16 %v266
    %v896 = vunpack.c.h.b16 %v266
    %v897 = vunpack.c.l.b16 %v267
    %v898 = vunpack.c.h.b16 %v267
    %v899 = vunpack.c.l.b16 %v268
    %v900 = vunpack.c.h.b16 %v268
    %v901 = vunpack.c.l.b16 %v269
    %v902 = vunpack.c.h.b16 %v269
    %v903 = vunpack.c.l.b16 %v270
    %v904 = vunpack.c.h.b16 %v270
    %v905 = vunpack.c.l.b16 %v271
    %v906 = vunpack.c.h.b16 %v271
    %v907 = vunpack.c.l.b16 %v272
    %v908 = vunpack.c.h.b16 %v272
    %v909 = vunpack.c.l.b16 %v273
    %v910 = vunpack.c.h.b16 %v273
    %v911 = vunpack.c.l.b16 %v274
    %v912 = vunpack.c.h.b16 %v274
    %v913 = vunpack.c.l.b16 %v275
    %v914 = vunpack.c.h.b16 %v275
    %v915 = vunpack.c.l.b16 %v276
    %v916 = vunpack.c.h.b16 %v276
    %v917 = vunpack.c.l.b16 %v277
    %v918 = vunpack.c.h.b16 %v277
    %v919 = vunpack.c.l.b16 %v278
    %v920 = vunpack.c.h.b16 %v278
    %v921 = vunpack.c.l.b16 %v279
    %v922 = vunpack.c.h.b16 %v279
    %v923 = vunpack.c.l.b16 %v280
    %v924 = vunpack.c.h.b16 %v280
    %v925 = vunpack.c.l.b16 %v281
    %v926 = vunpack.c.h.b16 %v281
    %v927 = vunpack.c.l.b16 %v282
    %v928 = vunpack.c.h.b16 %v282
    %v929 = vunpack.c.l.b16 %v283
    %v930 = vunpack.c.h.b16 %v283
    %v931 = vunpack.c.l.b16 %v284
    %v932 = vunpack.c.h.b16 %v284
    %v933 = vunpack.c.l.b16 %v285
    %v934 = vunpack.c.h.b16 %v285
    %v935 = vunpack.c.l.b16 %v286
    %v936 = vunpack.c.h.b16 %v286
    %v937 = vunpack.c.l.b16 %v287
    %v938 = vunpack.c.h.b16 %v287
    %v939 = vunpack.c.l.b16 %v288
    %v940 = vunpack.c.h.b16 %v288
    %v941 = vunpack.c.l.b16 %v289
    %v942 = vunpack.c.h.b16 %v289
    %v943 = vunpack.c.l.b16 %v290
    %v944 = vunpack.c.h.b16 %v290
    %v945 = vunpack.c.l.b16 %v291
    %v946 = vunpack.c.h.b16 %v291
    %v947 = vunpack.c.l.b16 %v292
    %v948 = vunpack.c.h.b16 %v292
    %v949 = vunpack.c.l.b16 %v293
    %v950 = vunpack.c.h.b16 %v293
    %v951 = vunpack.c.l.b16 %v294
    %v952 = vunpack.c.h.b16 %v294
    %v953 = vunpack.c.l.b16 %v295
    %v954 = vunpack.c.h.b16 %v295
    %v955 = vunpack.c.l.b16 %v296
    %v956 = vunpack.c.h.b16 %v296
    %v957 = vunpack.c.l.b16 %v297
    %v958 = vunpack.c.h.b16 %v297
    %v959 = vunpack.c.l.b16 %v298
    %v960 = vunpack.c.h.b16 %v298
    %v961 = vunpack.c.l.b16 %v299
    %v962 = vunpack.c.h.b16 %v299
    %v963 = vunpack.c.l.b16 %v300
    %v964 = vunpack.c.h.b16 %v300
    %v965 = vunpack.c.l.b16 %v301
    %v966 = vunpack.c.h.b16 %v301
    %v967 = vpack.c.b16 %v587, %v577
    %v968 = vpack.c.b16 %v588, %v578
    %v969 = vpack.c.b16 %v589, %v579
    %v970 = vpack.c.b16 %v590, %v580
    %v971 = vpack.c.b16 %v591, %v581
    %v972 = vpack.c.b16 %v592, %v582
    %v973 = vpack.c.b16 %v593, %v583
    %v974 = vpack.c.b16 %v594, %v584
    %v975 = vpack.c.b16 %v595, %v585
    %v976 = vpack.c.b16 %v596, %v586
    %v977 = vpack.c.b16 %v607, %v597
    %v978 = vpack.c.b16 %v608, %v598
    %v979 = vpack.c.b16 %v609, %v599
    %v980 = vpack.c.b16 %v610, %v600
    %v981 = vpack.c.b16 %v611, %v601
    %v982 = vpack.c.b16 %v612, %v602
    %v983 = vpack.c.b16 %v613, %v603
    %v984 = vpack.c.b16 %v614, %v604
    %v985 = vpack.c.b16 %v615, %v605
    %v986 = vpack.c.b16 %v616, %v606
    %v987 = vpack.c.b16 %v627, %v617
    %v988 = vpack.c.b16 %v628, %v618
    %v989 = vpack.c.b16 %v629, %v619
    %v990 = vpack.c.b16 %v630, %v620
    %v991 = vpack.c.b16 %v631, %v621
    %v992 = vpack.c.b16 %v632, %v622
    %v993 = vpack.c.b16 %v633, %v623
    %v994 = vpack.c.b16 %v634, %v624
    %v995 = vpack.c.b16 %v635, %v625
    %v996 = vpack.c.b16 %v636, %v626
    %v997 = vpack.c.b16 %v647, %v637
    %v998 = vpack.c.b16 %v648, %v638
    %v999 = vpack.c.b16 %v649, %v639
    %v1000 = vpack.c.b16 %v650, %v640
    %v1001 = vpack.c.b16 %v651, %v641
    %v1002 = vpack.c.b16 %v652, %v642
    %v1003 = vpack.c.b16 %v653, %v643
    %v1004 = vpack.c.b16 %v654, %v644
    %v1005 = vpack.c.b16 %v655, %v645
    %v1006 = vpack.c.b16 %v656, %v646
    %v1007 = vpack.c.b16 %v667, %v657
    %v1008 = vpack.c.b16 %v668, %v658
    %v1009 = vpack.c.b16 %v669, %v659
    %v1010 = vpack.c.b16 %v670, %v660
    %v1011 = vpack.c.b16 %v671, %v661
    %v1012 = vpack.c.b16 %v672, %v662
    %v1013 = vpack.c.b16 %v673, %v663
    %v1014 = vpack.c.b16 %v674, %v664
    %v1015 = vpack.c.b16 %v675, %v665
    %v1016 = vpack.c.b16 %v676, %v666
    %v1017 = vpack.c.b16 %v687, %v677
    %v1018 = vpack.c.b16 %v688, %v678
    %v1019 = vpack.c.b16 %v689, %v679
    %v1020 = vpack.c.b16 %v690, %v680
    %v1021 = vpack.c.b16 %v691, %v681
    %v1022 = vpack.c.b16 %v692, %v682
    %v1023 = vpack.c.b16 %v693, %v683
    %v1024 = vpack.c.b16 %v694, %v684
    %v1025 = vpack.c.b16 %v695, %v685
    %v1026 = vpack.c.b16 %v696, %v686
    %v1027 = vpack.c.b16 %v707, %v697
    %v1028 = vpack.c.b16 %v708, %v698
    %v1029 = vpack.c.b16 %v709, %v699
    %v1030 = vpack.c.b16 %v710, %v700
    %v1031 = vpack.c.b16 %v711, %v701
    %v1032 = vpack.c.b16 %v712, %v702
    %v1033 = vpack.c.b16 %v713, %v703
    %v1034 = vpack.c.b16 %v714, %v704
    %v1035 = vpack.c.b16 %v715, %v705
    %v1036 = vpack.c.b16 %v716, %v706
    %v1037 = vpack.c.b16 %v727, %v717
    %v1038 = vpack.c.b16 %v728, %v718
    %v1039 = vpack.c.b16 %v729, %v719
    %v1040 = vpack.c.b16 %v730, %v720
    %v1041 = vpack.c.b16 %v731, %v721
    %v1042 = vpack.c.b16 %v732, %v722
    %v1043 = vpack.c.b16 %v733, %v723
    %v1044 = vpack.c.b16 %v734, %v724
    %v1045 = vpack.c.b16 %v735, %v725
    %v1046 = vpack.c.b16 %v736, %v726
    %v1047 = vpack.c.b16 %v747, %v737
    %v1048 = vpack.c.b16 %v748, %v738
    %v1049 = vpack.c.b16 %v749, %v739
    %v1050 = vpack.c.b16 %v750, %v740
    %v1051 = vpack.c.b16 %v751, %v741
    %v1052 = vpack.c.b16 %v752, %v742
    %v1053 = vpack.c.b16 %v753, %v743
    %v1054 = vpack.c.b16 %v754, %v744
    %v1055 = vpack.c.b16 %v755, %v745
    %v1056 = vpack.c.b16 %v756, %v746
    %v1057 = vpack.c.b16 %v767, %v757
    %v1058 = vpack.c.b16 %v768, %v758
    %v1059 = vpack.c.b16 %v769, %v759
    %v1060 = vpack.c.b16 %v770, %v760
    %v1061 = vpack.c.b16 %v771, %v761
    %v1062 = vpack.c.b16 %v772, %v762
    %v1063 = vpack.c.b16 %v773, %v763
    %v1064 = vpack.c.b16 %v774, %v764
    %v1065 = vpack.c.b16 %v775, %v765
    %v1066 = vpack.c.b16 %v776, %v766
    %v1067 = vpack.c.b16 %v787, %v777
    %v1068 = vpack.c.b16 %v788, %v778
    %v1069 = vpack.c.b16 %v789, %v779
    %v1070 = vpack.c.b16 %v790, %v780
    %v1071 = vpack.c.b16 %v791, %v781
    %v1072 = vpack.c.b16 %v792, %v782
    %v1073 = vpack.c.b16 %v793, %v783
    %v1074 = vpack.c.b16 %v794, %v784
    %v1075 = vpack.c.b16 %v795, %v785
    %v1076 = vpack.c.b16 %v796, %v786
    %v1077 = vpack.c.b16 %v807, %v797
    %v1078 = vpack.c.b16 %v808, %v798
    %v1079 = vpack.c.b16 %v809, %v799
    %v1080 = vpack.c.b16 %v810, %v800
    %v1081 = vpack.c.b16 %v811, %v801
    %v1082 = vpack.c.b16 %v812, %v802
    %v1083 = vpack.c.b16 %v813, %v803
    %v1084 = vpack.c.b16 %v814, %v804
    %v1085 = vpack.c.b16 %v815, %v805
    %v1086 = vpack.c.b16 %v816, %v806
    %v1087 = vpack.c.b16 %v827, %v817
    %v1088 = vpack.c.b16 %v828, %v818
    %v1089 = vpack.c.b16 %v829, %v819
    %v1090 = vpack.c.b16 %v830, %v820
    %v1091 = vpack.c.b16 %v831, %v821
    %v1092 = vpack.c.b16 %v832, %v822
    %v1093 = vpack.c.b16 %v833, %v823
    %v1094 = vpack.c.b16 %v834, %v824
    %v1095 = vpack.c.b16 %v835, %v825
    %v1096 = vpack.c.b16 %v836, %v826
    %v1097 = vpack.c.b16 %v847, %v837
    %v1098 = vpack.c.b16 %v848, %v838
    %v1099 = vpack.c.b16 %v849, %v839
    %v1100 = vpack.c.b16 %v850, %v840
    %v1101 = vpack.c.b16 %v851, %v841
    %v1102 = vpack.c.b16 %v852, %v842
    %v1103 = vpack.c.b16 %v853, %v843
    %v1104 = vpack.c.b16 %v854, %v844
    %v1105 = vpack.c.b16 %v855, %v845
    %v1106 = vpack.c.b16 %v856, %v846
    %v1107 = vpack.c.b16 %v867, %v857
    %v1108 = vpack.c.b16 %v868, %v858
    %v1109 = vpack.c.b16 %v869, %v859
    %v1110 = vpack.c.b16 %v870, %v860
    %v1111 = vpack.c.b16 %v871, %v861
    %v1112 = vpack.c.b16 %v872, %v862
    %v1113 = vpack.c.b16 %v873, %v863
    %v1114 = vpack.c.b16 %v874, %v864
    %v1115 = vpack.c.b16 %v875, %v865
    %v1116 = vpack.c.b16 %v876, %v866
    %v1117 = vpack.c.b16 %v887, %v877
    %v1118 = vpack.c.b16 %v888, %v878
    %v1119 = vpack.c.b16 %v889, %v879
    %v1120 = vpack.c.b16 %v890, %v880
    %v1121 = vpack.c.b16 %v891, %v881
    %v1122 = vpack.c.b16 %v892, %v882
    %v1123 = vpack.c.b16 %v893, %v883
    %v1124 = vpack.c.b16 %v894, %v884
    %v1125 = vpack.c.b16 %v895, %v885
    %v1126 = vpack.c.b16 %v896, %v886
    %v1127 = vpack.c.b16 %v907, %v897
    %v1128 = vpack.c.b16 %v908, %v898
    %v1129 = vpack.c.b16 %v909, %v899
    %v1130 = vpack.c.b16 %v910, %v900
    %v1131 = vpack.c.b16 %v911, %v901
    %v1132 = vpack.c.b16 %v912, %v902
    %v1133 = vpack.c.b16 %v913, %v903
    %v1134 = vpack.c.b16 %v914, %v904
    %v1135 = vpack.c.b16 %v915, %v905
    %v1136 = vpack.c.b16 %v916, %v906
    %v1137 = vpack.c.b16 %v927, %v917
    %v1138 = vpack.c.b16 %v928, %v918
    %v1139 = vpack.c.b16 %v929, %v919
    %v1140 = vpack.c.b16 %v930, %v920
    %v1141 = vpack.c.b16 %v931, %v921
    %v1142 = vpack.c.b16 %v932, %v922
    %v1143 = vpack.c.b16 %v933, %v923
    %v1144 = vpack.c.b16 %v934, %v924
    %v1145 = vpack.c.b16 %v935, %v925
    %v1146 = vpack.c.b16 %v936, %v926
    %v1147 = vpack.c.b16 %v947, %v937
    %v1148 = vpack.c.b16 %v948, %v938
    %v1149 = vpack.c.b16 %v949, %v939
    %v1150 = vpack.c.b16 %v950, %v940
    %v1151 = vpack.c.b16 %v951, %v941
    %v1152 = vpack.c.b16 %v952, %v942
    %v1153 = vpack.c.b16 %v953, %v943
    %v1154 = vpack.c.b16 %v954, %v944
    %v1155 = vpack.c.b16 %v955, %v945
    %v1156 = vpack.c.b16 %v956, %v946
    %v1157 = vpack.c.b16 %v957, %v957
    %v1158 = vpack.c.b16 %v958, %v958
    %v1159 = vpack.c.b16 %v959, %v959
    %v1160 = vpack.c.b16 %v960, %v960
    %v1161 = vpack.c.b16 %v961, %v961
    %v1162 = vpack.c.b16 %v962, %v962
    %v1163 = vpack.c.b16 %v963, %v963
    %v1164 = vpack.c.b16 %v964, %v964
    %v1165 = vpack.c.b16 %v965, %v965
    %v1166 = vpack.c.b16 %v966, %v966
    %vm1357 = vcmask 416768
    %v1359 = vsel %vm1357, %v379, 0
    %vm1361 = vcmask 1040384
    %vm1362 = vcmask 1041408
    %v1363 = vsel %vm1361, 4294967295, 65535
    %v1364 = vsel %vm1362, %v1363, 0
    %v1366 = vand.u32 %v1157, %v1364
    %v1369 = vand.u32 %v1158, %v1364
    %v1372 = vand.u32 %v1159, %v1364
    %v1375 = vand.u32 %v1160, %v1364
    %v1378 = vand.u32 %v1161, %v1364
    %v1381 = vand.u32 %v1162, %v1364
    %v1384 = vand.u32 %v1163, %v1364
    %v1387 = vand.u32 %v1164, %v1364
    %v1390 = vand.u32 %v1165, %v1364
    %v1393 = vand.u32 %v1166, %v1364
    %1395 = vmatprep.subr.bf16.mxu0 %v1038
    %1396 = vmatpush1.bf16.msra.mxu0 %v1037
    %1397 = vmatprep.subr.bf16.mxu0 %v1028
    %1398 = vmatpush1.bf16.msra.mxu0 %v1027
    %1399 = vmatprep.subr.bf16.mxu0 %v1018
    %1400 = vmatpush1.bf16.msra.mxu0 %v1017
    %1401 = vmatprep.subr.bf16.mxu0 %v1008
    %1402 = vmatpush1.bf16.msra.mxu0 %v1007
    %1403 = vmatprep.subr.bf16.mxu0 %v998
    %1404 = vmatpush1.bf16.msra.mxu0 %v997
    %1405 = vmatprep.subr.bf16.mxu0 %v988
    %1406 = vmatpush1.bf16.msra.mxu0 %v987
    %1407 = vmatprep.subr.bf16.mxu0 %v978
    %1408 = vmatpush1.bf16.msra.mxu0 %v977
    %1409 = vmatprep.subr.bf16.mxu0 %v968
    %1410 = vmatpush1.bf16.msra.mxu0 %v967
    %1411 = vmatprep.subr.bf16.mxu0 %v1118
    %1412 = vmatpush2.bf16.msra.mxu0 %v1117
    %1413 = vmatprep.subr.bf16.mxu0 %v1108
    %1414 = vmatpush2.bf16.msra.mxu0 %v1107
    %1415 = vmatprep.subr.bf16.mxu0 %v1098
    %1416 = vmatpush2.bf16.msra.mxu0 %v1097
    %1417 = vmatprep.subr.bf16.mxu0 %v1088
    %1418 = vmatpush2.bf16.msra.mxu0 %v1087
    %1419 = vmatprep.subr.bf16.mxu0 %v1078
    %1420 = vmatpush2.bf16.msra.mxu0 %v1077
    %1421 = vmatprep.subr.bf16.mxu0 %v1068
    %1422 = vmatpush2.bf16.msra.mxu0 %v1067
    %1423 = vmatprep.subr.bf16.mxu0 %v1058
    %1424 = vmatpush2.bf16.msra.mxu0 %v1057
    %1425 = vmatprep.subr.bf16.mxu0 %v1048
    %1426 = vmatpush2.bf16.msra.mxu0 %v1047
    %1427 = vmatprep.mubr.bf16.mxu0 %v378
    %1428 = vmatmul.mubr.bf16.gmra.mxu0 %v371
    %v1429 = vpop.f32.mrf.mxu0
    %v1430 = vadd.f32 %v309, %v1429
    %v1431 = vpop.f32.mrf.mxu0
    %v1432 = vadd.f32 %v313, %v1431
    %v1433 = vpop.f32.mrf.mxu0
    %v1434 = vpop.f32.mrf.mxu0
    %1435 = vdwg.mxu0
    %1436 = vmatprep.subr.bf16.mxu0 0
    %1437 = vmatpush1.bf16.msra.mxu0 0
    %1438 = vmatprep.subr.bf16.mxu0 0
    %1439 = vmatpush1.bf16.msra.mxu0 0
    %1440 = vmatprep.subr.bf16.mxu0 0
    %1441 = vmatpush1.bf16.msra.mxu0 0
    %1442 = vmatprep.subr.bf16.mxu0 0
    %1443 = vmatpush1.bf16.msra.mxu0 0
    %1444 = vmatprep.subr.bf16.mxu0 %v1369
    %1445 = vmatpush1.bf16.msra.mxu0 %v1366
    %1446 = vmatprep.subr.bf16.mxu0 %v1148
    %1447 = vmatpush1.bf16.msra.mxu0 %v1147
    %1448 = vmatprep.subr.bf16.mxu0 %v1138
    %1449 = vmatpush1.bf16.msra.mxu0 %v1137
    %1450 = vmatprep.subr.bf16.mxu0 %v1128
    %1451 = vmatpush1.bf16.msra.mxu0 %v1127
    %1452 = vmatprep.subr.bf16.mxu0 0
    %1453 = vmatpush2.bf16.msra.mxu0 0
    %1454 = vmatprep.subr.bf16.mxu0 0
    %1455 = vmatpush2.bf16.msra.mxu0 0
    %1456 = vmatprep.subr.bf16.mxu0 0
    %1457 = vmatpush2.bf16.msra.mxu0 0
    %1458 = vmatprep.subr.bf16.mxu0 0
    %1459 = vmatpush2.bf16.msra.mxu0 0
    %1460 = vmatprep.subr.bf16.mxu0 0
    %1461 = vmatpush2.bf16.msra.mxu0 0
    %1462 = vmatprep.subr.bf16.mxu0 0
    %1463 = vmatpush2.bf16.msra.mxu0 0
    %1464 = vmatprep.subr.bf16.mxu0 0
    %1465 = vmatpush2.bf16.msra.mxu0 0
    %1466 = vmatprep.subr.bf16.mxu0 0
    %1467 = vmatpush2.bf16.msra.mxu0 0
    %1468 = vmatprep.mubr.bf16.mxu0 0
    %1469 = vmatmul.mubr.bf16.gmra.mxu0 %v1359
    %v1470 = vpop.f32.mrf.mxu0
    %v1471 = vadd.f32 %v1430, %v1470
    %v1472 = vpop.f32.mrf.mxu0
    %v1473 = vadd.f32 %v1432, %v1472
    %v1474 = vpop.f32.mrf.mxu0
    %v1475 = vpop.f32.mrf.mxu0
    %1476 = vdwg.mxu0
    %1477 = vmatprep.subr.bf16.mxu0 %v1040
    %1478 = vmatpush1.bf16.msra.mxu0 %v1039
    %1479 = vmatprep.subr.bf16.mxu0 %v1030
    %1480 = vmatpush1.bf16.msra.mxu0 %v1029
    %1481 = vmatprep.subr.bf16.mxu0 %v1020
    %1482 = vmatpush1.bf16.msra.mxu0 %v1019
    %1483 = vmatprep.subr.bf16.mxu0 %v1010
    %1484 = vmatpush1.bf16.msra.mxu0 %v1009
    %1485 = vmatprep.subr.bf16.mxu0 %v1000
    %1486 = vmatpush1.bf16.msra.mxu0 %v999
    %1487 = vmatprep.subr.bf16.mxu0 %v990
    %1488 = vmatpush1.bf16.msra.mxu0 %v989
    %1489 = vmatprep.subr.bf16.mxu0 %v980
    %1490 = vmatpush1.bf16.msra.mxu0 %v979
    %1491 = vmatprep.subr.bf16.mxu0 %v970
    %1492 = vmatpush1.bf16.msra.mxu0 %v969
    %1493 = vmatprep.subr.bf16.mxu0 %v1120
    %1494 = vmatpush2.bf16.msra.mxu0 %v1119
    %1495 = vmatprep.subr.bf16.mxu0 %v1110
    %1496 = vmatpush2.bf16.msra.mxu0 %v1109
    %1497 = vmatprep.subr.bf16.mxu0 %v1100
    %1498 = vmatpush2.bf16.msra.mxu0 %v1099
    %1499 = vmatprep.subr.bf16.mxu0 %v1090
    %1500 = vmatpush2.bf16.msra.mxu0 %v1089
    %1501 = vmatprep.subr.bf16.mxu0 %v1080
    %1502 = vmatpush2.bf16.msra.mxu0 %v1079
    %1503 = vmatprep.subr.bf16.mxu0 %v1070
    %1504 = vmatpush2.bf16.msra.mxu0 %v1069
    %1505 = vmatprep.subr.bf16.mxu0 %v1060
    %1506 = vmatpush2.bf16.msra.mxu0 %v1059
    %1507 = vmatprep.subr.bf16.mxu0 %v1050
    %1508 = vmatpush2.bf16.msra.mxu0 %v1049
    %1509 = vmatprep.mubr.bf16.mxu0 %v378
    %1510 = vmatmul.mubr.bf16.gmra.mxu0 %v371
    %v1511 = vpop.f32.mrf.mxu0
    %v1512 = vadd.f32 %v317, %v1511
    %v1513 = vpop.f32.mrf.mxu0
    %v1514 = vadd.f32 %v321, %v1513
    %v1515 = vpop.f32.mrf.mxu0
    %v1516 = vpop.f32.mrf.mxu0
    %1517 = vdwg.mxu0
    %1518 = vmatprep.subr.bf16.mxu0 0
    %1519 = vmatpush1.bf16.msra.mxu0 0
    %1520 = vmatprep.subr.bf16.mxu0 0
    %1521 = vmatpush1.bf16.msra.mxu0 0
    %1522 = vmatprep.subr.bf16.mxu0 0
    %1523 = vmatpush1.bf16.msra.mxu0 0
    %1524 = vmatprep.subr.bf16.mxu0 0
    %1525 = vmatpush1.bf16.msra.mxu0 0
    %1526 = vmatprep.subr.bf16.mxu0 %v1375
    %1527 = vmatpush1.bf16.msra.mxu0 %v1372
    %1528 = vmatprep.subr.bf16.mxu0 %v1150
    %1529 = vmatpush1.bf16.msra.mxu0 %v1149
    %1530 = vmatprep.subr.bf16.mxu0 %v1140
    %1531 = vmatpush1.bf16.msra.mxu0 %v1139
    %1532 = vmatprep.subr.bf16.mxu0 %v1130
    %1533 = vmatpush1.bf16.msra.mxu0 %v1129
    %1534 = vmatprep.subr.bf16.mxu0 0
    %1535 = vmatpush2.bf16.msra.mxu0 0
    %1536 = vmatprep.subr.bf16.mxu0 0
    %1537 = vmatpush2.bf16.msra.mxu0 0
    %1538 = vmatprep.subr.bf16.mxu0 0
    %1539 = vmatpush2.bf16.msra.mxu0 0
    %1540 = vmatprep.subr.bf16.mxu0 0
    %1541 = vmatpush2.bf16.msra.mxu0 0
    %1542 = vmatprep.subr.bf16.mxu0 0
    %1543 = vmatpush2.bf16.msra.mxu0 0
    %1544 = vmatprep.subr.bf16.mxu0 0
    %1545 = vmatpush2.bf16.msra.mxu0 0
    %1546 = vmatprep.subr.bf16.mxu0 0
    %1547 = vmatpush2.bf16.msra.mxu0 0
    %1548 = vmatprep.subr.bf16.mxu0 0
    %1549 = vmatpush2.bf16.msra.mxu0 0
    %1550 = vmatprep.mubr.bf16.mxu0 0
    %1551 = vmatmul.mubr.bf16.gmra.mxu0 %v1359
    %v1552 = vpop.f32.mrf.mxu0
    %v1553 = vadd.f32 %v1512, %v1552
    %v1554 = vpop.f32.mrf.mxu0
    %v1555 = vadd.f32 %v1514, %v1554
    %v1556 = vpop.f32.mrf.mxu0
    %v1557 = vpop.f32.mrf.mxu0
    %1558 = vdwg.mxu0
    %1559 = vmatprep.subr.bf16.mxu0 %v1042
    %1560 = vmatpush1.bf16.msra.mxu0 %v1041
    %1561 = vmatprep.subr.bf16.mxu0 %v1032
    %1562 = vmatpush1.bf16.msra.mxu0 %v1031
    %1563 = vmatprep.subr.bf16.mxu0 %v1022
    %1564 = vmatpush1.bf16.msra.mxu0 %v1021
    %1565 = vmatprep.subr.bf16.mxu0 %v1012
    %1566 = vmatpush1.bf16.msra.mxu0 %v1011
    %1567 = vmatprep.subr.bf16.mxu0 %v1002
    %1568 = vmatpush1.bf16.msra.mxu0 %v1001
    %1569 = vmatprep.subr.bf16.mxu0 %v992
    %1570 = vmatpush1.bf16.msra.mxu0 %v991
    %1571 = vmatprep.subr.bf16.mxu0 %v982
    %1572 = vmatpush1.bf16.msra.mxu0 %v981
    %1573 = vmatprep.subr.bf16.mxu0 %v972
    %1574 = vmatpush1.bf16.msra.mxu0 %v971
    %1575 = vmatprep.subr.bf16.mxu0 %v1122
    %1576 = vmatpush2.bf16.msra.mxu0 %v1121
    %1577 = vmatprep.subr.bf16.mxu0 %v1112
    %1578 = vmatpush2.bf16.msra.mxu0 %v1111
    %1579 = vmatprep.subr.bf16.mxu0 %v1102
    %1580 = vmatpush2.bf16.msra.mxu0 %v1101
    %1581 = vmatprep.subr.bf16.mxu0 %v1092
    %1582 = vmatpush2.bf16.msra.mxu0 %v1091
    %1583 = vmatprep.subr.bf16.mxu0 %v1082
    %1584 = vmatpush2.bf16.msra.mxu0 %v1081
    %1585 = vmatprep.subr.bf16.mxu0 %v1072
    %1586 = vmatpush2.bf16.msra.mxu0 %v1071
    %1587 = vmatprep.subr.bf16.mxu0 %v1062
    %1588 = vmatpush2.bf16.msra.mxu0 %v1061
    %1589 = vmatprep.subr.bf16.mxu0 %v1052
    %1590 = vmatpush2.bf16.msra.mxu0 %v1051
    %1591 = vmatprep.mubr.bf16.mxu0 %v378
    %1592 = vmatmul.mubr.bf16.gmra.mxu0 %v371
    %v1593 = vpop.f32.mrf.mxu0
    %v1594 = vadd.f32 %v325, %v1593
    %v1595 = vpop.f32.mrf.mxu0
    %v1596 = vadd.f32 %v329, %v1595
    %v1597 = vpop.f32.mrf.mxu0
    %v1598 = vpop.f32.mrf.mxu0
    %1599 = vdwg.mxu0
    %1600 = vmatprep.subr.bf16.mxu0 0
    %1601 = vmatpush1.bf16.msra.mxu0 0
    %1602 = vmatprep.subr.bf16.mxu0 0
    %1603 = vmatpush1.bf16.msra.mxu0 0
    %1604 = vmatprep.subr.bf16.mxu0 0
    %1605 = vmatpush1.bf16.msra.mxu0 0
    %1606 = vmatprep.subr.bf16.mxu0 0
    %1607 = vmatpush1.bf16.msra.mxu0 0
    %1608 = vmatprep.subr.bf16.mxu0 %v1381
    %1609 = vmatpush1.bf16.msra.mxu0 %v1378
    %1610 = vmatprep.subr.bf16.mxu0 %v1152
    %1611 = vmatpush1.bf16.msra.mxu0 %v1151
    %1612 = vmatprep.subr.bf16.mxu0 %v1142
    %1613 = vmatpush1.bf16.msra.mxu0 %v1141
    %1614 = vmatprep.subr.bf16.mxu0 %v1132
    %1615 = vmatpush1.bf16.msra.mxu0 %v1131
    %1616 = vmatprep.subr.bf16.mxu0 0
    %1617 = vmatpush2.bf16.msra.mxu0 0
    %1618 = vmatprep.subr.bf16.mxu0 0
    %1619 = vmatpush2.bf16.msra.mxu0 0
    %1620 = vmatprep.subr.bf16.mxu0 0
    %1621 = vmatpush2.bf16.msra.mxu0 0
    %1622 = vmatprep.subr.bf16.mxu0 0
    %1623 = vmatpush2.bf16.msra.mxu0 0
    %1624 = vmatprep.subr.bf16.mxu0 0
    %1625 = vmatpush2.bf16.msra.mxu0 0
    %1626 = vmatprep.subr.bf16.mxu0 0
    %1627 = vmatpush2.bf16.msra.mxu0 0
    %1628 = vmatprep.subr.bf16.mxu0 0
    %1629 = vmatpush2.bf16.msra.mxu0 0
    %1630 = vmatprep.subr.bf16.mxu0 0
    %1631 = vmatpush2.bf16.msra.mxu0 0
    %1632 = vmatprep.mubr.bf16.mxu0 0
    %1633 = vmatmul.mubr.bf16.gmra.mxu0 %v1359
    %v1634 = vpop.f32.mrf.mxu0
    %v1635 = vadd.f32 %v1594, %v1634
    %v1636 = vpop.f32.mrf.mxu0
    %v1637 = vadd.f32 %v1596, %v1636
    %v1638 = vpop.f32.mrf.mxu0
    %v1639 = vpop.f32.mrf.mxu0
    %1640 = vdwg.mxu0
    %1641 = vmatprep.subr.bf16.mxu0 %v1044
    %1642 = vmatpush1.bf16.msra.mxu0 %v1043
    %1643 = vmatprep.subr.bf16.mxu0 %v1034
    %1644 = vmatpush1.bf16.msra.mxu0 %v1033
    %1645 = vmatprep.subr.bf16.mxu0 %v1024
    %1646 = vmatpush1.bf16.msra.mxu0 %v1023
    %1647 = vmatprep.subr.bf16.mxu0 %v1014
    %1648 = vmatpush1.bf16.msra.mxu0 %v1013
    %1649 = vmatprep.subr.bf16.mxu0 %v1004
    %1650 = vmatpush1.bf16.msra.mxu0 %v1003
    %1651 = vmatprep.subr.bf16.mxu0 %v994
    %1652 = vmatpush1.bf16.msra.mxu0 %v993
    %1653 = vmatprep.subr.bf16.mxu0 %v984
    %1654 = vmatpush1.bf16.msra.mxu0 %v983
    %1655 = vmatprep.subr.bf16.mxu0 %v974
    %1656 = vmatpush1.bf16.msra.mxu0 %v973
    %1657 = vmatprep.subr.bf16.mxu0 %v1124
    %1658 = vmatpush2.bf16.msra.mxu0 %v1123
    %1659 = vmatprep.subr.bf16.mxu0 %v1114
    %1660 = vmatpush2.bf16.msra.mxu0 %v1113
    %1661 = vmatprep.subr.bf16.mxu0 %v1104
    %1662 = vmatpush2.bf16.msra.mxu0 %v1103
    %1663 = vmatprep.subr.bf16.mxu0 %v1094
    %1664 = vmatpush2.bf16.msra.mxu0 %v1093
    %1665 = vmatprep.subr.bf16.mxu0 %v1084
    %1666 = vmatpush2.bf16.msra.mxu0 %v1083
    %1667 = vmatprep.subr.bf16.mxu0 %v1074
    %1668 = vmatpush2.bf16.msra.mxu0 %v1073
    %1669 = vmatprep.subr.bf16.mxu0 %v1064
    %1670 = vmatpush2.bf16.msra.mxu0 %v1063
    %1671 = vmatprep.subr.bf16.mxu0 %v1054
    %1672 = vmatpush2.bf16.msra.mxu0 %v1053
    %1673 = vmatprep.mubr.bf16.mxu0 %v378
    %1674 = vmatmul.mubr.bf16.gmra.mxu0 %v371
    %v1675 = vpop.f32.mrf.mxu0
    %v1676 = vadd.f32 %v333, %v1675
    %v1677 = vpop.f32.mrf.mxu0
    %v1678 = vadd.f32 %v337, %v1677
    %v1679 = vpop.f32.mrf.mxu0
    %v1680 = vpop.f32.mrf.mxu0
    %1681 = vdwg.mxu0
    %1682 = vmatprep.subr.bf16.mxu0 0
    %1683 = vmatpush1.bf16.msra.mxu0 0
    %1684 = vmatprep.subr.bf16.mxu0 0
    %1685 = vmatpush1.bf16.msra.mxu0 0
    %1686 = vmatprep.subr.bf16.mxu0 0
    %1687 = vmatpush1.bf16.msra.mxu0 0
    %1688 = vmatprep.subr.bf16.mxu0 0
    %1689 = vmatpush1.bf16.msra.mxu0 0
    %1690 = vmatprep.subr.bf16.mxu0 %v1387
    %1691 = vmatpush1.bf16.msra.mxu0 %v1384
    %1692 = vmatprep.subr.bf16.mxu0 %v1154
    %1693 = vmatpush1.bf16.msra.mxu0 %v1153
    %1694 = vmatprep.subr.bf16.mxu0 %v1144
    %1695 = vmatpush1.bf16.msra.mxu0 %v1143
    %1696 = vmatprep.subr.bf16.mxu0 %v1134
    %1697 = vmatpush1.bf16.msra.mxu0 %v1133
    %1698 = vmatprep.subr.bf16.mxu0 0
    %1699 = vmatpush2.bf16.msra.mxu0 0
    %1700 = vmatprep.subr.bf16.mxu0 0
    %1701 = vmatpush2.bf16.msra.mxu0 0
    %1702 = vmatprep.subr.bf16.mxu0 0
    %1703 = vmatpush2.bf16.msra.mxu0 0
    %1704 = vmatprep.subr.bf16.mxu0 0
    %1705 = vmatpush2.bf16.msra.mxu0 0
    %1706 = vmatprep.subr.bf16.mxu0 0
    %1707 = vmatpush2.bf16.msra.mxu0 0
    %1708 = vmatprep.subr.bf16.mxu0 0
    %1709 = vmatpush2.bf16.msra.mxu0 0
    %1710 = vmatprep.subr.bf16.mxu0 0
    %1711 = vmatpush2.bf16.msra.mxu0 0
    %1712 = vmatprep.subr.bf16.mxu0 0
    %1713 = vmatpush2.bf16.msra.mxu0 0
    %1714 = vmatprep.mubr.bf16.mxu0 0
    %1715 = vmatmul.mubr.bf16.gmra.mxu0 %v1359
    %v1716 = vpop.f32.mrf.mxu0
    %v1717 = vadd.f32 %v1676, %v1716
    %v1718 = vpop.f32.mrf.mxu0
    %v1719 = vadd.f32 %v1678, %v1718
    %v1720 = vpop.f32.mrf.mxu0
    %v1721 = vpop.f32.mrf.mxu0
    %1722 = vdwg.mxu0
    %1723 = vmatprep.subr.bf16.mxu0 %v1046
    %1724 = vmatpush1.bf16.msra.mxu0 %v1045
    %1725 = vmatprep.subr.bf16.mxu0 %v1036
    %1726 = vmatpush1.bf16.msra.mxu0 %v1035
    %1727 = vmatprep.subr.bf16.mxu0 %v1026
    %1728 = vmatpush1.bf16.msra.mxu0 %v1025
    %1729 = vmatprep.subr.bf16.mxu0 %v1016
    %1730 = vmatpush1.bf16.msra.mxu0 %v1015
    %1731 = vmatprep.subr.bf16.mxu0 %v1006
    %1732 = vmatpush1.bf16.msra.mxu0 %v1005
    %1733 = vmatprep.subr.bf16.mxu0 %v996
    %1734 = vmatpush1.bf16.msra.mxu0 %v995
    %1735 = vmatprep.subr.bf16.mxu0 %v986
    %1736 = vmatpush1.bf16.msra.mxu0 %v985
    %1737 = vmatprep.subr.bf16.mxu0 %v976
    %1738 = vmatpush1.bf16.msra.mxu0 %v975
    %1739 = vmatprep.subr.bf16.mxu0 %v1126
    %1740 = vmatpush2.bf16.msra.mxu0 %v1125
    %1741 = vmatprep.subr.bf16.mxu0 %v1116
    %1742 = vmatpush2.bf16.msra.mxu0 %v1115
    %1743 = vmatprep.subr.bf16.mxu0 %v1106
    %1744 = vmatpush2.bf16.msra.mxu0 %v1105
    %1745 = vmatprep.subr.bf16.mxu0 %v1096
    %1746 = vmatpush2.bf16.msra.mxu0 %v1095
    %1747 = vmatprep.subr.bf16.mxu0 %v1086
    %1748 = vmatpush2.bf16.msra.mxu0 %v1085
    %1749 = vmatprep.subr.bf16.mxu0 %v1076
    %1750 = vmatpush2.bf16.msra.mxu0 %v1075
    %1751 = vmatprep.subr.bf16.mxu0 %v1066
    %1752 = vmatpush2.bf16.msra.mxu0 %v1065
    %1753 = vmatprep.subr.bf16.mxu0 %v1056
    %1754 = vmatpush2.bf16.msra.mxu0 %v1055
    %1755 = vmatprep.mubr.bf16.mxu0 %v378
    %1756 = vmatmul.mubr.bf16.gmra.mxu0 %v371
    %v1757 = vpop.f32.mrf.mxu0
    %v1758 = vadd.f32 %v341, %v1757
    %v1759 = vpop.f32.mrf.mxu0
    %v1760 = vadd.f32 %v345, %v1759
    %v1761 = vpop.f32.mrf.mxu0
    %v1762 = vpop.f32.mrf.mxu0
    %1763 = vdwg.mxu0
    %1764 = vmatprep.subr.bf16.mxu0 0
    %1765 = vmatpush1.bf16.msra.mxu0 0
    %1766 = vmatprep.subr.bf16.mxu0 0
    %1767 = vmatpush1.bf16.msra.mxu0 0
    %1768 = vmatprep.subr.bf16.mxu0 0
    %1769 = vmatpush1.bf16.msra.mxu0 0
    %1770 = vmatprep.subr.bf16.mxu0 0
    %1771 = vmatpush1.bf16.msra.mxu0 0
    %1772 = vmatprep.subr.bf16.mxu0 %v1393
    %1773 = vmatpush1.bf16.msra.mxu0 %v1390
    %1774 = vmatprep.subr.bf16.mxu0 %v1156
    %1775 = vmatpush1.bf16.msra.mxu0 %v1155
    %1776 = vmatprep.subr.bf16.mxu0 %v1146
    %1777 = vmatpush1.bf16.msra.mxu0 %v1145
    %1778 = vmatprep.subr.bf16.mxu0 %v1136
    %1779 = vmatpush1.bf16.msra.mxu0 %v1135
    %1780 = vmatprep.subr.bf16.mxu0 0
    %1781 = vmatpush2.bf16.msra.mxu0 0
    %1782 = vmatprep.subr.bf16.mxu0 0
    %1783 = vmatpush2.bf16.msra.mxu0 0
    %1784 = vmatprep.subr.bf16.mxu0 0
    %1785 = vmatpush2.bf16.msra.mxu0 0
    %1786 = vmatprep.subr.bf16.mxu0 0
    %1787 = vmatpush2.bf16.msra.mxu0 0
    %1788 = vmatprep.subr.bf16.mxu0 0
    %1789 = vmatpush2.bf16.msra.mxu0 0
    %1790 = vmatprep.subr.bf16.mxu0 0
    %1791 = vmatpush2.bf16.msra.mxu0 0
    %1792 = vmatprep.subr.bf16.mxu0 0
    %1793 = vmatpush2.bf16.msra.mxu0 0
    %1794 = vmatprep.subr.bf16.mxu0 0
    %1795 = vmatpush2.bf16.msra.mxu0 0
    %1796 = vmatprep.mubr.bf16.mxu0 0
    %1797 = vmatmul.mubr.bf16.gmra.mxu0 %v1359
    %v1798 = vpop.f32.mrf.mxu0
    %v1799 = vadd.f32 %v1758, %v1798
    %v1800 = vpop.f32.mrf.mxu0
    %v1801 = vadd.f32 %v1760, %v1800
    %v1802 = vpop.f32.mrf.mxu0
    %v1803 = vpop.f32.mrf.mxu0
    %1804 = vdwg.mxu0
    %v1805 = vmul.f32 %v1471, 0.01
    %v1806 = vmul.f32 %v1473, 0.01
    %v1807 = vmul.f32 %v1553, 0.01
    %v1808 = vmul.f32 %v1555, 0.01
    %v1809 = vmul.f32 %v1635, 0.01
    %v1810 = vmul.f32 %v1637, 0.01
    %v1811 = vmul.f32 %v1717, 0.01
    %v1812 = vmul.f32 %v1719, 0.01
    %v1813 = vmul.f32 %v1799, 0.01
    %v1814 = vmul.f32 %v1801, 0.01
    %v1815 = vmax.f32 %v1471, %v1805
    %v1816 = vmax.f32 %v1473, %v1806
    %v1817 = vmax.f32 %v1553, %v1807
    %v1818 = vmax.f32 %v1555, %v1808
    %v1819 = vmax.f32 %v1635, %v1809
    %v1820 = vmax.f32 %v1637, %v1810
    %v1821 = vmax.f32 %v1717, %v1811
    %v1822 = vmax.f32 %v1719, %v1812
    %v1823 = vmax.f32 %v1799, %v1813
    %v1824 = vmax.f32 %v1801, %v1814
    %v1825 = vadd.f32 %v1815, %v1820
    %v1826 = vadd.f32 %v1816, %v1821
    %v1827 = vadd.f32 %v1817, %v1822
    %v1828 = vadd.f32 %v1818, %v1823
    %v1829 = vadd.f32 %v1819, %v1824
    %v1830 = vpack.c.bf16 %v1825, %v1825
    %v1831 = vpack.c.bf16 %v1826, %v1826
    %v1832 = vpack.c.bf16 %v1827, %v1827
    %v1833 = vpack.c.bf16 %v1828, %v1828
    %v1834 = vpack.c.bf16 %v1829, %v1829
    %v1840 = vcombine.low %v1830, %v1831
    %v1841 = vcombine.low %v1832, %v1833
    %v1843 = vunpack.c.l.s4 1966171168
    %v1844 = vunpack.c.0.s8 %v1843
    %v1845 = vlaneseq
    %v1846 = vshrl.u32 %v1845, 7
    %v1847 = vsub.s32 %v1844, %v1846
    %v1848 = vrot.slane %v1840, %v1847
    %v1850 = vunpack.c.l.s4 1966171168
    %v1851 = vunpack.c.0.s8 %v1850
    %v1852 = vlaneseq
    %v1853 = vshrl.u32 %v1852, 7
    %v1854 = vsub.s32 %v1851, %v1853
    %v1855 = vrot.slane %v1841, %v1854
    %v1857 = vunpack.c.l.s4 1966171168
    %v1858 = vunpack.c.0.s8 %v1857
    %v1859 = vlaneseq
    %v1860 = vshrl.u32 %v1859, 7
    %v1861 = vsub.s32 %v1858, %v1860
    %v1862 = vrot.slane %v1834, %v1861
    %v1863 = vcombine.low %v1848, %v1855
    %v1865 = vunpack.c.l.s4 1966171168
    %v1866 = vunpack.c.0.s8 %v1865
    %v1867 = vlaneseq
    %v1868 = vshrl.u32 %v1867, 7
    %v1869 = vsub.s32 %v1866, %v1868
    %v1870 = vrot.slane %v1863, %v1869
    %v1872 = vunpack.c.l.s4 1966171168
    %v1873 = vunpack.c.0.s8 %v1872
    %v1874 = vlaneseq
    %v1875 = vshrl.u32 %v1874, 7
    %v1876 = vsub.s32 %v1873, %v1875
    %v1877 = vrot.slane %v1862, %v1876
    %v1878 = vcombine.low %v1870, %v1877
    %1880 = vst [vmem:[#allocation2] sm:$0x1f] %v1878
    %v1881 = vld [vmem:[#allocation7 + $0x28] sm:$0xff]
    %v1882 = vld [vmem:[#allocation7 + $0x30] sm:$0xff]
    %v1883 = vld [vmem:[#allocation7 + $0x38] sm:$0xff]
    %v1884 = vld [vmem:[#allocation7 + $0x40] sm:$0xff]
    %v1885 = vld [vmem:[#allocation7 + $0x48] sm:$0xff]
    %v1886 = vld [vmem:[#allocation7 + $0xc0] sm:$0xff]
    %v1887 = vld [vmem:[#allocation7 + $0xc8] sm:$0xff]
    %v1888 = vld [vmem:[#allocation7 + $0xd0] sm:$0xff]
    %v1889 = vld [vmem:[#allocation7 + $0xd8] sm:$0xff]
    %v1890 = vld [vmem:[#allocation7 + $0xe0] sm:$0xff]
    %v1891 = vld [vmem:[#allocation7 + $0x158] sm:$0xff]
    %v1892 = vld [vmem:[#allocation7 + $0x160] sm:$0xff]
    %v1893 = vld [vmem:[#allocation7 + $0x168] sm:$0xff]
    %v1894 = vld [vmem:[#allocation7 + $0x170] sm:$0xff]
    %v1895 = vld [vmem:[#allocation7 + $0x178] sm:$0xff]
    %v1896 = vld [vmem:[#allocation7 + $0x1f0] sm:$0xff]
    %v1897 = vld [vmem:[#allocation7 + $0x1f8] sm:$0xff]
    %v1898 = vld [vmem:[#allocation7 + $0x200] sm:$0xff]
    %v1899 = vld [vmem:[#allocation7 + $0x208] sm:$0xff]
    %v1900 = vld [vmem:[#allocation7 + $0x210] sm:$0xff]
    %v1901 = vld [vmem:[#allocation7 + $0x288] sm:$0xff]
    %v1902 = vld [vmem:[#allocation7 + $0x290] sm:$0xff]
    %v1903 = vld [vmem:[#allocation7 + $0x298] sm:$0xff]
    %v1904 = vld [vmem:[#allocation7 + $0x2a0] sm:$0xff]
    %v1905 = vld [vmem:[#allocation7 + $0x2a8] sm:$0xff]
    %v1906 = vld [vmem:[#allocation7 + $0x320] sm:$0xff]
    %v1907 = vld [vmem:[#allocation7 + $0x328] sm:$0xff]
    %v1908 = vld [vmem:[#allocation7 + $0x330] sm:$0xff]
    %v1909 = vld [vmem:[#allocation7 + $0x338] sm:$0xff]
    %v1910 = vld [vmem:[#allocation7 + $0x340] sm:$0xff]
    %v1911 = vld [vmem:[#allocation7 + $0x3b8] sm:$0xff]
    %v1912 = vld [vmem:[#allocation7 + $0x3c0] sm:$0xff]
    %v1913 = vld [vmem:[#allocation7 + $0x3c8] sm:$0xff]
    %v1914 = vld [vmem:[#allocation7 + $0x3d0] sm:$0xff]
    %v1915 = vld [vmem:[#allocation7 + $0x3d8] sm:$0xff]
    %v1916 = vld [vmem:[#allocation7 + $0x450] sm:$0xff]
    %v1917 = vld [vmem:[#allocation7 + $0x458] sm:$0xff]
    %v1918 = vld [vmem:[#allocation7 + $0x460] sm:$0xff]
    %v1919 = vld [vmem:[#allocation7 + $0x468] sm:$0xff]
    %v1920 = vld [vmem:[#allocation7 + $0x470] sm:$0xff]
    %v1921 = vld [vmem:[#allocation7 + $0x4e8] sm:$0xff]
    %v1922 = vld [vmem:[#allocation7 + $0x4f0] sm:$0xff]
    %v1923 = vld [vmem:[#allocation7 + $0x4f8] sm:$0xff]
    %v1924 = vld [vmem:[#allocation7 + $0x500] sm:$0xff]
    %v1925 = vld [vmem:[#allocation7 + $0x508] sm:$0xff]
    %v1926 = vld [vmem:[#allocation7 + $0x580] sm:$0xff]
    %v1927 = vld [vmem:[#allocation7 + $0x588] sm:$0xff]
    %v1928 = vld [vmem:[#allocation7 + $0x590] sm:$0xff]
    %v1929 = vld [vmem:[#allocation7 + $0x598] sm:$0xff]
    %v1930 = vld [vmem:[#allocation7 + $0x5a0] sm:$0xff]
    %v1931 = vld [vmem:[#allocation7 + $0x618] sm:$0xff]
    %v1932 = vld [vmem:[#allocation7 + $0x620] sm:$0xff]
    %v1933 = vld [vmem:[#allocation7 + $0x628] sm:$0xff]
    %v1934 = vld [vmem:[#allocation7 + $0x630] sm:$0xff]
    %v1935 = vld [vmem:[#allocation7 + $0x638] sm:$0xff]
    %v1936 = vld [vmem:[#allocation7 + $0x6b0] sm:$0xff]
    %v1937 = vld [vmem:[#allocation7 + $0x6b8] sm:$0xff]
    %v1938 = vld [vmem:[#allocation7 + $0x6c0] sm:$0xff]
    %v1939 = vld [vmem:[#allocation7 + $0x6c8] sm:$0xff]
    %v1940 = vld [vmem:[#allocation7 + $0x6d0] sm:$0xff]
    %v1941 = vld [vmem:[#allocation7 + $0x748] sm:$0xff]
    %v1942 = vld [vmem:[#allocation7 + $0x750] sm:$0xff]
    %v1943 = vld [vmem:[#allocation7 + $0x758] sm:$0xff]
    %v1944 = vld [vmem:[#allocation7 + $0x760] sm:$0xff]
    %v1945 = vld [vmem:[#allocation7 + $0x768] sm:$0xff]
    %v1946 = vld [vmem:[#allocation7 + $0x7e0] sm:$0xff]
    %v1947 = vld [vmem:[#allocation7 + $0x7e8] sm:$0xff]
    %v1948 = vld [vmem:[#allocation7 + $0x7f0] sm:$0xff]
    %v1949 = vld [vmem:[#allocation7 + $0x7f8] sm:$0xff]
    %v1950 = vld [vmem:[#allocation7 + $0x800] sm:$0xff]
    %v1951 = vld [vmem:[#allocation7 + $0x878] sm:$0xff]
    %v1952 = vld [vmem:[#allocation7 + $0x880] sm:$0xff]
    %v1953 = vld [vmem:[#allocation7 + $0x888] sm:$0xff]
    %v1954 = vld [vmem:[#allocation7 + $0x890] sm:$0xff]
    %v1955 = vld [vmem:[#allocation7 + $0x898] sm:$0xff]
    %v1956 = vld [vmem:[#allocation7 + $0x910] sm:$0xff]
    %v1957 = vld [vmem:[#allocation7 + $0x918] sm:$0xff]
    %v1958 = vld [vmem:[#allocation7 + $0x920] sm:$0xff]
    %v1959 = vld [vmem:[#allocation7 + $0x928] sm:$0xff]
    %v1960 = vld [vmem:[#allocation7 + $0x930] sm:$0xff]
    %v1961 = vld [vmem:[#allocation7 + $0x9a8] sm:$0xff]
    %v1962 = vld [vmem:[#allocation7 + $0x9b0] sm:$0xff]
    %v1963 = vld [vmem:[#allocation7 + $0x9b8] sm:$0xff]
    %v1964 = vld [vmem:[#allocation7 + $0x9c0] sm:$0xff]
    %v1965 = vld [vmem:[#allocation7 + $0x9c8] sm:$0xff]
    %v1966 = vld [vmem:[#allocation7 + $0xa40] sm:$0xff]
    %v1967 = vld [vmem:[#allocation7 + $0xa48] sm:$0xff]
    %v1968 = vld [vmem:[#allocation7 + $0xa50] sm:$0xff]
    %v1969 = vld [vmem:[#allocation7 + $0xa58] sm:$0xff]
    %v1970 = vld [vmem:[#allocation7 + $0xa60] sm:$0xff]
    %v1971 = vld [vmem:[#allocation7 + $0xad8] sm:$0xff]
    %v1972 = vld [vmem:[#allocation7 + $0xae0] sm:$0xff]
    %v1973 = vld [vmem:[#allocation7 + $0xae8] sm:$0xff]
    %v1974 = vld [vmem:[#allocation7 + $0xaf0] sm:$0xff]
    %v1975 = vld [vmem:[#allocation7 + $0xaf8] sm:$0xff]
    %v1976 = vld [vmem:[#allocation7 + $0xb70] sm:$0xff]
    %v1977 = vld [vmem:[#allocation7 + $0xb78] sm:$0xff]
    %v1978 = vld [vmem:[#allocation7 + $0xb80] sm:$0xff]
    %v1979 = vld [vmem:[#allocation7 + $0xb88] sm:$0xff]
    %v1980 = vld [vmem:[#allocation7 + $0xb90] sm:$0xff]
    %v1981 = vld [vmem:[#allocation7 + $0xc08] sm:$0xff]
    %v1982 = vld [vmem:[#allocation7 + $0xc10] sm:$0xff]
    %v1983 = vld [vmem:[#allocation7 + $0xc18] sm:$0xff]
    %v1984 = vld [vmem:[#allocation7 + $0xc20] sm:$0xff]
    %v1985 = vld [vmem:[#allocation7 + $0xc28] sm:$0xff]
    %v1986 = vld [vmem:[#allocation7 + $0xca0] sm:$0xff]
    %v1987 = vld [vmem:[#allocation7 + $0xca8] sm:$0xff]
    %v1988 = vld [vmem:[#allocation7 + $0xcb0] sm:$0xff]
    %v1989 = vld [vmem:[#allocation7 + $0xcb8] sm:$0xff]
    %v1990 = vld [vmem:[#allocation7 + $0xcc0] sm:$0xff]
    %v1991 = vld [vmem:[#allocation7 + $0xd38] sm:$0xff]
    %v1992 = vld [vmem:[#allocation7 + $0xd40] sm:$0xff]
    %v1993 = vld [vmem:[#allocation7 + $0xd48] sm:$0xff]
    %v1994 = vld [vmem:[#allocation7 + $0xd50] sm:$0xff]
    %v1995 = vld [vmem:[#allocation7 + $0xd58] sm:$0xff]
    %v1996 = vld [vmem:[#allocation7 + $0xdd0] sm:$0xff]
    %v1997 = vld [vmem:[#allocation7 + $0xdd8] sm:$0xff]
    %v1998 = vld [vmem:[#allocation7 + $0xde0] sm:$0xff]
    %v1999 = vld [vmem:[#allocation7 + $0xde8] sm:$0xff]
    %v2000 = vld [vmem:[#allocation7 + $0xdf0] sm:$0xff]
    %v2001 = vld [vmem:[#allocation7 + $0xe68] sm:$0xff]
    %v2002 = vld [vmem:[#allocation7 + $0xe70] sm:$0xff]
    %v2003 = vld [vmem:[#allocation7 + $0xe78] sm:$0xff]
    %v2004 = vld [vmem:[#allocation7 + $0xe80] sm:$0xff]
    %v2005 = vld [vmem:[#allocation7 + $0xe88] sm:$0xff]
    %v2006 = vld [vmem:[#allocation7 + $0xf00] sm:$0xff]
    %v2007 = vld [vmem:[#allocation7 + $0xf08] sm:$0xff]
    %v2008 = vld [vmem:[#allocation7 + $0xf10] sm:$0xff]
    %v2009 = vld [vmem:[#allocation7 + $0xf18] sm:$0xff]
    %v2010 = vld [vmem:[#allocation7 + $0xf20] sm:$0xff]
    %v2011 = vld [vmem:[#allocation7 + $0xf98] sm:$0xff]
    %v2012 = vld [vmem:[#allocation7 + $0xfa0] sm:$0xff]
    %v2013 = vld [vmem:[#allocation7 + $0xfa8] sm:$0xff]
    %v2014 = vld [vmem:[#allocation7 + $0xfb0] sm:$0xff]
    %v2015 = vld [vmem:[#allocation7 + $0xfb8] sm:$0xff]
    %v2016 = vld [vmem:[#allocation7 + $0x1030] sm:$0xff]
    %v2017 = vld [vmem:[#allocation7 + $0x1038] sm:$0xff]
    %v2018 = vld [vmem:[#allocation7 + $0x1040] sm:$0xff]
    %v2019 = vld [vmem:[#allocation7 + $0x1048] sm:$0xff]
    %v2020 = vld [vmem:[#allocation7 + $0x1050] sm:$0xff]
    %v2021 = vld [vmem:[#allocation7 + $0x10c8] sm:$0xff]
    %v2022 = vld [vmem:[#allocation7 + $0x10d0] sm:$0xff]
    %v2023 = vld [vmem:[#allocation7 + $0x10d8] sm:$0xff]
    %v2024 = vld [vmem:[#allocation7 + $0x10e0] sm:$0xff]
    %v2025 = vld [vmem:[#allocation7 + $0x10e8] sm:$0xff]
    %v2026 = vld [vmem:[#allocation7 + $0x1160] sm:$0xff]
    %v2027 = vld [vmem:[#allocation7 + $0x1168] sm:$0xff]
    %v2028 = vld [vmem:[#allocation7 + $0x1170] sm:$0xff]
    %v2029 = vld [vmem:[#allocation7 + $0x1178] sm:$0xff]
    %v2030 = vld [vmem:[#allocation7 + $0x1180] sm:$0xff]
    %v2031 = vld [vmem:[#allocation7 + $0x11f8] sm:$0xff]
    %v2032 = vld [vmem:[#allocation7 + $0x1200] sm:$0xff]
    %v2033 = vld [vmem:[#allocation7 + $0x1208] sm:$0xff]
    %v2034 = vld [vmem:[#allocation7 + $0x1210] sm:$0xff]
    %v2035 = vld [vmem:[#allocation7 + $0x1218] sm:$0xff]
    %v2036 = vld [vmem:[#allocation7 + $0x1290] sm:$0xff]
    %v2037 = vld [vmem:[#allocation7 + $0x1298] sm:$0xff]
    %v2038 = vld [vmem:[#allocation7 + $0x12a0] sm:$0xff]
    %v2039 = vld [vmem:[#allocation7 + $0x12a8] sm:$0xff]
    %v2040 = vld [vmem:[#allocation7 + $0x12b0] sm:$0xff]
    %v2041 = vld [vmem:[#allocation7 + $0x1328] sm:$0xff]
    %v2042 = vld [vmem:[#allocation7 + $0x1330] sm:$0xff]
    %v2043 = vld [vmem:[#allocation7 + $0x1338] sm:$0xff]
    %v2044 = vld [vmem:[#allocation7 + $0x1340] sm:$0xff]
    %v2045 = vld [vmem:[#allocation7 + $0x1348] sm:$0xff]
    %v2046 = vld [vmem:[#allocation7 + $0x13c0] sm:$0xff]
    %v2047 = vld [vmem:[#allocation7 + $0x13c8] sm:$0xff]
    %v2048 = vld [vmem:[#allocation7 + $0x13d0] sm:$0xff]
    %v2049 = vld [vmem:[#allocation7 + $0x13d8] sm:$0xff]
    %v2050 = vld [vmem:[#allocation7 + $0x13e0] sm:$0xff]
    %v2051 = vld [vmem:[#allocation7 + $0x1458] sm:$0xff]
    %v2052 = vld [vmem:[#allocation7 + $0x1460] sm:$0xff]
    %v2053 = vld [vmem:[#allocation7 + $0x1468] sm:$0xff]
    %v2054 = vld [vmem:[#allocation7 + $0x1470] sm:$0xff]
    %v2055 = vld [vmem:[#allocation7 + $0x1478] sm:$0xff]
    %v2056 = vld [vmem:[#allocation7 + $0x14f0] sm:$0xff]
    %v2057 = vld [vmem:[#allocation7 + $0x14f8] sm:$0xff]
    %v2058 = vld [vmem:[#allocation7 + $0x1500] sm:$0xff]
    %v2059 = vld [vmem:[#allocation7 + $0x1508] sm:$0xff]
    %v2060 = vld [vmem:[#allocation7 + $0x1510] sm:$0xff]
    %v2061 = vld [vmem:[#allocation7 + $0x1588] sm:$0xff]
    %v2062 = vld [vmem:[#allocation7 + $0x1590] sm:$0xff]
    %v2063 = vld [vmem:[#allocation7 + $0x1598] sm:$0xff]
    %v2064 = vld [vmem:[#allocation7 + $0x15a0] sm:$0xff]
    %v2065 = vld [vmem:[#allocation7 + $0x15a8] sm:$0xff]
    %v2066 = vld [vmem:[#allocation7 + $0x1620] sm:$0xff]
    %v2067 = vld [vmem:[#allocation7 + $0x1628] sm:$0xff]
    %v2068 = vld [vmem:[#allocation7 + $0x1630] sm:$0xff]
    %v2069 = vld [vmem:[#allocation7 + $0x1638] sm:$0xff]
    %v2070 = vld [vmem:[#allocation7 + $0x1640] sm:$0xff]
    %v2071 = vld [vmem:[#allocation7 + $0x16b8] sm:$0x33]
    %v2072 = vld [vmem:[#allocation7 + $0x16c0] sm:$0x33]
    %v2073 = vld [vmem:[#allocation7 + $0x16c8] sm:$0x33]
    %v2074 = vld [vmem:[#allocation7 + $0x16d0] sm:$0x33]
    %v2075 = vld [vmem:[#allocation7 + $0x16d8] sm:$0x33]
    %v2076 = vld [vmem:[#allocation9 + $0xa] sm:$0xff]
    %v2077 = vld [vmem:[#allocation9 + $0x12] sm:$0x3]
    %v2080 = vlaneseq
    %v2081 = vshrl.u32 %v2080, 7
    %v2082 = vsub.s32 0, %v2081
    %v2083 = vrot.slane %v2076, %v2082
    %v2084 = vlaneseq
    %v2085 = vshrl.u32 %v2084, 7
    %v2086 = vsub.s32 1, %v2085
    %v2087 = vrot.slane %v2076, %v2086
    %v2088 = vlaneseq
    %v2089 = vshrl.u32 %v2088, 7
    %v2090 = vsub.s32 2, %v2089
    %v2091 = vrot.slane %v2076, %v2090
    %v2092 = vlaneseq
    %v2093 = vshrl.u32 %v2092, 7
    %v2094 = vsub.s32 3, %v2093
    %v2095 = vrot.slane %v2076, %v2094
    %v2096 = vlaneseq
    %v2097 = vshrl.u32 %v2096, 7
    %v2098 = vsub.s32 4, %v2097
    %v2099 = vrot.slane %v2076, %v2098
    %v2100 = vlaneseq
    %v2101 = vshrl.u32 %v2100, 7
    %v2102 = vsub.s32 5, %v2101
    %v2103 = vrot.slane %v2076, %v2102
    %v2104 = vlaneseq
    %v2105 = vshrl.u32 %v2104, 7
    %v2106 = vsub.s32 6, %v2105
    %v2107 = vrot.slane %v2076, %v2106
    %v2108 = vlaneseq
    %v2109 = vshrl.u32 %v2108, 7
    %v2110 = vsub.s32 7, %v2109
    %v2111 = vrot.slane %v2076, %v2110
    %v2112 = vlaneseq
    %v2113 = vshrl.u32 %v2112, 7
    %v2114 = vsub.s32 0, %v2113
    %v2115 = vrot.slane %v2077, %v2114
    %v2116 = vlaneseq
    %v2117 = vshrl.u32 %v2116, 7
    %v2118 = vsub.s32 1, %v2117
    %v2119 = vrot.slane %v2077, %v2118
    %v2325 = vunpack.c.l.b16 %v1881
    %v2326 = vunpack.c.h.b16 %v1881
    %v2327 = vunpack.c.l.b16 %v1882
    %v2328 = vunpack.c.h.b16 %v1882
    %v2329 = vunpack.c.l.b16 %v1883
    %v2330 = vunpack.c.h.b16 %v1883
    %v2331 = vunpack.c.l.b16 %v1884
    %v2332 = vunpack.c.h.b16 %v1884
    %v2333 = vunpack.c.l.b16 %v1885
    %v2334 = vunpack.c.h.b16 %v1885
    %v2335 = vunpack.c.l.b16 %v1886
    %v2336 = vunpack.c.h.b16 %v1886
    %v2337 = vunpack.c.l.b16 %v1887
    %v2338 = vunpack.c.h.b16 %v1887
    %v2339 = vunpack.c.l.b16 %v1888
    %v2340 = vunpack.c.h.b16 %v1888
    %v2341 = vunpack.c.l.b16 %v1889
    %v2342 = vunpack.c.h.b16 %v1889
    %v2343 = vunpack.c.l.b16 %v1890
    %v2344 = vunpack.c.h.b16 %v1890
    %v2345 = vunpack.c.l.b16 %v1891
    %v2346 = vunpack.c.h.b16 %v1891
    %v2347 = vunpack.c.l.b16 %v1892
    %v2348 = vunpack.c.h.b16 %v1892
    %v2349 = vunpack.c.l.b16 %v1893
    %v2350 = vunpack.c.h.b16 %v1893
    %v2351 = vunpack.c.l.b16 %v1894
    %v2352 = vunpack.c.h.b16 %v1894
    %v2353 = vunpack.c.l.b16 %v1895
    %v2354 = vunpack.c.h.b16 %v1895
    %v2355 = vunpack.c.l.b16 %v1896
    %v2356 = vunpack.c.h.b16 %v1896
    %v2357 = vunpack.c.l.b16 %v1897
    %v2358 = vunpack.c.h.b16 %v1897
    %v2359 = vunpack.c.l.b16 %v1898
    %v2360 = vunpack.c.h.b16 %v1898
    %v2361 = vunpack.c.l.b16 %v1899
    %v2362 = vunpack.c.h.b16 %v1899
    %v2363 = vunpack.c.l.b16 %v1900
    %v2364 = vunpack.c.h.b16 %v1900
    %v2365 = vunpack.c.l.b16 %v1901
    %v2366 = vunpack.c.h.b16 %v1901
    %v2367 = vunpack.c.l.b16 %v1902
    %v2368 = vunpack.c.h.b16 %v1902
    %v2369 = vunpack.c.l.b16 %v1903
    %v2370 = vunpack.c.h.b16 %v1903
    %v2371 = vunpack.c.l.b16 %v1904
    %v2372 = vunpack.c.h.b16 %v1904
    %v2373 = vunpack.c.l.b16 %v1905
    %v2374 = vunpack.c.h.b16 %v1905
    %v2375 = vunpack.c.l.b16 %v1906
    %v2376 = vunpack.c.h.b16 %v1906
    %v2377 = vunpack.c.l.b16 %v1907
    %v2378 = vunpack.c.h.b16 %v1907
    %v2379 = vunpack.c.l.b16 %v1908
    %v2380 = vunpack.c.h.b16 %v1908
    %v2381 = vunpack.c.l.b16 %v1909
    %v2382 = vunpack.c.h.b16 %v1909
    %v2383 = vunpack.c.l.b16 %v1910
    %v2384 = vunpack.c.h.b16 %v1910
    %v2385 = vunpack.c.l.b16 %v1911
    %v2386 = vunpack.c.h.b16 %v1911
    %v2387 = vunpack.c.l.b16 %v1912
    %v2388 = vunpack.c.h.b16 %v1912
    %v2389 = vunpack.c.l.b16 %v1913
    %v2390 = vunpack.c.h.b16 %v1913
    %v2391 = vunpack.c.l.b16 %v1914
    %v2392 = vunpack.c.h.b16 %v1914
    %v2393 = vunpack.c.l.b16 %v1915
    %v2394 = vunpack.c.h.b16 %v1915
    %v2395 = vunpack.c.l.b16 %v1916
    %v2396 = vunpack.c.h.b16 %v1916
    %v2397 = vunpack.c.l.b16 %v1917
    %v2398 = vunpack.c.h.b16 %v1917
    %v2399 = vunpack.c.l.b16 %v1918
    %v2400 = vunpack.c.h.b16 %v1918
    %v2401 = vunpack.c.l.b16 %v1919
    %v2402 = vunpack.c.h.b16 %v1919
    %v2403 = vunpack.c.l.b16 %v1920
    %v2404 = vunpack.c.h.b16 %v1920
    %v2405 = vunpack.c.l.b16 %v1921
    %v2406 = vunpack.c.h.b16 %v1921
    %v2407 = vunpack.c.l.b16 %v1922
    %v2408 = vunpack.c.h.b16 %v1922
    %v2409 = vunpack.c.l.b16 %v1923
    %v2410 = vunpack.c.h.b16 %v1923
    %v2411 = vunpack.c.l.b16 %v1924
    %v2412 = vunpack.c.h.b16 %v1924
    %v2413 = vunpack.c.l.b16 %v1925
    %v2414 = vunpack.c.h.b16 %v1925
    %v2415 = vunpack.c.l.b16 %v1926
    %v2416 = vunpack.c.h.b16 %v1926
    %v2417 = vunpack.c.l.b16 %v1927
    %v2418 = vunpack.c.h.b16 %v1927
    %v2419 = vunpack.c.l.b16 %v1928
    %v2420 = vunpack.c.h.b16 %v1928
    %v2421 = vunpack.c.l.b16 %v1929
    %v2422 = vunpack.c.h.b16 %v1929
    %v2423 = vunpack.c.l.b16 %v1930
    %v2424 = vunpack.c.h.b16 %v1930
    %v2425 = vunpack.c.l.b16 %v1931
    %v2426 = vunpack.c.h.b16 %v1931
    %v2427 = vunpack.c.l.b16 %v1932
    %v2428 = vunpack.c.h.b16 %v1932
    %v2429 = vunpack.c.l.b16 %v1933
    %v2430 = vunpack.c.h.b16 %v1933
    %v2431 = vunpack.c.l.b16 %v1934
    %v2432 = vunpack.c.h.b16 %v1934
    %v2433 = vunpack.c.l.b16 %v1935
    %v2434 = vunpack.c.h.b16 %v1935
    %v2435 = vunpack.c.l.b16 %v1936
    %v2436 = vunpack.c.h.b16 %v1936
    %v2437 = vunpack.c.l.b16 %v1937
    %v2438 = vunpack.c.h.b16 %v1937
    %v2439 = vunpack.c.l.b16 %v1938
    %v2440 = vunpack.c.h.b16 %v1938
    %v2441 = vunpack.c.l.b16 %v1939
    %v2442 = vunpack.c.h.b16 %v1939
    %v2443 = vunpack.c.l.b16 %v1940
    %v2444 = vunpack.c.h.b16 %v1940
    %v2445 = vunpack.c.l.b16 %v1941
    %v2446 = vunpack.c.h.b16 %v1941
    %v2447 = vunpack.c.l.b16 %v1942
    %v2448 = vunpack.c.h.b16 %v1942
    %v2449 = vunpack.c.l.b16 %v1943
    %v2450 = vunpack.c.h.b16 %v1943
    %v2451 = vunpack.c.l.b16 %v1944
    %v2452 = vunpack.c.h.b16 %v1944
    %v2453 = vunpack.c.l.b16 %v1945
    %v2454 = vunpack.c.h.b16 %v1945
    %v2455 = vunpack.c.l.b16 %v1946
    %v2456 = vunpack.c.h.b16 %v1946
    %v2457 = vunpack.c.l.b16 %v1947
    %v2458 = vunpack.c.h.b16 %v1947
    %v2459 = vunpack.c.l.b16 %v1948
    %v2460 = vunpack.c.h.b16 %v1948
    %v2461 = vunpack.c.l.b16 %v1949
    %v2462 = vunpack.c.h.b16 %v1949
    %v2463 = vunpack.c.l.b16 %v1950
    %v2464 = vunpack.c.h.b16 %v1950
    %v2465 = vunpack.c.l.b16 %v1951
    %v2466 = vunpack.c.h.b16 %v1951
    %v2467 = vunpack.c.l.b16 %v1952
    %v2468 = vunpack.c.h.b16 %v1952
    %v2469 = vunpack.c.l.b16 %v1953
    %v2470 = vunpack.c.h.b16 %v1953
    %v2471 = vunpack.c.l.b16 %v1954
    %v2472 = vunpack.c.h.b16 %v1954
    %v2473 = vunpack.c.l.b16 %v1955
    %v2474 = vunpack.c.h.b16 %v1955
    %v2475 = vunpack.c.l.b16 %v1956
    %v2476 = vunpack.c.h.b16 %v1956
    %v2477 = vunpack.c.l.b16 %v1957
    %v2478 = vunpack.c.h.b16 %v1957
    %v2479 = vunpack.c.l.b16 %v1958
    %v2480 = vunpack.c.h.b16 %v1958
    %v2481 = vunpack.c.l.b16 %v1959
    %v2482 = vunpack.c.h.b16 %v1959
    %v2483 = vunpack.c.l.b16 %v1960
    %v2484 = vunpack.c.h.b16 %v1960
    %v2485 = vunpack.c.l.b16 %v1961
    %v2486 = vunpack.c.h.b16 %v1961
    %v2487 = vunpack.c.l.b16 %v1962
    %v2488 = vunpack.c.h.b16 %v1962
    %v2489 = vunpack.c.l.b16 %v1963
    %v2490 = vunpack.c.h.b16 %v1963
    %v2491 = vunpack.c.l.b16 %v1964
    %v2492 = vunpack.c.h.b16 %v1964
    %v2493 = vunpack.c.l.b16 %v1965
    %v2494 = vunpack.c.h.b16 %v1965
    %v2495 = vunpack.c.l.b16 %v1966
    %v2496 = vunpack.c.h.b16 %v1966
    %v2497 = vunpack.c.l.b16 %v1967
    %v2498 = vunpack.c.h.b16 %v1967
    %v2499 = vunpack.c.l.b16 %v1968
    %v2500 = vunpack.c.h.b16 %v1968
    %v2501 = vunpack.c.l.b16 %v1969
    %v2502 = vunpack.c.h.b16 %v1969
    %v2503 = vunpack.c.l.b16 %v1970
    %v2504 = vunpack.c.h.b16 %v1970
    %v2505 = vunpack.c.l.b16 %v1971
    %v2506 = vunpack.c.h.b16 %v1971
    %v2507 = vunpack.c.l.b16 %v1972
    %v2508 = vunpack.c.h.b16 %v1972
    %v2509 = vunpack.c.l.b16 %v1973
    %v2510 = vunpack.c.h.b16 %v1973
    %v2511 = vunpack.c.l.b16 %v1974
    %v2512 = vunpack.c.h.b16 %v1974
    %v2513 = vunpack.c.l.b16 %v1975
    %v2514 = vunpack.c.h.b16 %v1975
    %v2515 = vunpack.c.l.b16 %v1976
    %v2516 = vunpack.c.h.b16 %v1976
    %v2517 = vunpack.c.l.b16 %v1977
    %v2518 = vunpack.c.h.b16 %v1977
    %v2519 = vunpack.c.l.b16 %v1978
    %v2520 = vunpack.c.h.b16 %v1978
    %v2521 = vunpack.c.l.b16 %v1979
    %v2522 = vunpack.c.h.b16 %v1979
    %v2523 = vunpack.c.l.b16 %v1980
    %v2524 = vunpack.c.h.b16 %v1980
    %v2525 = vunpack.c.l.b16 %v1981
    %v2526 = vunpack.c.h.b16 %v1981
    %v2527 = vunpack.c.l.b16 %v1982
    %v2528 = vunpack.c.h.b16 %v1982
    %v2529 = vunpack.c.l.b16 %v1983
    %v2530 = vunpack.c.h.b16 %v1983
    %v2531 = vunpack.c.l.b16 %v1984
    %v2532 = vunpack.c.h.b16 %v1984
    %v2533 = vunpack.c.l.b16 %v1985
    %v2534 = vunpack.c.h.b16 %v1985
    %v2535 = vunpack.c.l.b16 %v1986
    %v2536 = vunpack.c.h.b16 %v1986
    %v2537 = vunpack.c.l.b16 %v1987
    %v2538 = vunpack.c.h.b16 %v1987
    %v2539 = vunpack.c.l.b16 %v1988
    %v2540 = vunpack.c.h.b16 %v1988
    %v2541 = vunpack.c.l.b16 %v1989
    %v2542 = vunpack.c.h.b16 %v1989
    %v2543 = vunpack.c.l.b16 %v1990
    %v2544 = vunpack.c.h.b16 %v1990
    %v2545 = vunpack.c.l.b16 %v1991
    %v2546 = vunpack.c.h.b16 %v1991
    %v2547 = vunpack.c.l.b16 %v1992
    %v2548 = vunpack.c.h.b16 %v1992
    %v2549 = vunpack.c.l.b16 %v1993
    %v2550 = vunpack.c.h.b16 %v1993
    %v2551 = vunpack.c.l.b16 %v1994
    %v2552 = vunpack.c.h.b16 %v1994
    %v2553 = vunpack.c.l.b16 %v1995
    %v2554 = vunpack.c.h.b16 %v1995
    %v2555 = vunpack.c.l.b16 %v1996
    %v2556 = vunpack.c.h.b16 %v1996
    %v2557 = vunpack.c.l.b16 %v1997
    %v2558 = vunpack.c.h.b16 %v1997
    %v2559 = vunpack.c.l.b16 %v1998
    %v2560 = vunpack.c.h.b16 %v1998
    %v2561 = vunpack.c.l.b16 %v1999
    %v2562 = vunpack.c.h.b16 %v1999
    %v2563 = vunpack.c.l.b16 %v2000
    %v2564 = vunpack.c.h.b16 %v2000
    %v2565 = vunpack.c.l.b16 %v2001
    %v2566 = vunpack.c.h.b16 %v2001
    %v2567 = vunpack.c.l.b16 %v2002
    %v2568 = vunpack.c.h.b16 %v2002
    %v2569 = vunpack.c.l.b16 %v2003
    %v2570 = vunpack.c.h.b16 %v2003
    %v2571 = vunpack.c.l.b16 %v2004
    %v2572 = vunpack.c.h.b16 %v2004
    %v2573 = vunpack.c.l.b16 %v2005
    %v2574 = vunpack.c.h.b16 %v2005
    %v2575 = vunpack.c.l.b16 %v2006
    %v2576 = vunpack.c.h.b16 %v2006
    %v2577 = vunpack.c.l.b16 %v2007
    %v2578 = vunpack.c.h.b16 %v2007
    %v2579 = vunpack.c.l.b16 %v2008
    %v2580 = vunpack.c.h.b16 %v2008
    %v2581 = vunpack.c.l.b16 %v2009
    %v2582 = vunpack.c.h.b16 %v2009
    %v2583 = vunpack.c.l.b16 %v2010
    %v2584 = vunpack.c.h.b16 %v2010
    %v2585 = vunpack.c.l.b16 %v2011
    %v2586 = vunpack.c.h.b16 %v2011
    %v2587 = vunpack.c.l.b16 %v2012
    %v2588 = vunpack.c.h.b16 %v2012
    %v2589 = vunpack.c.l.b16 %v2013
    %v2590 = vunpack.c.h.b16 %v2013
    %v2591 = vunpack.c.l.b16 %v2014
    %v2592 = vunpack.c.h.b16 %v2014
    %v2593 = vunpack.c.l.b16 %v2015
    %v2594 = vunpack.c.h.b16 %v2015
    %v2595 = vunpack.c.l.b16 %v2016
    %v2596 = vunpack.c.h.b16 %v2016
    %v2597 = vunpack.c.l.b16 %v2017
    %v2598 = vunpack.c.h.b16 %v2017
    %v2599 = vunpack.c.l.b16 %v2018
    %v2600 = vunpack.c.h.b16 %v2018
    %v2601 = vunpack.c.l.b16 %v2019
    %v2602 = vunpack.c.h.b16 %v2019
    %v2603 = vunpack.c.l.b16 %v2020
    %v2604 = vunpack.c.h.b16 %v2020
    %v2605 = vunpack.c.l.b16 %v2021
    %v2606 = vunpack.c.h.b16 %v2021
    %v2607 = vunpack.c.l.b16 %v2022
    %v2608 = vunpack.c.h.b16 %v2022
    %v2609 = vunpack.c.l.b16 %v2023
    %v2610 = vunpack.c.h.b16 %v2023
    %v2611 = vunpack.c.l.b16 %v2024
    %v2612 = vunpack.c.h.b16 %v2024
    %v2613 = vunpack.c.l.b16 %v2025
    %v2614 = vunpack.c.h.b16 %v2025
    %v2615 = vunpack.c.l.b16 %v2026
    %v2616 = vunpack.c.h.b16 %v2026
    %v2617 = vunpack.c.l.b16 %v2027
    %v2618 = vunpack.c.h.b16 %v2027
    %v2619 = vunpack.c.l.b16 %v2028
    %v2620 = vunpack.c.h.b16 %v2028
    %v2621 = vunpack.c.l.b16 %v2029
    %v2622 = vunpack.c.h.b16 %v2029
    %v2623 = vunpack.c.l.b16 %v2030
    %v2624 = vunpack.c.h.b16 %v2030
    %v2625 = vunpack.c.l.b16 %v2031
    %v2626 = vunpack.c.h.b16 %v2031
    %v2627 = vunpack.c.l.b16 %v2032
    %v2628 = vunpack.c.h.b16 %v2032
    %v2629 = vunpack.c.l.b16 %v2033
    %v2630 = vunpack.c.h.b16 %v2033
    %v2631 = vunpack.c.l.b16 %v2034
    %v2632 = vunpack.c.h.b16 %v2034
    %v2633 = vunpack.c.l.b16 %v2035
    %v2634 = vunpack.c.h.b16 %v2035
    %v2635 = vunpack.c.l.b16 %v2036
    %v2636 = vunpack.c.h.b16 %v2036
    %v2637 = vunpack.c.l.b16 %v2037
    %v2638 = vunpack.c.h.b16 %v2037
    %v2639 = vunpack.c.l.b16 %v2038
    %v2640 = vunpack.c.h.b16 %v2038
    %v2641 = vunpack.c.l.b16 %v2039
    %v2642 = vunpack.c.h.b16 %v2039
    %v2643 = vunpack.c.l.b16 %v2040
    %v2644 = vunpack.c.h.b16 %v2040
    %v2645 = vunpack.c.l.b16 %v2041
    %v2646 = vunpack.c.h.b16 %v2041
    %v2647 = vunpack.c.l.b16 %v2042
    %v2648 = vunpack.c.h.b16 %v2042
    %v2649 = vunpack.c.l.b16 %v2043
    %v2650 = vunpack.c.h.b16 %v2043
    %v2651 = vunpack.c.l.b16 %v2044
    %v2652 = vunpack.c.h.b16 %v2044
    %v2653 = vunpack.c.l.b16 %v2045
    %v2654 = vunpack.c.h.b16 %v2045
    %v2655 = vunpack.c.l.b16 %v2046
    %v2656 = vunpack.c.h.b16 %v2046
    %v2657 = vunpack.c.l.b16 %v2047
    %v2658 = vunpack.c.h.b16 %v2047
    %v2659 = vunpack.c.l.b16 %v2048
    %v2660 = vunpack.c.h.b16 %v2048
    %v2661 = vunpack.c.l.b16 %v2049
    %v2662 = vunpack.c.h.b16 %v2049
    %v2663 = vunpack.c.l.b16 %v2050
    %v2664 = vunpack.c.h.b16 %v2050
    %v2665 = vunpack.c.l.b16 %v2051
    %v2666 = vunpack.c.h.b16 %v2051
    %v2667 = vunpack.c.l.b16 %v2052
    %v2668 = vunpack.c.h.b16 %v2052
    %v2669 = vunpack.c.l.b16 %v2053
    %v2670 = vunpack.c.h.b16 %v2053
    %v2671 = vunpack.c.l.b16 %v2054
    %v2672 = vunpack.c.h.b16 %v2054
    %v2673 = vunpack.c.l.b16 %v2055
    %v2674 = vunpack.c.h.b16 %v2055
    %v2675 = vunpack.c.l.b16 %v2056
    %v2676 = vunpack.c.h.b16 %v2056
    %v2677 = vunpack.c.l.b16 %v2057
    %v2678 = vunpack.c.h.b16 %v2057
    %v2679 = vunpack.c.l.b16 %v2058
    %v2680 = vunpack.c.h.b16 %v2058
    %v2681 = vunpack.c.l.b16 %v2059
    %v2682 = vunpack.c.h.b16 %v2059
    %v2683 = vunpack.c.l.b16 %v2060
    %v2684 = vunpack.c.h.b16 %v2060
    %v2685 = vunpack.c.l.b16 %v2061
    %v2686 = vunpack.c.h.b16 %v2061
    %v2687 = vunpack.c.l.b16 %v2062
    %v2688 = vunpack.c.h.b16 %v2062
    %v2689 = vunpack.c.l.b16 %v2063
    %v2690 = vunpack.c.h.b16 %v2063
    %v2691 = vunpack.c.l.b16 %v2064
    %v2692 = vunpack.c.h.b16 %v2064
    %v2693 = vunpack.c.l.b16 %v2065
    %v2694 = vunpack.c.h.b16 %v2065
    %v2695 = vunpack.c.l.b16 %v2066
    %v2696 = vunpack.c.h.b16 %v2066
    %v2697 = vunpack.c.l.b16 %v2067
    %v2698 = vunpack.c.h.b16 %v2067
    %v2699 = vunpack.c.l.b16 %v2068
    %v2700 = vunpack.c.h.b16 %v2068
    %v2701 = vunpack.c.l.b16 %v2069
    %v2702 = vunpack.c.h.b16 %v2069
    %v2703 = vunpack.c.l.b16 %v2070
    %v2704 = vunpack.c.h.b16 %v2070
    %v2705 = vunpack.c.l.b16 %v2071
    %v2706 = vunpack.c.h.b16 %v2071
    %v2707 = vunpack.c.l.b16 %v2072
    %v2708 = vunpack.c.h.b16 %v2072
    %v2709 = vunpack.c.l.b16 %v2073
    %v2710 = vunpack.c.h.b16 %v2073
    %v2711 = vunpack.c.l.b16 %v2074
    %v2712 = vunpack.c.h.b16 %v2074
    %v2713 = vunpack.c.l.b16 %v2075
    %v2714 = vunpack.c.h.b16 %v2075
    %v2715 = vpack.c.b16 %v2335, %v2325
    %v2716 = vpack.c.b16 %v2336, %v2326
    %v2717 = vpack.c.b16 %v2337, %v2327
    %v2718 = vpack.c.b16 %v2338, %v2328
    %v2719 = vpack.c.b16 %v2339, %v2329
    %v2720 = vpack.c.b16 %v2340, %v2330
    %v2721 = vpack.c.b16 %v2341, %v2331
    %v2722 = vpack.c.b16 %v2342, %v2332
    %v2723 = vpack.c.b16 %v2343, %v2333
    %v2724 = vpack.c.b16 %v2344, %v2334
    %v2725 = vpack.c.b16 %v2355, %v2345
    %v2726 = vpack.c.b16 %v2356, %v2346
    %v2727 = vpack.c.b16 %v2357, %v2347
    %v2728 = vpack.c.b16 %v2358, %v2348
    %v2729 = vpack.c.b16 %v2359, %v2349
    %v2730 = vpack.c.b16 %v2360, %v2350
    %v2731 = vpack.c.b16 %v2361, %v2351
    %v2732 = vpack.c.b16 %v2362, %v2352
    %v2733 = vpack.c.b16 %v2363, %v2353
    %v2734 = vpack.c.b16 %v2364, %v2354
    %v2735 = vpack.c.b16 %v2375, %v2365
    %v2736 = vpack.c.b16 %v2376, %v2366
    %v2737 = vpack.c.b16 %v2377, %v2367
    %v2738 = vpack.c.b16 %v2378, %v2368
    %v2739 = vpack.c.b16 %v2379, %v2369
    %v2740 = vpack.c.b16 %v2380, %v2370
    %v2741 = vpack.c.b16 %v2381, %v2371
    %v2742 = vpack.c.b16 %v2382, %v2372
    %v2743 = vpack.c.b16 %v2383, %v2373
    %v2744 = vpack.c.b16 %v2384, %v2374
    %v2745 = vpack.c.b16 %v2395, %v2385
    %v2746 = vpack.c.b16 %v2396, %v2386
    %v2747 = vpack.c.b16 %v2397, %v2387
    %v2748 = vpack.c.b16 %v2398, %v2388
    %v2749 = vpack.c.b16 %v2399, %v2389
    %v2750 = vpack.c.b16 %v2400, %v2390
    %v2751 = vpack.c.b16 %v2401, %v2391
    %v2752 = vpack.c.b16 %v2402, %v2392
    %v2753 = vpack.c.b16 %v2403, %v2393
    %v2754 = vpack.c.b16 %v2404, %v2394
    %v2755 = vpack.c.b16 %v2415, %v2405
    %v2756 = vpack.c.b16 %v2416, %v2406
    %v2757 = vpack.c.b16 %v2417, %v2407
    %v2758 = vpack.c.b16 %v2418, %v2408
    %v2759 = vpack.c.b16 %v2419, %v2409
    %v2760 = vpack.c.b16 %v2420, %v2410
    %v2761 = vpack.c.b16 %v2421, %v2411
    %v2762 = vpack.c.b16 %v2422, %v2412
    %v2763 = vpack.c.b16 %v2423, %v2413
    %v2764 = vpack.c.b16 %v2424, %v2414
    %v2765 = vpack.c.b16 %v2435, %v2425
    %v2766 = vpack.c.b16 %v2436, %v2426
    %v2767 = vpack.c.b16 %v2437, %v2427
    %v2768 = vpack.c.b16 %v2438, %v2428
    %v2769 = vpack.c.b16 %v2439, %v2429
    %v2770 = vpack.c.b16 %v2440, %v2430
    %v2771 = vpack.c.b16 %v2441, %v2431
    %v2772 = vpack.c.b16 %v2442, %v2432
    %v2773 = vpack.c.b16 %v2443, %v2433
    %v2774 = vpack.c.b16 %v2444, %v2434
    %v2775 = vpack.c.b16 %v2455, %v2445
    %v2776 = vpack.c.b16 %v2456, %v2446
    %v2777 = vpack.c.b16 %v2457, %v2447
    %v2778 = vpack.c.b16 %v2458, %v2448
    %v2779 = vpack.c.b16 %v2459, %v2449
    %v2780 = vpack.c.b16 %v2460, %v2450
    %v2781 = vpack.c.b16 %v2461, %v2451
    %v2782 = vpack.c.b16 %v2462, %v2452
    %v2783 = vpack.c.b16 %v2463, %v2453
    %v2784 = vpack.c.b16 %v2464, %v2454
    %v2785 = vpack.c.b16 %v2475, %v2465
    %v2786 = vpack.c.b16 %v2476, %v2466
    %v2787 = vpack.c.b16 %v2477, %v2467
    %v2788 = vpack.c.b16 %v2478, %v2468
    %v2789 = vpack.c.b16 %v2479, %v2469
    %v2790 = vpack.c.b16 %v2480, %v2470
    %v2791 = vpack.c.b16 %v2481, %v2471
    %v2792 = vpack.c.b16 %v2482, %v2472
    %v2793 = vpack.c.b16 %v2483, %v2473
    %v2794 = vpack.c.b16 %v2484, %v2474
    %v2795 = vpack.c.b16 %v2495, %v2485
    %v2796 = vpack.c.b16 %v2496, %v2486
    %v2797 = vpack.c.b16 %v2497, %v2487
    %v2798 = vpack.c.b16 %v2498, %v2488
    %v2799 = vpack.c.b16 %v2499, %v2489
    %v2800 = vpack.c.b16 %v2500, %v2490
    %v2801 = vpack.c.b16 %v2501, %v2491
    %v2802 = vpack.c.b16 %v2502, %v2492
    %v2803 = vpack.c.b16 %v2503, %v2493
    %v2804 = vpack.c.b16 %v2504, %v2494
    %v2805 = vpack.c.b16 %v2515, %v2505
    %v2806 = vpack.c.b16 %v2516, %v2506
    %v2807 = vpack.c.b16 %v2517, %v2507
    %v2808 = vpack.c.b16 %v2518, %v2508
    %v2809 = vpack.c.b16 %v2519, %v2509
    %v2810 = vpack.c.b16 %v2520, %v2510
    %v2811 = vpack.c.b16 %v2521, %v2511
    %v2812 = vpack.c.b16 %v2522, %v2512
    %v2813 = vpack.c.b16 %v2523, %v2513
    %v2814 = vpack.c.b16 %v2524, %v2514
    %v2815 = vpack.c.b16 %v2535, %v2525
    %v2816 = vpack.c.b16 %v2536, %v2526
    %v2817 = vpack.c.b16 %v2537, %v2527
    %v2818 = vpack.c.b16 %v2538, %v2528
    %v2819 = vpack.c.b16 %v2539, %v2529
    %v2820 = vpack.c.b16 %v2540, %v2530
    %v2821 = vpack.c.b16 %v2541, %v2531
    %v2822 = vpack.c.b16 %v2542, %v2532
    %v2823 = vpack.c.b16 %v2543, %v2533
    %v2824 = vpack.c.b16 %v2544, %v2534
    %v2825 = vpack.c.b16 %v2555, %v2545
    %v2826 = vpack.c.b16 %v2556, %v2546
    %v2827 = vpack.c.b16 %v2557, %v2547
    %v2828 = vpack.c.b16 %v2558, %v2548
    %v2829 = vpack.c.b16 %v2559, %v2549
    %v2830 = vpack.c.b16 %v2560, %v2550
    %v2831 = vpack.c.b16 %v2561, %v2551
    %v2832 = vpack.c.b16 %v2562, %v2552
    %v2833 = vpack.c.b16 %v2563, %v2553
    %v2834 = vpack.c.b16 %v2564, %v2554
    %v2835 = vpack.c.b16 %v2575, %v2565
    %v2836 = vpack.c.b16 %v2576, %v2566
    %v2837 = vpack.c.b16 %v2577, %v2567
    %v2838 = vpack.c.b16 %v2578, %v2568
    %v2839 = vpack.c.b16 %v2579, %v2569
    %v2840 = vpack.c.b16 %v2580, %v2570
    %v2841 = vpack.c.b16 %v2581, %v2571
    %v2842 = vpack.c.b16 %v2582, %v2572
    %v2843 = vpack.c.b16 %v2583, %v2573
    %v2844 = vpack.c.b16 %v2584, %v2574
    %v2845 = vpack.c.b16 %v2595, %v2585
    %v2846 = vpack.c.b16 %v2596, %v2586
    %v2847 = vpack.c.b16 %v2597, %v2587
    %v2848 = vpack.c.b16 %v2598, %v2588
    %v2849 = vpack.c.b16 %v2599, %v2589
    %v2850 = vpack.c.b16 %v2600, %v2590
    %v2851 = vpack.c.b16 %v2601, %v2591
    %v2852 = vpack.c.b16 %v2602, %v2592
    %v2853 = vpack.c.b16 %v2603, %v2593
    %v2854 = vpack.c.b16 %v2604, %v2594
    %v2855 = vpack.c.b16 %v2615, %v2605
    %v2856 = vpack.c.b16 %v2616, %v2606
    %v2857 = vpack.c.b16 %v2617, %v2607
    %v2858 = vpack.c.b16 %v2618, %v2608
    %v2859 = vpack.c.b16 %v2619, %v2609
    %v2860 = vpack.c.b16 %v2620, %v2610
    %v2861 = vpack.c.b16 %v2621, %v2611
    %v2862 = vpack.c.b16 %v2622, %v2612
    %v2863 = vpack.c.b16 %v2623, %v2613
    %v2864 = vpack.c.b16 %v2624, %v2614
    %v2865 = vpack.c.b16 %v2635, %v2625
    %v2866 = vpack.c.b16 %v2636, %v2626
    %v2867 = vpack.c.b16 %v2637, %v2627
    %v2868 = vpack.c.b16 %v2638, %v2628
    %v2869 = vpack.c.b16 %v2639, %v2629
    %v2870 = vpack.c.b16 %v2640, %v2630
    %v2871 = vpack.c.b16 %v2641, %v2631
    %v2872 = vpack.c.b16 %v2642, %v2632
    %v2873 = vpack.c.b16 %v2643, %v2633
    %v2874 = vpack.c.b16 %v2644, %v2634
    %v2875 = vpack.c.b16 %v2655, %v2645
    %v2876 = vpack.c.b16 %v2656, %v2646
    %v2877 = vpack.c.b16 %v2657, %v2647
    %v2878 = vpack.c.b16 %v2658, %v2648
    %v2879 = vpack.c.b16 %v2659, %v2649
    %v2880 = vpack.c.b16 %v2660, %v2650
    %v2881 = vpack.c.b16 %v2661, %v2651
    %v2882 = vpack.c.b16 %v2662, %v2652
    %v2883 = vpack.c.b16 %v2663, %v2653
    %v2884 = vpack.c.b16 %v2664, %v2654
    %v2885 = vpack.c.b16 %v2675, %v2665
    %v2886 = vpack.c.b16 %v2676, %v2666
    %v2887 = vpack.c.b16 %v2677, %v2667
    %v2888 = vpack.c.b16 %v2678, %v2668
    %v2889 = vpack.c.b16 %v2679, %v2669
    %v2890 = vpack.c.b16 %v2680, %v2670
    %v2891 = vpack.c.b16 %v2681, %v2671
    %v2892 = vpack.c.b16 %v2682, %v2672
    %v2893 = vpack.c.b16 %v2683, %v2673
    %v2894 = vpack.c.b16 %v2684, %v2674
    %v2895 = vpack.c.b16 %v2695, %v2685
    %v2896 = vpack.c.b16 %v2696, %v2686
    %v2897 = vpack.c.b16 %v2697, %v2687
    %v2898 = vpack.c.b16 %v2698, %v2688
    %v2899 = vpack.c.b16 %v2699, %v2689
    %v2900 = vpack.c.b16 %v2700, %v2690
    %v2901 = vpack.c.b16 %v2701, %v2691
    %v2902 = vpack.c.b16 %v2702, %v2692
    %v2903 = vpack.c.b16 %v2703, %v2693
    %v2904 = vpack.c.b16 %v2704, %v2694
    %v2905 = vpack.c.b16 %v2705, %v2705
    %v2906 = vpack.c.b16 %v2706, %v2706
    %v2907 = vpack.c.b16 %v2707, %v2707
    %v2908 = vpack.c.b16 %v2708, %v2708
    %v2909 = vpack.c.b16 %v2709, %v2709
    %v2910 = vpack.c.b16 %v2710, %v2710
    %v2911 = vpack.c.b16 %v2711, %v2711
    %v2912 = vpack.c.b16 %v2712, %v2712
    %v2913 = vpack.c.b16 %v2713, %v2713
    %v2914 = vpack.c.b16 %v2714, %v2714
    %v3106 = vand.u32 %v2905, %v1364
    %v3109 = vand.u32 %v2906, %v1364
    %v3112 = vand.u32 %v2907, %v1364
    %v3115 = vand.u32 %v2908, %v1364
    %v3118 = vand.u32 %v2909, %v1364
    %v3121 = vand.u32 %v2910, %v1364
    %v3124 = vand.u32 %v2911, %v1364
    %v3127 = vand.u32 %v2912, %v1364
    %v3130 = vand.u32 %v2913, %v1364
    %v3133 = vand.u32 %v2914, %v1364
    %3135 = vmatprep.subr.bf16.mxu0 %v2786
    %3136 = vmatpush1.bf16.msra.mxu0 %v2785
    %3137 = vmatprep.subr.bf16.mxu0 %v2776
    %3138 = vmatpush1.bf16.msra.mxu0 %v2775
    %3139 = vmatprep.subr.bf16.mxu0 %v2766
    %3140 = vmatpush1.bf16.msra.mxu0 %v2765
    %3141 = vmatprep.subr.bf16.mxu0 %v2756
    %3142 = vmatpush1.bf16.msra.mxu0 %v2755
    %3143 = vmatprep.subr.bf16.mxu0 %v2746
    %3144 = vmatpush1.bf16.msra.mxu0 %v2745
    %3145 = vmatprep.subr.bf16.mxu0 %v2736
    %3146 = vmatpush1.bf16.msra.mxu0 %v2735
    %3147 = vmatprep.subr.bf16.mxu0 %v2726
    %3148 = vmatpush1.bf16.msra.mxu0 %v2725
    %3149 = vmatprep.subr.bf16.mxu0 %v2716
    %3150 = vmatpush1.bf16.msra.mxu0 %v2715
    %3151 = vmatprep.subr.bf16.mxu0 %v2866
    %3152 = vmatpush2.bf16.msra.mxu0 %v2865
    %3153 = vmatprep.subr.bf16.mxu0 %v2856
    %3154 = vmatpush2.bf16.msra.mxu0 %v2855
    %3155 = vmatprep.subr.bf16.mxu0 %v2846
    %3156 = vmatpush2.bf16.msra.mxu0 %v2845
    %3157 = vmatprep.subr.bf16.mxu0 %v2836
    %3158 = vmatpush2.bf16.msra.mxu0 %v2835
    %3159 = vmatprep.subr.bf16.mxu0 %v2826
    %3160 = vmatpush2.bf16.msra.mxu0 %v2825
    %3161 = vmatprep.subr.bf16.mxu0 %v2816
    %3162 = vmatpush2.bf16.msra.mxu0 %v2815
    %3163 = vmatprep.subr.bf16.mxu0 %v2806
    %3164 = vmatpush2.bf16.msra.mxu0 %v2805
    %3165 = vmatprep.subr.bf16.mxu0 %v2796
    %3166 = vmatpush2.bf16.msra.mxu0 %v2795
    %3167 = vmatprep.mubr.bf16.mxu0 %v378
    %3168 = vmatmul.mubr.bf16.gmra.mxu0 %v371
    %v3169 = vpop.f32.mrf.mxu0
    %v3170 = vadd.f32 %v2083, %v3169
    %v3171 = vpop.f32.mrf.mxu0
    %v3172 = vadd.f32 %v2087, %v3171
    %v3173 = vpop.f32.mrf.mxu0
    %v3174 = vpop.f32.mrf.mxu0
    %3175 = vdwg.mxu0
    %3176 = vmatprep.subr.bf16.mxu0 0
    %3177 = vmatpush1.bf16.msra.mxu0 0
    %3178 = vmatprep.subr.bf16.mxu0 0
    %3179 = vmatpush1.bf16.msra.mxu0 0
    %3180 = vmatprep.subr.bf16.mxu0 0
    %3181 = vmatpush1.bf16.msra.mxu0 0
    %3182 = vmatprep.subr.bf16.mxu0 0
    %3183 = vmatpush1.bf16.msra.mxu0 0
    %3184 = vmatprep.subr.bf16.mxu0 %v3109
    %3185 = vmatpush1.bf16.msra.mxu0 %v3106
    %3186 = vmatprep.subr.bf16.mxu0 %v2896
    %3187 = vmatpush1.bf16.msra.mxu0 %v2895
    %3188 = vmatprep.subr.bf16.mxu0 %v2886
    %3189 = vmatpush1.bf16.msra.mxu0 %v2885
    %3190 = vmatprep.subr.bf16.mxu0 %v2876
    %3191 = vmatpush1.bf16.msra.mxu0 %v2875
    %3192 = vmatprep.subr.bf16.mxu0 0
    %3193 = vmatpush2.bf16.msra.mxu0 0
    %3194 = vmatprep.subr.bf16.mxu0 0
    %3195 = vmatpush2.bf16.msra.mxu0 0
    %3196 = vmatprep.subr.bf16.mxu0 0
    %3197 = vmatpush2.bf16.msra.mxu0 0
    %3198 = vmatprep.subr.bf16.mxu0 0
    %3199 = vmatpush2.bf16.msra.mxu0 0
    %3200 = vmatprep.subr.bf16.mxu0 0
    %3201 = vmatpush2.bf16.msra.mxu0 0
    %3202 = vmatprep.subr.bf16.mxu0 0
    %3203 = vmatpush2.bf16.msra.mxu0 0
    %3204 = vmatprep.subr.bf16.mxu0 0
    %3205 = vmatpush2.bf16.msra.mxu0 0
    %3206 = vmatprep.subr.bf16.mxu0 0
    %3207 = vmatpush2.bf16.msra.mxu0 0
    %3208 = vmatprep.mubr.bf16.mxu0 0
    %3209 = vmatmul.mubr.bf16.gmra.mxu0 %v1359
    %v3210 = vpop.f32.mrf.mxu0
    %v3211 = vadd.f32 %v3170, %v3210
    %v3212 = vpop.f32.mrf.mxu0
    %v3213 = vadd.f32 %v3172, %v3212
    %v3214 = vpop.f32.mrf.mxu0
    %v3215 = vpop.f32.mrf.mxu0
    %3216 = vdwg.mxu0
    %3217 = vmatprep.subr.bf16.mxu0 %v2788
    %3218 = vmatpush1.bf16.msra.mxu0 %v2787
    %3219 = vmatprep.subr.bf16.mxu0 %v2778
    %3220 = vmatpush1.bf16.msra.mxu0 %v2777
    %3221 = vmatprep.subr.bf16.mxu0 %v2768
    %3222 = vmatpush1.bf16.msra.mxu0 %v2767
    %3223 = vmatprep.subr.bf16.mxu0 %v2758
    %3224 = vmatpush1.bf16.msra.mxu0 %v2757
    %3225 = vmatprep.subr.bf16.mxu0 %v2748
    %3226 = vmatpush1.bf16.msra.mxu0 %v2747
    %3227 = vmatprep.subr.bf16.mxu0 %v2738
    %3228 = vmatpush1.bf16.msra.mxu0 %v2737
    %3229 = vmatprep.subr.bf16.mxu0 %v2728
    %3230 = vmatpush1.bf16.msra.mxu0 %v2727
    %3231 = vmatprep.subr.bf16.mxu0 %v2718
    %3232 = vmatpush1.bf16.msra.mxu0 %v2717
    %3233 = vmatprep.subr.bf16.mxu0 %v2868
    %3234 = vmatpush2.bf16.msra.mxu0 %v2867
    %3235 = vmatprep.subr.bf16.mxu0 %v2858
    %3236 = vmatpush2.bf16.msra.mxu0 %v2857
    %3237 = vmatprep.subr.bf16.mxu0 %v2848
    %3238 = vmatpush2.bf16.msra.mxu0 %v2847
    %3239 = vmatprep.subr.bf16.mxu0 %v2838
    %3240 = vmatpush2.bf16.msra.mxu0 %v2837
    %3241 = vmatprep.subr.bf16.mxu0 %v2828
    %3242 = vmatpush2.bf16.msra.mxu0 %v2827
    %3243 = vmatprep.subr.bf16.mxu0 %v2818
    %3244 = vmatpush2.bf16.msra.mxu0 %v2817
    %3245 = vmatprep.subr.bf16.mxu0 %v2808
    %3246 = vmatpush2.bf16.msra.mxu0 %v2807
    %3247 = vmatprep.subr.bf16.mxu0 %v2798
    %3248 = vmatpush2.bf16.msra.mxu0 %v2797
    %3249 = vmatprep.mubr.bf16.mxu0 %v378
    %3250 = vmatmul.mubr.bf16.gmra.mxu0 %v371
    %v3251 = vpop.f32.mrf.mxu0
    %v3252 = vadd.f32 %v2091, %v3251
    %v3253 = vpop.f32.mrf.mxu0
    %v3254 = vadd.f32 %v2095, %v3253
    %v3255 = vpop.f32.mrf.mxu0
    %v3256 = vpop.f32.mrf.mxu0
    %3257 = vdwg.mxu0
    %3258 = vmatprep.subr.bf16.mxu0 0
    %3259 = vmatpush1.bf16.msra.mxu0 0
    %3260 = vmatprep.subr.bf16.mxu0 0
    %3261 = vmatpush1.bf16.msra.mxu0 0
    %3262 = vmatprep.subr.bf16.mxu0 0
    %3263 = vmatpush1.bf16.msra.mxu0 0
    %3264 = vmatprep.subr.bf16.mxu0 0
    %3265 = vmatpush1.bf16.msra.mxu0 0
    %3266 = vmatprep.subr.bf16.mxu0 %v3115
    %3267 = vmatpush1.bf16.msra.mxu0 %v3112
    %3268 = vmatprep.subr.bf16.mxu0 %v2898
    %3269 = vmatpush1.bf16.msra.mxu0 %v2897
    %3270 = vmatprep.subr.bf16.mxu0 %v2888
    %3271 = vmatpush1.bf16.msra.mxu0 %v2887
    %3272 = vmatprep.subr.bf16.mxu0 %v2878
    %3273 = vmatpush1.bf16.msra.mxu0 %v2877
    %3274 = vmatprep.subr.bf16.mxu0 0
    %3275 = vmatpush2.bf16.msra.mxu0 0
    %3276 = vmatprep.subr.bf16.mxu0 0
    %3277 = vmatpush2.bf16.msra.mxu0 0
    %3278 = vmatprep.subr.bf16.mxu0 0
    %3279 = vmatpush2.bf16.msra.mxu0 0
    %3280 = vmatprep.subr.bf16.mxu0 0
    %3281 = vmatpush2.bf16.msra.mxu0 0
    %3282 = vmatprep.subr.bf16.mxu0 0
    %3283 = vmatpush2.bf16.msra.mxu0 0
    %3284 = vmatprep.subr.bf16.mxu0 0
    %3285 = vmatpush2.bf16.msra.mxu0 0
    %3286 = vmatprep.subr.bf16.mxu0 0
    %3287 = vmatpush2.bf16.msra.mxu0 0
    %3288 = vmatprep.subr.bf16.mxu0 0
    %3289 = vmatpush2.bf16.msra.mxu0 0
    %3290 = vmatprep.mubr.bf16.mxu0 0
    %3291 = vmatmul.mubr.bf16.gmra.mxu0 %v1359
    %v3292 = vpop.f32.mrf.mxu0
    %v3293 = vadd.f32 %v3252, %v3292
    %v3294 = vpop.f32.mrf.mxu0
    %v3295 = vadd.f32 %v3254, %v3294
    %v3296 = vpop.f32.mrf.mxu0
    %v3297 = vpop.f32.mrf.mxu0
    %3298 = vdwg.mxu0
    %3299 = vmatprep.subr.bf16.mxu0 %v2790
    %3300 = vmatpush1.bf16.msra.mxu0 %v2789
    %3301 = vmatprep.subr.bf16.mxu0 %v2780
    %3302 = vmatpush1.bf16.msra.mxu0 %v2779
    %3303 = vmatprep.subr.bf16.mxu0 %v2770
    %3304 = vmatpush1.bf16.msra.mxu0 %v2769
    %3305 = vmatprep.subr.bf16.mxu0 %v2760
    %3306 = vmatpush1.bf16.msra.mxu0 %v2759
    %3307 = vmatprep.subr.bf16.mxu0 %v2750
    %3308 = vmatpush1.bf16.msra.mxu0 %v2749
    %3309 = vmatprep.subr.bf16.mxu0 %v2740
    %3310 = vmatpush1.bf16.msra.mxu0 %v2739
    %3311 = vmatprep.subr.bf16.mxu0 %v2730
    %3312 = vmatpush1.bf16.msra.mxu0 %v2729
    %3313 = vmatprep.subr.bf16.mxu0 %v2720
    %3314 = vmatpush1.bf16.msra.mxu0 %v2719
    %3315 = vmatprep.subr.bf16.mxu0 %v2870
    %3316 = vmatpush2.bf16.msra.mxu0 %v2869
    %3317 = vmatprep.subr.bf16.mxu0 %v2860
    %3318 = vmatpush2.bf16.msra.mxu0 %v2859
    %3319 = vmatprep.subr.bf16.mxu0 %v2850
    %3320 = vmatpush2.bf16.msra.mxu0 %v2849
    %3321 = vmatprep.subr.bf16.mxu0 %v2840
    %3322 = vmatpush2.bf16.msra.mxu0 %v2839
    %3323 = vmatprep.subr.bf16.mxu0 %v2830
    %3324 = vmatpush2.bf16.msra.mxu0 %v2829
    %3325 = vmatprep.subr.bf16.mxu0 %v2820
    %3326 = vmatpush2.bf16.msra.mxu0 %v2819
    %3327 = vmatprep.subr.bf16.mxu0 %v2810
    %3328 = vmatpush2.bf16.msra.mxu0 %v2809
    %3329 = vmatprep.subr.bf16.mxu0 %v2800
    %3330 = vmatpush2.bf16.msra.mxu0 %v2799
    %3331 = vmatprep.mubr.bf16.mxu0 %v378
    %3332 = vmatmul.mubr.bf16.gmra.mxu0 %v371
    %v3333 = vpop.f32.mrf.mxu0
    %v3334 = vadd.f32 %v2099, %v3333
    %v3335 = vpop.f32.mrf.mxu0
    %v3336 = vadd.f32 %v2103, %v3335
    %v3337 = vpop.f32.mrf.mxu0
    %v3338 = vpop.f32.mrf.mxu0
    %3339 = vdwg.mxu0
    %3340 = vmatprep.subr.bf16.mxu0 0
    %3341 = vmatpush1.bf16.msra.mxu0 0
    %3342 = vmatprep.subr.bf16.mxu0 0
    %3343 = vmatpush1.bf16.msra.mxu0 0
    %3344 = vmatprep.subr.bf16.mxu0 0
    %3345 = vmatpush1.bf16.msra.mxu0 0
    %3346 = vmatprep.subr.bf16.mxu0 0
    %3347 = vmatpush1.bf16.msra.mxu0 0
    %3348 = vmatprep.subr.bf16.mxu0 %v3121
    %3349 = vmatpush1.bf16.msra.mxu0 %v3118
    %3350 = vmatprep.subr.bf16.mxu0 %v2900
    %3351 = vmatpush1.bf16.msra.mxu0 %v2899
    %3352 = vmatprep.subr.bf16.mxu0 %v2890
    %3353 = vmatpush1.bf16.msra.mxu0 %v2889
    %3354 = vmatprep.subr.bf16.mxu0 %v2880
    %3355 = vmatpush1.bf16.msra.mxu0 %v2879
    %3356 = vmatprep.subr.bf16.mxu0 0
    %3357 = vmatpush2.bf16.msra.mxu0 0
    %3358 = vmatprep.subr.bf16.mxu0 0
    %3359 = vmatpush2.bf16.msra.mxu0 0
    %3360 = vmatprep.subr.bf16.mxu0 0
    %3361 = vmatpush2.bf16.msra.mxu0 0
    %3362 = vmatprep.subr.bf16.mxu0 0
    %3363 = vmatpush2.bf16.msra.mxu0 0
    %3364 = vmatprep.subr.bf16.mxu0 0
    %3365 = vmatpush2.bf16.msra.mxu0 0
    %3366 = vmatprep.subr.bf16.mxu0 0
    %3367 = vmatpush2.bf16.msra.mxu0 0
    %3368 = vmatprep.subr.bf16.mxu0 0
    %3369 = vmatpush2.bf16.msra.mxu0 0
    %3370 = vmatprep.subr.bf16.mxu0 0
    %3371 = vmatpush2.bf16.msra.mxu0 0
    %3372 = vmatprep.mubr.bf16.mxu0 0
    %3373 = vmatmul.mubr.bf16.gmra.mxu0 %v1359
    %v3374 = vpop.f32.mrf.mxu0
    %v3375 = vadd.f32 %v3334, %v3374
    %v3376 = vpop.f32.mrf.mxu0
    %v3377 = vadd.f32 %v3336, %v3376
    %v3378 = vpop.f32.mrf.mxu0
    %v3379 = vpop.f32.mrf.mxu0
    %3380 = vdwg.mxu0
    %3381 = vmatprep.subr.bf16.mxu0 %v2792
    %3382 = vmatpush1.bf16.msra.mxu0 %v2791
    %3383 = vmatprep.subr.bf16.mxu0 %v2782
    %3384 = vmatpush1.bf16.msra.mxu0 %v2781
    %3385 = vmatprep.subr.bf16.mxu0 %v2772
    %3386 = vmatpush1.bf16.msra.mxu0 %v2771
    %3387 = vmatprep.subr.bf16.mxu0 %v2762
    %3388 = vmatpush1.bf16.msra.mxu0 %v2761
    %3389 = vmatprep.subr.bf16.mxu0 %v2752
    %3390 = vmatpush1.bf16.msra.mxu0 %v2751
    %3391 = vmatprep.subr.bf16.mxu0 %v2742
    %3392 = vmatpush1.bf16.msra.mxu0 %v2741
    %3393 = vmatprep.subr.bf16.mxu0 %v2732
    %3394 = vmatpush1.bf16.msra.mxu0 %v2731
    %3395 = vmatprep.subr.bf16.mxu0 %v2722
    %3396 = vmatpush1.bf16.msra.mxu0 %v2721
    %3397 = vmatprep.subr.bf16.mxu0 %v2872
    %3398 = vmatpush2.bf16.msra.mxu0 %v2871
    %3399 = vmatprep.subr.bf16.mxu0 %v2862
    %3400 = vmatpush2.bf16.msra.mxu0 %v2861
    %3401 = vmatprep.subr.bf16.mxu0 %v2852
    %3402 = vmatpush2.bf16.msra.mxu0 %v2851
    %3403 = vmatprep.subr.bf16.mxu0 %v2842
    %3404 = vmatpush2.bf16.msra.mxu0 %v2841
    %3405 = vmatprep.subr.bf16.mxu0 %v2832
    %3406 = vmatpush2.bf16.msra.mxu0 %v2831
    %3407 = vmatprep.subr.bf16.mxu0 %v2822
    %3408 = vmatpush2.bf16.msra.mxu0 %v2821
    %3409 = vmatprep.subr.bf16.mxu0 %v2812
    %3410 = vmatpush2.bf16.msra.mxu0 %v2811
    %3411 = vmatprep.subr.bf16.mxu0 %v2802
    %3412 = vmatpush2.bf16.msra.mxu0 %v2801
    %3413 = vmatprep.mubr.bf16.mxu0 %v378
    %3414 = vmatmul.mubr.bf16.gmra.mxu0 %v371
    %v3415 = vpop.f32.mrf.mxu0
    %v3416 = vadd.f32 %v2107, %v3415
    %v3417 = vpop.f32.mrf.mxu0
    %v3418 = vadd.f32 %v2111, %v3417
    %v3419 = vpop.f32.mrf.mxu0
    %v3420 = vpop.f32.mrf.mxu0
    %3421 = vdwg.mxu0
    %3422 = vmatprep.subr.bf16.mxu0 0
    %3423 = vmatpush1.bf16.msra.mxu0 0
    %3424 = vmatprep.subr.bf16.mxu0 0
    %3425 = vmatpush1.bf16.msra.mxu0 0
    %3426 = vmatprep.subr.bf16.mxu0 0
    %3427 = vmatpush1.bf16.msra.mxu0 0
    %3428 = vmatprep.subr.bf16.mxu0 0
    %3429 = vmatpush1.bf16.msra.mxu0 0
    %3430 = vmatprep.subr.bf16.mxu0 %v3127
    %3431 = vmatpush1.bf16.msra.mxu0 %v3124
    %3432 = vmatprep.subr.bf16.mxu0 %v2902
    %3433 = vmatpush1.bf16.msra.mxu0 %v2901
    %3434 = vmatprep.subr.bf16.mxu0 %v2892
    %3435 = vmatpush1.bf16.msra.mxu0 %v2891
    %3436 = vmatprep.subr.bf16.mxu0 %v2882
    %3437 = vmatpush1.bf16.msra.mxu0 %v2881
    %3438 = vmatprep.subr.bf16.mxu0 0
    %3439 = vmatpush2.bf16.msra.mxu0 0
    %3440 = vmatprep.subr.bf16.mxu0 0
    %3441 = vmatpush2.bf16.msra.mxu0 0
    %3442 = vmatprep.subr.bf16.mxu0 0
    %3443 = vmatpush2.bf16.msra.mxu0 0
    %3444 = vmatprep.subr.bf16.mxu0 0
    %3445 = vmatpush2.bf16.msra.mxu0 0
    %3446 = vmatprep.subr.bf16.mxu0 0
    %3447 = vmatpush2.bf16.msra.mxu0 0
    %3448 = vmatprep.subr.bf16.mxu0 0
    %3449 = vmatpush2.bf16.msra.mxu0 0
    %3450 = vmatprep.subr.bf16.mxu0 0
    %3451 = vmatpush2.bf16.msra.mxu0 0
    %3452 = vmatprep.subr.bf16.mxu0 0
    %3453 = vmatpush2.bf16.msra.mxu0 0
    %3454 = vmatprep.mubr.bf16.mxu0 0
    %3455 = vmatmul.mubr.bf16.gmra.mxu0 %v1359
    %v3456 = vpop.f32.mrf.mxu0
    %v3457 = vadd.f32 %v3416, %v3456
    %v3458 = vpop.f32.mrf.mxu0
    %v3459 = vadd.f32 %v3418, %v3458
    %v3460 = vpop.f32.mrf.mxu0
    %v3461 = vpop.f32.mrf.mxu0
    %3462 = vdwg.mxu0
    %3463 = vmatprep.subr.bf16.mxu0 %v2794
    %3464 = vmatpush1.bf16.msra.mxu0 %v2793
    %3465 = vmatprep.subr.bf16.mxu0 %v2784
    %3466 = vmatpush1.bf16.msra.mxu0 %v2783
    %3467 = vmatprep.subr.bf16.mxu0 %v2774
    %3468 = vmatpush1.bf16.msra.mxu0 %v2773
    %3469 = vmatprep.subr.bf16.mxu0 %v2764
    %3470 = vmatpush1.bf16.msra.mxu0 %v2763
    %3471 = vmatprep.subr.bf16.mxu0 %v2754
    %3472 = vmatpush1.bf16.msra.mxu0 %v2753
    %3473 = vmatprep.subr.bf16.mxu0 %v2744
    %3474 = vmatpush1.bf16.msra.mxu0 %v2743
    %3475 = vmatprep.subr.bf16.mxu0 %v2734
    %3476 = vmatpush1.bf16.msra.mxu0 %v2733
    %3477 = vmatprep.subr.bf16.mxu0 %v2724
    %3478 = vmatpush1.bf16.msra.mxu0 %v2723
    %3479 = vmatprep.subr.bf16.mxu0 %v2874
    %3480 = vmatpush2.bf16.msra.mxu0 %v2873
    %3481 = vmatprep.subr.bf16.mxu0 %v2864
    %3482 = vmatpush2.bf16.msra.mxu0 %v2863
    %3483 = vmatprep.subr.bf16.mxu0 %v2854
    %3484 = vmatpush2.bf16.msra.mxu0 %v2853
    %3485 = vmatprep.subr.bf16.mxu0 %v2844
    %3486 = vmatpush2.bf16.msra.mxu0 %v2843
    %3487 = vmatprep.subr.bf16.mxu0 %v2834
    %3488 = vmatpush2.bf16.msra.mxu0 %v2833
    %3489 = vmatprep.subr.bf16.mxu0 %v2824
    %3490 = vmatpush2.bf16.msra.mxu0 %v2823
    %3491 = vmatprep.subr.bf16.mxu0 %v2814
    %3492 = vmatpush2.bf16.msra.mxu0 %v2813
    %3493 = vmatprep.subr.bf16.mxu0 %v2804
    %3494 = vmatpush2.bf16.msra.mxu0 %v2803
    %3495 = vmatprep.mubr.bf16.mxu0 %v378
    %3496 = vmatmul.mubr.bf16.gmra.mxu0 %v371
    %v3497 = vpop.f32.mrf.mxu0
    %v3498 = vadd.f32 %v2115, %v3497
    %v3499 = vpop.f32.mrf.mxu0
    %v3500 = vadd.f32 %v2119, %v3499
    %v3501 = vpop.f32.mrf.mxu0
    %v3502 = vpop.f32.mrf.mxu0
    %3503 = vdwg.mxu0
    %3504 = vmatprep.subr.bf16.mxu0 0
    %3505 = vmatpush1.bf16.msra.mxu0 0
    %3506 = vmatprep.subr.bf16.mxu0 0
    %3507 = vmatpush1.bf16.msra.mxu0 0
    %3508 = vmatprep.subr.bf16.mxu0 0
    %3509 = vmatpush1.bf16.msra.mxu0 0
    %3510 = vmatprep.subr.bf16.mxu0 0
    %3511 = vmatpush1.bf16.msra.mxu0 0
    %3512 = vmatprep.subr.bf16.mxu0 %v3133
    %3513 = vmatpush1.bf16.msra.mxu0 %v3130
    %3514 = vmatprep.subr.bf16.mxu0 %v2904
    %3515 = vmatpush1.bf16.msra.mxu0 %v2903
    %3516 = vmatprep.subr.bf16.mxu0 %v2894
    %3517 = vmatpush1.bf16.msra.mxu0 %v2893
    %3518 = vmatprep.subr.bf16.mxu0 %v2884
    %3519 = vmatpush1.bf16.msra.mxu0 %v2883
    %3520 = vmatprep.subr.bf16.mxu0 0
    %3521 = vmatpush2.bf16.msra.mxu0 0
    %3522 = vmatprep.subr.bf16.mxu0 0
    %3523 = vmatpush2.bf16.msra.mxu0 0
    %3524 = vmatprep.subr.bf16.mxu0 0
    %3525 = vmatpush2.bf16.msra.mxu0 0
    %3526 = vmatprep.subr.bf16.mxu0 0
    %3527 = vmatpush2.bf16.msra.mxu0 0
    %3528 = vmatprep.subr.bf16.mxu0 0
    %3529 = vmatpush2.bf16.msra.mxu0 0
    %3530 = vmatprep.subr.bf16.mxu0 0
    %3531 = vmatpush2.bf16.msra.mxu0 0
    %3532 = vmatprep.subr.bf16.mxu0 0
    %3533 = vmatpush2.bf16.msra.mxu0 0
    %3534 = vmatprep.subr.bf16.mxu0 0
    %3535 = vmatpush2.bf16.msra.mxu0 0
    %3536 = vmatprep.mubr.bf16.mxu0 0
    %3537 = vmatmul.mubr.bf16.gmra.mxu0 %v1359
    %v3538 = vpop.f32.mrf.mxu0
    %v3539 = vadd.f32 %v3498, %v3538
    %v3540 = vpop.f32.mrf.mxu0
    %v3541 = vadd.f32 %v3500, %v3540
    %v3542 = vpop.f32.mrf.mxu0
    %v3543 = vpop.f32.mrf.mxu0
    %3544 = vdwg.mxu0
    %v3545 = vmul.f32 %v3211, 0.01
    %v3546 = vmul.f32 %v3213, 0.01
    %v3547 = vmul.f32 %v3293, 0.01
    %v3548 = vmul.f32 %v3295, 0.01
    %v3549 = vmul.f32 %v3375, 0.01
    %v3550 = vmul.f32 %v3377, 0.01
    %v3551 = vmul.f32 %v3457, 0.01
    %v3552 = vmul.f32 %v3459, 0.01
    %v3553 = vmul.f32 %v3539, 0.01
    %v3554 = vmul.f32 %v3541, 0.01
    %v3555 = vmax.f32 %v3211, %v3545
    %v3556 = vmax.f32 %v3213, %v3546
    %v3557 = vmax.f32 %v3293, %v3547
    %v3558 = vmax.f32 %v3295, %v3548
    %v3559 = vmax.f32 %v3375, %v3549
    %v3560 = vmax.f32 %v3377, %v3550
    %v3561 = vmax.f32 %v3457, %v3551
    %v3562 = vmax.f32 %v3459, %v3552
    %v3563 = vmax.f32 %v3539, %v3553
    %v3564 = vmax.f32 %v3541, %v3554
    %v3565 = vadd.f32 %v3555, %v3560
    %v3566 = vadd.f32 %v3556, %v3561
    %v3567 = vadd.f32 %v3557, %v3562
    %v3568 = vadd.f32 %v3558, %v3563
    %v3569 = vadd.f32 %v3559, %v3564
    %v3570 = vpack.c.bf16 %v3565, %v3565
    %v3571 = vpack.c.bf16 %v3566, %v3566
    %v3572 = vpack.c.bf16 %v3567, %v3567
    %v3573 = vpack.c.bf16 %v3568, %v3568
    %v3574 = vpack.c.bf16 %v3569, %v3569
    %v3580 = vcombine.low %v3570, %v3571
    %v3581 = vcombine.low %v3572, %v3573
    %v3583 = vunpack.c.l.s4 1966171168
    %v3584 = vunpack.c.0.s8 %v3583
    %v3585 = vlaneseq
    %v3586 = vshrl.u32 %v3585, 7
    %v3587 = vsub.s32 %v3584, %v3586
    %v3588 = vrot.slane %v3580, %v3587
    %v3590 = vunpack.c.l.s4 1966171168
    %v3591 = vunpack.c.0.s8 %v3590
    %v3592 = vlaneseq
    %v3593 = vshrl.u32 %v3592, 7
    %v3594 = vsub.s32 %v3591, %v3593
    %v3595 = vrot.slane %v3581, %v3594
    %v3597 = vunpack.c.l.s4 1966171168
    %v3598 = vunpack.c.0.s8 %v3597
    %v3599 = vlaneseq
    %v3600 = vshrl.u32 %v3599, 7
    %v3601 = vsub.s32 %v3598, %v3600
    %v3602 = vrot.slane %v3574, %v3601
    %v3603 = vcombine.low %v3588, %v3595
    %v3605 = vunpack.c.l.s4 1966171168
    %v3606 = vunpack.c.0.s8 %v3605
    %v3607 = vlaneseq
    %v3608 = vshrl.u32 %v3607, 7
    %v3609 = vsub.s32 %v3606, %v3608
    %v3610 = vrot.slane %v3603, %v3609
    %v3612 = vunpack.c.l.s4 1966171168
    %v3613 = vunpack.c.0.s8 %v3612
    %v3614 = vlaneseq
    %v3615 = vshrl.u32 %v3614, 7
    %v3616 = vsub.s32 %v3613, %v3615
    %v3617 = vrot.slane %v3602, %v3616
    %v3618 = vcombine.low %v3610, %v3617
    %3620 = vst [vmem:[#allocation2 + $0x5] sm:$0x1f] %v3618
    %v3621 = vld [vmem:[#allocation7 + $0x50] sm:$0xff]
    %v3622 = vld [vmem:[#allocation7 + $0x58] sm:$0xff]
    %v3623 = vld [vmem:[#allocation7 + $0x60] sm:$0xff]
    %v3624 = vld [vmem:[#allocation7 + $0x68] sm:$0xff]
    %v3625 = vld [vmem:[#allocation7 + $0x70] sm:$0xff]
    %v3626 = vld [vmem:[#allocation7 + $0xe8] sm:$0xff]
    %v3627 = vld [vmem:[#allocation7 + $0xf0] sm:$0xff]
    %v3628 = vld [vmem:[#allocation7 + $0xf8] sm:$0xff]
    %v3629 = vld [vmem:[#allocation7 + $0x100] sm:$0xff]
    %v3630 = vld [vmem:[#allocation7 + $0x108] sm:$0xff]
    %v3631 = vld [vmem:[#allocation7 + $0x180] sm:$0xff]
    %v3632 = vld [vmem:[#allocation7 + $0x188] sm:$0xff]
    %v3633 = vld [vmem:[#allocation7 + $0x190] sm:$0xff]
    %v3634 = vld [vmem:[#allocation7 + $0x198] sm:$0xff]
    %v3635 = vld [vmem:[#allocation7 + $0x1a0] sm:$0xff]
    %v3636 = vld [vmem:[#allocation7 + $0x218] sm:$0xff]
    %v3637 = vld [vmem:[#allocation7 + $0x220] sm:$0xff]
    %v3638 = vld [vmem:[#allocation7 + $0x228] sm:$0xff]
    %v3639 = vld [vmem:[#allocation7 + $0x230] sm:$0xff]
    %v3640 = vld [vmem:[#allocation7 + $0x238] sm:$0xff]
    %v3641 = vld [vmem:[#allocation7 + $0x2b0] sm:$0xff]
    %v3642 = vld [vmem:[#allocation7 + $0x2b8] sm:$0xff]
    %v3643 = vld [vmem:[#allocation7 + $0x2c0] sm:$0xff]
    %v3644 = vld [vmem:[#allocation7 + $0x2c8] sm:$0xff]
    %v3645 = vld [vmem:[#allocation7 + $0x2d0] sm:$0xff]
    %v3646 = vld [vmem:[#allocation7 + $0x348] sm:$0xff]
    %v3647 = vld [vmem:[#allocation7 + $0x350] sm:$0xff]
    %v3648 = vld [vmem:[#allocation7 + $0x358] sm:$0xff]
    %v3649 = vld [vmem:[#allocation7 + $0x360] sm:$0xff]
    %v3650 = vld [vmem:[#allocation7 + $0x368] sm:$0xff]
    %v3651 = vld [vmem:[#allocation7 + $0x3e0] sm:$0xff]
    %v3652 = vld [vmem:[#allocation7 + $0x3e8] sm:$0xff]
    %v3653 = vld [vmem:[#allocation7 + $0x3f0] sm:$0xff]
    %v3654 = vld [vmem:[#allocation7 + $0x3f8] sm:$0xff]
    %v3655 = vld [vmem:[#allocation7 + $0x400] sm:$0xff]
    %v3656 = vld [vmem:[#allocation7 + $0x478] sm:$0xff]
    %v3657 = vld [vmem:[#allocation7 + $0x480] sm:$0xff]
    %v3658 = vld [vmem:[#allocation7 + $0x488] sm:$0xff]
    %v3659 = vld [vmem:[#allocation7 + $0x490] sm:$0xff]
    %v3660 = vld [vmem:[#allocation7 + $0x498] sm:$0xff]
    %v3661 = vld [vmem:[#allocation7 + $0x510] sm:$0xff]
    %v3662 = vld [vmem:[#allocation7 + $0x518] sm:$0xff]
    %v3663 = vld [vmem:[#allocation7 + $0x520] sm:$0xff]
    %v3664 = vld [vmem:[#allocation7 + $0x528] sm:$0xff]
    %v3665 = vld [vmem:[#allocation7 + $0x530] sm:$0xff]
    %v3666 = vld [vmem:[#allocation7 + $0x5a8] sm:$0xff]
    %v3667 = vld [vmem:[#allocation7 + $0x5b0] sm:$0xff]
    %v3668 = vld [vmem:[#allocation7 + $0x5b8] sm:$0xff]
    %v3669 = vld [vmem:[#allocation7 + $0x5c0] sm:$0xff]
    %v3670 = vld [vmem:[#allocation7 + $0x5c8] sm:$0xff]
    %v3671 = vld [vmem:[#allocation7 + $0x640] sm:$0xff]
    %v3672 = vld [vmem:[#allocation7 + $0x648] sm:$0xff]
    %v3673 = vld [vmem:[#allocation7 + $0x650] sm:$0xff]
    %v3674 = vld [vmem:[#allocation7 + $0x658] sm:$0xff]
    %v3675 = vld [vmem:[#allocation7 + $0x660] sm:$0xff]
    %v3676 = vld [vmem:[#allocation7 + $0x6d8] sm:$0xff]
    %v3677 = vld [vmem:[#allocation7 + $0x6e0] sm:$0xff]
    %v3678 = vld [vmem:[#allocation7 + $0x6e8] sm:$0xff]
    %v3679 = vld [vmem:[#allocation7 + $0x6f0] sm:$0xff]
    %v3680 = vld [vmem:[#allocation7 + $0x6f8] sm:$0xff]
    %v3681 = vld [vmem:[#allocation7 + $0x770] sm:$0xff]
    %v3682 = vld [vmem:[#allocation7 + $0x778] sm:$0xff]
    %v3683 = vld [vmem:[#allocation7 + $0x780] sm:$0xff]
    %v3684 = vld [vmem:[#allocation7 + $0x788] sm:$0xff]
    %v3685 = vld [vmem:[#allocation7 + $0x790] sm:$0xff]
    %v3686 = vld [vmem:[#allocation7 + $0x808] sm:$0xff]
    %v3687 = vld [vmem:[#allocation7 + $0x810] sm:$0xff]
    %v3688 = vld [vmem:[#allocation7 + $0x818] sm:$0xff]
    %v3689 = vld [vmem:[#allocation7 + $0x820] sm:$0xff]
    %v3690 = vld [vmem:[#allocation7 + $0x828] sm:$0xff]
    %v3691 = vld [vmem:[#allocation7 + $0x8a0] sm:$0xff]
    %v3692 = vld [vmem:[#allocation7 + $0x8a8] sm:$0xff]
    %v3693 = vld [vmem:[#allocation7 + $0x8b0] sm:$0xff]
    %v3694 = vld [vmem:[#allocation7 + $0x8b8] sm:$0xff]
    %v3695 = vld [vmem:[#allocation7 + $0x8c0] sm:$0xff]
    %v3696 = vld [vmem:[#allocation7 + $0x938] sm:$0xff]
    %v3697 = vld [vmem:[#allocation7 + $0x940] sm:$0xff]
    %v3698 = vld [vmem:[#allocation7 + $0x948] sm:$0xff]
    %v3699 = vld [vmem:[#allocation7 + $0x950] sm:$0xff]
    %v3700 = vld [vmem:[#allocation7 + $0x958] sm:$0xff]
    %v3701 = vld [vmem:[#allocation7 + $0x9d0] sm:$0xff]
    %v3702 = vld [vmem:[#allocation7 + $0x9d8] sm:$0xff]
    %v3703 = vld [vmem:[#allocation7 + $0x9e0] sm:$0xff]
    %v3704 = vld [vmem:[#allocation7 + $0x9e8] sm:$0xff]
    %v3705 = vld [vmem:[#allocation7 + $0x9f0] sm:$0xff]
    %v3706 = vld [vmem:[#allocation7 + $0xa68] sm:$0xff]
    %v3707 = vld [vmem:[#allocation7 + $0xa70] sm:$0xff]
    %v3708 = vld [vmem:[#allocation7 + $0xa78] sm:$0xff]
    %v3709 = vld [vmem:[#allocation7 + $0xa80] sm:$0xff]
    %v3710 = vld [vmem:[#allocation7 + $0xa88] sm:$0xff]
    %v3711 = vld [vmem:[#allocation7 + $0xb00] sm:$0xff]
    %v3712 = vld [vmem:[#allocation7 + $0xb08] sm:$0xff]
    %v3713 = vld [vmem:[#allocation7 + $0xb10] sm:$0xff]
    %v3714 = vld [vmem:[#allocation7 + $0xb18] sm:$0xff]
    %v3715 = vld [vmem:[#allocation7 + $0xb20] sm:$0xff]
    %v3716 = vld [vmem:[#allocation7 + $0xb98] sm:$0xff]
    %v3717 = vld [vmem:[#allocation7 + $0xba0] sm:$0xff]
    %v3718 = vld [vmem:[#allocation7 + $0xba8] sm:$0xff]
    %v3719 = vld [vmem:[#allocation7 + $0xbb0] sm:$0xff]
    %v3720 = vld [vmem:[#allocation7 + $0xbb8] sm:$0xff]
    %v3721 = vld [vmem:[#allocation7 + $0xc30] sm:$0xff]
    %v3722 = vld [vmem:[#allocation7 + $0xc38] sm:$0xff]
    %v3723 = vld [vmem:[#allocation7 + $0xc40] sm:$0xff]
    %v3724 = vld [vmem:[#allocation7 + $0xc48] sm:$0xff]
    %v3725 = vld [vmem:[#allocation7 + $0xc50] sm:$0xff]
    %v3726 = vld [vmem:[#allocation7 + $0xcc8] sm:$0xff]
    %v3727 = vld [vmem:[#allocation7 + $0xcd0] sm:$0xff]
    %v3728 = vld [vmem:[#allocation7 + $0xcd8] sm:$0xff]
    %v3729 = vld [vmem:[#allocation7 + $0xce0] sm:$0xff]
    %v3730 = vld [vmem:[#allocation7 + $0xce8] sm:$0xff]
    %v3731 = vld [vmem:[#allocation7 + $0xd60] sm:$0xff]
    %v3732 = vld [vmem:[#allocation7 + $0xd68] sm:$0xff]
    %v3733 = vld [vmem:[#allocation7 + $0xd70] sm:$0xff]
    %v3734 = vld [vmem:[#allocation7 + $0xd78] sm:$0xff]
    %v3735 = vld [vmem:[#allocation7 + $0xd80] sm:$0xff]
    %v3736 = vld [vmem:[#allocation7 + $0xdf8] sm:$0xff]
    %v3737 = vld [vmem:[#allocation7 + $0xe00] sm:$0xff]
    %v3738 = vld [vmem:[#allocation7 + $0xe08] sm:$0xff]
    %v3739 = vld [vmem:[#allocation7 + $0xe10] sm:$0xff]
    %v3740 = vld [vmem:[#allocation7 + $0xe18] sm:$0xff]
    %v3741 = vld [vmem:[#allocation7 + $0xe90] sm:$0xff]
    %v3742 = vld [vmem:[#allocation7 + $0xe98] sm:$0xff]
    %v3743 = vld [vmem:[#allocation7 + $0xea0] sm:$0xff]
    %v3744 = vld [vmem:[#allocation7 + $0xea8] sm:$0xff]
    %v3745 = vld [vmem:[#allocation7 + $0xeb0] sm:$0xff]
    %v3746 = vld [vmem:[#allocation7 + $0xf28] sm:$0xff]
    %v3747 = vld [vmem:[#allocation7 + $0xf30] sm:$0xff]
    %v3748 = vld [vmem:[#allocation7 + $0xf38] sm:$0xff]
    %v3749 = vld [vmem:[#allocation7 + $0xf40] sm:$0xff]
    %v3750 = vld [vmem:[#allocation7 + $0xf48] sm:$0xff]
    %v3751 = vld [vmem:[#allocation7 + $0xfc0] sm:$0xff]
    %v3752 = vld [vmem:[#allocation7 + $0xfc8] sm:$0xff]
    %v3753 = vld [vmem:[#allocation7 + $0xfd0] sm:$0xff]
    %v3754 = vld [vmem:[#allocation7 + $0xfd8] sm:$0xff]
    %v3755 = vld [vmem:[#allocation7 + $0xfe0] sm:$0xff]
    %v3756 = vld [vmem:[#allocation7 + $0x1058] sm:$0xff]
    %v3757 = vld [vmem:[#allocation7 + $0x1060] sm:$0xff]
    %v3758 = vld [vmem:[#allocation7 + $0x1068] sm:$0xff]
    %v3759 = vld [vmem:[#allocation7 + $0x1070] sm:$0xff]
    %v3760 = vld [vmem:[#allocation7 + $0x1078] sm:$0xff]
    %v3761 = vld [vmem:[#allocation7 + $0x10f0] sm:$0xff]
    %v3762 = vld [vmem:[#allocation7 + $0x10f8] sm:$0xff]
    %v3763 = vld [vmem:[#allocation7 + $0x1100] sm:$0xff]
    %v3764 = vld [vmem:[#allocation7 + $0x1108] sm:$0xff]
    %v3765 = vld [vmem:[#allocation7 + $0x1110] sm:$0xff]
    %v3766 = vld [vmem:[#allocation7 + $0x1188] sm:$0xff]
    %v3767 = vld [vmem:[#allocation7 + $0x1190] sm:$0xff]
    %v3768 = vld [vmem:[#allocation7 + $0x1198] sm:$0xff]
    %v3769 = vld [vmem:[#allocation7 + $0x11a0] sm:$0xff]
    %v3770 = vld [vmem:[#allocation7 + $0x11a8] sm:$0xff]
    %v3771 = vld [vmem:[#allocation7 + $0x1220] sm:$0xff]
    %v3772 = vld [vmem:[#allocation7 + $0x1228] sm:$0xff]
    %v3773 = vld [vmem:[#allocation7 + $0x1230] sm:$0xff]
    %v3774 = vld [vmem:[#allocation7 + $0x1238] sm:$0xff]
    %v3775 = vld [vmem:[#allocation7 + $0x1240] sm:$0xff]
    %v3776 = vld [vmem:[#allocation7 + $0x12b8] sm:$0xff]
    %v3777 = vld [vmem:[#allocation7 + $0x12c0] sm:$0xff]
    %v3778 = vld [vmem:[#allocation7 + $0x12c8] sm:$0xff]
    %v3779 = vld [vmem:[#allocation7 + $0x12d0] sm:$0xff]
    %v3780 = vld [vmem:[#allocation7 + $0x12d8] sm:$0xff]
    %v3781 = vld [vmem:[#allocation7 + $0x1350] sm:$0xff]
    %v3782 = vld [vmem:[#allocation7 + $0x1358] sm:$0xff]
    %v3783 = vld [vmem:[#allocation7 + $0x1360] sm:$0xff]
    %v3784 = vld [vmem:[#allocation7 + $0x1368] sm:$0xff]
    %v3785 = vld [vmem:[#allocation7 + $0x1370] sm:$0xff]
    %v3786 = vld [vmem:[#allocation7 + $0x13e8] sm:$0xff]
    %v3787 = vld [vmem:[#allocation7 + $0x13f0] sm:$0xff]
    %v3788 = vld [vmem:[#allocation7 + $0x13f8] sm:$0xff]
    %v3789 = vld [vmem:[#allocation7 + $0x1400] sm:$0xff]
    %v3790 = vld [vmem:[#allocation7 + $0x1408] sm:$0xff]
    %v3791 = vld [vmem:[#allocation7 + $0x1480] sm:$0xff]
    %v3792 = vld [vmem:[#allocation7 + $0x1488] sm:$0xff]
    %v3793 = vld [vmem:[#allocation7 + $0x1490] sm:$0xff]
    %v3794 = vld [vmem:[#allocation7 + $0x1498] sm:$0xff]
    %v3795 = vld [vmem:[#allocation7 + $0x14a0] sm:$0xff]
    %v3796 = vld [vmem:[#allocation7 + $0x1518] sm:$0xff]
    %v3797 = vld [vmem:[#allocation7 + $0x1520] sm:$0xff]
    %v3798 = vld [vmem:[#allocation7 + $0x1528] sm:$0xff]
    %v3799 = vld [vmem:[#allocation7 + $0x1530] sm:$0xff]
    %v3800 = vld [vmem:[#allocation7 + $0x1538] sm:$0xff]
    %v3801 = vld [vmem:[#allocation7 + $0x15b0] sm:$0xff]
    %v3802 = vld [vmem:[#allocation7 + $0x15b8] sm:$0xff]
    %v3803 = vld [vmem:[#allocation7 + $0x15c0] sm:$0xff]
    %v3804 = vld [vmem:[#allocation7 + $0x15c8] sm:$0xff]
    %v3805 = vld [vmem:[#allocation7 + $0x15d0] sm:$0xff]
    %v3806 = vld [vmem:[#allocation7 + $0x1648] sm:$0xff]
    %v3807 = vld [vmem:[#allocation7 + $0x1650] sm:$0xff]
    %v3808 = vld [vmem:[#allocation7 + $0x1658] sm:$0xff]
    %v3809 = vld [vmem:[#allocation7 + $0x1660] sm:$0xff]
    %v3810 = vld [vmem:[#allocation7 + $0x1668] sm:$0xff]
    %v3811 = vld [vmem:[#allocation7 + $0x16e0] sm:$0x33]
    %v3812 = vld [vmem:[#allocation7 + $0x16e8] sm:$0x33]
    %v3813 = vld [vmem:[#allocation7 + $0x16f0] sm:$0x33]
    %v3814 = vld [vmem:[#allocation7 + $0x16f8] sm:$0x33]
    %v3815 = vld [vmem:[#allocation7 + $0x1700] sm:$0x33]
    %v3816 = vld [vmem:[#allocation9 + $0x14] sm:$0xff]
    %v3817 = vld [vmem:[#allocation9 + $0x1c] sm:$0x3]
    %v3820 = vlaneseq
    %v3821 = vshrl.u32 %v3820, 7
    %v3822 = vsub.s32 0, %v3821
    %v3823 = vrot.slane %v3816, %v3822
    %v3824 = vlaneseq
    %v3825 = vshrl.u32 %v3824, 7
    %v3826 = vsub.s32 1, %v3825
    %v3827 = vrot.slane %v3816, %v3826
    %v3828 = vlaneseq
    %v3829 = vshrl.u32 %v3828, 7
    %v3830 = vsub.s32 2, %v3829
    %v3831 = vrot.slane %v3816, %v3830
    %v3832 = vlaneseq
    %v3833 = vshrl.u32 %v3832, 7
    %v3834 = vsub.s32 3, %v3833
    %v3835 = vrot.slane %v3816, %v3834
    %v3836 = vlaneseq
    %v3837 = vshrl.u32 %v3836, 7
    %v3838 = vsub.s32 4, %v3837
    %v3839 = vrot.slane %v3816, %v3838
    %v3840 = vlaneseq
    %v3841 = vshrl.u32 %v3840, 7
    %v3842 = vsub.s32 5, %v3841
    %v3843 = vrot.slane %v3816, %v3842
    %v3844 = vlaneseq
    %v3845 = vshrl.u32 %v3844, 7
    %v3846 = vsub.s32 6, %v3845
    %v3847 = vrot.slane %v3816, %v3846
    %v3848 = vlaneseq
    %v3849 = vshrl.u32 %v3848, 7
    %v3850 = vsub.s32 7, %v3849
    %v3851 = vrot.slane %v3816, %v3850
    %v3852 = vlaneseq
    %v3853 = vshrl.u32 %v3852, 7
    %v3854 = vsub.s32 0, %v3853
    %v3855 = vrot.slane %v3817, %v3854
    %v3856 = vlaneseq
    %v3857 = vshrl.u32 %v3856, 7
    %v3858 = vsub.s32 1, %v3857
    %v3859 = vrot.slane %v3817, %v3858
    %v4065 = vunpack.c.l.b16 %v3621
    %v4066 = vunpack.c.h.b16 %v3621
    %v4067 = vunpack.c.l.b16 %v3622
    %v4068 = vunpack.c.h.b16 %v3622
    %v4069 = vunpack.c.l.b16 %v3623
    %v4070 = vunpack.c.h.b16 %v3623
    %v4071 = vunpack.c.l.b16 %v3624
    %v4072 = vunpack.c.h.b16 %v3624
    %v4073 = vunpack.c.l.b16 %v3625
    %v4074 = vunpack.c.h.b16 %v3625
    %v4075 = vunpack.c.l.b16 %v3626
    %v4076 = vunpack.c.h.b16 %v3626
    %v4077 = vunpack.c.l.b16 %v3627
    %v4078 = vunpack.c.h.b16 %v3627
    %v4079 = vunpack.c.l.b16 %v3628
    %v4080 = vunpack.c.h.b16 %v3628
    %v4081 = vunpack.c.l.b16 %v3629
    %v4082 = vunpack.c.h.b16 %v3629
    %v4083 = vunpack.c.l.b16 %v3630
    %v4084 = vunpack.c.h.b16 %v3630
    %v4085 = vunpack.c.l.b16 %v3631
    %v4086 = vunpack.c.h.b16 %v3631
    %v4087 = vunpack.c.l.b16 %v3632
    %v4088 = vunpack.c.h.b16 %v3632
    %v4089 = vunpack.c.l.b16 %v3633
    %v4090 = vunpack.c.h.b16 %v3633
    %v4091 = vunpack.c.l.b16 %v3634
    %v4092 = vunpack.c.h.b16 %v3634
    %v4093 = vunpack.c.l.b16 %v3635
    %v4094 = vunpack.c.h.b16 %v3635
    %v4095 = vunpack.c.l.b16 %v3636
    %v4096 = vunpack.c.h.b16 %v3636
    %v4097 = vunpack.c.l.b16 %v3637
    %v4098 = vunpack.c.h.b16 %v3637
    %v4099 = vunpack.c.l.b16 %v3638
    %v4100 = vunpack.c.h.b16 %v3638
    %v4101 = vunpack.c.l.b16 %v3639
    %v4102 = vunpack.c.h.b16 %v3639
    %v4103 = vunpack.c.l.b16 %v3640
    %v4104 = vunpack.c.h.b16 %v3640
    %v4105 = vunpack.c.l.b16 %v3641
    %v4106 = vunpack.c.h.b16 %v3641
    %v4107 = vunpack.c.l.b16 %v3642
    %v4108 = vunpack.c.h.b16 %v3642
    %v4109 = vunpack.c.l.b16 %v3643
    %v4110 = vunpack.c.h.b16 %v3643
    %v4111 = vunpack.c.l.b16 %v3644
    %v4112 = vunpack.c.h.b16 %v3644
    %v4113 = vunpack.c.l.b16 %v3645
    %v4114 = vunpack.c.h.b16 %v3645
    %v4115 = vunpack.c.l.b16 %v3646
    %v4116 = vunpack.c.h.b16 %v3646
    %v4117 = vunpack.c.l.b16 %v3647
    %v4118 = vunpack.c.h.b16 %v3647
    %v4119 = vunpack.c.l.b16 %v3648
    %v4120 = vunpack.c.h.b16 %v3648
    %v4121 = vunpack.c.l.b16 %v3649
    %v4122 = vunpack.c.h.b16 %v3649
    %v4123 = vunpack.c.l.b16 %v3650
    %v4124 = vunpack.c.h.b16 %v3650
    %v4125 = vunpack.c.l.b16 %v3651
    %v4126 = vunpack.c.h.b16 %v3651
    %v4127 = vunpack.c.l.b16 %v3652
    %v4128 = vunpack.c.h.b16 %v3652
    %v4129 = vunpack.c.l.b16 %v3653
    %v4130 = vunpack.c.h.b16 %v3653
    %v4131 = vunpack.c.l.b16 %v3654
    %v4132 = vunpack.c.h.b16 %v3654
    %v4133 = vunpack.c.l.b16 %v3655
    %v4134 = vunpack.c.h.b16 %v3655
    %v4135 = vunpack.c.l.b16 %v3656
    %v4136 = vunpack.c.h.b16 %v3656
    %v4137 = vunpack.c.l.b16 %v3657
    %v4138 = vunpack.c.h.b16 %v3657
    %v4139 = vunpack.c.l.b16 %v3658
    %v4140 = vunpack.c.h.b16 %v3658
    %v4141 = vunpack.c.l.b16 %v3659
    %v4142 = vunpack.c.h.b16 %v3659
    %v4143 = vunpack.c.l.b16 %v3660
    %v4144 = vunpack.c.h.b16 %v3660
    %v4145 = vunpack.c.l.b16 %v3661
    %v4146 = vunpack.c.h.b16 %v3661
    %v4147 = vunpack.c.l.b16 %v3662
    %v4148 = vunpack.c.h.b16 %v3662
    %v4149 = vunpack.c.l.b16 %v3663
    %v4150 = vunpack.c.h.b16 %v3663
    %v4151 = vunpack.c.l.b16 %v3664
    %v4152 = vunpack.c.h.b16 %v3664
    %v4153 = vunpack.c.l.b16 %v3665
    %v4154 = vunpack.c.h.b16 %v3665
    %v4155 = vunpack.c.l.b16 %v3666
    %v4156 = vunpack.c.h.b16 %v3666
    %v4157 = vunpack.c.l.b16 %v3667
    %v4158 = vunpack.c.h.b16 %v3667
    %v4159 = vunpack.c.l.b16 %v3668
    %v4160 = vunpack.c.h.b16 %v3668
    %v4161 = vunpack.c.l.b16 %v3669
    %v4162 = vunpack.c.h.b16 %v3669
    %v4163 = vunpack.c.l.b16 %v3670
    %v4164 = vunpack.c.h.b16 %v3670
    %v4165 = vunpack.c.l.b16 %v3671
    %v4166 = vunpack.c.h.b16 %v3671
    %v4167 = vunpack.c.l.b16 %v3672
    %v4168 = vunpack.c.h.b16 %v3672
    %v4169 = vunpack.c.l.b16 %v3673
    %v4170 = vunpack.c.h.b16 %v3673
    %v4171 = vunpack.c.l.b16 %v3674
    %v4172 = vunpack.c.h.b16 %v3674
    %v4173 = vunpack.c.l.b16 %v3675
    %v4174 = vunpack.c.h.b16 %v3675
    %v4175 = vunpack.c.l.b16 %v3676
    %v4176 = vunpack.c.h.b16 %v3676
    %v4177 = vunpack.c.l.b16 %v3677
    %v4178 = vunpack.c.h.b16 %v3677
    %v4179 = vunpack.c.l.b16 %v3678
    %v4180 = vunpack.c.h.b16 %v3678
    %v4181 = vunpack.c.l.b16 %v3679
    %v4182 = vunpack.c.h.b16 %v3679
    %v4183 = vunpack.c.l.b16 %v3680
    %v4184 = vunpack.c.h.b16 %v3680
    %v4185 = vunpack.c.l.b16 %v3681
    %v4186 = vunpack.c.h.b16 %v3681
    %v4187 = vunpack.c.l.b16 %v3682
    %v4188 = vunpack.c.h.b16 %v3682
    %v4189 = vunpack.c.l.b16 %v3683
    %v4190 = vunpack.c.h.b16 %v3683
    %v4191 = vunpack.c.l.b16 %v3684
    %v4192 = vunpack.c.h.b16 %v3684
    %v4193 = vunpack.c.l.b16 %v3685
    %v4194 = vunpack.c.h.b16 %v3685
    %v4195 = vunpack.c.l.b16 %v3686
    %v4196 = vunpack.c.h.b16 %v3686
    %v4197 = vunpack.c.l.b16 %v3687
    %v4198 = vunpack.c.h.b16 %v3687
    %v4199 = vunpack.c.l.b16 %v3688
    %v4200 = vunpack.c.h.b16 %v3688
    %v4201 = vunpack.c.l.b16 %v3689
    %v4202 = vunpack.c.h.b16 %v3689
    %v4203 = vunpack.c.l.b16 %v3690
    %v4204 = vunpack.c.h.b16 %v3690
    %v4205 = vunpack.c.l.b16 %v3691
    %v4206 = vunpack.c.h.b16 %v3691
    %v4207 = vunpack.c.l.b16 %v3692
    %v4208 = vunpack.c.h.b16 %v3692
    %v4209 = vunpack.c.l.b16 %v3693
    %v4210 = vunpack.c.h.b16 %v3693
    %v4211 = vunpack.c.l.b16 %v3694
    %v4212 = vunpack.c.h.b16 %v3694
    %v4213 = vunpack.c.l.b16 %v3695
    %v4214 = vunpack.c.h.b16 %v3695
    %v4215 = vunpack.c.l.b16 %v3696
    %v4216 = vunpack.c.h.b16 %v3696
    %v4217 = vunpack.c.l.b16 %v3697
    %v4218 = vunpack.c.h.b16 %v3697
    %v4219 = vunpack.c.l.b16 %v3698
    %v4220 = vunpack.c.h.b16 %v3698
    %v4221 = vunpack.c.l.b16 %v3699
    %v4222 = vunpack.c.h.b16 %v3699
    %v4223 = vunpack.c.l.b16 %v3700
    %v4224 = vunpack.c.h.b16 %v3700
    %v4225 = vunpack.c.l.b16 %v3701
    %v4226 = vunpack.c.h.b16 %v3701
    %v4227 = vunpack.c.l.b16 %v3702
    %v4228 = vunpack.c.h.b16 %v3702
    %v4229 = vunpack.c.l.b16 %v3703
    %v4230 = vunpack.c.h.b16 %v3703
    %v4231 = vunpack.c.l.b16 %v3704
    %v4232 = vunpack.c.h.b16 %v3704
    %v4233 = vunpack.c.l.b16 %v3705
    %v4234 = vunpack.c.h.b16 %v3705
    %v4235 = vunpack.c.l.b16 %v3706
    %v4236 = vunpack.c.h.b16 %v3706
    %v4237 = vunpack.c.l.b16 %v3707
    %v4238 = vunpack.c.h.b16 %v3707
    %v4239 = vunpack.c.l.b16 %v3708
    %v4240 = vunpack.c.h.b16 %v3708
    %v4241 = vunpack.c.l.b16 %v3709
    %v4242 = vunpack.c.h.b16 %v3709
    %v4243 = vunpack.c.l.b16 %v3710
    %v4244 = vunpack.c.h.b16 %v3710
    %v4245 = vunpack.c.l.b16 %v3711
    %v4246 = vunpack.c.h.b16 %v3711
    %v4247 = vunpack.c.l.b16 %v3712
    %v4248 = vunpack.c.h.b16 %v3712
    %v4249 = vunpack.c.l.b16 %v3713
    %v4250 = vunpack.c.h.b16 %v3713
    %v4251 = vunpack.c.l.b16 %v3714
    %v4252 = vunpack.c.h.b16 %v3714
    %v4253 = vunpack.c.l.b16 %v3715
    %v4254 = vunpack.c.h.b16 %v3715
    %v4255 = vunpack.c.l.b16 %v3716
    %v4256 = vunpack.c.h.b16 %v3716
    %v4257 = vunpack.c.l.b16 %v3717
    %v4258 = vunpack.c.h.b16 %v3717
    %v4259 = vunpack.c.l.b16 %v3718
    %v4260 = vunpack.c.h.b16 %v3718
    %v4261 = vunpack.c.l.b16 %v3719
    %v4262 = vunpack.c.h.b16 %v3719
    %v4263 = vunpack.c.l.b16 %v3720
    %v4264 = vunpack.c.h.b16 %v3720
    %v4265 = vunpack.c.l.b16 %v3721
    %v4266 = vunpack.c.h.b16 %v3721
    %v4267 = vunpack.c.l.b16 %v3722
    %v4268 = vunpack.c.h.b16 %v3722
    %v4269 = vunpack.c.l.b16 %v3723
    %v4270 = vunpack.c.h.b16 %v3723
    %v4271 = vunpack.c.l.b16 %v3724
    %v4272 = vunpack.c.h.b16 %v3724
    %v4273 = vunpack.c.l.b16 %v3725
    %v4274 = vunpack.c.h.b16 %v3725
    %v4275 = vunpack.c.l.b16 %v3726
    %v4276 = vunpack.c.h.b16 %v3726
    %v4277 = vunpack.c.l.b16 %v3727
    %v4278 = vunpack.c.h.b16 %v3727
    %v4279 = vunpack.c.l.b16 %v3728
    %v4280 = vunpack.c.h.b16 %v3728
    %v4281 = vunpack.c.l.b16 %v3729
    %v4282 = vunpack.c.h.b16 %v3729
    %v4283 = vunpack.c.l.b16 %v3730
    %v4284 = vunpack.c.h.b16 %v3730
    %v4285 = vunpack.c.l.b16 %v3731
    %v4286 = vunpack.c.h.b16 %v3731
    %v4287 = vunpack.c.l.b16 %v3732
    %v4288 = vunpack.c.h.b16 %v3732
    %v4289 = vunpack.c.l.b16 %v3733
    %v4290 = vunpack.c.h.b16 %v3733
    %v4291 = vunpack.c.l.b16 %v3734
    %v4292 = vunpack.c.h.b16 %v3734
    %v4293 = vunpack.c.l.b16 %v3735
    %v4294 = vunpack.c.h.b16 %v3735
    %v4295 = vunpack.c.l.b16 %v3736
    %v4296 = vunpack.c.h.b16 %v3736
    %v4297 = vunpack.c.l.b16 %v3737
    %v4298 = vunpack.c.h.b16 %v3737
    %v4299 = vunpack.c.l.b16 %v3738
    %v4300 = vunpack.c.h.b16 %v3738
    %v4301 = vunpack.c.l.b16 %v3739
    %v4302 = vunpack.c.h.b16 %v3739
    %v4303 = vunpack.c.l.b16 %v3740
    %v4304 = vunpack.c.h.b16 %v3740
    %v4305 = vunpack.c.l.b16 %v3741
    %v4306 = vunpack.c.h.b16 %v3741
    %v4307 = vunpack.c.l.b16 %v3742
    %v4308 = vunpack.c.h.b16 %v3742
    %v4309 = vunpack.c.l.b16 %v3743
    %v4310 = vunpack.c.h.b16 %v3743
    %v4311 = vunpack.c.l.b16 %v3744
    %v4312 = vunpack.c.h.b16 %v3744
    %v4313 = vunpack.c.l.b16 %v3745
    %v4314 = vunpack.c.h.b16 %v3745
    %v4315 = vunpack.c.l.b16 %v3746
    %v4316 = vunpack.c.h.b16 %v3746
    %v4317 = vunpack.c.l.b16 %v3747
    %v4318 = vunpack.c.h.b16 %v3747
    %v4319 = vunpack.c.l.b16 %v3748
    %v4320 = vunpack.c.h.b16 %v3748
    %v4321 = vunpack.c.l.b16 %v3749
    %v4322 = vunpack.c.h.b16 %v3749
    %v4323 = vunpack.c.l.b16 %v3750
    %v4324 = vunpack.c.h.b16 %v3750
    %v4325 = vunpack.c.l.b16 %v3751
    %v4326 = vunpack.c.h.b16 %v3751
    %v4327 = vunpack.c.l.b16 %v3752
    %v4328 = vunpack.c.h.b16 %v3752
    %v4329 = vunpack.c.l.b16 %v3753
    %v4330 = vunpack.c.h.b16 %v3753
    %v4331 = vunpack.c.l.b16 %v3754
    %v4332 = vunpack.c.h.b16 %v3754
    %v4333 = vunpack.c.l.b16 %v3755
    %v4334 = vunpack.c.h.b16 %v3755
    %v4335 = vunpack.c.l.b16 %v3756
    %v4336 = vunpack.c.h.b16 %v3756
    %v4337 = vunpack.c.l.b16 %v3757
    %v4338 = vunpack.c.h.b16 %v3757
    %v4339 = vunpack.c.l.b16 %v3758
    %v4340 = vunpack.c.h.b16 %v3758
    %v4341 = vunpack.c.l.b16 %v3759
    %v4342 = vunpack.c.h.b16 %v3759
    %v4343 = vunpack.c.l.b16 %v3760
    %v4344 = vunpack.c.h.b16 %v3760
    %v4345 = vunpack.c.l.b16 %v3761
    %v4346 = vunpack.c.h.b16 %v3761
    %v4347 = vunpack.c.l.b16 %v3762
    %v4348 = vunpack.c.h.b16 %v3762
    %v4349 = vunpack.c.l.b16 %v3763
    %v4350 = vunpack.c.h.b16 %v3763
    %v4351 = vunpack.c.l.b16 %v3764
    %v4352 = vunpack.c.h.b16 %v3764
    %v4353 = vunpack.c.l.b16 %v3765
    %v4354 = vunpack.c.h.b16 %v3765
    %v4355 = vunpack.c.l.b16 %v3766
    %v4356 = vunpack.c.h.b16 %v3766
    %v4357 = vunpack.c.l.b16 %v3767
    %v4358 = vunpack.c.h.b16 %v3767
    %v4359 = vunpack.c.l.b16 %v3768
    %v4360 = vunpack.c.h.b16 %v3768
    %v4361 = vunpack.c.l.b16 %v3769
    %v4362 = vunpack.c.h.b16 %v3769
    %v4363 = vunpack.c.l.b16 %v3770
    %v4364 = vunpack.c.h.b16 %v3770
    %v4365 = vunpack.c.l.b16 %v3771
    %v4366 = vunpack.c.h.b16 %v3771
    %v4367 = vunpack.c.l.b16 %v3772
    %v4368 = vunpack.c.h.b16 %v3772
    %v4369 = vunpack.c.l.b16 %v3773
    %v4370 = vunpack.c.h.b16 %v3773
    %v4371 = vunpack.c.l.b16 %v3774
    %v4372 = vunpack.c.h.b16 %v3774
    %v4373 = vunpack.c.l.b16 %v3775
    %v4374 = vunpack.c.h.b16 %v3775
    %v4375 = vunpack.c.l.b16 %v3776
    %v4376 = vunpack.c.h.b16 %v3776
    %v4377 = vunpack.c.l.b16 %v3777
    %v4378 = vunpack.c.h.b16 %v3777
    %v4379 = vunpack.c.l.b16 %v3778
    %v4380 = vunpack.c.h.b16 %v3778
    %v4381 = vunpack.c.l.b16 %v3779
    %v4382 = vunpack.c.h.b16 %v3779
    %v4383 = vunpack.c.l.b16 %v3780
    %v4384 = vunpack.c.h.b16 %v3780
    %v4385 = vunpack.c.l.b16 %v3781
    %v4386 = vunpack.c.h.b16 %v3781
    %v4387 = vunpack.c.l.b16 %v3782
    %v4388 = vunpack.c.h.b16 %v3782
    %v4389 = vunpack.c.l.b16 %v3783
    %v4390 = vunpack.c.h.b16 %v3783
    %v4391 = vunpack.c.l.b16 %v3784
    %v4392 = vunpack.c.h.b16 %v3784
    %v4393 = vunpack.c.l.b16 %v3785
    %v4394 = vunpack.c.h.b16 %v3785
    %v4395 = vunpack.c.l.b16 %v3786
    %v4396 = vunpack.c.h.b16 %v3786
    %v4397 = vunpack.c.l.b16 %v3787
    %v4398 = vunpack.c.h.b16 %v3787
    %v4399 = vunpack.c.l.b16 %v3788
    %v4400 = vunpack.c.h.b16 %v3788
    %v4401 = vunpack.c.l.b16 %v3789
    %v4402 = vunpack.c.h.b16 %v3789
    %v4403 = vunpack.c.l.b16 %v3790
    %v4404 = vunpack.c.h.b16 %v3790
    %v4405 = vunpack.c.l.b16 %v3791
    %v4406 = vunpack.c.h.b16 %v3791
    %v4407 = vunpack.c.l.b16 %v3792
    %v4408 = vunpack.c.h.b16 %v3792
    %v4409 = vunpack.c.l.b16 %v3793
    %v4410 = vunpack.c.h.b16 %v3793
    %v4411 = vunpack.c.l.b16 %v3794
    %v4412 = vunpack.c.h.b16 %v3794
    %v4413 = vunpack.c.l.b16 %v3795
    %v4414 = vunpack.c.h.b16 %v3795
    %v4415 = vunpack.c.l.b16 %v3796
    %v4416 = vunpack.c.h.b16 %v3796
    %v4417 = vunpack.c.l.b16 %v3797
    %v4418 = vunpack.c.h.b16 %v3797
    %v4419 = vunpack.c.l.b16 %v3798
    %v4420 = vunpack.c.h.b16 %v3798
    %v4421 = vunpack.c.l.b16 %v3799
    %v4422 = vunpack.c.h.b16 %v3799
    %v4423 = vunpack.c.l.b16 %v3800
    %v4424 = vunpack.c.h.b16 %v3800
    %v4425 = vunpack.c.l.b16 %v3801
    %v4426 = vunpack.c.h.b16 %v3801
    %v4427 = vunpack.c.l.b16 %v3802
    %v4428 = vunpack.c.h.b16 %v3802
    %v4429 = vunpack.c.l.b16 %v3803
    %v4430 = vunpack.c.h.b16 %v3803
    %v4431 = vunpack.c.l.b16 %v3804
    %v4432 = vunpack.c.h.b16 %v3804
    %v4433 = vunpack.c.l.b16 %v3805
    %v4434 = vunpack.c.h.b16 %v3805
    %v4435 = vunpack.c.l.b16 %v3806
    %v4436 = vunpack.c.h.b16 %v3806
    %v4437 = vunpack.c.l.b16 %v3807
    %v4438 = vunpack.c.h.b16 %v3807
    %v4439 = vunpack.c.l.b16 %v3808
    %v4440 = vunpack.c.h.b16 %v3808
    %v4441 = vunpack.c.l.b16 %v3809
    %v4442 = vunpack.c.h.b16 %v3809
    %v4443 = vunpack.c.l.b16 %v3810
    %v4444 = vunpack.c.h.b16 %v3810
    %v4445 = vunpack.c.l.b16 %v3811
    %v4446 = vunpack.c.h.b16 %v3811
    %v4447 = vunpack.c.l.b16 %v3812
    %v4448 = vunpack.c.h.b16 %v3812
    %v4449 = vunpack.c.l.b16 %v3813
    %v4450 = vunpack.c.h.b16 %v3813
    %v4451 = vunpack.c.l.b16 %v3814
    %v4452 = vunpack.c.h.b16 %v3814
    %v4453 = vunpack.c.l.b16 %v3815
    %v4454 = vunpack.c.h.b16 %v3815
    %v4455 = vpack.c.b16 %v4075, %v4065
    %v4456 = vpack.c.b16 %v4076, %v4066
    %v4457 = vpack.c.b16 %v4077, %v4067
    %v4458 = vpack.c.b16 %v4078, %v4068
    %v4459 = vpack.c.b16 %v4079, %v4069
    %v4460 = vpack.c.b16 %v4080, %v4070
    %v4461 = vpack.c.b16 %v4081, %v4071
    %v4462 = vpack.c.b16 %v4082, %v4072
    %v4463 = vpack.c.b16 %v4083, %v4073
    %v4464 = vpack.c.b16 %v4084, %v4074
    %v4465 = vpack.c.b16 %v4095, %v4085
    %v4466 = vpack.c.b16 %v4096, %v4086
    %v4467 = vpack.c.b16 %v4097, %v4087
    %v4468 = vpack.c.b16 %v4098, %v4088
    %v4469 = vpack.c.b16 %v4099, %v4089
    %v4470 = vpack.c.b16 %v4100, %v4090
    %v4471 = vpack.c.b16 %v4101, %v4091
    %v4472 = vpack.c.b16 %v4102, %v4092
    %v4473 = vpack.c.b16 %v4103, %v4093
    %v4474 = vpack.c.b16 %v4104, %v4094
    %v4475 = vpack.c.b16 %v4115, %v4105
    %v4476 = vpack.c.b16 %v4116, %v4106
    %v4477 = vpack.c.b16 %v4117, %v4107
    %v4478 = vpack.c.b16 %v4118, %v4108
    %v4479 = vpack.c.b16 %v4119, %v4109
    %v4480 = vpack.c.b16 %v4120, %v4110
    %v4481 = vpack.c.b16 %v4121, %v4111
    %v4482 = vpack.c.b16 %v4122, %v4112
    %v4483 = vpack.c.b16 %v4123, %v4113
    %v4484 = vpack.c.b16 %v4124, %v4114
    %v4485 = vpack.c.b16 %v4135, %v4125
    %v4486 = vpack.c.b16 %v4136, %v4126
    %v4487 = vpack.c.b16 %v4137, %v4127
    %v4488 = vpack.c.b16 %v4138, %v4128
    %v4489 = vpack.c.b16 %v4139, %v4129
    %v4490 = vpack.c.b16 %v4140, %v4130
    %v4491 = vpack.c.b16 %v4141, %v4131
    %v4492 = vpack.c.b16 %v4142, %v4132
    %v4493 = vpack.c.b16 %v4143, %v4133
    %v4494 = vpack.c.b16 %v4144, %v4134
    %v4495 = vpack.c.b16 %v4155, %v4145
    %v4496 = vpack.c.b16 %v4156, %v4146
    %v4497 = vpack.c.b16 %v4157, %v4147
    %v4498 = vpack.c.b16 %v4158, %v4148
    %v4499 = vpack.c.b16 %v4159, %v4149
    %v4500 = vpack.c.b16 %v4160, %v4150
    %v4501 = vpack.c.b16 %v4161, %v4151
    %v4502 = vpack.c.b16 %v4162, %v4152
    %v4503 = vpack.c.b16 %v4163, %v4153
    %v4504 = vpack.c.b16 %v4164, %v4154
    %v4505 = vpack.c.b16 %v4175, %v4165
    %v4506 = vpack.c.b16 %v4176, %v4166
    %v4507 = vpack.c.b16 %v4177, %v4167
    %v4508 = vpack.c.b16 %v4178, %v4168
    %v4509 = vpack.c.b16 %v4179, %v4169
    %v4510 = vpack.c.b16 %v4180, %v4170
    %v4511 = vpack.c.b16 %v4181, %v4171
    %v4512 = vpack.c.b16 %v4182, %v4172
    %v4513 = vpack.c.b16 %v4183, %v4173
    %v4514 = vpack.c.b16 %v4184, %v4174
    %v4515 = vpack.c.b16 %v4195, %v4185
    %v4516 = vpack.c.b16 %v4196, %v4186
    %v4517 = vpack.c.b16 %v4197, %v4187
    %v4518 = vpack.c.b16 %v4198, %v4188
    %v4519 = vpack.c.b16 %v4199, %v4189
    %v4520 = vpack.c.b16 %v4200, %v4190
    %v4521 = vpack.c.b16 %v4201, %v4191
    %v4522 = vpack.c.b16 %v4202, %v4192
    %v4523 = vpack.c.b16 %v4203, %v4193
    %v4524 = vpack.c.b16 %v4204, %v4194
    %v4525 = vpack.c.b16 %v4215, %v4205
    %v4526 = vpack.c.b16 %v4216, %v4206
    %v4527 = vpack.c.b16 %v4217, %v4207
    %v4528 = vpack.c.b16 %v4218, %v4208
    %v4529 = vpack.c.b16 %v4219, %v4209
    %v4530 = vpack.c.b16 %v4220, %v4210
    %v4531 = vpack.c.b16 %v4221, %v4211
    %v4532 = vpack.c.b16 %v4222, %v4212
    %v4533 = vpack.c.b16 %v4223, %v4213
    %v4534 = vpack.c.b16 %v4224, %v4214
    %v4535 = vpack.c.b16 %v4235, %v4225
    %v4536 = vpack.c.b16 %v4236, %v4226
    %v4537 = vpack.c.b16 %v4237, %v4227
    %v4538 = vpack.c.b16 %v4238, %v4228
    %v4539 = vpack.c.b16 %v4239, %v4229
    %v4540 = vpack.c.b16 %v4240, %v4230
    %v4541 = vpack.c.b16 %v4241, %v4231
    %v4542 = vpack.c.b16 %v4242, %v4232
    %v4543 = vpack.c.b16 %v4243, %v4233
    %v4544 = vpack.c.b16 %v4244, %v4234
    %v4545 = vpack.c.b16 %v4255, %v4245
    %v4546 = vpack.c.b16 %v4256, %v4246
    %v4547 = vpack.c.b16 %v4257, %v4247
    %v4548 = vpack.c.b16 %v4258, %v4248
    %v4549 = vpack.c.b16 %v4259, %v4249
    %v4550 = vpack.c.b16 %v4260, %v4250
    %v4551 = vpack.c.b16 %v4261, %v4251
    %v4552 = vpack.c.b16 %v4262, %v4252
    %v4553 = vpack.c.b16 %v4263, %v4253
    %v4554 = vpack.c.b16 %v4264, %v4254
    %v4555 = vpack.c.b16 %v4275, %v4265
    %v4556 = vpack.c.b16 %v4276, %v4266
    %v4557 = vpack.c.b16 %v4277, %v4267
    %v4558 = vpack.c.b16 %v4278, %v4268
    %v4559 = vpack.c.b16 %v4279, %v4269
    %v4560 = vpack.c.b16 %v4280, %v4270
    %v4561 = vpack.c.b16 %v4281, %v4271
    %v4562 = vpack.c.b16 %v4282, %v4272
    %v4563 = vpack.c.b16 %v4283, %v4273
    %v4564 = vpack.c.b16 %v4284, %v4274
    %v4565 = vpack.c.b16 %v4295, %v4285
    %v4566 = vpack.c.b16 %v4296, %v4286
    %v4567 = vpack.c.b16 %v4297, %v4287
    %v4568 = vpack.c.b16 %v4298, %v4288
    %v4569 = vpack.c.b16 %v4299, %v4289
    %v4570 = vpack.c.b16 %v4300, %v4290
    %v4571 = vpack.c.b16 %v4301, %v4291
    %v4572 = vpack.c.b16 %v4302, %v4292
    %v4573 = vpack.c.b16 %v4303, %v4293
    %v4574 = vpack.c.b16 %v4304, %v4294
    %v4575 = vpack.c.b16 %v4315, %v4305
    %v4576 = vpack.c.b16 %v4316, %v4306
    %v4577 = vpack.c.b16 %v4317, %v4307
    %v4578 = vpack.c.b16 %v4318, %v4308
    %v4579 = vpack.c.b16 %v4319, %v4309
    %v4580 = vpack.c.b16 %v4320, %v4310
    %v4581 = vpack.c.b16 %v4321, %v4311
    %v4582 = vpack.c.b16 %v4322, %v4312
    %v4583 = vpack.c.b16 %v4323, %v4313
    %v4584 = vpack.c.b16 %v4324, %v4314
    %v4585 = vpack.c.b16 %v4335, %v4325
    %v4586 = vpack.c.b16 %v4336, %v4326
    %v4587 = vpack.c.b16 %v4337, %v4327
    %v4588 = vpack.c.b16 %v4338, %v4328
    %v4589 = vpack.c.b16 %v4339, %v4329
    %v4590 = vpack.c.b16 %v4340, %v4330
    %v4591 = vpack.c.b16 %v4341, %v4331
    %v4592 = vpack.c.b16 %v4342, %v4332
    %v4593 = vpack.c.b16 %v4343, %v4333
    %v4594 = vpack.c.b16 %v4344, %v4334
    %v4595 = vpack.c.b16 %v4355, %v4345
    %v4596 = vpack.c.b16 %v4356, %v4346
    %v4597 = vpack.c.b16 %v4357, %v4347
    %v4598 = vpack.c.b16 %v4358, %v4348
    %v4599 = vpack.c.b16 %v4359, %v4349
    %v4600 = vpack.c.b16 %v4360, %v4350
    %v4601 = vpack.c.b16 %v4361, %v4351
    %v4602 = vpack.c.b16 %v4362, %v4352
    %v4603 = vpack.c.b16 %v4363, %v4353
    %v4604 = vpack.c.b16 %v4364, %v4354
    %v4605 = vpack.c.b16 %v4375, %v4365
    %v4606 = vpack.c.b16 %v4376, %v4366
    %v4607 = vpack.c.b16 %v4377, %v4367
    %v4608 = vpack.c.b16 %v4378, %v4368
    %v4609 = vpack.c.b16 %v4379, %v4369
    %v4610 = vpack.c.b16 %v4380, %v4370
    %v4611 = vpack.c.b16 %v4381, %v4371
    %v4612 = vpack.c.b16 %v4382, %v4372
    %v4613 = vpack.c.b16 %v4383, %v4373
    %v4614 = vpack.c.b16 %v4384, %v4374
    %v4615 = vpack.c.b16 %v4395, %v4385
    %v4616 = vpack.c.b16 %v4396, %v4386
    %v4617 = vpack.c.b16 %v4397, %v4387
    %v4618 = vpack.c.b16 %v4398, %v4388
    %v4619 = vpack.c.b16 %v4399, %v4389
    %v4620 = vpack.c.b16 %v4400, %v4390
    %v4621 = vpack.c.b16 %v4401, %v4391
    %v4622 = vpack.c.b16 %v4402, %v4392
    %v4623 = vpack.c.b16 %v4403, %v4393
    %v4624 = vpack.c.b16 %v4404, %v4394
    %v4625 = vpack.c.b16 %v4415, %v4405
    %v4626 = vpack.c.b16 %v4416, %v4406
    %v4627 = vpack.c.b16 %v4417, %v4407
    %v4628 = vpack.c.b16 %v4418, %v4408
    %v4629 = vpack.c.b16 %v4419, %v4409
    %v4630 = vpack.c.b16 %v4420, %v4410
    %v4631 = vpack.c.b16 %v4421, %v4411
    %v4632 = vpack.c.b16 %v4422, %v4412
    %v4633 = vpack.c.b16 %v4423, %v4413
    %v4634 = vpack.c.b16 %v4424, %v4414
    %v4635 = vpack.c.b16 %v4435, %v4425
    %v4636 = vpack.c.b16 %v4436, %v4426
    %v4637 = vpack.c.b16 %v4437, %v4427
    %v4638 = vpack.c.b16 %v4438, %v4428
    %v4639 = vpack.c.b16 %v4439, %v4429
    %v4640 = vpack.c.b16 %v4440, %v4430
    %v4641 = vpack.c.b16 %v4441, %v4431
    %v4642 = vpack.c.b16 %v4442, %v4432
    %v4643 = vpack.c.b16 %v4443, %v4433
    %v4644 = vpack.c.b16 %v4444, %v4434
    %v4645 = vpack.c.b16 %v4445, %v4445
    %v4646 = vpack.c.b16 %v4446, %v4446
    %v4647 = vpack.c.b16 %v4447, %v4447
    %v4648 = vpack.c.b16 %v4448, %v4448
    %v4649 = vpack.c.b16 %v4449, %v4449
    %v4650 = vpack.c.b16 %v4450, %v4450
    %v4651 = vpack.c.b16 %v4451, %v4451
    %v4652 = vpack.c.b16 %v4452, %v4452
    %v4653 = vpack.c.b16 %v4453, %v4453
    %v4654 = vpack.c.b16 %v4454, %v4454
    %v4846 = vand.u32 %v4645, %v1364
    %v4849 = vand.u32 %v4646, %v1364
    %v4852 = vand.u32 %v4647, %v1364
    %v4855 = vand.u32 %v4648, %v1364
    %v4858 = vand.u32 %v4649, %v1364
    %v4861 = vand.u32 %v4650, %v1364
    %v4864 = vand.u32 %v4651, %v1364
    %v4867 = vand.u32 %v4652, %v1364
    %v4870 = vand.u32 %v4653, %v1364
    %v4873 = vand.u32 %v4654, %v1364
    %4875 = vmatprep.subr.bf16.mxu0 %v4526
    %4876 = vmatpush1.bf16.msra.mxu0 %v4525
    %4877 = vmatprep.subr.bf16.mxu0 %v4516
    %4878 = vmatpush1.bf16.msra.mxu0 %v4515
    %4879 = vmatprep.subr.bf16.mxu0 %v4506
    %4880 = vmatpush1.bf16.msra.mxu0 %v4505
    %4881 = vmatprep.subr.bf16.mxu0 %v4496
    %4882 = vmatpush1.bf16.msra.mxu0 %v4495
    %4883 = vmatprep.subr.bf16.mxu0 %v4486
    %4884 = vmatpush1.bf16.msra.mxu0 %v4485
    %4885 = vmatprep.subr.bf16.mxu0 %v4476
    %4886 = vmatpush1.bf16.msra.mxu0 %v4475
    %4887 = vmatprep.subr.bf16.mxu0 %v4466
    %4888 = vmatpush1.bf16.msra.mxu0 %v4465
    %4889 = vmatprep.subr.bf16.mxu0 %v4456
    %4890 = vmatpush1.bf16.msra.mxu0 %v4455
    %4891 = vmatprep.subr.bf16.mxu0 %v4606
    %4892 = vmatpush2.bf16.msra.mxu0 %v4605
    %4893 = vmatprep.subr.bf16.mxu0 %v4596
    %4894 = vmatpush2.bf16.msra.mxu0 %v4595
    %4895 = vmatprep.subr.bf16.mxu0 %v4586
    %4896 = vmatpush2.bf16.msra.mxu0 %v4585
    %4897 = vmatprep.subr.bf16.mxu0 %v4576
    %4898 = vmatpush2.bf16.msra.mxu0 %v4575
    %4899 = vmatprep.subr.bf16.mxu0 %v4566
    %4900 = vmatpush2.bf16.msra.mxu0 %v4565
    %4901 = vmatprep.subr.bf16.mxu0 %v4556
    %4902 = vmatpush2.bf16.msra.mxu0 %v4555
    %4903 = vmatprep.subr.bf16.mxu0 %v4546
    %4904 = vmatpush2.bf16.msra.mxu0 %v4545
    %4905 = vmatprep.subr.bf16.mxu0 %v4536
    %4906 = vmatpush2.bf16.msra.mxu0 %v4535
    %4907 = vmatprep.mubr.bf16.mxu0 %v378
    %4908 = vmatmul.mubr.bf16.gmra.mxu0 %v371
    %v4909 = vpop.f32.mrf.mxu0
    %v4910 = vadd.f32 %v3823, %v4909
    %v4911 = vpop.f32.mrf.mxu0
    %v4912 = vadd.f32 %v3827, %v4911
    %v4913 = vpop.f32.mrf.mxu0
    %v4914 = vpop.f32.mrf.mxu0
    %4915 = vdwg.mxu0
    %4916 = vmatprep.subr.bf16.mxu0 0
    %4917 = vmatpush1.bf16.msra.mxu0 0
    %4918 = vmatprep.subr.bf16.mxu0 0
    %4919 = vmatpush1.bf16.msra.mxu0 0
    %4920 = vmatprep.subr.bf16.mxu0 0
    %4921 = vmatpush1.bf16.msra.mxu0 0
    %4922 = vmatprep.subr.bf16.mxu0 0
    %4923 = vmatpush1.bf16.msra.mxu0 0
    %4924 = vmatprep.subr.bf16.mxu0 %v4849
    %4925 = vmatpush1.bf16.msra.mxu0 %v4846
    %4926 = vmatprep.subr.bf16.mxu0 %v4636
    %4927 = vmatpush1.bf16.msra.mxu0 %v4635
    %4928 = vmatprep.subr.bf16.mxu0 %v4626
    %4929 = vmatpush1.bf16.msra.mxu0 %v4625
    %4930 = vmatprep.subr.bf16.mxu0 %v4616
    %4931 = vmatpush1.bf16.msra.mxu0 %v4615
    %4932 = vmatprep.subr.bf16.mxu0 0
    %4933 = vmatpush2.bf16.msra.mxu0 0
    %4934 = vmatprep.subr.bf16.mxu0 0
    %4935 = vmatpush2.bf16.msra.mxu0 0
    %4936 = vmatprep.subr.bf16.mxu0 0
    %4937 = vmatpush2.bf16.msra.mxu0 0
    %4938 = vmatprep.subr.bf16.mxu0 0
    %4939 = vmatpush2.bf16.msra.mxu0 0
    %4940 = vmatprep.subr.bf16.mxu0 0
    %4941 = vmatpush2.bf16.msra.mxu0 0
    %4942 = vmatprep.subr.bf16.mxu0 0
    %4943 = vmatpush2.bf16.msra.mxu0 0
    %4944 = vmatprep.subr.bf16.mxu0 0
    %4945 = vmatpush2.bf16.msra.mxu0 0
    %4946 = vmatprep.subr.bf16.mxu0 0
    %4947 = vmatpush2.bf16.msra.mxu0 0
    %4948 = vmatprep.mubr.bf16.mxu0 0
    %4949 = vmatmul.mubr.bf16.gmra.mxu0 %v1359
    %v4950 = vpop.f32.mrf.mxu0
    %v4951 = vadd.f32 %v4910, %v4950
    %v4952 = vpop.f32.mrf.mxu0
    %v4953 = vadd.f32 %v4912, %v4952
    %v4954 = vpop.f32.mrf.mxu0
    %v4955 = vpop.f32.mrf.mxu0
    %4956 = vdwg.mxu0
    %4957 = vmatprep.subr.bf16.mxu0 %v4528
    %4958 = vmatpush1.bf16.msra.mxu0 %v4527
    %4959 = vmatprep.subr.bf16.mxu0 %v4518
    %4960 = vmatpush1.bf16.msra.mxu0 %v4517
    %4961 = vmatprep.subr.bf16.mxu0 %v4508
    %4962 = vmatpush1.bf16.msra.mxu0 %v4507
    %4963 = vmatprep.subr.bf16.mxu0 %v4498
    %4964 = vmatpush1.bf16.msra.mxu0 %v4497
    %4965 = vmatprep.subr.bf16.mxu0 %v4488
    %4966 = vmatpush1.bf16.msra.mxu0 %v4487
    %4967 = vmatprep.subr.bf16.mxu0 %v4478
    %4968 = vmatpush1.bf16.msra.mxu0 %v4477
    %4969 = vmatprep.subr.bf16.mxu0 %v4468
    %4970 = vmatpush1.bf16.msra.mxu0 %v4467
    %4971 = vmatprep.subr.bf16.mxu0 %v4458
    %4972 = vmatpush1.bf16.msra.mxu0 %v4457
    %4973 = vmatprep.subr.bf16.mxu0 %v4608
    %4974 = vmatpush2.bf16.msra.mxu0 %v4607
    %4975 = vmatprep.subr.bf16.mxu0 %v4598
    %4976 = vmatpush2.bf16.msra.mxu0 %v4597
    %4977 = vmatprep.subr.bf16.mxu0 %v4588
    %4978 = vmatpush2.bf16.msra.mxu0 %v4587
    %4979 = vmatprep.subr.bf16.mxu0 %v4578
    %4980 = vmatpush2.bf16.msra.mxu0 %v4577
    %4981 = vmatprep.subr.bf16.mxu0 %v4568
    %4982 = vmatpush2.bf16.msra.mxu0 %v4567
    %4983 = vmatprep.subr.bf16.mxu0 %v4558
    %4984 = vmatpush2.bf16.msra.mxu0 %v4557
    %4985 = vmatprep.subr.bf16.mxu0 %v4548
    %4986 = vmatpush2.bf16.msra.mxu0 %v4547
    %4987 = vmatprep.subr.bf16.mxu0 %v4538
    %4988 = vmatpush2.bf16.msra.mxu0 %v4537
    %4989 = vmatprep.mubr.bf16.mxu0 %v378
    %4990 = vmatmul.mubr.bf16.gmra.mxu0 %v371
    %v4991 = vpop.f32.mrf.mxu0
    %v4992 = vadd.f32 %v3831, %v4991
    %v4993 = vpop.f32.mrf.mxu0
    %v4994 = vadd.f32 %v3835, %v4993
    %v4995 = vpop.f32.mrf.mxu0
    %v4996 = vpop.f32.mrf.mxu0
    %4997 = vdwg.mxu0
    %4998 = vmatprep.subr.bf16.mxu0 0
    %4999 = vmatpush1.bf16.msra.mxu0 0
    %5000 = vmatprep.subr.bf16.mxu0 0
    %5001 = vmatpush1.bf16.msra.mxu0 0
    %5002 = vmatprep.subr.bf16.mxu0 0
    %5003 = vmatpush1.bf16.msra.mxu0 0
    %5004 = vmatprep.subr.bf16.mxu0 0
    %5005 = vmatpush1.bf16.msra.mxu0 0
    %5006 = vmatprep.subr.bf16.mxu0 %v4855
    %5007 = vmatpush1.bf16.msra.mxu0 %v4852
    %5008 = vmatprep.subr.bf16.mxu0 %v4638
    %5009 = vmatpush1.bf16.msra.mxu0 %v4637
    %5010 = vmatprep.subr.bf16.mxu0 %v4628
    %5011 = vmatpush1.bf16.msra.mxu0 %v4627
    %5012 = vmatprep.subr.bf16.mxu0 %v4618
    %5013 = vmatpush1.bf16.msra.mxu0 %v4617
    %5014 = vmatprep.subr.bf16.mxu0 0
    %5015 = vmatpush2.bf16.msra.mxu0 0
    %5016 = vmatprep.subr.bf16.mxu0 0
    %5017 = vmatpush2.bf16.msra.mxu0 0
    %5018 = vmatprep.subr.bf16.mxu0 0
    %5019 = vmatpush2.bf16.msra.mxu0 0
    %5020 = vmatprep.subr.bf16.mxu0 0
    %5021 = vmatpush2.bf16.msra.mxu0 0
    %5022 = vmatprep.subr.bf16.mxu0 0
    %5023 = vmatpush2.bf16.msra.mxu0 0
    %5024 = vmatprep.subr.bf16.mxu0 0
    %5025 = vmatpush2.bf16.msra.mxu0 0
    %5026 = vmatprep.subr.bf16.mxu0 0
    %5027 = vmatpush2.bf16.msra.mxu0 0
    %5028 = vmatprep.subr.bf16.mxu0 0
    %5029 = vmatpush2.bf16.msra.mxu0 0
    %5030 = vmatprep.mubr.bf16.mxu0 0
    %5031 = vmatmul.mubr.bf16.gmra.mxu0 %v1359
    %v5032 = vpop.f32.mrf.mxu0
    %v5033 = vadd.f32 %v4992, %v5032
    %v5034 = vpop.f32.mrf.mxu0
    %v5035 = vadd.f32 %v4994, %v5034
    %v5036 = vpop.f32.mrf.mxu0
    %v5037 = vpop.f32.mrf.mxu0
    %5038 = vdwg.mxu0
    %5039 = vmatprep.subr.bf16.mxu0 %v4530
    %5040 = vmatpush1.bf16.msra.mxu0 %v4529
    %5041 = vmatprep.subr.bf16.mxu0 %v4520
    %5042 = vmatpush1.bf16.msra.mxu0 %v4519
    %5043 = vmatprep.subr.bf16.mxu0 %v4510
    %5044 = vmatpush1.bf16.msra.mxu0 %v4509
    %5045 = vmatprep.subr.bf16.mxu0 %v4500
    %5046 = vmatpush1.bf16.msra.mxu0 %v4499
    %5047 = vmatprep.subr.bf16.mxu0 %v4490
    %5048 = vmatpush1.bf16.msra.mxu0 %v4489
    %5049 = vmatprep.subr.bf16.mxu0 %v4480
    %5050 = vmatpush1.bf16.msra.mxu0 %v4479
    %5051 = vmatprep.subr.bf16.mxu0 %v4470
    %5052 = vmatpush1.bf16.msra.mxu0 %v4469
    %5053 = vmatprep.subr.bf16.mxu0 %v4460
    %5054 = vmatpush1.bf16.msra.mxu0 %v4459
    %5055 = vmatprep.subr.bf16.mxu0 %v4610
    %5056 = vmatpush2.bf16.msra.mxu0 %v4609
    %5057 = vmatprep.subr.bf16.mxu0 %v4600
    %5058 = vmatpush2.bf16.msra.mxu0 %v4599
    %5059 = vmatprep.subr.bf16.mxu0 %v4590
    %5060 = vmatpush2.bf16.msra.mxu0 %v4589
    %5061 = vmatprep.subr.bf16.mxu0 %v4580
    %5062 = vmatpush2.bf16.msra.mxu0 %v4579
    %5063 = vmatprep.subr.bf16.mxu0 %v4570
    %5064 = vmatpush2.bf16.msra.mxu0 %v4569
    %5065 = vmatprep.subr.bf16.mxu0 %v4560
    %5066 = vmatpush2.bf16.msra.mxu0 %v4559
    %5067 = vmatprep.subr.bf16.mxu0 %v4550
    %5068 = vmatpush2.bf16.msra.mxu0 %v4549
    %5069 = vmatprep.subr.bf16.mxu0 %v4540
    %5070 = vmatpush2.bf16.msra.mxu0 %v4539
    %5071 = vmatprep.mubr.bf16.mxu0 %v378
    %5072 = vmatmul.mubr.bf16.gmra.mxu0 %v371
    %v5073 = vpop.f32.mrf.mxu0
    %v5074 = vadd.f32 %v3839, %v5073
    %v5075 = vpop.f32.mrf.mxu0
    %v5076 = vadd.f32 %v3843, %v5075
    %v5077 = vpop.f32.mrf.mxu0
    %v5078 = vpop.f32.mrf.mxu0
    %5079 = vdwg.mxu0
    %5080 = vmatprep.subr.bf16.mxu0 0
    %5081 = vmatpush1.bf16.msra.mxu0 0
    %5082 = vmatprep.subr.bf16.mxu0 0
    %5083 = vmatpush1.bf16.msra.mxu0 0
    %5084 = vmatprep.subr.bf16.mxu0 0
    %5085 = vmatpush1.bf16.msra.mxu0 0
    %5086 = vmatprep.subr.bf16.mxu0 0
    %5087 = vmatpush1.bf16.msra.mxu0 0
    %5088 = vmatprep.subr.bf16.mxu0 %v4861
    %5089 = vmatpush1.bf16.msra.mxu0 %v4858
    %5090 = vmatprep.subr.bf16.mxu0 %v4640
    %5091 = vmatpush1.bf16.msra.mxu0 %v4639
    %5092 = vmatprep.subr.bf16.mxu0 %v4630
    %5093 = vmatpush1.bf16.msra.mxu0 %v4629
    %5094 = vmatprep.subr.bf16.mxu0 %v4620
    %5095 = vmatpush1.bf16.msra.mxu0 %v4619
    %5096 = vmatprep.subr.bf16.mxu0 0
    %5097 = vmatpush2.bf16.msra.mxu0 0
    %5098 = vmatprep.subr.bf16.mxu0 0
    %5099 = vmatpush2.bf16.msra.mxu0 0
    %5100 = vmatprep.subr.bf16.mxu0 0
    %5101 = vmatpush2.bf16.msra.mxu0 0
    %5102 = vmatprep.subr.bf16.mxu0 0
    %5103 = vmatpush2.bf16.msra.mxu0 0
    %5104 = vmatprep.subr.bf16.mxu0 0
    %5105 = vmatpush2.bf16.msra.mxu0 0
    %5106 = vmatprep.subr.bf16.mxu0 0
    %5107 = vmatpush2.bf16.msra.mxu0 0
    %5108 = vmatprep.subr.bf16.mxu0 0
    %5109 = vmatpush2.bf16.msra.mxu0 0
    %5110 = vmatprep.subr.bf16.mxu0 0
    %5111 = vmatpush2.bf16.msra.mxu0 0
    %5112 = vmatprep.mubr.bf16.mxu0 0
    %5113 = vmatmul.mubr.bf16.gmra.mxu0 %v1359
    %v5114 = vpop.f32.mrf.mxu0
    %v5115 = vadd.f32 %v5074, %v5114
    %v5116 = vpop.f32.mrf.mxu0
    %v5117 = vadd.f32 %v5076, %v5116
    %v5118 = vpop.f32.mrf.mxu0
    %v5119 = vpop.f32.mrf.mxu0
    %5120 = vdwg.mxu0
    %5121 = vmatprep.subr.bf16.mxu0 %v4532
    %5122 = vmatpush1.bf16.msra.mxu0 %v4531
    %5123 = vmatprep.subr.bf16.mxu0 %v4522
    %5124 = vmatpush1.bf16.msra.mxu0 %v4521
    %5125 = vmatprep.subr.bf16.mxu0 %v4512
    %5126 = vmatpush1.bf16.msra.mxu0 %v4511
    %5127 = vmatprep.subr.bf16.mxu0 %v4502
    %5128 = vmatpush1.bf16.msra.mxu0 %v4501
    %5129 = vmatprep.subr.bf16.mxu0 %v4492
    %5130 = vmatpush1.bf16.msra.mxu0 %v4491
    %5131 = vmatprep.subr.bf16.mxu0 %v4482
    %5132 = vmatpush1.bf16.msra.mxu0 %v4481
    %5133 = vmatprep.subr.bf16.mxu0 %v4472
    %5134 = vmatpush1.bf16.msra.mxu0 %v4471
    %5135 = vmatprep.subr.bf16.mxu0 %v4462
    %5136 = vmatpush1.bf16.msra.mxu0 %v4461
    %5137 = vmatprep.subr.bf16.mxu0 %v4612
    %5138 = vmatpush2.bf16.msra.mxu0 %v4611
    %5139 = vmatprep.subr.bf16.mxu0 %v4602
    %5140 = vmatpush2.bf16.msra.mxu0 %v4601
    %5141 = vmatprep.subr.bf16.mxu0 %v4592
    %5142 = vmatpush2.bf16.msra.mxu0 %v4591
    %5143 = vmatprep.subr.bf16.mxu0 %v4582
    %5144 = vmatpush2.bf16.msra.mxu0 %v4581
    %5145 = vmatprep.subr.bf16.mxu0 %v4572
    %5146 = vmatpush2.bf16.msra.mxu0 %v4571
    %5147 = vmatprep.subr.bf16.mxu0 %v4562
    %5148 = vmatpush2.bf16.msra.mxu0 %v4561
    %5149 = vmatprep.subr.bf16.mxu0 %v4552
    %5150 = vmatpush2.bf16.msra.mxu0 %v4551
    %5151 = vmatprep.subr.bf16.mxu0 %v4542
    %5152 = vmatpush2.bf16.msra.mxu0 %v4541
    %5153 = vmatprep.mubr.bf16.mxu0 %v378
    %5154 = vmatmul.mubr.bf16.gmra.mxu0 %v371
    %v5155 = vpop.f32.mrf.mxu0
    %v5156 = vadd.f32 %v3847, %v5155
    %v5157 = vpop.f32.mrf.mxu0
    %v5158 = vadd.f32 %v3851, %v5157
    %v5159 = vpop.f32.mrf.mxu0
    %v5160 = vpop.f32.mrf.mxu0
    %5161 = vdwg.mxu0
    %5162 = vmatprep.subr.bf16.mxu0 0
    %5163 = vmatpush1.bf16.msra.mxu0 0
    %5164 = vmatprep.subr.bf16.mxu0 0
    %5165 = vmatpush1.bf16.msra.mxu0 0
    %5166 = vmatprep.subr.bf16.mxu0 0
    %5167 = vmatpush1.bf16.msra.mxu0 0
    %5168 = vmatprep.subr.bf16.mxu0 0
    %5169 = vmatpush1.bf16.msra.mxu0 0
    %5170 = vmatprep.subr.bf16.mxu0 %v4867
    %5171 = vmatpush1.bf16.msra.mxu0 %v4864
    %5172 = vmatprep.subr.bf16.mxu0 %v4642
    %5173 = vmatpush1.bf16.msra.mxu0 %v4641
    %5174 = vmatprep.subr.bf16.mxu0 %v4632
    %5175 = vmatpush1.bf16.msra.mxu0 %v4631
    %5176 = vmatprep.subr.bf16.mxu0 %v4622
    %5177 = vmatpush1.bf16.msra.mxu0 %v4621
    %5178 = vmatprep.subr.bf16.mxu0 0
    %5179 = vmatpush2.bf16.msra.mxu0 0
    %5180 = vmatprep.subr.bf16.mxu0 0
    %5181 = vmatpush2.bf16.msra.mxu0 0
    %5182 = vmatprep.subr.bf16.mxu0 0
    %5183 = vmatpush2.bf16.msra.mxu0 0
    %5184 = vmatprep.subr.bf16.mxu0 0
    %5185 = vmatpush2.bf16.msra.mxu0 0
    %5186 = vmatprep.subr.bf16.mxu0 0
    %5187 = vmatpush2.bf16.msra.mxu0 0
    %5188 = vmatprep.subr.bf16.mxu0 0
    %5189 = vmatpush2.bf16.msra.mxu0 0
    %5190 = vmatprep.subr.bf16.mxu0 0
    %5191 = vmatpush2.bf16.msra.mxu0 0
    %5192 = vmatprep.subr.bf16.mxu0 0
    %5193 = vmatpush2.bf16.msra.mxu0 0
    %5194 = vmatprep.mubr.bf16.mxu0 0
    %5195 = vmatmul.mubr.bf16.gmra.mxu0 %v1359
    %v5196 = vpop.f32.mrf.mxu0
    %v5197 = vadd.f32 %v5156, %v5196
    %v5198 = vpop.f32.mrf.mxu0
    %v5199 = vadd.f32 %v5158, %v5198
    %v5200 = vpop.f32.mrf.mxu0
    %v5201 = vpop.f32.mrf.mxu0
    %5202 = vdwg.mxu0
    %5203 = vmatprep.subr.bf16.mxu0 %v4534
    %5204 = vmatpush1.bf16.msra.mxu0 %v4533
    %5205 = vmatprep.subr.bf16.mxu0 %v4524
    %5206 = vmatpush1.bf16.msra.mxu0 %v4523
    %5207 = vmatprep.subr.bf16.mxu0 %v4514
    %5208 = vmatpush1.bf16.msra.mxu0 %v4513
    %5209 = vmatprep.subr.bf16.mxu0 %v4504
    %5210 = vmatpush1.bf16.msra.mxu0 %v4503
    %5211 = vmatprep.subr.bf16.mxu0 %v4494
    %5212 = vmatpush1.bf16.msra.mxu0 %v4493
    %5213 = vmatprep.subr.bf16.mxu0 %v4484
    %5214 = vmatpush1.bf16.msra.mxu0 %v4483
    %5215 = vmatprep.subr.bf16.mxu0 %v4474
    %5216 = vmatpush1.bf16.msra.mxu0 %v4473
    %5217 = vmatprep.subr.bf16.mxu0 %v4464
    %5218 = vmatpush1.bf16.msra.mxu0 %v4463
    %5219 = vmatprep.subr.bf16.mxu0 %v4614
    %5220 = vmatpush2.bf16.msra.mxu0 %v4613
    %5221 = vmatprep.subr.bf16.mxu0 %v4604
    %5222 = vmatpush2.bf16.msra.mxu0 %v4603
    %5223 = vmatprep.subr.bf16.mxu0 %v4594
    %5224 = vmatpush2.bf16.msra.mxu0 %v4593
    %5225 = vmatprep.subr.bf16.mxu0 %v4584
    %5226 = vmatpush2.bf16.msra.mxu0 %v4583
    %5227 = vmatprep.subr.bf16.mxu0 %v4574
    %5228 = vmatpush2.bf16.msra.mxu0 %v4573
    %5229 = vmatprep.subr.bf16.mxu0 %v4564
    %5230 = vmatpush2.bf16.msra.mxu0 %v4563
    %5231 = vmatprep.subr.bf16.mxu0 %v4554
    %5232 = vmatpush2.bf16.msra.mxu0 %v4553
    %5233 = vmatprep.subr.bf16.mxu0 %v4544
    %5234 = vmatpush2.bf16.msra.mxu0 %v4543
    %5235 = vmatprep.mubr.bf16.mxu0 %v378
    %5236 = vmatmul.mubr.bf16.gmra.mxu0 %v371
    %v5237 = vpop.f32.mrf.mxu0
    %v5238 = vadd.f32 %v3855, %v5237
    %v5239 = vpop.f32.mrf.mxu0
    %v5240 = vadd.f32 %v3859, %v5239
    %v5241 = vpop.f32.mrf.mxu0
    %v5242 = vpop.f32.mrf.mxu0
    %5243 = vdwg.mxu0
    %5244 = vmatprep.subr.bf16.mxu0 0
    %5245 = vmatpush1.bf16.msra.mxu0 0
    %5246 = vmatprep.subr.bf16.mxu0 0
    %5247 = vmatpush1.bf16.msra.mxu0 0
    %5248 = vmatprep.subr.bf16.mxu0 0
    %5249 = vmatpush1.bf16.msra.mxu0 0
    %5250 = vmatprep.subr.bf16.mxu0 0
    %5251 = vmatpush1.bf16.msra.mxu0 0
    %5252 = vmatprep.subr.bf16.mxu0 %v4873
    %5253 = vmatpush1.bf16.msra.mxu0 %v4870
    %5254 = vmatprep.subr.bf16.mxu0 %v4644
    %5255 = vmatpush1.bf16.msra.mxu0 %v4643
    %5256 = vmatprep.subr.bf16.mxu0 %v4634
    %5257 = vmatpush1.bf16.msra.mxu0 %v4633
    %5258 = vmatprep.subr.bf16.mxu0 %v4624
    %5259 = vmatpush1.bf16.msra.mxu0 %v4623
    %5260 = vmatprep.subr.bf16.mxu0 0
    %5261 = vmatpush2.bf16.msra.mxu0 0
    %5262 = vmatprep.subr.bf16.mxu0 0
    %5263 = vmatpush2.bf16.msra.mxu0 0
    %5264 = vmatprep.subr.bf16.mxu0 0
    %5265 = vmatpush2.bf16.msra.mxu0 0
    %5266 = vmatprep.subr.bf16.mxu0 0
    %5267 = vmatpush2.bf16.msra.mxu0 0
    %5268 = vmatprep.subr.bf16.mxu0 0
    %5269 = vmatpush2.bf16.msra.mxu0 0
    %5270 = vmatprep.subr.bf16.mxu0 0
    %5271 = vmatpush2.bf16.msra.mxu0 0
    %5272 = vmatprep.subr.bf16.mxu0 0
    %5273 = vmatpush2.bf16.msra.mxu0 0
    %5274 = vmatprep.subr.bf16.mxu0 0
    %5275 = vmatpush2.bf16.msra.mxu0 0
    %5276 = vmatprep.mubr.bf16.mxu0 0
    %5277 = vmatmul.mubr.bf16.gmra.mxu0 %v1359
    %v5278 = vpop.f32.mrf.mxu0
    %v5279 = vadd.f32 %v5238, %v5278
    %v5280 = vpop.f32.mrf.mxu0
    %v5281 = vadd.f32 %v5240, %v5280
    %v5282 = vpop.f32.mrf.mxu0
    %v5283 = vpop.f32.mrf.mxu0
    %5284 = vdwg.mxu0
    %v5285 = vmul.f32 %v4951, 0.01
    %v5286 = vmul.f32 %v4953, 0.01
    %v5287 = vmul.f32 %v5033, 0.01
    %v5288 = vmul.f32 %v5035, 0.01
    %v5289 = vmul.f32 %v5115, 0.01
    %v5290 = vmul.f32 %v5117, 0.01
    %v5291 = vmul.f32 %v5197, 0.01
    %v5292 = vmul.f32 %v5199, 0.01
    %v5293 = vmul.f32 %v5279, 0.01
    %v5294 = vmul.f32 %v5281, 0.01
    %v5295 = vmax.f32 %v4951, %v5285
    %v5296 = vmax.f32 %v4953, %v5286
    %v5297 = vmax.f32 %v5033, %v5287
    %v5298 = vmax.f32 %v5035, %v5288
    %v5299 = vmax.f32 %v5115, %v5289
    %v5300 = vmax.f32 %v5117, %v5290
    %v5301 = vmax.f32 %v5197, %v5291
    %v5302 = vmax.f32 %v5199, %v5292
    %v5303 = vmax.f32 %v5279, %v5293
    %v5304 = vmax.f32 %v5281, %v5294
    %v5305 = vadd.f32 %v5295, %v5300
    %v5306 = vadd.f32 %v5296, %v5301
    %v5307 = vadd.f32 %v5297, %v5302
    %v5308 = vadd.f32 %v5298, %v5303
    %v5309 = vadd.f32 %v5299, %v5304
    %v5310 = vpack.c.bf16 %v5305, %v5305
    %v5311 = vpack.c.bf16 %v5306, %v5306
    %v5312 = vpack.c.bf16 %v5307, %v5307
    %v5313 = vpack.c.bf16 %v5308, %v5308
    %v5314 = vpack.c.bf16 %v5309, %v5309
    %v5320 = vcombine.low %v5310, %v5311
    %v5321 = vcombine.low %v5312, %v5313
    %v5323 = vunpack.c.l.s4 1966171168
    %v5324 = vunpack.c.0.s8 %v5323
    %v5325 = vlaneseq
    %v5326 = vshrl.u32 %v5325, 7
    %v5327 = vsub.s32 %v5324, %v5326
    %v5328 = vrot.slane %v5320, %v5327
    %v5330 = vunpack.c.l.s4 1966171168
    %v5331 = vunpack.c.0.s8 %v5330
    %v5332 = vlaneseq
    %v5333 = vshrl.u32 %v5332, 7
    %v5334 = vsub.s32 %v5331, %v5333
    %v5335 = vrot.slane %v5321, %v5334
    %v5337 = vunpack.c.l.s4 1966171168
    %v5338 = vunpack.c.0.s8 %v5337
    %v5339 = vlaneseq
    %v5340 = vshrl.u32 %v5339, 7
    %v5341 = vsub.s32 %v5338, %v5340
    %v5342 = vrot.slane %v5314, %v5341
    %v5343 = vcombine.low %v5328, %v5335
    %v5345 = vunpack.c.l.s4 1966171168
    %v5346 = vunpack.c.0.s8 %v5345
    %v5347 = vlaneseq
    %v5348 = vshrl.u32 %v5347, 7
    %v5349 = vsub.s32 %v5346, %v5348
    %v5350 = vrot.slane %v5343, %v5349
    %v5352 = vunpack.c.l.s4 1966171168
    %v5353 = vunpack.c.0.s8 %v5352
    %v5354 = vlaneseq
    %v5355 = vshrl.u32 %v5354, 7
    %v5356 = vsub.s32 %v5353, %v5355
    %v5357 = vrot.slane %v5342, %v5356
    %v5358 = vcombine.low %v5350, %v5357
    %5360 = vst [vmem:[#allocation2 + $0xa] sm:$0x1f] %v5358
    %v5361 = vld [vmem:[#allocation7 + $0x78] sm:$0xff]
    %v5362 = vld [vmem:[#allocation7 + $0x80] sm:$0xff]
    %v5363 = vld [vmem:[#allocation7 + $0x88] sm:$0xff]
    %v5364 = vld [vmem:[#allocation7 + $0x90] sm:$0xff]
    %v5365 = vld [vmem:[#allocation7 + $0x110] sm:$0xff]
    %v5366 = vld [vmem:[#allocation7 + $0x118] sm:$0xff]
    %v5367 = vld [vmem:[#allocation7 + $0x120] sm:$0xff]
    %v5368 = vld [vmem:[#allocation7 + $0x128] sm:$0xff]
    %v5369 = vld [vmem:[#allocation7 + $0x1a8] sm:$0xff]
    %v5370 = vld [vmem:[#allocation7 + $0x1b0] sm:$0xff]
    %v5371 = vld [vmem:[#allocation7 + $0x1b8] sm:$0xff]
    %v5372 = vld [vmem:[#allocation7 + $0x1c0] sm:$0xff]
    %v5373 = vld [vmem:[#allocation7 + $0x240] sm:$0xff]
    %v5374 = vld [vmem:[#allocation7 + $0x248] sm:$0xff]
    %v5375 = vld [vmem:[#allocation7 + $0x250] sm:$0xff]
    %v5376 = vld [vmem:[#allocation7 + $0x258] sm:$0xff]
    %v5377 = vld [vmem:[#allocation7 + $0x2d8] sm:$0xff]
    %v5378 = vld [vmem:[#allocation7 + $0x2e0] sm:$0xff]
    %v5379 = vld [vmem:[#allocation7 + $0x2e8] sm:$0xff]
    %v5380 = vld [vmem:[#allocation7 + $0x2f0] sm:$0xff]
    %v5381 = vld [vmem:[#allocation7 + $0x370] sm:$0xff]
    %v5382 = vld [vmem:[#allocation7 + $0x378] sm:$0xff]
    %v5383 = vld [vmem:[#allocation7 + $0x380] sm:$0xff]
    %v5384 = vld [vmem:[#allocation7 + $0x388] sm:$0xff]
    %v5385 = vld [vmem:[#allocation7 + $0x408] sm:$0xff]
    %v5386 = vld [vmem:[#allocation7 + $0x410] sm:$0xff]
    %v5387 = vld [vmem:[#allocation7 + $0x418] sm:$0xff]
    %v5388 = vld [vmem:[#allocation7 + $0x420] sm:$0xff]
    %v5389 = vld [vmem:[#allocation7 + $0x4a0] sm:$0xff]
    %v5390 = vld [vmem:[#allocation7 + $0x4a8] sm:$0xff]
    %v5391 = vld [vmem:[#allocation7 + $0x4b0] sm:$0xff]
    %v5392 = vld [vmem:[#allocation7 + $0x4b8] sm:$0xff]
    %v5393 = vld [vmem:[#allocation7 + $0x538] sm:$0xff]
    %v5394 = vld [vmem:[#allocation7 + $0x540] sm:$0xff]
    %v5395 = vld [vmem:[#allocation7 + $0x548] sm:$0xff]
    %v5396 = vld [vmem:[#allocation7 + $0x550] sm:$0xff]
    %v5397 = vld [vmem:[#allocation7 + $0x5d0] sm:$0xff]
    %v5398 = vld [vmem:[#allocation7 + $0x5d8] sm:$0xff]
    %v5399 = vld [vmem:[#allocation7 + $0x5e0] sm:$0xff]
    %v5400 = vld [vmem:[#allocation7 + $0x5e8] sm:$0xff]
    %v5401 = vld [vmem:[#allocation7 + $0x668] sm:$0xff]
    %v5402 = vld [vmem:[#allocation7 + $0x670] sm:$0xff]
    %v5403 = vld [vmem:[#allocation7 + $0x678] sm:$0xff]
    %v5404 = vld [vmem:[#allocation7 + $0x680] sm:$0xff]
    %v5405 = vld [vmem:[#allocation7 + $0x700] sm:$0xff]
    %v5406 = vld [vmem:[#allocation7 + $0x708] sm:$0xff]
    %v5407 = vld [vmem:[#allocation7 + $0x710] sm:$0xff]
    %v5408 = vld [vmem:[#allocation7 + $0x718] sm:$0xff]
    %v5409 = vld [vmem:[#allocation7 + $0x798] sm:$0xff]
    %v5410 = vld [vmem:[#allocation7 + $0x7a0] sm:$0xff]
    %v5411 = vld [vmem:[#allocation7 + $0x7a8] sm:$0xff]
    %v5412 = vld [vmem:[#allocation7 + $0x7b0] sm:$0xff]
    %v5413 = vld [vmem:[#allocation7 + $0x830] sm:$0xff]
    %v5414 = vld [vmem:[#allocation7 + $0x838] sm:$0xff]
    %v5415 = vld [vmem:[#allocation7 + $0x840] sm:$0xff]
    %v5416 = vld [vmem:[#allocation7 + $0x848] sm:$0xff]
    %v5417 = vld [vmem:[#allocation7 + $0x8c8] sm:$0xff]
    %v5418 = vld [vmem:[#allocation7 + $0x8d0] sm:$0xff]
    %v5419 = vld [vmem:[#allocation7 + $0x8d8] sm:$0xff]
    %v5420 = vld [vmem:[#allocation7 + $0x8e0] sm:$0xff]
    %v5421 = vld [vmem:[#allocation7 + $0x960] sm:$0xff]
    %v5422 = vld [vmem:[#allocation7 + $0x968] sm:$0xff]
    %v5423 = vld [vmem:[#allocation7 + $0x970] sm:$0xff]
    %v5424 = vld [vmem:[#allocation7 + $0x978] sm:$0xff]
    %v5425 = vld [vmem:[#allocation7 + $0x9f8] sm:$0xff]
    %v5426 = vld [vmem:[#allocation7 + $0xa00] sm:$0xff]
    %v5427 = vld [vmem:[#allocation7 + $0xa08] sm:$0xff]
    %v5428 = vld [vmem:[#allocation7 + $0xa10] sm:$0xff]
    %v5429 = vld [vmem:[#allocation7 + $0xa90] sm:$0xff]
    %v5430 = vld [vmem:[#allocation7 + $0xa98] sm:$0xff]
    %v5431 = vld [vmem:[#allocation7 + $0xaa0] sm:$0xff]
    %v5432 = vld [vmem:[#allocation7 + $0xaa8] sm:$0xff]
    %v5433 = vld [vmem:[#allocation7 + $0xb28] sm:$0xff]
    %v5434 = vld [vmem:[#allocation7 + $0xb30] sm:$0xff]
    %v5435 = vld [vmem:[#allocation7 + $0xb38] sm:$0xff]
    %v5436 = vld [vmem:[#allocation7 + $0xb40] sm:$0xff]
    %v5437 = vld [vmem:[#allocation7 + $0xbc0] sm:$0xff]
    %v5438 = vld [vmem:[#allocation7 + $0xbc8] sm:$0xff]
    %v5439 = vld [vmem:[#allocation7 + $0xbd0] sm:$0xff]
    %v5440 = vld [vmem:[#allocation7 + $0xbd8] sm:$0xff]
    %v5441 = vld [vmem:[#allocation7 + $0xc58] sm:$0xff]
    %v5442 = vld [vmem:[#allocation7 + $0xc60] sm:$0xff]
    %v5443 = vld [vmem:[#allocation7 + $0xc68] sm:$0xff]
    %v5444 = vld [vmem:[#allocation7 + $0xc70] sm:$0xff]
    %v5445 = vld [vmem:[#allocation7 + $0xcf0] sm:$0xff]
    %v5446 = vld [vmem:[#allocation7 + $0xcf8] sm:$0xff]
    %v5447 = vld [vmem:[#allocation7 + $0xd00] sm:$0xff]
    %v5448 = vld [vmem:[#allocation7 + $0xd08] sm:$0xff]
    %v5449 = vld [vmem:[#allocation7 + $0xd88] sm:$0xff]
    %v5450 = vld [vmem:[#allocation7 + $0xd90] sm:$0xff]
    %v5451 = vld [vmem:[#allocation7 + $0xd98] sm:$0xff]
    %v5452 = vld [vmem:[#allocation7 + $0xda0] sm:$0xff]
    %v5453 = vld [vmem:[#allocation7 + $0xe20] sm:$0xff]
    %v5454 = vld [vmem:[#allocation7 + $0xe28] sm:$0xff]
    %v5455 = vld [vmem:[#allocation7 + $0xe30] sm:$0xff]
    %v5456 = vld [vmem:[#allocation7 + $0xe38] sm:$0xff]
    %v5457 = vld [vmem:[#allocation7 + $0xeb8] sm:$0xff]
    %v5458 = vld [vmem:[#allocation7 + $0xec0] sm:$0xff]
    %v5459 = vld [vmem:[#allocation7 + $0xec8] sm:$0xff]
    %v5460 = vld [vmem:[#allocation7 + $0xed0] sm:$0xff]
    %v5461 = vld [vmem:[#allocation7 + $0xf50] sm:$0xff]
    %v5462 = vld [vmem:[#allocation7 + $0xf58] sm:$0xff]
    %v5463 = vld [vmem:[#allocation7 + $0xf60] sm:$0xff]
    %v5464 = vld [vmem:[#allocation7 + $0xf68] sm:$0xff]
    %v5465 = vld [vmem:[#allocation7 + $0xfe8] sm:$0xff]
    %v5466 = vld [vmem:[#allocation7 + $0xff0] sm:$0xff]
    %v5467 = vld [vmem:[#allocation7 + $0xff8] sm:$0xff]
    %v5468 = vld [vmem:[#allocation7 + $0x1000] sm:$0xff]
    %v5469 = vld [vmem:[#allocation7 + $0x1080] sm:$0xff]
    %v5470 = vld [vmem:[#allocation7 + $0x1088] sm:$0xff]
    %v5471 = vld [vmem:[#allocation7 + $0x1090] sm:$0xff]
    %v5472 = vld [vmem:[#allocation7 + $0x1098] sm:$0xff]
    %v5473 = vld [vmem:[#allocation7 + $0x1118] sm:$0xff]
    %v5474 = vld [vmem:[#allocation7 + $0x1120] sm:$0xff]
    %v5475 = vld [vmem:[#allocation7 + $0x1128] sm:$0xff]
    %v5476 = vld [vmem:[#allocation7 + $0x1130] sm:$0xff]
    %v5477 = vld [vmem:[#allocation7 + $0x11b0] sm:$0xff]
    %v5478 = vld [vmem:[#allocation7 + $0x11b8] sm:$0xff]
    %v5479 = vld [vmem:[#allocation7 + $0x11c0] sm:$0xff]
    %v5480 = vld [vmem:[#allocation7 + $0x11c8] sm:$0xff]
    %v5481 = vld [vmem:[#allocation7 + $0x1248] sm:$0xff]
    %v5482 = vld [vmem:[#allocation7 + $0x1250] sm:$0xff]
    %v5483 = vld [vmem:[#allocation7 + $0x1258] sm:$0xff]
    %v5484 = vld [vmem:[#allocation7 + $0x1260] sm:$0xff]
    %v5485 = vld [vmem:[#allocation7 + $0x12e0] sm:$0xff]
    %v5486 = vld [vmem:[#allocation7 + $0x12e8] sm:$0xff]
    %v5487 = vld [vmem:[#allocation7 + $0x12f0] sm:$0xff]
    %v5488 = vld [vmem:[#allocation7 + $0x12f8] sm:$0xff]
    %v5489 = vld [vmem:[#allocation7 + $0x1378] sm:$0xff]
    %v5490 = vld [vmem:[#allocation7 + $0x1380] sm:$0xff]
    %v5491 = vld [vmem:[#allocation7 + $0x1388] sm:$0xff]
    %v5492 = vld [vmem:[#allocation7 + $0x1390] sm:$0xff]
    %v5493 = vld [vmem:[#allocation7 + $0x1410] sm:$0xff]
    %v5494 = vld [vmem:[#allocation7 + $0x1418] sm:$0xff]
    %v5495 = vld [vmem:[#allocation7 + $0x1420] sm:$0xff]
    %v5496 = vld [vmem:[#allocation7 + $0x1428] sm:$0xff]
    %v5497 = vld [vmem:[#allocation7 + $0x14a8] sm:$0xff]
    %v5498 = vld [vmem:[#allocation7 + $0x14b0] sm:$0xff]
    %v5499 = vld [vmem:[#allocation7 + $0x14b8] sm:$0xff]
    %v5500 = vld [vmem:[#allocation7 + $0x14c0] sm:$0xff]
    %v5501 = vld [vmem:[#allocation7 + $0x1540] sm:$0xff]
    %v5502 = vld [vmem:[#allocation7 + $0x1548] sm:$0xff]
    %v5503 = vld [vmem:[#allocation7 + $0x1550] sm:$0xff]
    %v5504 = vld [vmem:[#allocation7 + $0x1558] sm:$0xff]
    %v5505 = vld [vmem:[#allocation7 + $0x15d8] sm:$0xff]
    %v5506 = vld [vmem:[#allocation7 + $0x15e0] sm:$0xff]
    %v5507 = vld [vmem:[#allocation7 + $0x15e8] sm:$0xff]
    %v5508 = vld [vmem:[#allocation7 + $0x15f0] sm:$0xff]
    %v5509 = vld [vmem:[#allocation7 + $0x1670] sm:$0xff]
    %v5510 = vld [vmem:[#allocation7 + $0x1678] sm:$0xff]
    %v5511 = vld [vmem:[#allocation7 + $0x1680] sm:$0xff]
    %v5512 = vld [vmem:[#allocation7 + $0x1688] sm:$0xff]
    %v5513 = vld [vmem:[#allocation7 + $0x1708] sm:$0x33]
    %v5514 = vld [vmem:[#allocation7 + $0x1710] sm:$0x33]
    %v5515 = vld [vmem:[#allocation7 + $0x1718] sm:$0x33]
    %v5516 = vld [vmem:[#allocation7 + $0x1720] sm:$0x33]
    %v5517 = vld [vmem:[#allocation9 + $0x1e] sm:$0xff]
    %v5519 = vlaneseq
    %v5520 = vshrl.u32 %v5519, 7
    %v5521 = vsub.s32 0, %v5520
    %v5522 = vrot.slane %v5517, %v5521
    %v5523 = vlaneseq
    %v5524 = vshrl.u32 %v5523, 7
    %v5525 = vsub.s32 1, %v5524
    %v5526 = vrot.slane %v5517, %v5525
    %v5527 = vlaneseq
    %v5528 = vshrl.u32 %v5527, 7
    %v5529 = vsub.s32 2, %v5528
    %v5530 = vrot.slane %v5517, %v5529
    %v5531 = vlaneseq
    %v5532 = vshrl.u32 %v5531, 7
    %v5533 = vsub.s32 3, %v5532
    %v5534 = vrot.slane %v5517, %v5533
    %v5535 = vlaneseq
    %v5536 = vshrl.u32 %v5535, 7
    %v5537 = vsub.s32 4, %v5536
    %v5538 = vrot.slane %v5517, %v5537
    %v5539 = vlaneseq
    %v5540 = vshrl.u32 %v5539, 7
    %v5541 = vsub.s32 5, %v5540
    %v5542 = vrot.slane %v5517, %v5541
    %v5543 = vlaneseq
    %v5544 = vshrl.u32 %v5543, 7
    %v5545 = vsub.s32 6, %v5544
    %v5546 = vrot.slane %v5517, %v5545
    %v5547 = vlaneseq
    %v5548 = vshrl.u32 %v5547, 7
    %v5549 = vsub.s32 7, %v5548
    %v5550 = vrot.slane %v5517, %v5549
    %v5715 = vunpack.c.l.b16 %v5361
    %v5716 = vunpack.c.h.b16 %v5361
    %v5717 = vunpack.c.l.b16 %v5362
    %v5718 = vunpack.c.h.b16 %v5362
    %v5719 = vunpack.c.l.b16 %v5363
    %v5720 = vunpack.c.h.b16 %v5363
    %v5721 = vunpack.c.l.b16 %v5364
    %v5722 = vunpack.c.h.b16 %v5364
    %v5723 = vunpack.c.l.b16 %v5365
    %v5724 = vunpack.c.h.b16 %v5365
    %v5725 = vunpack.c.l.b16 %v5366
    %v5726 = vunpack.c.h.b16 %v5366
    %v5727 = vunpack.c.l.b16 %v5367
    %v5728 = vunpack.c.h.b16 %v5367
    %v5729 = vunpack.c.l.b16 %v5368
    %v5730 = vunpack.c.h.b16 %v5368
    %v5731 = vunpack.c.l.b16 %v5369
    %v5732 = vunpack.c.h.b16 %v5369
    %v5733 = vunpack.c.l.b16 %v5370
    %v5734 = vunpack.c.h.b16 %v5370
    %v5735 = vunpack.c.l.b16 %v5371
    %v5736 = vunpack.c.h.b16 %v5371
    %v5737 = vunpack.c.l.b16 %v5372
    %v5738 = vunpack.c.h.b16 %v5372
    %v5739 = vunpack.c.l.b16 %v5373
    %v5740 = vunpack.c.h.b16 %v5373
    %v5741 = vunpack.c.l.b16 %v5374
    %v5742 = vunpack.c.h.b16 %v5374
    %v5743 = vunpack.c.l.b16 %v5375
    %v5744 = vunpack.c.h.b16 %v5375
    %v5745 = vunpack.c.l.b16 %v5376
    %v5746 = vunpack.c.h.b16 %v5376
    %v5747 = vunpack.c.l.b16 %v5377
    %v5748 = vunpack.c.h.b16 %v5377
    %v5749 = vunpack.c.l.b16 %v5378
    %v5750 = vunpack.c.h.b16 %v5378
    %v5751 = vunpack.c.l.b16 %v5379
    %v5752 = vunpack.c.h.b16 %v5379
    %v5753 = vunpack.c.l.b16 %v5380
    %v5754 = vunpack.c.h.b16 %v5380
    %v5755 = vunpack.c.l.b16 %v5381
    %v5756 = vunpack.c.h.b16 %v5381
    %v5757 = vunpack.c.l.b16 %v5382
    %v5758 = vunpack.c.h.b16 %v5382
    %v5759 = vunpack.c.l.b16 %v5383
    %v5760 = vunpack.c.h.b16 %v5383
    %v5761 = vunpack.c.l.b16 %v5384
    %v5762 = vunpack.c.h.b16 %v5384
    %v5763 = vunpack.c.l.b16 %v5385
    %v5764 = vunpack.c.h.b16 %v5385
    %v5765 = vunpack.c.l.b16 %v5386
    %v5766 = vunpack.c.h.b16 %v5386
    %v5767 = vunpack.c.l.b16 %v5387
    %v5768 = vunpack.c.h.b16 %v5387
    %v5769 = vunpack.c.l.b16 %v5388
    %v5770 = vunpack.c.h.b16 %v5388
    %v5771 = vunpack.c.l.b16 %v5389
    %v5772 = vunpack.c.h.b16 %v5389
    %v5773 = vunpack.c.l.b16 %v5390
    %v5774 = vunpack.c.h.b16 %v5390
    %v5775 = vunpack.c.l.b16 %v5391
    %v5776 = vunpack.c.h.b16 %v5391
    %v5777 = vunpack.c.l.b16 %v5392
    %v5778 = vunpack.c.h.b16 %v5392
    %v5779 = vunpack.c.l.b16 %v5393
    %v5780 = vunpack.c.h.b16 %v5393
    %v5781 = vunpack.c.l.b16 %v5394
    %v5782 = vunpack.c.h.b16 %v5394
    %v5783 = vunpack.c.l.b16 %v5395
    %v5784 = vunpack.c.h.b16 %v5395
    %v5785 = vunpack.c.l.b16 %v5396
    %v5786 = vunpack.c.h.b16 %v5396
    %v5787 = vunpack.c.l.b16 %v5397
    %v5788 = vunpack.c.h.b16 %v5397
    %v5789 = vunpack.c.l.b16 %v5398
    %v5790 = vunpack.c.h.b16 %v5398
    %v5791 = vunpack.c.l.b16 %v5399
    %v5792 = vunpack.c.h.b16 %v5399
    %v5793 = vunpack.c.l.b16 %v5400
    %v5794 = vunpack.c.h.b16 %v5400
    %v5795 = vunpack.c.l.b16 %v5401
    %v5796 = vunpack.c.h.b16 %v5401
    %v5797 = vunpack.c.l.b16 %v5402
    %v5798 = vunpack.c.h.b16 %v5402
    %v5799 = vunpack.c.l.b16 %v5403
    %v5800 = vunpack.c.h.b16 %v5403
    %v5801 = vunpack.c.l.b16 %v5404
    %v5802 = vunpack.c.h.b16 %v5404
    %v5803 = vunpack.c.l.b16 %v5405
    %v5804 = vunpack.c.h.b16 %v5405
    %v5805 = vunpack.c.l.b16 %v5406
    %v5806 = vunpack.c.h.b16 %v5406
    %v5807 = vunpack.c.l.b16 %v5407
    %v5808 = vunpack.c.h.b16 %v5407
    %v5809 = vunpack.c.l.b16 %v5408
    %v5810 = vunpack.c.h.b16 %v5408
    %v5811 = vunpack.c.l.b16 %v5409
    %v5812 = vunpack.c.h.b16 %v5409
    %v5813 = vunpack.c.l.b16 %v5410
    %v5814 = vunpack.c.h.b16 %v5410
    %v5815 = vunpack.c.l.b16 %v5411
    %v5816 = vunpack.c.h.b16 %v5411
    %v5817 = vunpack.c.l.b16 %v5412
    %v5818 = vunpack.c.h.b16 %v5412
    %v5819 = vunpack.c.l.b16 %v5413
    %v5820 = vunpack.c.h.b16 %v5413
    %v5821 = vunpack.c.l.b16 %v5414
    %v5822 = vunpack.c.h.b16 %v5414
    %v5823 = vunpack.c.l.b16 %v5415
    %v5824 = vunpack.c.h.b16 %v5415
    %v5825 = vunpack.c.l.b16 %v5416
    %v5826 = vunpack.c.h.b16 %v5416
    %v5827 = vunpack.c.l.b16 %v5417
    %v5828 = vunpack.c.h.b16 %v5417
    %v5829 = vunpack.c.l.b16 %v5418
    %v5830 = vunpack.c.h.b16 %v5418
    %v5831 = vunpack.c.l.b16 %v5419
    %v5832 = vunpack.c.h.b16 %v5419
    %v5833 = vunpack.c.l.b16 %v5420
    %v5834 = vunpack.c.h.b16 %v5420
    %v5835 = vunpack.c.l.b16 %v5421
    %v5836 = vunpack.c.h.b16 %v5421
    %v5837 = vunpack.c.l.b16 %v5422
    %v5838 = vunpack.c.h.b16 %v5422
    %v5839 = vunpack.c.l.b16 %v5423
    %v5840 = vunpack.c.h.b16 %v5423
    %v5841 = vunpack.c.l.b16 %v5424
    %v5842 = vunpack.c.h.b16 %v5424
    %v5843 = vunpack.c.l.b16 %v5425
    %v5844 = vunpack.c.h.b16 %v5425
    %v5845 = vunpack.c.l.b16 %v5426
    %v5846 = vunpack.c.h.b16 %v5426
    %v5847 = vunpack.c.l.b16 %v5427
    %v5848 = vunpack.c.h.b16 %v5427
    %v5849 = vunpack.c.l.b16 %v5428
    %v5850 = vunpack.c.h.b16 %v5428
    %v5851 = vunpack.c.l.b16 %v5429
    %v5852 = vunpack.c.h.b16 %v5429
    %v5853 = vunpack.c.l.b16 %v5430
    %v5854 = vunpack.c.h.b16 %v5430
    %v5855 = vunpack.c.l.b16 %v5431
    %v5856 = vunpack.c.h.b16 %v5431
    %v5857 = vunpack.c.l.b16 %v5432
    %v5858 = vunpack.c.h.b16 %v5432
    %v5859 = vunpack.c.l.b16 %v5433
    %v5860 = vunpack.c.h.b16 %v5433
    %v5861 = vunpack.c.l.b16 %v5434
    %v5862 = vunpack.c.h.b16 %v5434
    %v5863 = vunpack.c.l.b16 %v5435
    %v5864 = vunpack.c.h.b16 %v5435
    %v5865 = vunpack.c.l.b16 %v5436
    %v5866 = vunpack.c.h.b16 %v5436
    %v5867 = vunpack.c.l.b16 %v5437
    %v5868 = vunpack.c.h.b16 %v5437
    %v5869 = vunpack.c.l.b16 %v5438
    %v5870 = vunpack.c.h.b16 %v5438
    %v5871 = vunpack.c.l.b16 %v5439
    %v5872 = vunpack.c.h.b16 %v5439
    %v5873 = vunpack.c.l.b16 %v5440
    %v5874 = vunpack.c.h.b16 %v5440
    %v5875 = vunpack.c.l.b16 %v5441
    %v5876 = vunpack.c.h.b16 %v5441
    %v5877 = vunpack.c.l.b16 %v5442
    %v5878 = vunpack.c.h.b16 %v5442
    %v5879 = vunpack.c.l.b16 %v5443
    %v5880 = vunpack.c.h.b16 %v5443
    %v5881 = vunpack.c.l.b16 %v5444
    %v5882 = vunpack.c.h.b16 %v5444
    %v5883 = vunpack.c.l.b16 %v5445
    %v5884 = vunpack.c.h.b16 %v5445
    %v5885 = vunpack.c.l.b16 %v5446
    %v5886 = vunpack.c.h.b16 %v5446
    %v5887 = vunpack.c.l.b16 %v5447
    %v5888 = vunpack.c.h.b16 %v5447
    %v5889 = vunpack.c.l.b16 %v5448
    %v5890 = vunpack.c.h.b16 %v5448
    %v5891 = vunpack.c.l.b16 %v5449
    %v5892 = vunpack.c.h.b16 %v5449
    %v5893 = vunpack.c.l.b16 %v5450
    %v5894 = vunpack.c.h.b16 %v5450
    %v5895 = vunpack.c.l.b16 %v5451
    %v5896 = vunpack.c.h.b16 %v5451
    %v5897 = vunpack.c.l.b16 %v5452
    %v5898 = vunpack.c.h.b16 %v5452
    %v5899 = vunpack.c.l.b16 %v5453
    %v5900 = vunpack.c.h.b16 %v5453
    %v5901 = vunpack.c.l.b16 %v5454
    %v5902 = vunpack.c.h.b16 %v5454
    %v5903 = vunpack.c.l.b16 %v5455
    %v5904 = vunpack.c.h.b16 %v5455
    %v5905 = vunpack.c.l.b16 %v5456
    %v5906 = vunpack.c.h.b16 %v5456
    %v5907 = vunpack.c.l.b16 %v5457
    %v5908 = vunpack.c.h.b16 %v5457
    %v5909 = vunpack.c.l.b16 %v5458
    %v5910 = vunpack.c.h.b16 %v5458
    %v5911 = vunpack.c.l.b16 %v5459
    %v5912 = vunpack.c.h.b16 %v5459
    %v5913 = vunpack.c.l.b16 %v5460
    %v5914 = vunpack.c.h.b16 %v5460
    %v5915 = vunpack.c.l.b16 %v5461
    %v5916 = vunpack.c.h.b16 %v5461
    %v5917 = vunpack.c.l.b16 %v5462
    %v5918 = vunpack.c.h.b16 %v5462
    %v5919 = vunpack.c.l.b16 %v5463
    %v5920 = vunpack.c.h.b16 %v5463
    %v5921 = vunpack.c.l.b16 %v5464
    %v5922 = vunpack.c.h.b16 %v5464
    %v5923 = vunpack.c.l.b16 %v5465
    %v5924 = vunpack.c.h.b16 %v5465
    %v5925 = vunpack.c.l.b16 %v5466
    %v5926 = vunpack.c.h.b16 %v5466
    %v5927 = vunpack.c.l.b16 %v5467
    %v5928 = vunpack.c.h.b16 %v5467
    %v5929 = vunpack.c.l.b16 %v5468
    %v5930 = vunpack.c.h.b16 %v5468
    %v5931 = vunpack.c.l.b16 %v5469
    %v5932 = vunpack.c.h.b16 %v5469
    %v5933 = vunpack.c.l.b16 %v5470
    %v5934 = vunpack.c.h.b16 %v5470
    %v5935 = vunpack.c.l.b16 %v5471
    %v5936 = vunpack.c.h.b16 %v5471
    %v5937 = vunpack.c.l.b16 %v5472
    %v5938 = vunpack.c.h.b16 %v5472
    %v5939 = vunpack.c.l.b16 %v5473
    %v5940 = vunpack.c.h.b16 %v5473
    %v5941 = vunpack.c.l.b16 %v5474
    %v5942 = vunpack.c.h.b16 %v5474
    %v5943 = vunpack.c.l.b16 %v5475
    %v5944 = vunpack.c.h.b16 %v5475
    %v5945 = vunpack.c.l.b16 %v5476
    %v5946 = vunpack.c.h.b16 %v5476
    %v5947 = vunpack.c.l.b16 %v5477
    %v5948 = vunpack.c.h.b16 %v5477
    %v5949 = vunpack.c.l.b16 %v5478
    %v5950 = vunpack.c.h.b16 %v5478
    %v5951 = vunpack.c.l.b16 %v5479
    %v5952 = vunpack.c.h.b16 %v5479
    %v5953 = vunpack.c.l.b16 %v5480
    %v5954 = vunpack.c.h.b16 %v5480
    %v5955 = vunpack.c.l.b16 %v5481
    %v5956 = vunpack.c.h.b16 %v5481
    %v5957 = vunpack.c.l.b16 %v5482
    %v5958 = vunpack.c.h.b16 %v5482
    %v5959 = vunpack.c.l.b16 %v5483
    %v5960 = vunpack.c.h.b16 %v5483
    %v5961 = vunpack.c.l.b16 %v5484
    %v5962 = vunpack.c.h.b16 %v5484
    %v5963 = vunpack.c.l.b16 %v5485
    %v5964 = vunpack.c.h.b16 %v5485
    %v5965 = vunpack.c.l.b16 %v5486
    %v5966 = vunpack.c.h.b16 %v5486
    %v5967 = vunpack.c.l.b16 %v5487
    %v5968 = vunpack.c.h.b16 %v5487
    %v5969 = vunpack.c.l.b16 %v5488
    %v5970 = vunpack.c.h.b16 %v5488
    %v5971 = vunpack.c.l.b16 %v5489
    %v5972 = vunpack.c.h.b16 %v5489
    %v5973 = vunpack.c.l.b16 %v5490
    %v5974 = vunpack.c.h.b16 %v5490
    %v5975 = vunpack.c.l.b16 %v5491
    %v5976 = vunpack.c.h.b16 %v5491
    %v5977 = vunpack.c.l.b16 %v5492
    %v5978 = vunpack.c.h.b16 %v5492
    %v5979 = vunpack.c.l.b16 %v5493
    %v5980 = vunpack.c.h.b16 %v5493
    %v5981 = vunpack.c.l.b16 %v5494
    %v5982 = vunpack.c.h.b16 %v5494
    %v5983 = vunpack.c.l.b16 %v5495
    %v5984 = vunpack.c.h.b16 %v5495
    %v5985 = vunpack.c.l.b16 %v5496
    %v5986 = vunpack.c.h.b16 %v5496
    %v5987 = vunpack.c.l.b16 %v5497
    %v5988 = vunpack.c.h.b16 %v5497
    %v5989 = vunpack.c.l.b16 %v5498
    %v5990 = vunpack.c.h.b16 %v5498
    %v5991 = vunpack.c.l.b16 %v5499
    %v5992 = vunpack.c.h.b16 %v5499
    %v5993 = vunpack.c.l.b16 %v5500
    %v5994 = vunpack.c.h.b16 %v5500
    %v5995 = vunpack.c.l.b16 %v5501
    %v5996 = vunpack.c.h.b16 %v5501
    %v5997 = vunpack.c.l.b16 %v5502
    %v5998 = vunpack.c.h.b16 %v5502
    %v5999 = vunpack.c.l.b16 %v5503
    %v6000 = vunpack.c.h.b16 %v5503
    %v6001 = vunpack.c.l.b16 %v5504
    %v6002 = vunpack.c.h.b16 %v5504
    %v6003 = vunpack.c.l.b16 %v5505
    %v6004 = vunpack.c.h.b16 %v5505
    %v6005 = vunpack.c.l.b16 %v5506
    %v6006 = vunpack.c.h.b16 %v5506
    %v6007 = vunpack.c.l.b16 %v5507
    %v6008 = vunpack.c.h.b16 %v5507
    %v6009 = vunpack.c.l.b16 %v5508
    %v6010 = vunpack.c.h.b16 %v5508
    %v6011 = vunpack.c.l.b16 %v5509
    %v6012 = vunpack.c.h.b16 %v5509
    %v6013 = vunpack.c.l.b16 %v5510
    %v6014 = vunpack.c.h.b16 %v5510
    %v6015 = vunpack.c.l.b16 %v5511
    %v6016 = vunpack.c.h.b16 %v5511
    %v6017 = vunpack.c.l.b16 %v5512
    %v6018 = vunpack.c.h.b16 %v5512
    %v6019 = vunpack.c.l.b16 %v5513
    %v6020 = vunpack.c.h.b16 %v5513
    %v6021 = vunpack.c.l.b16 %v5514
    %v6022 = vunpack.c.h.b16 %v5514
    %v6023 = vunpack.c.l.b16 %v5515
    %v6024 = vunpack.c.h.b16 %v5515
    %v6025 = vunpack.c.l.b16 %v5516
    %v6026 = vunpack.c.h.b16 %v5516
    %v6027 = vpack.c.b16 %v5723, %v5715
    %v6028 = vpack.c.b16 %v5724, %v5716
    %v6029 = vpack.c.b16 %v5725, %v5717
    %v6030 = vpack.c.b16 %v5726, %v5718
    %v6031 = vpack.c.b16 %v5727, %v5719
    %v6032 = vpack.c.b16 %v5728, %v5720
    %v6033 = vpack.c.b16 %v5729, %v5721
    %v6034 = vpack.c.b16 %v5730, %v5722
    %v6035 = vpack.c.b16 %v5739, %v5731
    %v6036 = vpack.c.b16 %v5740, %v5732
    %v6037 = vpack.c.b16 %v5741, %v5733
    %v6038 = vpack.c.b16 %v5742, %v5734
    %v6039 = vpack.c.b16 %v5743, %v5735
    %v6040 = vpack.c.b16 %v5744, %v5736
    %v6041 = vpack.c.b16 %v5745, %v5737
    %v6042 = vpack.c.b16 %v5746, %v5738
    %v6043 = vpack.c.b16 %v5755, %v5747
    %v6044 = vpack.c.b16 %v5756, %v5748
    %v6045 = vpack.c.b16 %v5757, %v5749
    %v6046 = vpack.c.b16 %v5758, %v5750
    %v6047 = vpack.c.b16 %v5759, %v5751
    %v6048 = vpack.c.b16 %v5760, %v5752
    %v6049 = vpack.c.b16 %v5761, %v5753
    %v6050 = vpack.c.b16 %v5762, %v5754
    %v6051 = vpack.c.b16 %v5771, %v5763
    %v6052 = vpack.c.b16 %v5772, %v5764
    %v6053 = vpack.c.b16 %v5773, %v5765
    %v6054 = vpack.c.b16 %v5774, %v5766
    %v6055 = vpack.c.b16 %v5775, %v5767
    %v6056 = vpack.c.b16 %v5776, %v5768
    %v6057 = vpack.c.b16 %v5777, %v5769
    %v6058 = vpack.c.b16 %v5778, %v5770
    %v6059 = vpack.c.b16 %v5787, %v5779
    %v6060 = vpack.c.b16 %v5788, %v5780
    %v6061 = vpack.c.b16 %v5789, %v5781
    %v6062 = vpack.c.b16 %v5790, %v5782
    %v6063 = vpack.c.b16 %v5791, %v5783
    %v6064 = vpack.c.b16 %v5792, %v5784
    %v6065 = vpack.c.b16 %v5793, %v5785
    %v6066 = vpack.c.b16 %v5794, %v5786
    %v6067 = vpack.c.b16 %v5803, %v5795
    %v6068 = vpack.c.b16 %v5804, %v5796
    %v6069 = vpack.c.b16 %v5805, %v5797
    %v6070 = vpack.c.b16 %v5806, %v5798
    %v6071 = vpack.c.b16 %v5807, %v5799
    %v6072 = vpack.c.b16 %v5808, %v5800
    %v6073 = vpack.c.b16 %v5809, %v5801
    %v6074 = vpack.c.b16 %v5810, %v5802
    %v6075 = vpack.c.b16 %v5819, %v5811
    %v6076 = vpack.c.b16 %v5820, %v5812
    %v6077 = vpack.c.b16 %v5821, %v5813
    %v6078 = vpack.c.b16 %v5822, %v5814
    %v6079 = vpack.c.b16 %v5823, %v5815
    %v6080 = vpack.c.b16 %v5824, %v5816
    %v6081 = vpack.c.b16 %v5825, %v5817
    %v6082 = vpack.c.b16 %v5826, %v5818
    %v6083 = vpack.c.b16 %v5835, %v5827
    %v6084 = vpack.c.b16 %v5836, %v5828
    %v6085 = vpack.c.b16 %v5837, %v5829
    %v6086 = vpack.c.b16 %v5838, %v5830
    %v6087 = vpack.c.b16 %v5839, %v5831
    %v6088 = vpack.c.b16 %v5840, %v5832
    %v6089 = vpack.c.b16 %v5841, %v5833
    %v6090 = vpack.c.b16 %v5842, %v5834
    %v6091 = vpack.c.b16 %v5851, %v5843
    %v6092 = vpack.c.b16 %v5852, %v5844
    %v6093 = vpack.c.b16 %v5853, %v5845
    %v6094 = vpack.c.b16 %v5854, %v5846
    %v6095 = vpack.c.b16 %v5855, %v5847
    %v6096 = vpack.c.b16 %v5856, %v5848
    %v6097 = vpack.c.b16 %v5857, %v5849
    %v6098 = vpack.c.b16 %v5858, %v5850
    %v6099 = vpack.c.b16 %v5867, %v5859
    %v6100 = vpack.c.b16 %v5868, %v5860
    %v6101 = vpack.c.b16 %v5869, %v5861
    %v6102 = vpack.c.b16 %v5870, %v5862
    %v6103 = vpack.c.b16 %v5871, %v5863
    %v6104 = vpack.c.b16 %v5872, %v5864
    %v6105 = vpack.c.b16 %v5873, %v5865
    %v6106 = vpack.c.b16 %v5874, %v5866
    %v6107 = vpack.c.b16 %v5883, %v5875
    %v6108 = vpack.c.b16 %v5884, %v5876
    %v6109 = vpack.c.b16 %v5885, %v5877
    %v6110 = vpack.c.b16 %v5886, %v5878
    %v6111 = vpack.c.b16 %v5887, %v5879
    %v6112 = vpack.c.b16 %v5888, %v5880
    %v6113 = vpack.c.b16 %v5889, %v5881
    %v6114 = vpack.c.b16 %v5890, %v5882
    %v6115 = vpack.c.b16 %v5899, %v5891
    %v6116 = vpack.c.b16 %v5900, %v5892
    %v6117 = vpack.c.b16 %v5901, %v5893
    %v6118 = vpack.c.b16 %v5902, %v5894
    %v6119 = vpack.c.b16 %v5903, %v5895
    %v6120 = vpack.c.b16 %v5904, %v5896
    %v6121 = vpack.c.b16 %v5905, %v5897
    %v6122 = vpack.c.b16 %v5906, %v5898
    %v6123 = vpack.c.b16 %v5915, %v5907
    %v6124 = vpack.c.b16 %v5916, %v5908
    %v6125 = vpack.c.b16 %v5917, %v5909
    %v6126 = vpack.c.b16 %v5918, %v5910
    %v6127 = vpack.c.b16 %v5919, %v5911
    %v6128 = vpack.c.b16 %v5920, %v5912
    %v6129 = vpack.c.b16 %v5921, %v5913
    %v6130 = vpack.c.b16 %v5922, %v5914
    %v6131 = vpack.c.b16 %v5931, %v5923
    %v6132 = vpack.c.b16 %v5932, %v5924
    %v6133 = vpack.c.b16 %v5933, %v5925
    %v6134 = vpack.c.b16 %v5934, %v5926
    %v6135 = vpack.c.b16 %v5935, %v5927
    %v6136 = vpack.c.b16 %v5936, %v5928
    %v6137 = vpack.c.b16 %v5937, %v5929
    %v6138 = vpack.c.b16 %v5938, %v5930
    %v6139 = vpack.c.b16 %v5947, %v5939
    %v6140 = vpack.c.b16 %v5948, %v5940
    %v6141 = vpack.c.b16 %v5949, %v5941
    %v6142 = vpack.c.b16 %v5950, %v5942
    %v6143 = vpack.c.b16 %v5951, %v5943
    %v6144 = vpack.c.b16 %v5952, %v5944
    %v6145 = vpack.c.b16 %v5953, %v5945
    %v6146 = vpack.c.b16 %v5954, %v5946
    %v6147 = vpack.c.b16 %v5963, %v5955
    %v6148 = vpack.c.b16 %v5964, %v5956
    %v6149 = vpack.c.b16 %v5965, %v5957
    %v6150 = vpack.c.b16 %v5966, %v5958
    %v6151 = vpack.c.b16 %v5967, %v5959
    %v6152 = vpack.c.b16 %v5968, %v5960
    %v6153 = vpack.c.b16 %v5969, %v5961
    %v6154 = vpack.c.b16 %v5970, %v5962
    %v6155 = vpack.c.b16 %v5979, %v5971
    %v6156 = vpack.c.b16 %v5980, %v5972
    %v6157 = vpack.c.b16 %v5981, %v5973
    %v6158 = vpack.c.b16 %v5982, %v5974
    %v6159 = vpack.c.b16 %v5983, %v5975
    %v6160 = vpack.c.b16 %v5984, %v5976
    %v6161 = vpack.c.b16 %v5985, %v5977
    %v6162 = vpack.c.b16 %v5986, %v5978
    %v6163 = vpack.c.b16 %v5995, %v5987
    %v6164 = vpack.c.b16 %v5996, %v5988
    %v6165 = vpack.c.b16 %v5997, %v5989
    %v6166 = vpack.c.b16 %v5998, %v5990
    %v6167 = vpack.c.b16 %v5999, %v5991
    %v6168 = vpack.c.b16 %v6000, %v5992
    %v6169 = vpack.c.b16 %v6001, %v5993
    %v6170 = vpack.c.b16 %v6002, %v5994
    %v6171 = vpack.c.b16 %v6011, %v6003
    %v6172 = vpack.c.b16 %v6012, %v6004
    %v6173 = vpack.c.b16 %v6013, %v6005
    %v6174 = vpack.c.b16 %v6014, %v6006
    %v6175 = vpack.c.b16 %v6015, %v6007
    %v6176 = vpack.c.b16 %v6016, %v6008
    %v6177 = vpack.c.b16 %v6017, %v6009
    %v6178 = vpack.c.b16 %v6018, %v6010
    %v6179 = vpack.c.b16 %v6019, %v6019
    %v6180 = vpack.c.b16 %v6020, %v6020
    %v6181 = vpack.c.b16 %v6021, %v6021
    %v6182 = vpack.c.b16 %v6022, %v6022
    %v6183 = vpack.c.b16 %v6023, %v6023
    %v6184 = vpack.c.b16 %v6024, %v6024
    %v6185 = vpack.c.b16 %v6025, %v6025
    %v6186 = vpack.c.b16 %v6026, %v6026
    %v6340 = vand.u32 %v6179, %v1364
    %v6343 = vand.u32 %v6180, %v1364
    %v6346 = vand.u32 %v6181, %v1364
    %v6349 = vand.u32 %v6182, %v1364
    %v6352 = vand.u32 %v6183, %v1364
    %v6355 = vand.u32 %v6184, %v1364
    %v6358 = vand.u32 %v6185, %v1364
    %v6361 = vand.u32 %v6186, %v1364
    %6363 = vmatprep.subr.bf16.mxu0 %v6084
    %6364 = vmatpush1.bf16.msra.mxu0 %v6083
    %6365 = vmatprep.subr.bf16.mxu0 %v6076
    %6366 = vmatpush1.bf16.msra.mxu0 %v6075
    %6367 = vmatprep.subr.bf16.mxu0 %v6068
    %6368 = vmatpush1.bf16.msra.mxu0 %v6067
    %6369 = vmatprep.subr.bf16.mxu0 %v6060
    %6370 = vmatpush1.bf16.msra.mxu0 %v6059
    %6371 = vmatprep.subr.bf16.mxu0 %v6052
    %6372 = vmatpush1.bf16.msra.mxu0 %v6051
    %6373 = vmatprep.subr.bf16.mxu0 %v6044
    %6374 = vmatpush1.bf16.msra.mxu0 %v6043
    %6375 = vmatprep.subr.bf16.mxu0 %v6036
    %6376 = vmatpush1.bf16.msra.mxu0 %v6035
    %6377 = vmatprep.subr.bf16.mxu0 %v6028
    %6378 = vmatpush1.bf16.msra.mxu0 %v6027
    %6379 = vmatprep.subr.bf16.mxu0 %v6148
    %6380 = vmatpush2.bf16.msra.mxu0 %v6147
    %6381 = vmatprep.subr.bf16.mxu0 %v6140
    %6382 = vmatpush2.bf16.msra.mxu0 %v6139
    %6383 = vmatprep.subr.bf16.mxu0 %v6132
    %6384 = vmatpush2.bf16.msra.mxu0 %v6131
    %6385 = vmatprep.subr.bf16.mxu0 %v6124
    %6386 = vmatpush2.bf16.msra.mxu0 %v6123
    %6387 = vmatprep.subr.bf16.mxu0 %v6116
    %6388 = vmatpush2.bf16.msra.mxu0 %v6115
    %6389 = vmatprep.subr.bf16.mxu0 %v6108
    %6390 = vmatpush2.bf16.msra.mxu0 %v6107
    %6391 = vmatprep.subr.bf16.mxu0 %v6100
    %6392 = vmatpush2.bf16.msra.mxu0 %v6099
    %6393 = vmatprep.subr.bf16.mxu0 %v6092
    %6394 = vmatpush2.bf16.msra.mxu0 %v6091
    %6395 = vmatprep.mubr.bf16.mxu0 %v378
    %6396 = vmatmul.mubr.bf16.gmra.mxu0 %v371
    %v6397 = vpop.f32.mrf.mxu0
    %v6398 = vadd.f32 %v5522, %v6397
    %v6399 = vpop.f32.mrf.mxu0
    %v6400 = vadd.f32 %v5526, %v6399
    %v6401 = vpop.f32.mrf.mxu0
    %v6402 = vpop.f32.mrf.mxu0
    %6403 = vdwg.mxu0
    %6404 = vmatprep.subr.bf16.mxu0 0
    %6405 = vmatpush1.bf16.msra.mxu0 0
    %6406 = vmatprep.subr.bf16.mxu0 0
    %6407 = vmatpush1.bf16.msra.mxu0 0
    %6408 = vmatprep.subr.bf16.mxu0 0
    %6409 = vmatpush1.bf16.msra.mxu0 0
    %6410 = vmatprep.subr.bf16.mxu0 0
    %6411 = vmatpush1.bf16.msra.mxu0 0
    %6412 = vmatprep.subr.bf16.mxu0 %v6343
    %6413 = vmatpush1.bf16.msra.mxu0 %v6340
    %6414 = vmatprep.subr.bf16.mxu0 %v6172
    %6415 = vmatpush1.bf16.msra.mxu0 %v6171
    %6416 = vmatprep.subr.bf16.mxu0 %v6164
    %6417 = vmatpush1.bf16.msra.mxu0 %v6163
    %6418 = vmatprep.subr.bf16.mxu0 %v6156
    %6419 = vmatpush1.bf16.msra.mxu0 %v6155
    %6420 = vmatprep.subr.bf16.mxu0 0
    %6421 = vmatpush2.bf16.msra.mxu0 0
    %6422 = vmatprep.subr.bf16.mxu0 0
    %6423 = vmatpush2.bf16.msra.mxu0 0
    %6424 = vmatprep.subr.bf16.mxu0 0
    %6425 = vmatpush2.bf16.msra.mxu0 0
    %6426 = vmatprep.subr.bf16.mxu0 0
    %6427 = vmatpush2.bf16.msra.mxu0 0
    %6428 = vmatprep.subr.bf16.mxu0 0
    %6429 = vmatpush2.bf16.msra.mxu0 0
    %6430 = vmatprep.subr.bf16.mxu0 0
    %6431 = vmatpush2.bf16.msra.mxu0 0
    %6432 = vmatprep.subr.bf16.mxu0 0
    %6433 = vmatpush2.bf16.msra.mxu0 0
    %6434 = vmatprep.subr.bf16.mxu0 0
    %6435 = vmatpush2.bf16.msra.mxu0 0
    %6436 = vmatprep.mubr.bf16.mxu0 0
    %6437 = vmatmul.mubr.bf16.gmra.mxu0 %v1359
    %v6438 = vpop.f32.mrf.mxu0
    %v6439 = vadd.f32 %v6398, %v6438
    %v6440 = vpop.f32.mrf.mxu0
    %v6441 = vadd.f32 %v6400, %v6440
    %v6442 = vpop.f32.mrf.mxu0
    %v6443 = vpop.f32.mrf.mxu0
    %6444 = vdwg.mxu0
    %6445 = vmatprep.subr.bf16.mxu0 %v6086
    %6446 = vmatpush1.bf16.msra.mxu0 %v6085
    %6447 = vmatprep.subr.bf16.mxu0 %v6078
    %6448 = vmatpush1.bf16.msra.mxu0 %v6077
    %6449 = vmatprep.subr.bf16.mxu0 %v6070
    %6450 = vmatpush1.bf16.msra.mxu0 %v6069
    %6451 = vmatprep.subr.bf16.mxu0 %v6062
    %6452 = vmatpush1.bf16.msra.mxu0 %v6061
    %6453 = vmatprep.subr.bf16.mxu0 %v6054
    %6454 = vmatpush1.bf16.msra.mxu0 %v6053
    %6455 = vmatprep.subr.bf16.mxu0 %v6046
    %6456 = vmatpush1.bf16.msra.mxu0 %v6045
    %6457 = vmatprep.subr.bf16.mxu0 %v6038
    %6458 = vmatpush1.bf16.msra.mxu0 %v6037
    %6459 = vmatprep.subr.bf16.mxu0 %v6030
    %6460 = vmatpush1.bf16.msra.mxu0 %v6029
    %6461 = vmatprep.subr.bf16.mxu0 %v6150
    %6462 = vmatpush2.bf16.msra.mxu0 %v6149
    %6463 = vmatprep.subr.bf16.mxu0 %v6142
    %6464 = vmatpush2.bf16.msra.mxu0 %v6141
    %6465 = vmatprep.subr.bf16.mxu0 %v6134
    %6466 = vmatpush2.bf16.msra.mxu0 %v6133
    %6467 = vmatprep.subr.bf16.mxu0 %v6126
    %6468 = vmatpush2.bf16.msra.mxu0 %v6125
    %6469 = vmatprep.subr.bf16.mxu0 %v6118
    %6470 = vmatpush2.bf16.msra.mxu0 %v6117
    %6471 = vmatprep.subr.bf16.mxu0 %v6110
    %6472 = vmatpush2.bf16.msra.mxu0 %v6109
    %6473 = vmatprep.subr.bf16.mxu0 %v6102
    %6474 = vmatpush2.bf16.msra.mxu0 %v6101
    %6475 = vmatprep.subr.bf16.mxu0 %v6094
    %6476 = vmatpush2.bf16.msra.mxu0 %v6093
    %6477 = vmatprep.mubr.bf16.mxu0 %v378
    %6478 = vmatmul.mubr.bf16.gmra.mxu0 %v371
    %v6479 = vpop.f32.mrf.mxu0
    %v6480 = vadd.f32 %v5530, %v6479
    %v6481 = vpop.f32.mrf.mxu0
    %v6482 = vadd.f32 %v5534, %v6481
    %v6483 = vpop.f32.mrf.mxu0
    %v6484 = vpop.f32.mrf.mxu0
    %6485 = vdwg.mxu0
    %6486 = vmatprep.subr.bf16.mxu0 0
    %6487 = vmatpush1.bf16.msra.mxu0 0
    %6488 = vmatprep.subr.bf16.mxu0 0
    %6489 = vmatpush1.bf16.msra.mxu0 0
    %6490 = vmatprep.subr.bf16.mxu0 0
    %6491 = vmatpush1.bf16.msra.mxu0 0
    %6492 = vmatprep.subr.bf16.mxu0 0
    %6493 = vmatpush1.bf16.msra.mxu0 0
    %6494 = vmatprep.subr.bf16.mxu0 %v6349
    %6495 = vmatpush1.bf16.msra.mxu0 %v6346
    %6496 = vmatprep.subr.bf16.mxu0 %v6174
    %6497 = vmatpush1.bf16.msra.mxu0 %v6173
    %6498 = vmatprep.subr.bf16.mxu0 %v6166
    %6499 = vmatpush1.bf16.msra.mxu0 %v6165
    %6500 = vmatprep.subr.bf16.mxu0 %v6158
    %6501 = vmatpush1.bf16.msra.mxu0 %v6157
    %6502 = vmatprep.subr.bf16.mxu0 0
    %6503 = vmatpush2.bf16.msra.mxu0 0
    %6504 = vmatprep.subr.bf16.mxu0 0
    %6505 = vmatpush2.bf16.msra.mxu0 0
    %6506 = vmatprep.subr.bf16.mxu0 0
    %6507 = vmatpush2.bf16.msra.mxu0 0
    %6508 = vmatprep.subr.bf16.mxu0 0
    %6509 = vmatpush2.bf16.msra.mxu0 0
    %6510 = vmatprep.subr.bf16.mxu0 0
    %6511 = vmatpush2.bf16.msra.mxu0 0
    %6512 = vmatprep.subr.bf16.mxu0 0
    %6513 = vmatpush2.bf16.msra.mxu0 0
    %6514 = vmatprep.subr.bf16.mxu0 0
    %6515 = vmatpush2.bf16.msra.mxu0 0
    %6516 = vmatprep.subr.bf16.mxu0 0
    %6517 = vmatpush2.bf16.msra.mxu0 0
    %6518 = vmatprep.mubr.bf16.mxu0 0
    %6519 = vmatmul.mubr.bf16.gmra.mxu0 %v1359
    %v6520 = vpop.f32.mrf.mxu0
    %v6521 = vadd.f32 %v6480, %v6520
    %v6522 = vpop.f32.mrf.mxu0
    %v6523 = vadd.f32 %v6482, %v6522
    %v6524 = vpop.f32.mrf.mxu0
    %v6525 = vpop.f32.mrf.mxu0
    %6526 = vdwg.mxu0
    %6527 = vmatprep.subr.bf16.mxu0 %v6088
    %6528 = vmatpush1.bf16.msra.mxu0 %v6087
    %6529 = vmatprep.subr.bf16.mxu0 %v6080
    %6530 = vmatpush1.bf16.msra.mxu0 %v6079
    %6531 = vmatprep.subr.bf16.mxu0 %v6072
    %6532 = vmatpush1.bf16.msra.mxu0 %v6071
    %6533 = vmatprep.subr.bf16.mxu0 %v6064
    %6534 = vmatpush1.bf16.msra.mxu0 %v6063
    %6535 = vmatprep.subr.bf16.mxu0 %v6056
    %6536 = vmatpush1.bf16.msra.mxu0 %v6055
    %6537 = vmatprep.subr.bf16.mxu0 %v6048
    %6538 = vmatpush1.bf16.msra.mxu0 %v6047
    %6539 = vmatprep.subr.bf16.mxu0 %v6040
    %6540 = vmatpush1.bf16.msra.mxu0 %v6039
    %6541 = vmatprep.subr.bf16.mxu0 %v6032
    %6542 = vmatpush1.bf16.msra.mxu0 %v6031
    %6543 = vmatprep.subr.bf16.mxu0 %v6152
    %6544 = vmatpush2.bf16.msra.mxu0 %v6151
    %6545 = vmatprep.subr.bf16.mxu0 %v6144
    %6546 = vmatpush2.bf16.msra.mxu0 %v6143
    %6547 = vmatprep.subr.bf16.mxu0 %v6136
    %6548 = vmatpush2.bf16.msra.mxu0 %v6135
    %6549 = vmatprep.subr.bf16.mxu0 %v6128
    %6550 = vmatpush2.bf16.msra.mxu0 %v6127
    %6551 = vmatprep.subr.bf16.mxu0 %v6120
    %6552 = vmatpush2.bf16.msra.mxu0 %v6119
    %6553 = vmatprep.subr.bf16.mxu0 %v6112
    %6554 = vmatpush2.bf16.msra.mxu0 %v6111
    %6555 = vmatprep.subr.bf16.mxu0 %v6104
    %6556 = vmatpush2.bf16.msra.mxu0 %v6103
    %6557 = vmatprep.subr.bf16.mxu0 %v6096
    %6558 = vmatpush2.bf16.msra.mxu0 %v6095
    %6559 = vmatprep.mubr.bf16.mxu0 %v378
    %6560 = vmatmul.mubr.bf16.gmra.mxu0 %v371
    %v6561 = vpop.f32.mrf.mxu0
    %v6562 = vadd.f32 %v5538, %v6561
    %v6563 = vpop.f32.mrf.mxu0
    %v6564 = vadd.f32 %v5542, %v6563
    %v6565 = vpop.f32.mrf.mxu0
    %v6566 = vpop.f32.mrf.mxu0
    %6567 = vdwg.mxu0
    %6568 = vmatprep.subr.bf16.mxu0 0
    %6569 = vmatpush1.bf16.msra.mxu0 0
    %6570 = vmatprep.subr.bf16.mxu0 0
    %6571 = vmatpush1.bf16.msra.mxu0 0
    %6572 = vmatprep.subr.bf16.mxu0 0
    %6573 = vmatpush1.bf16.msra.mxu0 0
    %6574 = vmatprep.subr.bf16.mxu0 0
    %6575 = vmatpush1.bf16.msra.mxu0 0
    %6576 = vmatprep.subr.bf16.mxu0 %v6355
    %6577 = vmatpush1.bf16.msra.mxu0 %v6352
    %6578 = vmatprep.subr.bf16.mxu0 %v6176
    %6579 = vmatpush1.bf16.msra.mxu0 %v6175
    %6580 = vmatprep.subr.bf16.mxu0 %v6168
    %6581 = vmatpush1.bf16.msra.mxu0 %v6167
    %6582 = vmatprep.subr.bf16.mxu0 %v6160
    %6583 = vmatpush1.bf16.msra.mxu0 %v6159
    %6584 = vmatprep.subr.bf16.mxu0 0
    %6585 = vmatpush2.bf16.msra.mxu0 0
    %6586 = vmatprep.subr.bf16.mxu0 0
    %6587 = vmatpush2.bf16.msra.mxu0 0
    %6588 = vmatprep.subr.bf16.mxu0 0
    %6589 = vmatpush2.bf16.msra.mxu0 0
    %6590 = vmatprep.subr.bf16.mxu0 0
    %6591 = vmatpush2.bf16.msra.mxu0 0
    %6592 = vmatprep.subr.bf16.mxu0 0
    %6593 = vmatpush2.bf16.msra.mxu0 0
    %6594 = vmatprep.subr.bf16.mxu0 0
    %6595 = vmatpush2.bf16.msra.mxu0 0
    %6596 = vmatprep.subr.bf16.mxu0 0
    %6597 = vmatpush2.bf16.msra.mxu0 0
    %6598 = vmatprep.subr.bf16.mxu0 0
    %6599 = vmatpush2.bf16.msra.mxu0 0
    %6600 = vmatprep.mubr.bf16.mxu0 0
    %6601 = vmatmul.mubr.bf16.gmra.mxu0 %v1359
    %v6602 = vpop.f32.mrf.mxu0
    %v6603 = vadd.f32 %v6562, %v6602
    %v6604 = vpop.f32.mrf.mxu0
    %v6605 = vadd.f32 %v6564, %v6604
    %v6606 = vpop.f32.mrf.mxu0
    %v6607 = vpop.f32.mrf.mxu0
    %6608 = vdwg.mxu0
    %6609 = vmatprep.subr.bf16.mxu0 %v6090
    %6610 = vmatpush1.bf16.msra.mxu0 %v6089
    %6611 = vmatprep.subr.bf16.mxu0 %v6082
    %6612 = vmatpush1.bf16.msra.mxu0 %v6081
    %6613 = vmatprep.subr.bf16.mxu0 %v6074
    %6614 = vmatpush1.bf16.msra.mxu0 %v6073
    %6615 = vmatprep.subr.bf16.mxu0 %v6066
    %6616 = vmatpush1.bf16.msra.mxu0 %v6065
    %6617 = vmatprep.subr.bf16.mxu0 %v6058
    %6618 = vmatpush1.bf16.msra.mxu0 %v6057
    %6619 = vmatprep.subr.bf16.mxu0 %v6050
    %6620 = vmatpush1.bf16.msra.mxu0 %v6049
    %6621 = vmatprep.subr.bf16.mxu0 %v6042
    %6622 = vmatpush1.bf16.msra.mxu0 %v6041
    %6623 = vmatprep.subr.bf16.mxu0 %v6034
    %6624 = vmatpush1.bf16.msra.mxu0 %v6033
    %6625 = vmatprep.subr.bf16.mxu0 %v6154
    %6626 = vmatpush2.bf16.msra.mxu0 %v6153
    %6627 = vmatprep.subr.bf16.mxu0 %v6146
    %6628 = vmatpush2.bf16.msra.mxu0 %v6145
    %6629 = vmatprep.subr.bf16.mxu0 %v6138
    %6630 = vmatpush2.bf16.msra.mxu0 %v6137
    %6631 = vmatprep.subr.bf16.mxu0 %v6130
    %6632 = vmatpush2.bf16.msra.mxu0 %v6129
    %6633 = vmatprep.subr.bf16.mxu0 %v6122
    %6634 = vmatpush2.bf16.msra.mxu0 %v6121
    %6635 = vmatprep.subr.bf16.mxu0 %v6114
    %6636 = vmatpush2.bf16.msra.mxu0 %v6113
    %6637 = vmatprep.subr.bf16.mxu0 %v6106
    %6638 = vmatpush2.bf16.msra.mxu0 %v6105
    %6639 = vmatprep.subr.bf16.mxu0 %v6098
    %6640 = vmatpush2.bf16.msra.mxu0 %v6097
    %6641 = vmatprep.mubr.bf16.mxu0 %v378
    %6642 = vmatmul.mubr.bf16.gmra.mxu0 %v371
    %v6643 = vpop.f32.mrf.mxu0
    %v6644 = vadd.f32 %v5546, %v6643
    %v6645 = vpop.f32.mrf.mxu0
    %v6646 = vadd.f32 %v5550, %v6645
    %v6647 = vpop.f32.mrf.mxu0
    %v6648 = vpop.f32.mrf.mxu0
    %6649 = vdwg.mxu0
    %6650 = vmatprep.subr.bf16.mxu0 0
    %6651 = vmatpush1.bf16.msra.mxu0 0
    %6652 = vmatprep.subr.bf16.mxu0 0
    %6653 = vmatpush1.bf16.msra.mxu0 0
    %6654 = vmatprep.subr.bf16.mxu0 0
    %6655 = vmatpush1.bf16.msra.mxu0 0
    %6656 = vmatprep.subr.bf16.mxu0 0
    %6657 = vmatpush1.bf16.msra.mxu0 0
    %6658 = vmatprep.subr.bf16.mxu0 %v6361
    %6659 = vmatpush1.bf16.msra.mxu0 %v6358
    %6660 = vmatprep.subr.bf16.mxu0 %v6178
    %6661 = vmatpush1.bf16.msra.mxu0 %v6177
    %6662 = vmatprep.subr.bf16.mxu0 %v6170
    %6663 = vmatpush1.bf16.msra.mxu0 %v6169
    %6664 = vmatprep.subr.bf16.mxu0 %v6162
    %6665 = vmatpush1.bf16.msra.mxu0 %v6161
    %6666 = vmatprep.subr.bf16.mxu0 0
    %6667 = vmatpush2.bf16.msra.mxu0 0
    %6668 = vmatprep.subr.bf16.mxu0 0
    %6669 = vmatpush2.bf16.msra.mxu0 0
    %6670 = vmatprep.subr.bf16.mxu0 0
    %6671 = vmatpush2.bf16.msra.mxu0 0
    %6672 = vmatprep.subr.bf16.mxu0 0
    %6673 = vmatpush2.bf16.msra.mxu0 0
    %6674 = vmatprep.subr.bf16.mxu0 0
    %6675 = vmatpush2.bf16.msra.mxu0 0
    %6676 = vmatprep.subr.bf16.mxu0 0
    %6677 = vmatpush2.bf16.msra.mxu0 0
    %6678 = vmatprep.subr.bf16.mxu0 0
    %6679 = vmatpush2.bf16.msra.mxu0 0
    %6680 = vmatprep.subr.bf16.mxu0 0
    %6681 = vmatpush2.bf16.msra.mxu0 0
    %6682 = vmatprep.mubr.bf16.mxu0 0
    %6683 = vmatmul.mubr.bf16.gmra.mxu0 %v1359
    %v6684 = vpop.f32.mrf.mxu0
    %v6685 = vadd.f32 %v6644, %v6684
    %v6686 = vpop.f32.mrf.mxu0
    %v6687 = vadd.f32 %v6646, %v6686
    %v6688 = vpop.f32.mrf.mxu0
    %v6689 = vpop.f32.mrf.mxu0
    %6690 = vdwg.mxu0
    %v6691 = vmul.f32 %v6439, 0.01
    %v6692 = vmul.f32 %v6441, 0.01
    %v6693 = vmul.f32 %v6521, 0.01
    %v6694 = vmul.f32 %v6523, 0.01
    %v6695 = vmul.f32 %v6603, 0.01
    %v6696 = vmul.f32 %v6605, 0.01
    %v6697 = vmul.f32 %v6685, 0.01
    %v6698 = vmul.f32 %v6687, 0.01
    %v6699 = vmax.f32 %v6439, %v6691
    %v6700 = vmax.f32 %v6441, %v6692
    %v6701 = vmax.f32 %v6521, %v6693
    %v6702 = vmax.f32 %v6523, %v6694
    %v6703 = vmax.f32 %v6603, %v6695
    %v6704 = vmax.f32 %v6605, %v6696
    %v6705 = vmax.f32 %v6685, %v6697
    %v6706 = vmax.f32 %v6687, %v6698
    %v6707 = vadd.f32 %v6699, %v6703
    %v6708 = vadd.f32 %v6700, %v6704
    %v6709 = vadd.f32 %v6701, %v6705
    %v6710 = vadd.f32 %v6702, %v6706
    %v6711 = vpack.c.bf16 %v6707, %v6707
    %v6712 = vpack.c.bf16 %v6708, %v6708
    %v6713 = vpack.c.bf16 %v6709, %v6709
    %v6714 = vpack.c.bf16 %v6710, %v6710
    %v6719 = vcombine.low %v6711, %v6712
    %v6720 = vcombine.low %v6713, %v6714
    %v6722 = vunpack.c.l.s4 1966171168
    %v6723 = vunpack.c.0.s8 %v6722
    %v6724 = vlaneseq
    %v6725 = vshrl.u32 %v6724, 7
    %v6726 = vsub.s32 %v6723, %v6725
    %v6727 = vrot.slane %v6719, %v6726
    %v6729 = vunpack.c.l.s4 1966171168
    %v6730 = vunpack.c.0.s8 %v6729
    %v6731 = vlaneseq
    %v6732 = vshrl.u32 %v6731, 7
    %v6733 = vsub.s32 %v6730, %v6732
    %v6734 = vrot.slane %v6720, %v6733
    %v6735 = vcombine.low %v6727, %v6734
    %v6737 = vunpack.c.l.s4 1966171168
    %v6738 = vunpack.c.0.s8 %v6737
    %v6739 = vlaneseq
    %v6740 = vshrl.u32 %v6739, 7
    %v6741 = vsub.s32 %v6738, %v6740
    %v6742 = vrot.slane %v6735, %v6741
    %6744 = vst [vmem:[#allocation2 + $0xf] sm:$0xf] %v6742
    %v6745 = vld [vmem:[#allocation2] sm:$0xff]
    %v6746 = vld [vmem:[#allocation2 + $0x8] sm:$0xff]
    %v6747 = vld [vmem:[#allocation2 + $0x10] sm:$0x7]
    %v6748 = vld [vmem:[#allocation10] sm:$0xf]
    %v6749 = vld [vmem:[#allocation10 + $0x4] sm:$0xf]
    %v6750 = vld [vmem:[#allocation10 + $0x8] sm:$0xf]
    %v6751 = vld [vmem:[#allocation10 + $0xc] sm:$0xf]
    %v6752 = vld [vmem:[#allocation10 + $0x10] sm:$0xf]
    %v6753 = vld [vmem:[#allocation10 + $0x14] sm:$0xf]
    %v6754 = vld [vmem:[#allocation10 + $0x18] sm:$0xf]
    %v6755 = vld [vmem:[#allocation10 + $0x1c] sm:$0xf]
    %v6756 = vld [vmem:[#allocation10 + $0x20] sm:$0xf]
    %v6757 = vld [vmem:[#allocation10 + $0x24] sm:$0xf]
    %v6758 = vld [vmem:[#allocation10 + $0x28] sm:$0xf]
    %v6759 = vld [vmem:[#allocation10 + $0x2c] sm:$0xf]
    %v6760 = vld [vmem:[#allocation10 + $0x30] sm:$0xf]
    %v6761 = vld [vmem:[#allocation10 + $0x34] sm:$0xf]
    %v6762 = vld [vmem:[#allocation10 + $0x38] sm:$0xf]
    %v6763 = vld [vmem:[#allocation10 + $0x3c] sm:$0xf]
    %v6764 = vld [vmem:[#allocation10 + $0x40] sm:$0xf]
    %v6765 = vld [vmem:[#allocation10 + $0x44] sm:$0xf]
    %v6766 = vld [vmem:[#allocation10 + $0x48] sm:$0xf]
    %v6767 = vld [vmem:[#allocation10 + $0x4c] sm:$0xf]
    %v6768 = vld [vmem:[#allocation10 + $0x50] sm:$0xf]
    %v6769 = vld [vmem:[#allocation10 + $0x54] sm:$0xf]
    %v6770 = vld [vmem:[#allocation10 + $0x58] sm:$0xf]
    %v6771 = vld [vmem:[#allocation10 + $0x5c] sm:$0xf]
    %v6772 = vld [vmem:[#allocation10 + $0x60] sm:$0xf]
    %v6773 = vld [vmem:[#allocation10 + $0x64] sm:$0xf]
    %v6774 = vld [vmem:[#allocation10 + $0x68] sm:$0xf]
    %v6775 = vld [vmem:[#allocation10 + $0x6c] sm:$0xf]
    %v6776 = vld [vmem:[#allocation10 + $0x70] sm:$0xf]
    %v6777 = vld [vmem:[#allocation10 + $0x74] sm:$0xf]
    %v6778 = vld [vmem:[#allocation10 + $0x78] sm:$0xf]
    %v6779 = vld [vmem:[#allocation10 + $0x7c] sm:$0xf]
    %v6780 = vld [vmem:[#allocation10 + $0x80] sm:$0xf]
    %v6781 = vld [vmem:[#allocation10 + $0x84] sm:$0xf]
    %v6782 = vld [vmem:[#allocation10 + $0x88] sm:$0xf]
    %v6783 = vld [vmem:[#allocation10 + $0x8c] sm:$0xf]
    %v6784 = vld [vmem:[#allocation10 + $0x90] sm:$0xf]
    %v6785 = vld [vmem:[#allocation10 + $0x94] sm:$0xf]
    %v6786 = vld [vmem:[#allocation10 + $0x98] sm:$0xf]
    %v6787 = vld [vmem:[#allocation10 + $0x9c] sm:$0xf]
    %v6788 = vld [vmem:[#allocation10 + $0xa0] sm:$0xf]
    %v6789 = vld [vmem:[#allocation10 + $0xa4] sm:$0xf]
    %v6790 = vld [vmem:[#allocation10 + $0xa8] sm:$0xf]
    %v6791 = vld [vmem:[#allocation10 + $0xac] sm:$0xf]
    %v6792 = vld [vmem:[#allocation10 + $0xb0] sm:$0xf]
    %v6793 = vld [vmem:[#allocation10 + $0xb4] sm:$0xf]
    %v6794 = vld [vmem:[#allocation10 + $0xb8] sm:$0xf]
    %v6795 = vld [vmem:[#allocation10 + $0xbc] sm:$0xf]
    %v6796 = vld [vmem:[#allocation10 + $0xc0] sm:$0xf]
    %v6797 = vld [vmem:[#allocation10 + $0xc4] sm:$0xf]
    %v6798 = vld [vmem:[#allocation10 + $0xc8] sm:$0xf]
    %v6799 = vld [vmem:[#allocation10 + $0xcc] sm:$0xf]
    %v6800 = vld [vmem:[#allocation10 + $0xd0] sm:$0xf]
    %v6801 = vld [vmem:[#allocation10 + $0xd4] sm:$0xf]
    %v6802 = vld [vmem:[#allocation10 + $0xd8] sm:$0xf]
    %v6803 = vld [vmem:[#allocation10 + $0xdc] sm:$0xf]
    %v6804 = vld [vmem:[#allocation10 + $0xe0] sm:$0xf]
    %v6805 = vld [vmem:[#allocation10 + $0xe4] sm:$0xf]
    %v6806 = vld [vmem:[#allocation10 + $0xe8] sm:$0xf]
    %v6807 = vld [vmem:[#allocation10 + $0xec] sm:$0xf]
    %v6808 = vld [vmem:[#allocation10 + $0xf0] sm:$0xf]
    %v6809 = vld [vmem:[#allocation10 + $0xf4] sm:$0xf]
    %v6810 = vld [vmem:[#allocation10 + $0xf8] sm:$0xf]
    %v6811 = vld [vmem:[#allocation10 + $0xfc] sm:$0xf]
    %v6812 = vld [vmem:[#allocation10 + $0x100] sm:$0xf]
    %v6813 = vld [vmem:[#allocation10 + $0x104] sm:$0xf]
    %v6814 = vld [vmem:[#allocation10 + $0x108] sm:$0xf]
    %v6815 = vld [vmem:[#allocation10 + $0x10c] sm:$0xf]
    %v6816 = vld [vmem:[#allocation10 + $0x110] sm:$0xf]
    %v6817 = vld [vmem:[#allocation10 + $0x114] sm:$0xf]
    %v6818 = vld [vmem:[#allocation10 + $0x118] sm:$0xf]
    %v6819 = vld [vmem:[#allocation10 + $0x11c] sm:$0xf]
    %v6820 = vld [vmem:[#allocation10 + $0x120] sm:$0xf]
    %v6821 = vld [vmem:[#allocation10 + $0x124] sm:$0xf]
    %v6822 = vld [vmem:[#allocation10 + $0x128] sm:$0xf]
    %v6823 = vld [vmem:[#allocation10 + $0x12c] sm:$0xf]
    %v6824 = vld [vmem:[#allocation10 + $0x130] sm:$0xf]
    %v6825 = vld [vmem:[#allocation10 + $0x134] sm:$0xf]
    %v6826 = vld [vmem:[#allocation10 + $0x138] sm:$0xf]
    %v6827 = vld [vmem:[#allocation10 + $0x13c] sm:$0xf]
    %v6828 = vld [vmem:[#allocation10 + $0x140] sm:$0xf]
    %v6829 = vld [vmem:[#allocation10 + $0x144] sm:$0xf]
    %v6830 = vld [vmem:[#allocation10 + $0x148] sm:$0xf]
    %v6831 = vld [vmem:[#allocation10 + $0x14c] sm:$0xf]
    %v6832 = vld [vmem:[#allocation10 + $0x150] sm:$0xf]
    %v6833 = vld [vmem:[#allocation10 + $0x154] sm:$0xf]
    %v6834 = vld [vmem:[#allocation10 + $0x158] sm:$0xf]
    %v6835 = vld [vmem:[#allocation10 + $0x15c] sm:$0xf]
    %v6836 = vld [vmem:[#allocation10 + $0x160] sm:$0xf]
    %v6837 = vld [vmem:[#allocation10 + $0x164] sm:$0xf]
    %v6838 = vld [vmem:[#allocation10 + $0x168] sm:$0xf]
    %v6839 = vld [vmem:[#allocation10 + $0x16c] sm:$0xf]
    %v6840 = vld [vmem:[#allocation10 + $0x170] sm:$0xf]
    %v6841 = vld [vmem:[#allocation10 + $0x174] sm:$0xf]
    %v6842 = vld [vmem:[#allocation10 + $0x178] sm:$0xf]
    %v6843 = vld [vmem:[#allocation10 + $0x17c] sm:$0xf]
    %v6844 = vld [vmem:[#allocation10 + $0x180] sm:$0xf]
    %v6845 = vld [vmem:[#allocation10 + $0x184] sm:$0xf]
    %v6846 = vld [vmem:[#allocation10 + $0x188] sm:$0xf]
    %v6847 = vld [vmem:[#allocation10 + $0x18c] sm:$0xf]
    %v6848 = vld [vmem:[#allocation10 + $0x190] sm:$0xf]
    %v6849 = vld [vmem:[#allocation10 + $0x194] sm:$0xf]
    %v6850 = vld [vmem:[#allocation10 + $0x198] sm:$0xf]
    %v6851 = vld [vmem:[#allocation10 + $0x19c] sm:$0xf]
    %v6852 = vld [vmem:[#allocation10 + $0x1a0] sm:$0xf]
    %v6853 = vld [vmem:[#allocation10 + $0x1a4] sm:$0xf]
    %v6854 = vld [vmem:[#allocation10 + $0x1a8] sm:$0xf]
    %v6855 = vld [vmem:[#allocation10 + $0x1ac] sm:$0xf]
    %v6856 = vld [vmem:[#allocation10 + $0x1b0] sm:$0xf]
    %v6857 = vld [vmem:[#allocation10 + $0x1b4] sm:$0xf]
    %v6858 = vld [vmem:[#allocation10 + $0x1b8] sm:$0xf]
    %v6859 = vld [vmem:[#allocation10 + $0x1bc] sm:$0xf]
    %v6860 = vld [vmem:[#allocation10 + $0x1c0] sm:$0xf]
    %v6861 = vld [vmem:[#allocation10 + $0x1c4] sm:$0xf]
    %v6862 = vld [vmem:[#allocation10 + $0x1c8] sm:$0xf]
    %v6863 = vld [vmem:[#allocation10 + $0x1cc] sm:$0xf]
    %v6864 = vld [vmem:[#allocation10 + $0x1d0] sm:$0xf]
    %v6865 = vld [vmem:[#allocation10 + $0x1d4] sm:$0xf]
    %v6866 = vld [vmem:[#allocation10 + $0x1d8] sm:$0xf]
    %v6867 = vld [vmem:[#allocation10 + $0x1dc] sm:$0xf]
    %v6868 = vld [vmem:[#allocation10 + $0x1e0] sm:$0xf]
    %v6869 = vld [vmem:[#allocation10 + $0x1e4] sm:$0xf]
    %v6870 = vld [vmem:[#allocation10 + $0x1e8] sm:$0xf]
    %v6871 = vld [vmem:[#allocation10 + $0x1ec] sm:$0xf]
    %v6872 = vld [vmem:[#allocation10 + $0x1f0] sm:$0xf]
    %v6873 = vld [vmem:[#allocation10 + $0x1f4] sm:$0xf]
    %v6874 = vld [vmem:[#allocation10 + $0x1f8] sm:$0xf]
    %v6875 = vld [vmem:[#allocation10 + $0x1fc] sm:$0xf]
    %v6876 = vld [vmem:[#allocation10 + $0x200] sm:$0xf]
    %v6877 = vld [vmem:[#allocation10 + $0x204] sm:$0xf]
    %v6878 = vld [vmem:[#allocation10 + $0x208] sm:$0xf]
    %v6879 = vld [vmem:[#allocation10 + $0x20c] sm:$0xf]
    %v6880 = vld [vmem:[#allocation10 + $0x210] sm:$0xf]
    %v6881 = vld [vmem:[#allocation10 + $0x214] sm:$0xf]
    %v6882 = vld [vmem:[#allocation10 + $0x218] sm:$0xf]
    %v6883 = vld [vmem:[#allocation10 + $0x21c] sm:$0xf]
    %v6884 = vld [vmem:[#allocation10 + $0x220] sm:$0xf]
    %v6885 = vld [vmem:[#allocation10 + $0x224] sm:$0xf]
    %v6886 = vld [vmem:[#allocation10 + $0x228] sm:$0xf]
    %v6887 = vld [vmem:[#allocation10 + $0x22c] sm:$0xf]
    %v6888 = vld [vmem:[#allocation10 + $0x230] sm:$0xf]
    %v6889 = vld [vmem:[#allocation10 + $0x234] sm:$0xf]
    %v6890 = vld [vmem:[#allocation10 + $0x238] sm:$0xf]
    %v6891 = vld [vmem:[#allocation10 + $0x23c] sm:$0xf]
    %v6892 = vld [vmem:[#allocation10 + $0x240] sm:$0xf]
    %v6893 = vld [vmem:[#allocation10 + $0x244] sm:$0xf]
    %v6894 = vld [vmem:[#allocation10 + $0x248] sm:$0xf]
    %v6895 = vld [vmem:[#allocation10 + $0x24c] sm:$0xf]
    %v6896 = vld [vmem:[#allocation10 + $0x250] sm:$0xf]
    %v6897 = vld [vmem:[#allocation10 + $0x254] sm:$0xf]
    %v6898 = vld [vmem:[#allocation10 + $0x258] sm:$0xf]
    %v6899 = vld [vmem:[#allocation10 + $0x25c] sm:$0xf]
    %v6900 = vld [vmem:[#allocation10 + $0x260] sm:$0xf]
    %v6901 = vld [vmem:[#allocation10 + $0x264] sm:$0xf]
    %v6902 = vld [vmem:[#allocation10 + $0x268] sm:$0xf]
    %v6903 = vld [vmem:[#allocation10 + $0x26c] sm:$0xf]
    %v6904 = vld [vmem:[#allocation10 + $0x270] sm:$0xf]
    %v6905 = vld [vmem:[#allocation10 + $0x274] sm:$0xf]
    %v6906 = vld [vmem:[#allocation10 + $0x278] sm:$0xf]
    %v6907 = vld [vmem:[#allocation10 + $0x27c] sm:$0xf]
    %v6908 = vld [vmem:[#allocation10 + $0x280] sm:$0xf]
    %v6909 = vld [vmem:[#allocation10 + $0x284] sm:$0xf]
    %v6910 = vld [vmem:[#allocation10 + $0x288] sm:$0xf]
    %v6911 = vld [vmem:[#allocation10 + $0x28c] sm:$0xf]
    %v6912 = vld [vmem:[#allocation10 + $0x290] sm:$0xf]
    %v6913 = vld [vmem:[#allocation10 + $0x294] sm:$0xf]
    %v6914 = vld [vmem:[#allocation10 + $0x298] sm:$0xf]
    %v6915 = vld [vmem:[#allocation10 + $0x29c] sm:$0xf]
    %v6916 = vld [vmem:[#allocation10 + $0x2a0] sm:$0xf]
    %v6917 = vld [vmem:[#allocation10 + $0x2a4] sm:$0xf]
    %v6918 = vld [vmem:[#allocation10 + $0x2a8] sm:$0xf]
    %v6919 = vld [vmem:[#allocation10 + $0x2ac] sm:$0xf]
    %v6920 = vld [vmem:[#allocation10 + $0x2b0] sm:$0xf]
    %v6921 = vld [vmem:[#allocation10 + $0x2b4] sm:$0xf]
    %v6922 = vld [vmem:[#allocation10 + $0x2b8] sm:$0xf]
    %v6923 = vld [vmem:[#allocation10 + $0x2bc] sm:$0xf]
    %v6924 = vld [vmem:[#allocation10 + $0x2c0] sm:$0xf]
    %v6925 = vld [vmem:[#allocation10 + $0x2c4] sm:$0xf]
    %v6926 = vld [vmem:[#allocation10 + $0x2c8] sm:$0xf]
    %v6927 = vld [vmem:[#allocation10 + $0x2cc] sm:$0xf]
    %v6928 = vld [vmem:[#allocation10 + $0x2d0] sm:$0xf]
    %v6929 = vld [vmem:[#allocation10 + $0x2d4] sm:$0xf]
    %v6930 = vld [vmem:[#allocation10 + $0x2d8] sm:$0xf]
    %v6931 = vld [vmem:[#allocation10 + $0x2dc] sm:$0xf]
    %v6932 = vld [vmem:[#allocation10 + $0x2e0] sm:$0xf]
    %v6933 = vld [vmem:[#allocation10 + $0x2e4] sm:$0xf]
    %v6934 = vld [vmem:[#allocation10 + $0x2e8] sm:$0xf]
    %v6935 = vld [vmem:[#allocation10 + $0x2ec] sm:$0xf]
    %v6936 = vld [vmem:[#allocation10 + $0x2f0] sm:$0xf]
    %v6937 = vld [vmem:[#allocation10 + $0x2f4] sm:$0xf]
    %v6938 = vld [vmem:[#allocation10 + $0x2f8] sm:$0xf]
    %v6939 = vld [vmem:[#allocation10 + $0x2fc] sm:$0xf]
    %v6940 = vld [vmem:[#allocation10 + $0x300] sm:$0xf]
    %v6941 = vld [vmem:[#allocation10 + $0x304] sm:$0xf]
    %v6942 = vld [vmem:[#allocation10 + $0x308] sm:$0xf]
    %v6943 = vld [vmem:[#allocation10 + $0x30c] sm:$0xf]
    %v6944 = vld [vmem:[#allocation10 + $0x310] sm:$0xf]
    %v6945 = vld [vmem:[#allocation10 + $0x314] sm:$0xf]
    %v6946 = vld [vmem:[#allocation10 + $0x318] sm:$0xf]
    %v6947 = vld [vmem:[#allocation10 + $0x31c] sm:$0xf]
    %v6948 = vld [vmem:[#allocation10 + $0x320] sm:$0xf]
    %v6949 = vld [vmem:[#allocation10 + $0x324] sm:$0xf]
    %v6950 = vld [vmem:[#allocation10 + $0x328] sm:$0xf]
    %v6951 = vld [vmem:[#allocation10 + $0x32c] sm:$0xf]
    %v6952 = vld [vmem:[#allocation10 + $0x330] sm:$0xf]
    %v6953 = vld [vmem:[#allocation10 + $0x334] sm:$0xf]
    %v6954 = vld [vmem:[#allocation10 + $0x338] sm:$0xf]
    %v6955 = vld [vmem:[#allocation10 + $0x33c] sm:$0xf]
    %v6956 = vld [vmem:[#allocation10 + $0x340] sm:$0xf]
    %v6957 = vld [vmem:[#allocation10 + $0x344] sm:$0xf]
    %v6958 = vld [vmem:[#allocation10 + $0x348] sm:$0xf]
    %v6959 = vld [vmem:[#allocation10 + $0x34c] sm:$0xf]
    %v6960 = vld [vmem:[#allocation10 + $0x350] sm:$0xf]
    %v6961 = vld [vmem:[#allocation10 + $0x354] sm:$0xf]
    %v6962 = vld [vmem:[#allocation10 + $0x358] sm:$0xf]
    %v6963 = vld [vmem:[#allocation10 + $0x35c] sm:$0xf]
    %v6964 = vld [vmem:[#allocation10 + $0x360] sm:$0xf]
    %v6965 = vld [vmem:[#allocation10 + $0x364] sm:$0xf]
    %v6966 = vld [vmem:[#allocation10 + $0x368] sm:$0xf]
    %v6967 = vld [vmem:[#allocation10 + $0x36c] sm:$0xf]
    %v6968 = vld [vmem:[#allocation10 + $0x370] sm:$0xf]
    %v6969 = vld [vmem:[#allocation10 + $0x374] sm:$0xf]
    %v6970 = vld [vmem:[#allocation10 + $0x378] sm:$0xf]
    %v6971 = vld [vmem:[#allocation10 + $0x37c] sm:$0xf]
    %v6972 = vld [vmem:[#allocation10 + $0x380] sm:$0xf]
    %v6973 = vld [vmem:[#allocation10 + $0x384] sm:$0xf]
    %v6974 = vld [vmem:[#allocation10 + $0x388] sm:$0xf]
    %v6975 = vld [vmem:[#allocation10 + $0x38c] sm:$0xf]
    %v6976 = vld [vmem:[#allocation10 + $0x390] sm:$0xf]
    %v6977 = vld [vmem:[#allocation10 + $0x394] sm:$0xf]
    %v6978 = vld [vmem:[#allocation10 + $0x398] sm:$0xf]
    %v6979 = vld [vmem:[#allocation10 + $0x39c] sm:$0xf]
    %v6980 = vld [vmem:[#allocation10 + $0x3a0] sm:$0xf]
    %v6981 = vld [vmem:[#allocation10 + $0x3a4] sm:$0xf]
    %v6982 = vld [vmem:[#allocation10 + $0x3a8] sm:$0xf]
    %v6983 = vld [vmem:[#allocation10 + $0x3ac] sm:$0xf]
    %v6984 = vld [vmem:[#allocation10 + $0x3b0] sm:$0xf]
    %v6985 = vld [vmem:[#allocation10 + $0x3b4] sm:$0xf]
    %v6986 = vld [vmem:[#allocation10 + $0x3b8] sm:$0xf]
    %v6987 = vld [vmem:[#allocation10 + $0x3bc] sm:$0xf]
    %v6988 = vld [vmem:[#allocation10 + $0x3c0] sm:$0xf]
    %v6989 = vld [vmem:[#allocation10 + $0x3c4] sm:$0xf]
    %v6990 = vld [vmem:[#allocation10 + $0x3c8] sm:$0xf]
    %v6991 = vld [vmem:[#allocation10 + $0x3cc] sm:$0xf]
    %v6992 = vld [vmem:[#allocation10 + $0x3d0] sm:$0xf]
    %v6993 = vld [vmem:[#allocation10 + $0x3d4] sm:$0xf]
    %v6994 = vld [vmem:[#allocation10 + $0x3d8] sm:$0xf]
    %v6995 = vld [vmem:[#allocation10 + $0x3dc] sm:$0xf]
    %v6996 = vld [vmem:[#allocation10 + $0x3e0] sm:$0xf]
    %v6997 = vld [vmem:[#allocation10 + $0x3e4] sm:$0xf]
    %v6998 = vld [vmem:[#allocation10 + $0x3e8] sm:$0xf]
    %v6999 = vld [vmem:[#allocation10 + $0x3ec] sm:$0xf]
    %v7000 = vld [vmem:[#allocation10 + $0x3f0] sm:$0xf]
    %v7001 = vld [vmem:[#allocation10 + $0x3f4] sm:$0xf]
    %v7002 = vld [vmem:[#allocation10 + $0x3f8] sm:$0xf]
    %v7003 = vld [vmem:[#allocation10 + $0x3fc] sm:$0xf]
    %v7004 = vld [vmem:[#allocation10 + $0x400] sm:$0xf]
    %v7005 = vld [vmem:[#allocation10 + $0x404] sm:$0xf]
    %v7006 = vld [vmem:[#allocation10 + $0x408] sm:$0xf]
    %v7007 = vld [vmem:[#allocation10 + $0x40c] sm:$0xf]
    %v7008 = vld [vmem:[#allocation10 + $0x410] sm:$0xf]
    %v7009 = vld [vmem:[#allocation10 + $0x414] sm:$0xf]
    %v7010 = vld [vmem:[#allocation10 + $0x418] sm:$0xf]
    %v7011 = vld [vmem:[#allocation10 + $0x41c] sm:$0xf]
    %v7012 = vld [vmem:[#allocation10 + $0x420] sm:$0xf]
    %v7013 = vld [vmem:[#allocation10 + $0x424] sm:$0xf]
    %v7014 = vld [vmem:[#allocation10 + $0x428] sm:$0xf]
    %v7015 = vld [vmem:[#allocation10 + $0x42c] sm:$0xf]
    %v7016 = vld [vmem:[#allocation10 + $0x430] sm:$0xf]
    %v7017 = vld [vmem:[#allocation10 + $0x434] sm:$0xf]
    %v7018 = vld [vmem:[#allocation10 + $0x438] sm:$0xf]
    %v7019 = vld [vmem:[#allocation10 + $0x43c] sm:$0xf]
    %v7020 = vld [vmem:[#allocation10 + $0x440] sm:$0xf]
    %v7021 = vld [vmem:[#allocation10 + $0x444] sm:$0xf]
    %v7022 = vld [vmem:[#allocation10 + $0x448] sm:$0xf]
    %v7023 = vld [vmem:[#allocation10 + $0x44c] sm:$0xf]
    %v7024 = vld [vmem:[#allocation10 + $0x450] sm:$0xf]
    %v7025 = vld [vmem:[#allocation10 + $0x454] sm:$0xf]
    %v7026 = vld [vmem:[#allocation10 + $0x458] sm:$0xf]
    %v7027 = vld [vmem:[#allocation10 + $0x45c] sm:$0xf]
    %v7028 = vld [vmem:[#allocation10 + $0x460] sm:$0xf]
    %v7029 = vld [vmem:[#allocation10 + $0x464] sm:$0xf]
    %v7030 = vld [vmem:[#allocation10 + $0x468] sm:$0xf]
    %v7031 = vld [vmem:[#allocation10 + $0x46c] sm:$0xf]
    %v7032 = vld [vmem:[#allocation10 + $0x470] sm:$0xf]
    %v7033 = vld [vmem:[#allocation10 + $0x474] sm:$0xf]
    %v7034 = vld [vmem:[#allocation10 + $0x478] sm:$0xf]
    %v7035 = vld [vmem:[#allocation10 + $0x47c] sm:$0xf]
    %v7036 = vld [vmem:[#allocation10 + $0x480] sm:$0xf]
    %v7037 = vld [vmem:[#allocation10 + $0x484] sm:$0xf]
    %v7038 = vld [vmem:[#allocation10 + $0x488] sm:$0xf]
    %v7039 = vld [vmem:[#allocation10 + $0x48c] sm:$0xf]
    %v7040 = vld [vmem:[#allocation10 + $0x490] sm:$0xf]
    %v7041 = vld [vmem:[#allocation10 + $0x494] sm:$0xf]
    %v7042 = vld [vmem:[#allocation10 + $0x498] sm:$0xf]
    %v7043 = vld [vmem:[#allocation10 + $0x49c] sm:$0xf]
    %v7044 = vld [vmem:[#allocation10 + $0x4a0] sm:$0xf]
    %v7045 = vld [vmem:[#allocation10 + $0x4a4] sm:$0xf]
    %v7046 = vld [vmem:[#allocation10 + $0x4a8] sm:$0xf]
    %v7047 = vld [vmem:[#allocation10 + $0x4ac] sm:$0xf]
    %v7048 = vld [vmem:[#allocation10 + $0x4b0] sm:$0xf]
    %v7049 = vld [vmem:[#allocation10 + $0x4b4] sm:$0xf]
    %v7050 = vld [vmem:[#allocation10 + $0x4b8] sm:$0xf]
    %v7051 = vld [vmem:[#allocation10 + $0x4bc] sm:$0xf]
    %v7052 = vld [vmem:[#allocation12] sm:$0x1]
    %v7054 = vlaneseq
    %v7055 = vshrl.u32 %v7054, 7
    %v7056 = vsub.s32 0, %v7055
    %v7057 = vrot.slane %v7052, %v7056
    %v7062 = vcombine.high %v6745, %v6745
    %v7064 = vunpack.c.l.s4 1966171168
    %v7065 = vunpack.c.0.s8 %v7064
    %v7066 = vlaneseq
    %v7067 = vshrl.u32 %v7066, 7
    %v7068 = vsub.s32 %v7065, %v7067
    %v7069 = vrot.slane %v6745, %v7068
    %v7071 = vunpack.c.l.s4 1966171168
    %v7072 = vunpack.c.0.s8 %v7071
    %v7073 = vlaneseq
    %v7074 = vshrl.u32 %v7073, 7
    %v7075 = vsub.s32 %v7072, %v7074
    %v7076 = vrot.slane %v7062, %v7075
    %v7077 = vcombine.high %v7069, %v7069
    %v7078 = vcombine.high %v7076, %v7076
    %v7080 = vunpack.c.l.s4 1966171168
    %v7081 = vunpack.c.0.s8 %v7080
    %v7082 = vlaneseq
    %v7083 = vshrl.u32 %v7082, 7
    %v7084 = vsub.s32 %v7081, %v7083
    %v7085 = vrot.slane %v7069, %v7084
    %v7087 = vunpack.c.l.s4 1966171168
    %v7088 = vunpack.c.0.s8 %v7087
    %v7089 = vlaneseq
    %v7090 = vshrl.u32 %v7089, 7
    %v7091 = vsub.s32 %v7088, %v7090
    %v7092 = vrot.slane %v7076, %v7091
    %v7094 = vunpack.c.l.s4 1966171168
    %v7095 = vunpack.c.0.s8 %v7094
    %v7096 = vlaneseq
    %v7097 = vshrl.u32 %v7096, 7
    %v7098 = vsub.s32 %v7095, %v7097
    %v7099 = vrot.slane %v7077, %v7098
    %v7101 = vunpack.c.l.s4 1966171168
    %v7102 = vunpack.c.0.s8 %v7101
    %v7103 = vlaneseq
    %v7104 = vshrl.u32 %v7103, 7
    %v7105 = vsub.s32 %v7102, %v7104
    %v7106 = vrot.slane %v7078, %v7105
    %v7107 = vcombine.high %v7085, %v7085
    %v7108 = vcombine.high %v7092, %v7092
    %v7109 = vcombine.high %v7099, %v7099
    %v7110 = vcombine.high %v7106, %v7106
    %v7111 = vcombine.high %v6746, %v6746
    %v7113 = vunpack.c.l.s4 1966171168
    %v7114 = vunpack.c.0.s8 %v7113
    %v7115 = vlaneseq
    %v7116 = vshrl.u32 %v7115, 7
    %v7117 = vsub.s32 %v7114, %v7116
    %v7118 = vrot.slane %v6746, %v7117
    %v7120 = vunpack.c.l.s4 1966171168
    %v7121 = vunpack.c.0.s8 %v7120
    %v7122 = vlaneseq
    %v7123 = vshrl.u32 %v7122, 7
    %v7124 = vsub.s32 %v7121, %v7123
    %v7125 = vrot.slane %v7111, %v7124
    %v7126 = vcombine.high %v7118, %v7118
    %v7127 = vcombine.high %v7125, %v7125
    %v7129 = vunpack.c.l.s4 1966171168
    %v7130 = vunpack.c.0.s8 %v7129
    %v7131 = vlaneseq
    %v7132 = vshrl.u32 %v7131, 7
    %v7133 = vsub.s32 %v7130, %v7132
    %v7134 = vrot.slane %v7118, %v7133
    %v7136 = vunpack.c.l.s4 1966171168
    %v7137 = vunpack.c.0.s8 %v7136
    %v7138 = vlaneseq
    %v7139 = vshrl.u32 %v7138, 7
    %v7140 = vsub.s32 %v7137, %v7139
    %v7141 = vrot.slane %v7125, %v7140
    %v7143 = vunpack.c.l.s4 1966171168
    %v7144 = vunpack.c.0.s8 %v7143
    %v7145 = vlaneseq
    %v7146 = vshrl.u32 %v7145, 7
    %v7147 = vsub.s32 %v7144, %v7146
    %v7148 = vrot.slane %v7126, %v7147
    %v7150 = vunpack.c.l.s4 1966171168
    %v7151 = vunpack.c.0.s8 %v7150
    %v7152 = vlaneseq
    %v7153 = vshrl.u32 %v7152, 7
    %v7154 = vsub.s32 %v7151, %v7153
    %v7155 = vrot.slane %v7127, %v7154
    %v7156 = vcombine.high %v7134, %v7134
    %v7157 = vcombine.high %v7141, %v7141
    %v7158 = vcombine.high %v7148, %v7148
    %v7159 = vcombine.high %v7155, %v7155
    %v7161 = vunpack.c.l.s4 1966171168
    %v7162 = vunpack.c.0.s8 %v7161
    %v7163 = vlaneseq
    %v7164 = vshrl.u32 %v7163, 7
    %v7165 = vsub.s32 %v7162, %v7164
    %v7166 = vrot.slane %v6747, %v7165
    %v7167 = vcombine.high %v7166, %v7166
    %v7169 = vunpack.c.l.s4 1966171168
    %v7170 = vunpack.c.0.s8 %v7169
    %v7171 = vlaneseq
    %v7172 = vshrl.u32 %v7171, 7
    %v7173 = vsub.s32 %v7170, %v7172
    %v7174 = vrot.slane %v7166, %v7173
    %v7176 = vunpack.c.l.s4 1966171168
    %v7177 = vunpack.c.0.s8 %v7176
    %v7178 = vlaneseq
    %v7179 = vshrl.u32 %v7178, 7
    %v7180 = vsub.s32 %v7177, %v7179
    %v7181 = vrot.slane %v7167, %v7180
    %v7182 = vcombine.high %v7174, %v7174
    %v7506 = vunpack.c.l.b16 %v6748
    %v7507 = vunpack.c.l.b16 %v6749
    %v7508 = vunpack.c.l.b16 %v6750
    %v7509 = vunpack.c.l.b16 %v6751
    %v7510 = vunpack.c.l.b16 %v6752
    %v7511 = vunpack.c.l.b16 %v6753
    %v7512 = vunpack.c.l.b16 %v6754
    %v7513 = vunpack.c.l.b16 %v6755
    %v7514 = vunpack.c.l.b16 %v6756
    %v7515 = vunpack.c.l.b16 %v6757
    %v7516 = vunpack.c.l.b16 %v6758
    %v7517 = vunpack.c.l.b16 %v6759
    %v7518 = vunpack.c.l.b16 %v6760
    %v7519 = vunpack.c.l.b16 %v6761
    %v7520 = vunpack.c.l.b16 %v6762
    %v7521 = vunpack.c.l.b16 %v6763
    %v7522 = vunpack.c.l.b16 %v6764
    %v7523 = vunpack.c.l.b16 %v6765
    %v7524 = vunpack.c.l.b16 %v6766
    %v7525 = vunpack.c.l.b16 %v6767
    %v7526 = vunpack.c.l.b16 %v6768
    %v7527 = vunpack.c.l.b16 %v6769
    %v7528 = vunpack.c.l.b16 %v6770
    %v7529 = vunpack.c.l.b16 %v6771
    %v7530 = vunpack.c.l.b16 %v6772
    %v7531 = vunpack.c.l.b16 %v6773
    %v7532 = vunpack.c.l.b16 %v6774
    %v7533 = vunpack.c.l.b16 %v6775
    %v7534 = vunpack.c.l.b16 %v6776
    %v7535 = vunpack.c.l.b16 %v6777
    %v7536 = vunpack.c.l.b16 %v6778
    %v7537 = vunpack.c.l.b16 %v6779
    %v7538 = vunpack.c.l.b16 %v6780
    %v7539 = vunpack.c.l.b16 %v6781
    %v7540 = vunpack.c.l.b16 %v6782
    %v7541 = vunpack.c.l.b16 %v6783
    %v7542 = vunpack.c.l.b16 %v6784
    %v7543 = vunpack.c.l.b16 %v6785
    %v7544 = vunpack.c.l.b16 %v6786
    %v7545 = vunpack.c.l.b16 %v6787
    %v7546 = vunpack.c.l.b16 %v6788
    %v7547 = vunpack.c.l.b16 %v6789
    %v7548 = vunpack.c.l.b16 %v6790
    %v7549 = vunpack.c.l.b16 %v6791
    %v7550 = vunpack.c.l.b16 %v6792
    %v7551 = vunpack.c.l.b16 %v6793
    %v7552 = vunpack.c.l.b16 %v6794
    %v7553 = vunpack.c.l.b16 %v6795
    %v7554 = vunpack.c.l.b16 %v6796
    %v7555 = vunpack.c.l.b16 %v6797
    %v7556 = vunpack.c.l.b16 %v6798
    %v7557 = vunpack.c.l.b16 %v6799
    %v7558 = vunpack.c.l.b16 %v6800
    %v7559 = vunpack.c.l.b16 %v6801
    %v7560 = vunpack.c.l.b16 %v6802
    %v7561 = vunpack.c.l.b16 %v6803
    %v7562 = vunpack.c.l.b16 %v6804
    %v7563 = vunpack.c.l.b16 %v6805
    %v7564 = vunpack.c.l.b16 %v6806
    %v7565 = vunpack.c.l.b16 %v6807
    %v7566 = vunpack.c.l.b16 %v6808
    %v7567 = vunpack.c.l.b16 %v6809
    %v7568 = vunpack.c.l.b16 %v6810
    %v7569 = vunpack.c.l.b16 %v6811
    %v7570 = vunpack.c.l.b16 %v6812
    %v7571 = vunpack.c.l.b16 %v6813
    %v7572 = vunpack.c.l.b16 %v6814
    %v7573 = vunpack.c.l.b16 %v6815
    %v7574 = vunpack.c.l.b16 %v6816
    %v7575 = vunpack.c.l.b16 %v6817
    %v7576 = vunpack.c.l.b16 %v6818
    %v7577 = vunpack.c.l.b16 %v6819
    %v7578 = vunpack.c.l.b16 %v6820
    %v7579 = vunpack.c.l.b16 %v6821
    %v7580 = vunpack.c.l.b16 %v6822
    %v7581 = vunpack.c.l.b16 %v6823
    %v7582 = vunpack.c.l.b16 %v6824
    %v7583 = vunpack.c.l.b16 %v6825
    %v7584 = vunpack.c.l.b16 %v6826
    %v7585 = vunpack.c.l.b16 %v6827
    %v7586 = vunpack.c.l.b16 %v6828
    %v7587 = vunpack.c.l.b16 %v6829
    %v7588 = vunpack.c.l.b16 %v6830
    %v7589 = vunpack.c.l.b16 %v6831
    %v7590 = vunpack.c.l.b16 %v6832
    %v7591 = vunpack.c.l.b16 %v6833
    %v7592 = vunpack.c.l.b16 %v6834
    %v7593 = vunpack.c.l.b16 %v6835
    %v7594 = vunpack.c.l.b16 %v6836
    %v7595 = vunpack.c.l.b16 %v6837
    %v7596 = vunpack.c.l.b16 %v6838
    %v7597 = vunpack.c.l.b16 %v6839
    %v7598 = vunpack.c.l.b16 %v6840
    %v7599 = vunpack.c.l.b16 %v6841
    %v7600 = vunpack.c.l.b16 %v6842
    %v7601 = vunpack.c.l.b16 %v6843
    %v7602 = vunpack.c.l.b16 %v6844
    %v7603 = vunpack.c.l.b16 %v6845
    %v7604 = vunpack.c.l.b16 %v6846
    %v7605 = vunpack.c.l.b16 %v6847
    %v7606 = vunpack.c.l.b16 %v6848
    %v7607 = vunpack.c.l.b16 %v6849
    %v7608 = vunpack.c.l.b16 %v6850
    %v7609 = vunpack.c.l.b16 %v6851
    %v7610 = vunpack.c.l.b16 %v6852
    %v7611 = vunpack.c.l.b16 %v6853
    %v7612 = vunpack.c.l.b16 %v6854
    %v7613 = vunpack.c.l.b16 %v6855
    %v7614 = vunpack.c.l.b16 %v6856
    %v7615 = vunpack.c.l.b16 %v6857
    %v7616 = vunpack.c.l.b16 %v6858
    %v7617 = vunpack.c.l.b16 %v6859
    %v7618 = vunpack.c.l.b16 %v6860
    %v7619 = vunpack.c.l.b16 %v6861
    %v7620 = vunpack.c.l.b16 %v6862
    %v7621 = vunpack.c.l.b16 %v6863
    %v7622 = vunpack.c.l.b16 %v6864
    %v7623 = vunpack.c.l.b16 %v6865
    %v7624 = vunpack.c.l.b16 %v6866
    %v7625 = vunpack.c.l.b16 %v6867
    %v7626 = vunpack.c.l.b16 %v6868
    %v7627 = vunpack.c.l.b16 %v6869
    %v7628 = vunpack.c.l.b16 %v6870
    %v7629 = vunpack.c.l.b16 %v6871
    %v7630 = vunpack.c.l.b16 %v6872
    %v7631 = vunpack.c.l.b16 %v6873
    %v7632 = vunpack.c.l.b16 %v6874
    %v7633 = vunpack.c.l.b16 %v6875
    %v7634 = vunpack.c.l.b16 %v6876
    %v7635 = vunpack.c.l.b16 %v6877
    %v7636 = vunpack.c.l.b16 %v6878
    %v7637 = vunpack.c.l.b16 %v6879
    %v7638 = vunpack.c.l.b16 %v6880
    %v7639 = vunpack.c.l.b16 %v6881
    %v7640 = vunpack.c.l.b16 %v6882
    %v7641 = vunpack.c.l.b16 %v6883
    %v7642 = vunpack.c.l.b16 %v6884
    %v7643 = vunpack.c.l.b16 %v6885
    %v7644 = vunpack.c.l.b16 %v6886
    %v7645 = vunpack.c.l.b16 %v6887
    %v7646 = vunpack.c.l.b16 %v6888
    %v7647 = vunpack.c.l.b16 %v6889
    %v7648 = vunpack.c.l.b16 %v6890
    %v7649 = vunpack.c.l.b16 %v6891
    %v7650 = vunpack.c.l.b16 %v6892
    %v7651 = vunpack.c.l.b16 %v6893
    %v7652 = vunpack.c.l.b16 %v6894
    %v7653 = vunpack.c.l.b16 %v6895
    %v7654 = vunpack.c.l.b16 %v6896
    %v7655 = vunpack.c.l.b16 %v6897
    %v7656 = vunpack.c.l.b16 %v6898
    %v7657 = vunpack.c.l.b16 %v6899
    %v7658 = vunpack.c.l.b16 %v6900
    %v7659 = vunpack.c.l.b16 %v6901
    %v7660 = vunpack.c.l.b16 %v6902
    %v7661 = vunpack.c.l.b16 %v6903
    %v7662 = vunpack.c.l.b16 %v6904
    %v7663 = vunpack.c.l.b16 %v6905
    %v7664 = vunpack.c.l.b16 %v6906
    %v7665 = vunpack.c.l.b16 %v6907
    %v7666 = vunpack.c.l.b16 %v6908
    %v7667 = vunpack.c.l.b16 %v6909
    %v7668 = vunpack.c.l.b16 %v6910
    %v7669 = vunpack.c.l.b16 %v6911
    %v7670 = vunpack.c.l.b16 %v6912
    %v7671 = vunpack.c.l.b16 %v6913
    %v7672 = vunpack.c.l.b16 %v6914
    %v7673 = vunpack.c.l.b16 %v6915
    %v7674 = vunpack.c.l.b16 %v6916
    %v7675 = vunpack.c.l.b16 %v6917
    %v7676 = vunpack.c.l.b16 %v6918
    %v7677 = vunpack.c.l.b16 %v6919
    %v7678 = vunpack.c.l.b16 %v6920
    %v7679 = vunpack.c.l.b16 %v6921
    %v7680 = vunpack.c.l.b16 %v6922
    %v7681 = vunpack.c.l.b16 %v6923
    %v7682 = vunpack.c.l.b16 %v6924
    %v7683 = vunpack.c.l.b16 %v6925
    %v7684 = vunpack.c.l.b16 %v6926
    %v7685 = vunpack.c.l.b16 %v6927
    %v7686 = vunpack.c.l.b16 %v6928
    %v7687 = vunpack.c.l.b16 %v6929
    %v7688 = vunpack.c.l.b16 %v6930
    %v7689 = vunpack.c.l.b16 %v6931
    %v7690 = vunpack.c.l.b16 %v6932
    %v7691 = vunpack.c.l.b16 %v6933
    %v7692 = vunpack.c.l.b16 %v6934
    %v7693 = vunpack.c.l.b16 %v6935
    %v7694 = vunpack.c.l.b16 %v6936
    %v7695 = vunpack.c.l.b16 %v6937
    %v7696 = vunpack.c.l.b16 %v6938
    %v7697 = vunpack.c.l.b16 %v6939
    %v7698 = vunpack.c.l.b16 %v6940
    %v7699 = vunpack.c.l.b16 %v6941
    %v7700 = vunpack.c.l.b16 %v6942
    %v7701 = vunpack.c.l.b16 %v6943
    %v7702 = vunpack.c.l.b16 %v6944
    %v7703 = vunpack.c.l.b16 %v6945
    %v7704 = vunpack.c.l.b16 %v6946
    %v7705 = vunpack.c.l.b16 %v6947
    %v7706 = vunpack.c.l.b16 %v6948
    %v7707 = vunpack.c.l.b16 %v6949
    %v7708 = vunpack.c.l.b16 %v6950
    %v7709 = vunpack.c.l.b16 %v6951
    %v7710 = vunpack.c.l.b16 %v6952
    %v7711 = vunpack.c.l.b16 %v6953
    %v7712 = vunpack.c.l.b16 %v6954
    %v7713 = vunpack.c.l.b16 %v6955
    %v7714 = vunpack.c.l.b16 %v6956
    %v7715 = vunpack.c.l.b16 %v6957
    %v7716 = vunpack.c.l.b16 %v6958
    %v7717 = vunpack.c.l.b16 %v6959
    %v7718 = vunpack.c.l.b16 %v6960
    %v7719 = vunpack.c.l.b16 %v6961
    %v7720 = vunpack.c.l.b16 %v6962
    %v7721 = vunpack.c.l.b16 %v6963
    %v7722 = vunpack.c.l.b16 %v6964
    %v7723 = vunpack.c.l.b16 %v6965
    %v7724 = vunpack.c.l.b16 %v6966
    %v7725 = vunpack.c.l.b16 %v6967
    %v7726 = vunpack.c.l.b16 %v6968
    %v7727 = vunpack.c.l.b16 %v6969
    %v7728 = vunpack.c.l.b16 %v6970
    %v7729 = vunpack.c.l.b16 %v6971
    %v7730 = vunpack.c.l.b16 %v6972
    %v7731 = vunpack.c.l.b16 %v6973
    %v7732 = vunpack.c.l.b16 %v6974
    %v7733 = vunpack.c.l.b16 %v6975
    %v7734 = vunpack.c.l.b16 %v6976
    %v7735 = vunpack.c.l.b16 %v6977
    %v7736 = vunpack.c.l.b16 %v6978
    %v7737 = vunpack.c.l.b16 %v6979
    %v7738 = vunpack.c.l.b16 %v6980
    %v7739 = vunpack.c.l.b16 %v6981
    %v7740 = vunpack.c.l.b16 %v6982
    %v7741 = vunpack.c.l.b16 %v6983
    %v7742 = vunpack.c.l.b16 %v6984
    %v7743 = vunpack.c.l.b16 %v6985
    %v7744 = vunpack.c.l.b16 %v6986
    %v7745 = vunpack.c.l.b16 %v6987
    %v7746 = vunpack.c.l.b16 %v6988
    %v7747 = vunpack.c.l.b16 %v6989
    %v7748 = vunpack.c.l.b16 %v6990
    %v7749 = vunpack.c.l.b16 %v6991
    %v7750 = vunpack.c.l.b16 %v6992
    %v7751 = vunpack.c.l.b16 %v6993
    %v7752 = vunpack.c.l.b16 %v6994
    %v7753 = vunpack.c.l.b16 %v6995
    %v7754 = vunpack.c.l.b16 %v6996
    %v7755 = vunpack.c.l.b16 %v6997
    %v7756 = vunpack.c.l.b16 %v6998
    %v7757 = vunpack.c.l.b16 %v6999
    %v7758 = vunpack.c.l.b16 %v7000
    %v7759 = vunpack.c.l.b16 %v7001
    %v7760 = vunpack.c.l.b16 %v7002
    %v7761 = vunpack.c.l.b16 %v7003
    %v7762 = vunpack.c.l.b16 %v7004
    %v7763 = vunpack.c.l.b16 %v7005
    %v7764 = vunpack.c.l.b16 %v7006
    %v7765 = vunpack.c.l.b16 %v7007
    %v7766 = vunpack.c.l.b16 %v7008
    %v7767 = vunpack.c.l.b16 %v7009
    %v7768 = vunpack.c.l.b16 %v7010
    %v7769 = vunpack.c.l.b16 %v7011
    %v7770 = vunpack.c.l.b16 %v7012
    %v7771 = vunpack.c.l.b16 %v7013
    %v7772 = vunpack.c.l.b16 %v7014
    %v7773 = vunpack.c.l.b16 %v7015
    %v7774 = vunpack.c.l.b16 %v7016
    %v7775 = vunpack.c.l.b16 %v7017
    %v7776 = vunpack.c.l.b16 %v7018
    %v7777 = vunpack.c.l.b16 %v7019
    %v7778 = vunpack.c.l.b16 %v7020
    %v7779 = vunpack.c.l.b16 %v7021
    %v7780 = vunpack.c.l.b16 %v7022
    %v7781 = vunpack.c.l.b16 %v7023
    %v7782 = vunpack.c.l.b16 %v7024
    %v7783 = vunpack.c.l.b16 %v7025
    %v7784 = vunpack.c.l.b16 %v7026
    %v7785 = vunpack.c.l.b16 %v7027
    %v7786 = vunpack.c.l.b16 %v7028
    %v7787 = vunpack.c.l.b16 %v7029
    %v7788 = vunpack.c.l.b16 %v7030
    %v7789 = vunpack.c.l.b16 %v7031
    %v7790 = vunpack.c.l.b16 %v7032
    %v7791 = vunpack.c.l.b16 %v7033
    %v7792 = vunpack.c.l.b16 %v7034
    %v7793 = vunpack.c.l.b16 %v7035
    %v7794 = vunpack.c.l.b16 %v7036
    %v7795 = vunpack.c.l.b16 %v7037
    %v7796 = vunpack.c.l.b16 %v7038
    %v7797 = vunpack.c.l.b16 %v7039
    %v7798 = vunpack.c.l.b16 %v7040
    %v7799 = vunpack.c.l.b16 %v7041
    %v7800 = vunpack.c.l.b16 %v7042
    %v7801 = vunpack.c.l.b16 %v7043
    %v7802 = vunpack.c.l.b16 %v7044
    %v7803 = vunpack.c.l.b16 %v7045
    %v7804 = vunpack.c.l.b16 %v7046
    %v7805 = vunpack.c.l.b16 %v7047
    %v7806 = vunpack.c.l.b16 %v7048
    %v7807 = vunpack.c.l.b16 %v7049
    %v7808 = vunpack.c.l.b16 %v7050
    %v7809 = vunpack.c.l.b16 %v7051
    %v7810 = vpack.c.b16 %v7507, %v7506
    %v7811 = vpack.c.b16 %v7509, %v7508
    %v7812 = vpack.c.b16 %v7511, %v7510
    %v7813 = vpack.c.b16 %v7513, %v7512
    %v7814 = vpack.c.b16 %v7515, %v7514
    %v7815 = vpack.c.b16 %v7517, %v7516
    %v7816 = vpack.c.b16 %v7519, %v7518
    %v7817 = vpack.c.b16 %v7521, %v7520
    %v7818 = vpack.c.b16 %v7523, %v7522
    %v7819 = vpack.c.b16 %v7525, %v7524
    %v7820 = vpack.c.b16 %v7527, %v7526
    %v7821 = vpack.c.b16 %v7529, %v7528
    %v7822 = vpack.c.b16 %v7531, %v7530
    %v7823 = vpack.c.b16 %v7533, %v7532
    %v7824 = vpack.c.b16 %v7535, %v7534
    %v7825 = vpack.c.b16 %v7537, %v7536
    %v7826 = vpack.c.b16 %v7539, %v7538
    %v7827 = vpack.c.b16 %v7541, %v7540
    %v7828 = vpack.c.b16 %v7543, %v7542
    %v7829 = vpack.c.b16 %v7545, %v7544
    %v7830 = vpack.c.b16 %v7547, %v7546
    %v7831 = vpack.c.b16 %v7549, %v7548
    %v7832 = vpack.c.b16 %v7551, %v7550
    %v7833 = vpack.c.b16 %v7553, %v7552
    %v7834 = vpack.c.b16 %v7555, %v7554
    %v7835 = vpack.c.b16 %v7557, %v7556
    %v7836 = vpack.c.b16 %v7559, %v7558
    %v7837 = vpack.c.b16 %v7561, %v7560
    %v7838 = vpack.c.b16 %v7563, %v7562
    %v7839 = vpack.c.b16 %v7565, %v7564
    %v7840 = vpack.c.b16 %v7567, %v7566
    %v7841 = vpack.c.b16 %v7569, %v7568
    %v7842 = vpack.c.b16 %v7571, %v7570
    %v7843 = vpack.c.b16 %v7573, %v7572
    %v7844 = vpack.c.b16 %v7575, %v7574
    %v7845 = vpack.c.b16 %v7577, %v7576
    %v7846 = vpack.c.b16 %v7579, %v7578
    %v7847 = vpack.c.b16 %v7581, %v7580
    %v7848 = vpack.c.b16 %v7583, %v7582
    %v7849 = vpack.c.b16 %v7585, %v7584
    %v7850 = vpack.c.b16 %v7587, %v7586
    %v7851 = vpack.c.b16 %v7589, %v7588
    %v7852 = vpack.c.b16 %v7591, %v7590
    %v7853 = vpack.c.b16 %v7593, %v7592
    %v7854 = vpack.c.b16 %v7595, %v7594
    %v7855 = vpack.c.b16 %v7597, %v7596
    %v7856 = vpack.c.b16 %v7599, %v7598
    %v7857 = vpack.c.b16 %v7601, %v7600
    %v7858 = vpack.c.b16 %v7603, %v7602
    %v7859 = vpack.c.b16 %v7605, %v7604
    %v7860 = vpack.c.b16 %v7607, %v7606
    %v7861 = vpack.c.b16 %v7609, %v7608
    %v7862 = vpack.c.b16 %v7611, %v7610
    %v7863 = vpack.c.b16 %v7613, %v7612
    %v7864 = vpack.c.b16 %v7615, %v7614
    %v7865 = vpack.c.b16 %v7617, %v7616
    %v7866 = vpack.c.b16 %v7619, %v7618
    %v7867 = vpack.c.b16 %v7621, %v7620
    %v7868 = vpack.c.b16 %v7623, %v7622
    %v7869 = vpack.c.b16 %v7625, %v7624
    %v7870 = vpack.c.b16 %v7627, %v7626
    %v7871 = vpack.c.b16 %v7629, %v7628
    %v7872 = vpack.c.b16 %v7631, %v7630
    %v7873 = vpack.c.b16 %v7633, %v7632
    %v7874 = vpack.c.b16 %v7635, %v7634
    %v7875 = vpack.c.b16 %v7637, %v7636
    %v7876 = vpack.c.b16 %v7639, %v7638
    %v7877 = vpack.c.b16 %v7641, %v7640
    %v7878 = vpack.c.b16 %v7643, %v7642
    %v7879 = vpack.c.b16 %v7645, %v7644
    %v7880 = vpack.c.b16 %v7647, %v7646
    %v7881 = vpack.c.b16 %v7649, %v7648
    %v7882 = vpack.c.b16 %v7651, %v7650
    %v7883 = vpack.c.b16 %v7653, %v7652
    %v7884 = vpack.c.b16 %v7655, %v7654
    %v7885 = vpack.c.b16 %v7657, %v7656
    %v7886 = vpack.c.b16 %v7659, %v7658
    %v7887 = vpack.c.b16 %v7661, %v7660
    %v7888 = vpack.c.b16 %v7663, %v7662
    %v7889 = vpack.c.b16 %v7665, %v7664
    %v7890 = vpack.c.b16 %v7667, %v7666
    %v7891 = vpack.c.b16 %v7669, %v7668
    %v7892 = vpack.c.b16 %v7671, %v7670
    %v7893 = vpack.c.b16 %v7673, %v7672
    %v7894 = vpack.c.b16 %v7675, %v7674
    %v7895 = vpack.c.b16 %v7677, %v7676
    %v7896 = vpack.c.b16 %v7679, %v7678
    %v7897 = vpack.c.b16 %v7681, %v7680
    %v7898 = vpack.c.b16 %v7683, %v7682
    %v7899 = vpack.c.b16 %v7685, %v7684
    %v7900 = vpack.c.b16 %v7687, %v7686
    %v7901 = vpack.c.b16 %v7689, %v7688
    %v7902 = vpack.c.b16 %v7691, %v7690
    %v7903 = vpack.c.b16 %v7693, %v7692
    %v7904 = vpack.c.b16 %v7695, %v7694
    %v7905 = vpack.c.b16 %v7697, %v7696
    %v7906 = vpack.c.b16 %v7699, %v7698
    %v7907 = vpack.c.b16 %v7701, %v7700
    %v7908 = vpack.c.b16 %v7703, %v7702
    %v7909 = vpack.c.b16 %v7705, %v7704
    %v7910 = vpack.c.b16 %v7707, %v7706
    %v7911 = vpack.c.b16 %v7709, %v7708
    %v7912 = vpack.c.b16 %v7711, %v7710
    %v7913 = vpack.c.b16 %v7713, %v7712
    %v7914 = vpack.c.b16 %v7715, %v7714
    %v7915 = vpack.c.b16 %v7717, %v7716
    %v7916 = vpack.c.b16 %v7719, %v7718
    %v7917 = vpack.c.b16 %v7721, %v7720
    %v7918 = vpack.c.b16 %v7723, %v7722
    %v7919 = vpack.c.b16 %v7725, %v7724
    %v7920 = vpack.c.b16 %v7727, %v7726
    %v7921 = vpack.c.b16 %v7729, %v7728
    %v7922 = vpack.c.b16 %v7731, %v7730
    %v7923 = vpack.c.b16 %v7733, %v7732
    %v7924 = vpack.c.b16 %v7735, %v7734
    %v7925 = vpack.c.b16 %v7737, %v7736
    %v7926 = vpack.c.b16 %v7739, %v7738
    %v7927 = vpack.c.b16 %v7741, %v7740
    %v7928 = vpack.c.b16 %v7743, %v7742
    %v7929 = vpack.c.b16 %v7745, %v7744
    %v7930 = vpack.c.b16 %v7747, %v7746
    %v7931 = vpack.c.b16 %v7749, %v7748
    %v7932 = vpack.c.b16 %v7751, %v7750
    %v7933 = vpack.c.b16 %v7753, %v7752
    %v7934 = vpack.c.b16 %v7755, %v7754
    %v7935 = vpack.c.b16 %v7757, %v7756
    %v7936 = vpack.c.b16 %v7759, %v7758
    %v7937 = vpack.c.b16 %v7761, %v7760
    %v7938 = vpack.c.b16 %v7763, %v7762
    %v7939 = vpack.c.b16 %v7765, %v7764
    %v7940 = vpack.c.b16 %v7767, %v7766
    %v7941 = vpack.c.b16 %v7769, %v7768
    %v7942 = vpack.c.b16 %v7771, %v7770
    %v7943 = vpack.c.b16 %v7773, %v7772
    %v7944 = vpack.c.b16 %v7775, %v7774
    %v7945 = vpack.c.b16 %v7777, %v7776
    %v7946 = vpack.c.b16 %v7779, %v7778
    %v7947 = vpack.c.b16 %v7781, %v7780
    %v7948 = vpack.c.b16 %v7783, %v7782
    %v7949 = vpack.c.b16 %v7785, %v7784
    %v7950 = vpack.c.b16 %v7787, %v7786
    %v7951 = vpack.c.b16 %v7789, %v7788
    %v7952 = vpack.c.b16 %v7791, %v7790
    %v7953 = vpack.c.b16 %v7793, %v7792
    %v7954 = vpack.c.b16 %v7795, %v7794
    %v7955 = vpack.c.b16 %v7797, %v7796
    %v7956 = vpack.c.b16 %v7799, %v7798
    %v7957 = vpack.c.b16 %v7801, %v7800
    %v7958 = vpack.c.b16 %v7803, %v7802
    %v7959 = vpack.c.b16 %v7805, %v7804
    %v7960 = vpack.c.b16 %v7807, %v7806
    %v7961 = vpack.c.b16 %v7809, %v7808
    %8114 = vmatprep.subr.bf16.mxu0 0
    %8115 = vmatpush1.bf16.msra.mxu0 %v7817
    %8116 = vmatprep.subr.bf16.mxu0 0
    %8117 = vmatpush1.bf16.msra.mxu0 %v7816
    %8118 = vmatprep.subr.bf16.mxu0 0
    %8119 = vmatpush1.bf16.msra.mxu0 %v7815
    %8120 = vmatprep.subr.bf16.mxu0 0
    %8121 = vmatpush1.bf16.msra.mxu0 %v7814
    %8122 = vmatprep.subr.bf16.mxu0 0
    %8123 = vmatpush1.bf16.msra.mxu0 %v7813
    %8124 = vmatprep.subr.bf16.mxu0 0
    %8125 = vmatpush1.bf16.msra.mxu0 %v7812
    %8126 = vmatprep.subr.bf16.mxu0 0
    %8127 = vmatpush1.bf16.msra.mxu0 %v7811
    %8128 = vmatprep.subr.bf16.mxu0 0
    %8129 = vmatpush1.bf16.msra.mxu0 %v7810
    %8130 = vmatprep.subr.bf16.mxu0 0
    %8131 = vmatpush2.bf16.msra.mxu0 %v7825
    %8132 = vmatprep.subr.bf16.mxu0 0
    %8133 = vmatpush2.bf16.msra.mxu0 %v7824
    %8134 = vmatprep.subr.bf16.mxu0 0
    %8135 = vmatpush2.bf16.msra.mxu0 %v7823
    %8136 = vmatprep.subr.bf16.mxu0 0
    %8137 = vmatpush2.bf16.msra.mxu0 %v7822
    %8138 = vmatprep.subr.bf16.mxu0 0
    %8139 = vmatpush2.bf16.msra.mxu0 %v7821
    %8140 = vmatprep.subr.bf16.mxu0 0
    %8141 = vmatpush2.bf16.msra.mxu0 %v7820
    %8142 = vmatprep.subr.bf16.mxu0 0
    %8143 = vmatpush2.bf16.msra.mxu0 %v7819
    %8144 = vmatprep.subr.bf16.mxu0 0
    %8145 = vmatpush2.bf16.msra.mxu0 %v7818
    %8146 = vmatprep.mubr.bf16.mxu0 %v7099
    %8147 = vmatmul.mubr.bf16.gmra.mxu0 %v7085
    %v8148 = vpop.f32.mrf.mxu0
    %v8149 = vadd.f32 %v7057, %v8148
    %v8150 = vpop.f32.mrf.mxu0
    %v8151 = vpop.f32.mrf.mxu0
    %v8152 = vpop.f32.mrf.mxu0
    %8153 = vdwg.mxu0
    %8154 = vmatprep.subr.bf16.mxu0 0
    %8155 = vmatpush1.bf16.msra.mxu0 %v7833
    %8156 = vmatprep.subr.bf16.mxu0 0
    %8157 = vmatpush1.bf16.msra.mxu0 %v7832
    %8158 = vmatprep.subr.bf16.mxu0 0
    %8159 = vmatpush1.bf16.msra.mxu0 %v7831
    %8160 = vmatprep.subr.bf16.mxu0 0
    %8161 = vmatpush1.bf16.msra.mxu0 %v7830
    %8162 = vmatprep.subr.bf16.mxu0 0
    %8163 = vmatpush1.bf16.msra.mxu0 %v7829
    %8164 = vmatprep.subr.bf16.mxu0 0
    %8165 = vmatpush1.bf16.msra.mxu0 %v7828
    %8166 = vmatprep.subr.bf16.mxu0 0
    %8167 = vmatpush1.bf16.msra.mxu0 %v7827
    %8168 = vmatprep.subr.bf16.mxu0 0
    %8169 = vmatpush1.bf16.msra.mxu0 %v7826
    %8170 = vmatprep.subr.bf16.mxu0 0
    %8171 = vmatpush2.bf16.msra.mxu0 %v7841
    %8172 = vmatprep.subr.bf16.mxu0 0
    %8173 = vmatpush2.bf16.msra.mxu0 %v7840
    %8174 = vmatprep.subr.bf16.mxu0 0
    %8175 = vmatpush2.bf16.msra.mxu0 %v7839
    %8176 = vmatprep.subr.bf16.mxu0 0
    %8177 = vmatpush2.bf16.msra.mxu0 %v7838
    %8178 = vmatprep.subr.bf16.mxu0 0
    %8179 = vmatpush2.bf16.msra.mxu0 %v7837
    %8180 = vmatprep.subr.bf16.mxu0 0
    %8181 = vmatpush2.bf16.msra.mxu0 %v7836
    %8182 = vmatprep.subr.bf16.mxu0 0
    %8183 = vmatpush2.bf16.msra.mxu0 %v7835
    %8184 = vmatprep.subr.bf16.mxu0 0
    %8185 = vmatpush2.bf16.msra.mxu0 %v7834
    %8186 = vmatprep.mubr.bf16.mxu0 %v7109
    %8187 = vmatmul.mubr.bf16.gmra.mxu0 %v7107
    %v8188 = vpop.f32.mrf.mxu0
    %v8189 = vadd.f32 %v8149, %v8188
    %v8190 = vpop.f32.mrf.mxu0
    %v8191 = vpop.f32.mrf.mxu0
    %v8192 = vpop.f32.mrf.mxu0
    %8193 = vdwg.mxu0
    %8194 = vmatprep.subr.bf16.mxu0 0
    %8195 = vmatpush1.bf16.msra.mxu0 %v7849
    %8196 = vmatprep.subr.bf16.mxu0 0
    %8197 = vmatpush1.bf16.msra.mxu0 %v7848
    %8198 = vmatprep.subr.bf16.mxu0 0
    %8199 = vmatpush1.bf16.msra.mxu0 %v7847
    %8200 = vmatprep.subr.bf16.mxu0 0
    %8201 = vmatpush1.bf16.msra.mxu0 %v7846
    %8202 = vmatprep.subr.bf16.mxu0 0
    %8203 = vmatpush1.bf16.msra.mxu0 %v7845
    %8204 = vmatprep.subr.bf16.mxu0 0
    %8205 = vmatpush1.bf16.msra.mxu0 %v7844
    %8206 = vmatprep.subr.bf16.mxu0 0
    %8207 = vmatpush1.bf16.msra.mxu0 %v7843
    %8208 = vmatprep.subr.bf16.mxu0 0
    %8209 = vmatpush1.bf16.msra.mxu0 %v7842
    %8210 = vmatprep.subr.bf16.mxu0 0
    %8211 = vmatpush2.bf16.msra.mxu0 %v7857
    %8212 = vmatprep.subr.bf16.mxu0 0
    %8213 = vmatpush2.bf16.msra.mxu0 %v7856
    %8214 = vmatprep.subr.bf16.mxu0 0
    %8215 = vmatpush2.bf16.msra.mxu0 %v7855
    %8216 = vmatprep.subr.bf16.mxu0 0
    %8217 = vmatpush2.bf16.msra.mxu0 %v7854
    %8218 = vmatprep.subr.bf16.mxu0 0
    %8219 = vmatpush2.bf16.msra.mxu0 %v7853
    %8220 = vmatprep.subr.bf16.mxu0 0
    %8221 = vmatpush2.bf16.msra.mxu0 %v7852
    %8222 = vmatprep.subr.bf16.mxu0 0
    %8223 = vmatpush2.bf16.msra.mxu0 %v7851
    %8224 = vmatprep.subr.bf16.mxu0 0
    %8225 = vmatpush2.bf16.msra.mxu0 %v7850
    %8226 = vmatprep.mubr.bf16.mxu0 %v7106
    %8227 = vmatmul.mubr.bf16.gmra.mxu0 %v7092
    %v8228 = vpop.f32.mrf.mxu0
    %v8229 = vadd.f32 %v8189, %v8228
    %v8230 = vpop.f32.mrf.mxu0
    %v8231 = vpop.f32.mrf.mxu0
    %v8232 = vpop.f32.mrf.mxu0
    %8233 = vdwg.mxu0
    %8234 = vmatprep.subr.bf16.mxu0 0
    %8235 = vmatpush1.bf16.msra.mxu0 %v7865
    %8236 = vmatprep.subr.bf16.mxu0 0
    %8237 = vmatpush1.bf16.msra.mxu0 %v7864
    %8238 = vmatprep.subr.bf16.mxu0 0
    %8239 = vmatpush1.bf16.msra.mxu0 %v7863
    %8240 = vmatprep.subr.bf16.mxu0 0
    %8241 = vmatpush1.bf16.msra.mxu0 %v7862
    %8242 = vmatprep.subr.bf16.mxu0 0
    %8243 = vmatpush1.bf16.msra.mxu0 %v7861
    %8244 = vmatprep.subr.bf16.mxu0 0
    %8245 = vmatpush1.bf16.msra.mxu0 %v7860
    %8246 = vmatprep.subr.bf16.mxu0 0
    %8247 = vmatpush1.bf16.msra.mxu0 %v7859
    %8248 = vmatprep.subr.bf16.mxu0 0
    %8249 = vmatpush1.bf16.msra.mxu0 %v7858
    %8250 = vmatprep.subr.bf16.mxu0 0
    %8251 = vmatpush2.bf16.msra.mxu0 %v7873
    %8252 = vmatprep.subr.bf16.mxu0 0
    %8253 = vmatpush2.bf16.msra.mxu0 %v7872
    %8254 = vmatprep.subr.bf16.mxu0 0
    %8255 = vmatpush2.bf16.msra.mxu0 %v7871
    %8256 = vmatprep.subr.bf16.mxu0 0
    %8257 = vmatpush2.bf16.msra.mxu0 %v7870
    %8258 = vmatprep.subr.bf16.mxu0 0
    %8259 = vmatpush2.bf16.msra.mxu0 %v7869
    %8260 = vmatprep.subr.bf16.mxu0 0
    %8261 = vmatpush2.bf16.msra.mxu0 %v7868
    %8262 = vmatprep.subr.bf16.mxu0 0
    %8263 = vmatpush2.bf16.msra.mxu0 %v7867
    %8264 = vmatprep.subr.bf16.mxu0 0
    %8265 = vmatpush2.bf16.msra.mxu0 %v7866
    %8266 = vmatprep.mubr.bf16.mxu0 %v7110
    %8267 = vmatmul.mubr.bf16.gmra.mxu0 %v7108
    %v8268 = vpop.f32.mrf.mxu0
    %v8269 = vadd.f32 %v8229, %v8268
    %v8270 = vpop.f32.mrf.mxu0
    %v8271 = vpop.f32.mrf.mxu0
    %v8272 = vpop.f32.mrf.mxu0
    %8273 = vdwg.mxu0
    %8274 = vmatprep.subr.bf16.mxu0 0
    %8275 = vmatpush1.bf16.msra.mxu0 %v7881
    %8276 = vmatprep.subr.bf16.mxu0 0
    %8277 = vmatpush1.bf16.msra.mxu0 %v7880
    %8278 = vmatprep.subr.bf16.mxu0 0
    %8279 = vmatpush1.bf16.msra.mxu0 %v7879
    %8280 = vmatprep.subr.bf16.mxu0 0
    %8281 = vmatpush1.bf16.msra.mxu0 %v7878
    %8282 = vmatprep.subr.bf16.mxu0 0
    %8283 = vmatpush1.bf16.msra.mxu0 %v7877
    %8284 = vmatprep.subr.bf16.mxu0 0
    %8285 = vmatpush1.bf16.msra.mxu0 %v7876
    %8286 = vmatprep.subr.bf16.mxu0 0
    %8287 = vmatpush1.bf16.msra.mxu0 %v7875
    %8288 = vmatprep.subr.bf16.mxu0 0
    %8289 = vmatpush1.bf16.msra.mxu0 %v7874
    %8290 = vmatprep.subr.bf16.mxu0 0
    %8291 = vmatpush2.bf16.msra.mxu0 %v7889
    %8292 = vmatprep.subr.bf16.mxu0 0
    %8293 = vmatpush2.bf16.msra.mxu0 %v7888
    %8294 = vmatprep.subr.bf16.mxu0 0
    %8295 = vmatpush2.bf16.msra.mxu0 %v7887
    %8296 = vmatprep.subr.bf16.mxu0 0
    %8297 = vmatpush2.bf16.msra.mxu0 %v7886
    %8298 = vmatprep.subr.bf16.mxu0 0
    %8299 = vmatpush2.bf16.msra.mxu0 %v7885
    %8300 = vmatprep.subr.bf16.mxu0 0
    %8301 = vmatpush2.bf16.msra.mxu0 %v7884
    %8302 = vmatprep.subr.bf16.mxu0 0
    %8303 = vmatpush2.bf16.msra.mxu0 %v7883
    %8304 = vmatprep.subr.bf16.mxu0 0
    %8305 = vmatpush2.bf16.msra.mxu0 %v7882
    %8306 = vmatprep.mubr.bf16.mxu0 %v7148
    %8307 = vmatmul.mubr.bf16.gmra.mxu0 %v7134
    %v8308 = vpop.f32.mrf.mxu0
    %v8309 = vadd.f32 %v8269, %v8308
    %v8310 = vpop.f32.mrf.mxu0
    %v8311 = vpop.f32.mrf.mxu0
    %v8312 = vpop.f32.mrf.mxu0
    %8313 = vdwg.mxu0
    %8314 = vmatprep.subr.bf16.mxu0 0
    %8315 = vmatpush1.bf16.msra.mxu0 %v7897
    %8316 = vmatprep.subr.bf16.mxu0 0
    %8317 = vmatpush1.bf16.msra.mxu0 %v7896
    %8318 = vmatprep.subr.bf16.mxu0 0
    %8319 = vmatpush1.bf16.msra.mxu0 %v7895
    %8320 = vmatprep.subr.bf16.mxu0 0
    %8321 = vmatpush1.bf16.msra.mxu0 %v7894
    %8322 = vmatprep.subr.bf16.mxu0 0
    %8323 = vmatpush1.bf16.msra.mxu0 %v7893
    %8324 = vmatprep.subr.bf16.mxu0 0
    %8325 = vmatpush1.bf16.msra.mxu0 %v7892
    %8326 = vmatprep.subr.bf16.mxu0 0
    %8327 = vmatpush1.bf16.msra.mxu0 %v7891
    %8328 = vmatprep.subr.bf16.mxu0 0
    %8329 = vmatpush1.bf16.msra.mxu0 %v7890
    %8330 = vmatprep.subr.bf16.mxu0 0
    %8331 = vmatpush2.bf16.msra.mxu0 %v7905
    %8332 = vmatprep.subr.bf16.mxu0 0
    %8333 = vmatpush2.bf16.msra.mxu0 %v7904
    %8334 = vmatprep.subr.bf16.mxu0 0
    %8335 = vmatpush2.bf16.msra.mxu0 %v7903
    %8336 = vmatprep.subr.bf16.mxu0 0
    %8337 = vmatpush2.bf16.msra.mxu0 %v7902
    %8338 = vmatprep.subr.bf16.mxu0 0
    %8339 = vmatpush2.bf16.msra.mxu0 %v7901
    %8340 = vmatprep.subr.bf16.mxu0 0
    %8341 = vmatpush2.bf16.msra.mxu0 %v7900
    %8342 = vmatprep.subr.bf16.mxu0 0
    %8343 = vmatpush2.bf16.msra.mxu0 %v7899
    %8344 = vmatprep.subr.bf16.mxu0 0
    %8345 = vmatpush2.bf16.msra.mxu0 %v7898
    %8346 = vmatprep.mubr.bf16.mxu0 %v7158
    %8347 = vmatmul.mubr.bf16.gmra.mxu0 %v7156
    %v8348 = vpop.f32.mrf.mxu0
    %v8349 = vadd.f32 %v8309, %v8348
    %v8350 = vpop.f32.mrf.mxu0
    %v8351 = vpop.f32.mrf.mxu0
    %v8352 = vpop.f32.mrf.mxu0
    %8353 = vdwg.mxu0
    %8354 = vmatprep.subr.bf16.mxu0 0
    %8355 = vmatpush1.bf16.msra.mxu0 %v7913
    %8356 = vmatprep.subr.bf16.mxu0 0
    %8357 = vmatpush1.bf16.msra.mxu0 %v7912
    %8358 = vmatprep.subr.bf16.mxu0 0
    %8359 = vmatpush1.bf16.msra.mxu0 %v7911
    %8360 = vmatprep.subr.bf16.mxu0 0
    %8361 = vmatpush1.bf16.msra.mxu0 %v7910
    %8362 = vmatprep.subr.bf16.mxu0 0
    %8363 = vmatpush1.bf16.msra.mxu0 %v7909
    %8364 = vmatprep.subr.bf16.mxu0 0
    %8365 = vmatpush1.bf16.msra.mxu0 %v7908
    %8366 = vmatprep.subr.bf16.mxu0 0
    %8367 = vmatpush1.bf16.msra.mxu0 %v7907
    %8368 = vmatprep.subr.bf16.mxu0 0
    %8369 = vmatpush1.bf16.msra.mxu0 %v7906
    %8370 = vmatprep.subr.bf16.mxu0 0
    %8371 = vmatpush2.bf16.msra.mxu0 %v7921
    %8372 = vmatprep.subr.bf16.mxu0 0
    %8373 = vmatpush2.bf16.msra.mxu0 %v7920
    %8374 = vmatprep.subr.bf16.mxu0 0
    %8375 = vmatpush2.bf16.msra.mxu0 %v7919
    %8376 = vmatprep.subr.bf16.mxu0 0
    %8377 = vmatpush2.bf16.msra.mxu0 %v7918
    %8378 = vmatprep.subr.bf16.mxu0 0
    %8379 = vmatpush2.bf16.msra.mxu0 %v7917
    %8380 = vmatprep.subr.bf16.mxu0 0
    %8381 = vmatpush2.bf16.msra.mxu0 %v7916
    %8382 = vmatprep.subr.bf16.mxu0 0
    %8383 = vmatpush2.bf16.msra.mxu0 %v7915
    %8384 = vmatprep.subr.bf16.mxu0 0
    %8385 = vmatpush2.bf16.msra.mxu0 %v7914
    %8386 = vmatprep.mubr.bf16.mxu0 %v7155
    %8387 = vmatmul.mubr.bf16.gmra.mxu0 %v7141
    %v8388 = vpop.f32.mrf.mxu0
    %v8389 = vadd.f32 %v8349, %v8388
    %v8390 = vpop.f32.mrf.mxu0
    %v8391 = vpop.f32.mrf.mxu0
    %v8392 = vpop.f32.mrf.mxu0
    %8393 = vdwg.mxu0
    %8394 = vmatprep.subr.bf16.mxu0 0
    %8395 = vmatpush1.bf16.msra.mxu0 %v7929
    %8396 = vmatprep.subr.bf16.mxu0 0
    %8397 = vmatpush1.bf16.msra.mxu0 %v7928
    %8398 = vmatprep.subr.bf16.mxu0 0
    %8399 = vmatpush1.bf16.msra.mxu0 %v7927
    %8400 = vmatprep.subr.bf16.mxu0 0
    %8401 = vmatpush1.bf16.msra.mxu0 %v7926
    %8402 = vmatprep.subr.bf16.mxu0 0
    %8403 = vmatpush1.bf16.msra.mxu0 %v7925
    %8404 = vmatprep.subr.bf16.mxu0 0
    %8405 = vmatpush1.bf16.msra.mxu0 %v7924
    %8406 = vmatprep.subr.bf16.mxu0 0
    %8407 = vmatpush1.bf16.msra.mxu0 %v7923
    %8408 = vmatprep.subr.bf16.mxu0 0
    %8409 = vmatpush1.bf16.msra.mxu0 %v7922
    %8410 = vmatprep.subr.bf16.mxu0 0
    %8411 = vmatpush2.bf16.msra.mxu0 %v7937
    %8412 = vmatprep.subr.bf16.mxu0 0
    %8413 = vmatpush2.bf16.msra.mxu0 %v7936
    %8414 = vmatprep.subr.bf16.mxu0 0
    %8415 = vmatpush2.bf16.msra.mxu0 %v7935
    %8416 = vmatprep.subr.bf16.mxu0 0
    %8417 = vmatpush2.bf16.msra.mxu0 %v7934
    %8418 = vmatprep.subr.bf16.mxu0 0
    %8419 = vmatpush2.bf16.msra.mxu0 %v7933
    %8420 = vmatprep.subr.bf16.mxu0 0
    %8421 = vmatpush2.bf16.msra.mxu0 %v7932
    %8422 = vmatprep.subr.bf16.mxu0 0
    %8423 = vmatpush2.bf16.msra.mxu0 %v7931
    %8424 = vmatprep.subr.bf16.mxu0 0
    %8425 = vmatpush2.bf16.msra.mxu0 %v7930
    %8426 = vmatprep.mubr.bf16.mxu0 %v7159
    %8427 = vmatmul.mubr.bf16.gmra.mxu0 %v7157
    %v8428 = vpop.f32.mrf.mxu0
    %v8429 = vadd.f32 %v8389, %v8428
    %v8430 = vpop.f32.mrf.mxu0
    %v8431 = vpop.f32.mrf.mxu0
    %v8432 = vpop.f32.mrf.mxu0
    %8433 = vdwg.mxu0
    %8434 = vmatprep.subr.bf16.mxu0 0
    %8435 = vmatpush1.bf16.msra.mxu0 %v7945
    %8436 = vmatprep.subr.bf16.mxu0 0
    %8437 = vmatpush1.bf16.msra.mxu0 %v7944
    %8438 = vmatprep.subr.bf16.mxu0 0
    %8439 = vmatpush1.bf16.msra.mxu0 %v7943
    %8440 = vmatprep.subr.bf16.mxu0 0
    %8441 = vmatpush1.bf16.msra.mxu0 %v7942
    %8442 = vmatprep.subr.bf16.mxu0 0
    %8443 = vmatpush1.bf16.msra.mxu0 %v7941
    %8444 = vmatprep.subr.bf16.mxu0 0
    %8445 = vmatpush1.bf16.msra.mxu0 %v7940
    %8446 = vmatprep.subr.bf16.mxu0 0
    %8447 = vmatpush1.bf16.msra.mxu0 %v7939
    %8448 = vmatprep.subr.bf16.mxu0 0
    %8449 = vmatpush1.bf16.msra.mxu0 %v7938
    %8450 = vmatprep.subr.bf16.mxu0 0
    %8451 = vmatpush2.bf16.msra.mxu0 %v7953
    %8452 = vmatprep.subr.bf16.mxu0 0
    %8453 = vmatpush2.bf16.msra.mxu0 %v7952
    %8454 = vmatprep.subr.bf16.mxu0 0
    %8455 = vmatpush2.bf16.msra.mxu0 %v7951
    %8456 = vmatprep.subr.bf16.mxu0 0
    %8457 = vmatpush2.bf16.msra.mxu0 %v7950
    %8458 = vmatprep.subr.bf16.mxu0 0
    %8459 = vmatpush2.bf16.msra.mxu0 %v7949
    %8460 = vmatprep.subr.bf16.mxu0 0
    %8461 = vmatpush2.bf16.msra.mxu0 %v7948
    %8462 = vmatprep.subr.bf16.mxu0 0
    %8463 = vmatpush2.bf16.msra.mxu0 %v7947
    %8464 = vmatprep.subr.bf16.mxu0 0
    %8465 = vmatpush2.bf16.msra.mxu0 %v7946
    %8466 = vmatprep.mubr.bf16.mxu0 %v7181
    %8467 = vmatmul.mubr.bf16.gmra.mxu0 %v7174
    %v8468 = vpop.f32.mrf.mxu0
    %v8469 = vadd.f32 %v8429, %v8468
    %v8470 = vpop.f32.mrf.mxu0
    %v8471 = vpop.f32.mrf.mxu0
    %v8472 = vpop.f32.mrf.mxu0
    %8473 = vdwg.mxu0
    %8474 = vmatprep.subr.bf16.mxu0 0
    %8475 = vmatpush1.bf16.msra.mxu0 %v7961
    %8476 = vmatprep.subr.bf16.mxu0 0
    %8477 = vmatpush1.bf16.msra.mxu0 %v7960
    %8478 = vmatprep.subr.bf16.mxu0 0
    %8479 = vmatpush1.bf16.msra.mxu0 %v7959
    %8480 = vmatprep.subr.bf16.mxu0 0
    %8481 = vmatpush1.bf16.msra.mxu0 %v7958
    %8482 = vmatprep.subr.bf16.mxu0 0
    %8483 = vmatpush1.bf16.msra.mxu0 %v7957
    %8484 = vmatprep.subr.bf16.mxu0 0
    %8485 = vmatpush1.bf16.msra.mxu0 %v7956
    %8486 = vmatprep.subr.bf16.mxu0 0
    %8487 = vmatpush1.bf16.msra.mxu0 %v7955
    %8488 = vmatprep.subr.bf16.mxu0 0
    %8489 = vmatpush1.bf16.msra.mxu0 %v7954
    %8490 = vmatprep.subr.bf16.mxu0 0
    %8491 = vmatpush2.bf16.msra.mxu0 0
    %8492 = vmatprep.subr.bf16.mxu0 0
    %8493 = vmatpush2.bf16.msra.mxu0 0
    %8494 = vmatprep.subr.bf16.mxu0 0
    %8495 = vmatpush2.bf16.msra.mxu0 0
    %8496 = vmatprep.subr.bf16.mxu0 0
    %8497 = vmatpush2.bf16.msra.mxu0 0
    %8498 = vmatprep.subr.bf16.mxu0 0
    %8499 = vmatpush2.bf16.msra.mxu0 0
    %8500 = vmatprep.subr.bf16.mxu0 0
    %8501 = vmatpush2.bf16.msra.mxu0 0
    %8502 = vmatprep.subr.bf16.mxu0 0
    %8503 = vmatpush2.bf16.msra.mxu0 0
    %8504 = vmatprep.subr.bf16.mxu0 0
    %8505 = vmatpush2.bf16.msra.mxu0 0
    %8506 = vmatprep.mubr.bf16.mxu0 0
    %8507 = vmatmul.mubr.bf16.gmra.mxu0 %v7182
    %v8508 = vpop.f32.mrf.mxu0
    %v8509 = vadd.f32 %v8469, %v8508
    %v8510 = vpop.f32.mrf.mxu0
    %v8511 = vpop.f32.mrf.mxu0
    %v8512 = vpop.f32.mrf.mxu0
    %8513 = vdwg.mxu0
    %v8514 = vmax.f32 %v8509, 0.0
    %v8515 = vpack.c.bf16 %v8514, %v8514
    %v8516 = vld [vmem:[%s5] sm:$0xf]
    %v8517 = vld [vmem:[%s5 + $0x4] sm:$0xf]
    %v8518 = vld [vmem:[%s5 + $0x8] sm:$0xf]
    %v8519 = vld [vmem:[%s5 + $0xc] sm:$0xf]
    %v8520 = vld [vmem:[%s5 + $0x10] sm:$0xf]
    %v8521 = vld [vmem:[%s5 + $0x14] sm:$0xf]
    %v8522 = vld [vmem:[%s5 + $0x18] sm:$0xf]
    %v8523 = vld [vmem:[%s5 + $0x1c] sm:$0xf]
    %v8524 = vld [vmem:[%s5 + $0x20] sm:$0xf]
    %v8525 = vld [vmem:[%s5 + $0x24] sm:$0xf]
    %v8526 = vld [vmem:[%s5 + $0x28] sm:$0xf]
    %v8527 = vld [vmem:[%s5 + $0x2c] sm:$0xf]
    %v8528 = vld [vmem:[%s5 + $0x30] sm:$0xf]
    %v8529 = vld [vmem:[%s5 + $0x34] sm:$0xf]
    %v8530 = vld [vmem:[%s5 + $0x38] sm:$0xf]
    %v8531 = vld [vmem:[%s5 + $0x3c] sm:$0xf]
    %v8532 = vld [vmem:[#allocation13] sm:$0x1]
    %v8534 = vlaneseq
    %v8535 = vshrl.u32 %v8534, 7
    %v8536 = vsub.s32 0, %v8535
    %v8537 = vrot.slane %v8532, %v8536
    %v8555 = vunpack.c.l.b16 %v8516
    %v8556 = vunpack.c.l.b16 %v8517
    %v8557 = vunpack.c.l.b16 %v8518
    %v8558 = vunpack.c.l.b16 %v8519
    %v8559 = vunpack.c.l.b16 %v8520
    %v8560 = vunpack.c.l.b16 %v8521
    %v8561 = vunpack.c.l.b16 %v8522
    %v8562 = vunpack.c.l.b16 %v8523
    %v8563 = vunpack.c.l.b16 %v8524
    %v8564 = vunpack.c.l.b16 %v8525
    %v8565 = vunpack.c.l.b16 %v8526
    %v8566 = vunpack.c.l.b16 %v8527
    %v8567 = vunpack.c.l.b16 %v8528
    %v8568 = vunpack.c.l.b16 %v8529
    %v8569 = vunpack.c.l.b16 %v8530
    %v8570 = vunpack.c.l.b16 %v8531
    %v8571 = vpack.c.b16 %v8556, %v8555
    %v8572 = vpack.c.b16 %v8558, %v8557
    %v8573 = vpack.c.b16 %v8560, %v8559
    %v8574 = vpack.c.b16 %v8562, %v8561
    %v8575 = vpack.c.b16 %v8564, %v8563
    %v8576 = vpack.c.b16 %v8566, %v8565
    %v8577 = vpack.c.b16 %v8568, %v8567
    %v8578 = vpack.c.b16 %v8570, %v8569
    %8587 = vmatprep.subr.bf16.mxu0 0
    %8588 = vmatpush1.bf16.msra.mxu0 %v8578
    %8589 = vmatprep.subr.bf16.mxu0 0
    %8590 = vmatpush1.bf16.msra.mxu0 %v8577
    %8591 = vmatprep.subr.bf16.mxu0 0
    %8592 = vmatpush1.bf16.msra.mxu0 %v8576
    %8593 = vmatprep.subr.bf16.mxu0 0
    %8594 = vmatpush1.bf16.msra.mxu0 %v8575
    %8595 = vmatprep.subr.bf16.mxu0 0
    %8596 = vmatpush1.bf16.msra.mxu0 %v8574
    %8597 = vmatprep.subr.bf16.mxu0 0
    %8598 = vmatpush1.bf16.msra.mxu0 %v8573
    %8599 = vmatprep.subr.bf16.mxu0 0
    %8600 = vmatpush1.bf16.msra.mxu0 %v8572
    %8601 = vmatprep.subr.bf16.mxu0 0
    %8602 = vmatpush1.bf16.msra.mxu0 %v8571
    %8603 = vmatprep.subr.bf16.mxu0 0
    %8604 = vmatpush2.bf16.msra.mxu0 0
    %8605 = vmatprep.subr.bf16.mxu0 0
    %8606 = vmatpush2.bf16.msra.mxu0 0
    %8607 = vmatprep.subr.bf16.mxu0 0
    %8608 = vmatpush2.bf16.msra.mxu0 0
    %8609 = vmatprep.subr.bf16.mxu0 0
    %8610 = vmatpush2.bf16.msra.mxu0 0
    %8611 = vmatprep.subr.bf16.mxu0 0
    %8612 = vmatpush2.bf16.msra.mxu0 0
    %8613 = vmatprep.subr.bf16.mxu0 0
    %8614 = vmatpush2.bf16.msra.mxu0 0
    %8615 = vmatprep.subr.bf16.mxu0 0
    %8616 = vmatpush2.bf16.msra.mxu0 0
    %8617 = vmatprep.subr.bf16.mxu0 0
    %8618 = vmatpush2.bf16.msra.mxu0 0
    %8619 = vmatprep.mubr.bf16.mxu0 0
    %8620 = vmatmul.mubr.bf16.gmra.mxu0 %v8515
    %v8621 = vpop.f32.mrf.mxu0
    %v8622 = vadd.f32 %v8537, %v8621
    %v8623 = vpop.f32.mrf.mxu0
    %v8624 = vpop.f32.mrf.mxu0
    %v8625 = vpop.f32.mrf.mxu0
    %8626 = vdwg.mxu0
    %vm8627 = vcmask 9216
    %v8628 = vsel %vm8627, %v8622, -inf
    %8629 = vmax.xlane.f32.xlu0 %v8628
    %v8630 = vpop.xlane.xlu0 %8629
    %v8631 = vsub.f32 %v8622, %v8630
    %v8632 = vmul.f32 %v8631, 1.442695
    %v8633 = vpow.pop %v8632
    %v8634 = vsel %vm8627, %v8633, 0.0
    %8635 = vadd.xlane.f32.xlu0 %v8634
    %v8636 = vpop.xlane.xlu0 %8635
    %v8637 = vlog2.pop %v8636
    %v8638 = vmul.f32 %v8637, 0.6931472
    %v8639 = vsub.f32 %v8631, %v8638
    %s8640 = sld [smem:[#allocation3]]
    %v8641 = vstv %s8640
    %v8642 = vmul.f32 %v8622, %v8641
    %v8643 = vsel %vm8627, %v8642, -inf
    %8644 = vmax.xlane.f32.xlu0 %v8643
    %v8645 = vpop.xlane.xlu0 %8644
    %v8646 = vsub.f32 %v8642, %v8645
    %v8647 = vmul.f32 %v8646, 1.442695
    %v8648 = vpow.pop %v8647
    %v8649 = vsel %vm8627, %v8648, 0.0
    %8650 = vadd.xlane.f32.xlu0 %v8649
    %v8651 = vpop.xlane.xlu0 %8650
    %v8652 = vrcp.pop %v8651
    %v8653 = vmul.f32 %v8648, %v8652
    %8654 = vst.msk [vmem:[#allocation15] sm:$0x3] %vm8627, %v8639
    %8656 = vrot.lane.b32.xlu0 %v8653, 2
    %v8657 = vpop.permute.xlu0 %8656
    %vm8659 = vcmask 25616
    %8660 = vst.msk [vmem:[#allocation15] sm:$0x3] %vm8659, %v8657
    %8662 = vrot.lane.b32.xlu0 %v8622, 4
    %v8663 = vpop.permute.xlu0 %8662
    %vm8665 = vcmask 42016
    %8666 = vst.msk [vmem:[#allocation15] sm:$0x3] %vm8665, %v8663
    // Predicated region
    $region58: #{tpu_custom_call.1} parent=1 // pred_check
      _
    $region59: #{tpu_custom_call.1} parent=1 // pred_check_branch
      %8668 = sbr.rel (0) target = $region61
    $region60: #{tpu_custom_call.1} parent=1 // pred_region
      %s8670 = ssub.s32 32, 32
      %8671 = vsyncadd [#allocation6], %s8670
      %s8673 = sshll.u32 [#allocation15], 4
      %s8674 = int_to_ptr.vmem [resolvable:$true] %s8673
      %8676 = dma.vmem_to_hbm [thread:$0]  %s8674, 32, %s8, [#allocation6]
    $region61: #{tpu_custom_call.1} parent=1 // pred_fallthru
      _
    // Predicated region
    $region62: #{tpu_custom_call.1} parent=1 // pred_check
      _
    $region63: #{tpu_custom_call.1} parent=1 // pred_check_branch
      %8678 = sbr.rel (0) target = $region65
    $region64: #{tpu_custom_call.1} parent=1 // pred_region
      %8679 = dma.done [#allocation6], 32
    $region65: #{tpu_custom_call.1} parent=1 // pred_fallthru
      _
    %8680 = vsyncpa [#allocation5], 1
    %8681 = vsyncpa [#allocation8], 1
    %8682 = vsyncpa [#allocation11], 1
    %8683 = vsyncpa [#allocation14], 1
    %8684 = vsyncpa [#allocation6], 1

</llo_original>
